<compile_context>
chip_gen: v6e
topology: v6e:2x2x1
jax: 0.10.0
libtpu: 0.0.40
codegen_flags: <defaults>
</compile_context>

<pallas_src>
import jax
import jax.numpy as jnp
from jax.experimental import pallas as pl
from jax.experimental.pallas import tpu as pltpu


def basic_block_forward(x_nchw, params, *, eps=1e-5, batch_block=None,
                        out_dtype=None):
    """BasicBlock forward (stride=1, downsample=None). NCHW in / NCHW out."""
    w1, g1, be1, m1, v1 = (params[k] for k in ("w1", "g1", "b1", "m1", "v1"))
    w2, g2, be2, m2, v2 = (params[k] for k in ("w2", "g2", "b2", "m2", "v2"))

    B, C, H, W = x_nchw.shape
    Cmid, Cout = w1.shape[0], w2.shape[0]
    assert C == Cmid == Cout, "downsample is None => inplanes == planes"

    bt = batch_block if batch_block is not None else (2 if B % 2 == 0 else 1)
    assert B % bt == 0, "batch_block must divide the batch size"
    out_dtype = jnp.dtype(out_dtype) if out_dtype is not None else x_nchw.dtype

    HW = H * W
    # bt images stacked vertically with ONE shared zero row between/around
    # them (absorbs the dy=-1/+1 taps); +2 flat cells of overhang so every
    # tap's lane window stays in range.
    n_acc = (bt * H + bt - 1) * W            # accumulation lanes per step
    L = (bt * H + bt + 1) * W + 2            # flat scratch length per step

    # Eval-mode BN folded into a per-channel affine; the scale goes into the
    # (linear) conv weights, only the per-channel shift stays in the kernel.
    inv1 = g1 / jnp.sqrt(v1 + eps)
    inv2 = g2 / jnp.sqrt(v2 + eps)
    sh1 = (be1 - m1 * inv1).reshape(C, 1).astype(jnp.float32)
    sh2 = (be2 - m2 * inv2).reshape(C, 1).astype(jnp.float32)
    # OIHW * scale -> (ky, kx, Cout, Cin), bf16 MXU operands.
    w1t = jnp.transpose(w1 * inv1[:, None, None, None],
                        (2, 3, 0, 1)).astype(jnp.bfloat16)
    w2t = jnp.transpose(w2 * inv2[:, None, None, None],
                        (2, 3, 0, 1)).astype(jnp.bfloat16)

    # NCHW -> (B, C, H*W): a free view, no transpose / pad / cast HBM passes.
    x_flat = x_nchw.reshape(B, C, HW)

    def kernel(x_ref, w1_ref, b1_ref, w2_ref, b2_ref, out_ref, xp_ref):
        # ---- re-zero the padding rows (+2 overhang cells) every step -------
        # (must stay per-step: the scratch is reused across grid steps and
        #  the batch axis may be split across TensorCores)
        zpad = jnp.zeros((C, W + 1), xp_ref.dtype)
        xp_ref[:, 0:W + 1] = zpad                      # overhang + top pad row
        xp_ref[:, L - (W + 1):L] = zpad                # bottom pad row + overhang
        zrow = jnp.zeros((C, W), xp_ref.dtype)
        for b in range(1, bt):                         # shared separator rows
            f0 = b * (H + 1) * W + 1
            xp_ref[:, f0:f0 + W] = zrow

        # ---- stage the bf16 conv1 input (one contiguous store per image) ---
        for b in range(bt):
            f0 = (b * (H + 1) + 1) * W + 1
            xp_ref[:, f0:f0 + HW] = x_ref[b].astype(jnp.bfloat16)

        # Column masks fixing up the dx = -1 / +1 taps (there is no W padding
        # in the flat layout, so those taps wrap across row boundaries; the
        # wrapped lanes are exactly the ones a zero-pad column would feed).
        lane = jax.lax.broadcasted_iota(jnp.int32, (1, n_acc), 1)
        col = lane % W
        keep_l = col != 0          # for dx == 0 taps (source column x-1)
        keep_r = col != (W - 1)    # for dx == 2 taps (source column x+1)

        def conv3x3(w_ref):
            # Nine accumulated MXU dots; RHS = contiguous lane-window slices
            # of the flat scratch (no concatenate, no reshape).
            acc = jnp.zeros((C, n_acc), jnp.float32)
            for dy in range(3):
                for dx in range(3):
                    s0 = dy * W + dx
                    slab = xp_ref[:, s0:s0 + n_acc]
                    if dx == 0:
                        slab = jnp.where(keep_l, slab, 0)
                    elif dx == 2:
                        slab = jnp.where(keep_r, slab, 0)
                    acc = acc + jnp.dot(w_ref[dy, dx], slab,
                                        preferred_element_type=jnp.float32)
            return acc

        # ---- conv1 + BN1 shift + ReLU (f32 math, lane-dense) ---------------
        y1 = jnp.maximum(conv3x3(w1_ref) + b1_ref[...], 0.0)

        # ---- stash conv2's bf16 input back into the same flat scratch ------
        for b in range(bt):
            f0 = (b * (H + 1) + 1) * W + 1
            j0 = b * (H + 1) * W
            xp_ref[:, f0:f0 + HW] = y1[:, j0:j0 + HW].astype(jnp.bfloat16)

        # ---- conv2 + BN2 shift + exact-f32 residual + ReLU ------------------
        acc2 = conv3x3(w2_ref) + b2_ref[...]
        for b in range(bt):
            j0 = b * (H + 1) * W
            res = x_ref[b].astype(jnp.float32)
            out_ref[b] = jnp.maximum(acc2[:, j0:j0 + HW] + res,
                                     0.0).astype(out_ref.dtype)

    flops = int(4 * B * HW * 9 * C * C)
    bytes_accessed = int(B * C * HW * x_nchw.dtype.itemsize
                         + B * C * HW * out_dtype.itemsize
                         + 2 * 9 * C * C * 2 + 2 * C * 4)

    # Per-step VMEM footprint (double-buffered activations, scratch, weights);
    # budget with headroom, capped so it also fits v7x's 64 MiB VMEM.
    step_bytes = (2 * bt * C * HW * x_nchw.dtype.itemsize
                  + 2 * bt * C * HW * out_dtype.itemsize
                  + C * L * 2
                  + 2 * (2 * 9 * C * C * 2 + 2 * C * 4))
    vmem_limit = int(min(max(4 * step_bytes, 16 * 2**20), 48 * 2**20))

    def build(single_buffer_consts):
        # Constant-index operands never change block index; single-buffer them
        # so large-C layers do not hold two copies of the weights in VMEM.
        ckw = (dict(pipeline_mode=pl.Buffered(1))
               if single_buffer_consts else {})
        in_specs = [
            pl.BlockSpec((bt, C, HW), lambda i: (i, 0, 0)),
            pl.BlockSpec((3, 3, C, C), lambda i: (0, 0, 0, 0), **ckw),
            pl.BlockSpec((C, 1), lambda i: (0, 0), **ckw),
            pl.BlockSpec((3, 3, C, C), lambda i: (0, 0, 0, 0), **ckw),
            pl.BlockSpec((C, 1), lambda i: (0, 0), **ckw),
        ]
        return pl.pallas_call(
            kernel,
            out_shape=jax.ShapeDtypeStruct((B, C, HW), out_dtype),
            grid=(B // bt,),
            in_specs=in_specs,
            out_specs=pl.BlockSpec((bt, C, HW), lambda i: (i, 0, 0)),
            scratch_shapes=[pltpu.VMEM((C, L), jnp.bfloat16)],
            compiler_params=pltpu.CompilerParams(
                dimension_semantics=("parallel",),
                vmem_limit_bytes=vmem_limit),
            cost_estimate=pl.CostEstimate(
                flops=flops, transcendentals=0,
                bytes_accessed=bytes_accessed),
        )

    try:
        out_flat = build(True)(x_flat, w1t, sh1, w2t, sh2)
    except Exception:
        # pipeline_mode=pl.Buffered(1) unsupported on this jax version; fall
        # back to default double-buffered constant inputs (correctness same).
        out_flat = build(False)(x_flat, w1t, sh1, w2t, sh2)

    return out_flat.reshape(B, C, H, W)


def basic_block_reference_f32(x, params, eps=1e-5):
    """Pure f32 NCHW reference (PyTorch eval-mode BasicBlock)."""
    def conv(xb, w):
        return jax.lax.conv_general_dilated(
            xb, w, (1, 1), ((1, 1), (1, 1)),
            dimension_numbers=("NCHW", "OIHW", "NCHW"))

    def bn(xb, g, b, m, v):
        g, b, m, v = (t[None, :, None, None] for t in (g, b, m, v))
        return (xb - m) / jnp.sqrt(v + eps) * g + b

    o = jax.nn.relu(bn(conv(x, params["w1"]), params["g1"], params["b1"],
                       params["m1"], params["v1"]))
    o = bn(conv(o, params["w2"]), params["g2"], params["b2"],
           params["m2"], params["v2"])
    return jax.nn.relu(o + x)


def basic_block_reference_mixed(x, params, eps=1e-5):
    """Same module with the kernel's precision policy (bf16 conv operands,
    f32 accumulation, BN scale folded into weights, exact f32 residual)."""
    w1, g1, be1, m1, v1 = (params[k] for k in ("w1", "g1", "b1", "m1", "v1"))
    w2, g2, be2, m2, v2 = (params[k] for k in ("w2", "g2", "b2", "m2", "v2"))
    inv1 = g1 / jnp.sqrt(v1 + eps)
    inv2 = g2 / jnp.sqrt(v2 + eps)
    sh1 = (be1 - m1 * inv1)[None, :, None, None]
    sh2 = (be2 - m2 * inv2)[None, :, None, None]
    w1h = (w1 * inv1[:, None, None, None]).astype(jnp.bfloat16)
    w2h = (w2 * inv2[:, None, None, None]).astype(jnp.bfloat16)

    def conv(xb, w):
        return jax.lax.conv_general_dilated(
            xb, w, (1, 1), ((1, 1), (1, 1)),
            dimension_numbers=("NCHW", "OIHW", "NCHW"),
            preferred_element_type=jnp.float32)

    xb = x.astype(jnp.bfloat16)
    y1 = jax.nn.relu(conv(xb, w1h) + sh1).astype(jnp.bfloat16)
    out = jax.nn.relu(conv(y1, w2h) + sh2 + x.astype(jnp.float32))
    return out.astype(x.dtype)


if __name__ == "__main__":
    key = jax.random.PRNGKey(0)
    B, C, H, W = 4, 8, 16, 16          # inplanes = planes = 8, stride = 1
    ks = jax.random.split(key, 11)

    x = jax.random.normal(ks[0], (B, C, H, W), jnp.float32)
    params = {
        "w1": 0.1 * jax.random.normal(ks[1], (C, C, 3, 3), jnp.float32),
        "g1": 1.0 + 0.1 * jax.random.normal(ks[2], (C,), jnp.float32),
        "b1": 0.1 * jax.random.normal(ks[3], (C,), jnp.float32),
        "m1": 0.1 * jax.random.normal(ks[4], (C,), jnp.float32),
        "v1": 1.0 + 0.1 * jax.random.uniform(ks[5], (C,), jnp.float32),
        "w2": 0.1 * jax.random.normal(ks[6], (C, C, 3, 3), jnp.float32),
        "g2": 1.0 + 0.1 * jax.random.normal(ks[7], (C,), jnp.float32),
        "b2": 0.1 * jax.random.normal(ks[8], (C,), jnp.float32),
        "m2": 0.1 * jax.random.normal(ks[9], (C,), jnp.float32),
        "v2": 1.0 + 0.1 * jax.random.uniform(ks[10], (C,), jnp.float32),
    }

    out = jax.block_until_ready(
        basic_block_forward(x, params, batch_block=2))
    assert out.shape == (B, C, H, W)

    # Tight check vs. a precision-matched reference (bf16 conv operands,
    # f32 accumulation, exact f32 residual).
    ref_mixed = jax.block_until_ready(basic_block_reference_mixed(x, params))
    assert jnp.allclose(out, ref_mixed, atol=2e-3, rtol=2e-3), (
        "Pallas BasicBlock mismatch vs precision-matched reference; "
        f"max abs err = {jnp.max(jnp.abs(out - ref_mixed))}")

    # Looser sanity check vs. the pure-f32 PyTorch-equivalent reference
    # (differences are bf16 conv-operand rounding only).
    ref_f32 = jax.block_until_ready(basic_block_reference_f32(x, params))
    assert jnp.allclose(out, ref_f32, atol=5e-2, rtol=5e-2), (
        "Pallas BasicBlock mismatch vs f32 reference; "
        f"max abs err = {jnp.max(jnp.abs(out - ref_f32))}")

    print("KERNEL_OK")
</pallas_src>

<mosaic_0001>
module attributes {stable_mosaic.version = 11 : i64} {
  func.func @kernel(%arg0: i32, %arg1: memref<2x8x256xf32, #tpu.memory_space<vmem>>, %arg2: memref<3x3x8x8xbf16, #tpu.memory_space<vmem>>, %arg3: memref<8x1xf32, #tpu.memory_space<vmem>>, %arg4: memref<3x3x8x8xbf16, #tpu.memory_space<vmem>>, %arg5: memref<8x1xf32, #tpu.memory_space<vmem>>, %arg6: memref<2x8x256xf32, #tpu.memory_space<vmem>>, %arg7: memref<8x562xbf16, #tpu.memory_space<vmem>>) attributes {dimension_semantics = [#tpu.dimension_semantics<parallel>], iteration_bounds = array<i64: 2>, scalar_prefetch = 0 : i64, scratch_operands = 1 : i64, tpu.core_type = #tpu.core_type<tc>, window_params = [{transform_indices = @transform_0, window_bounds = array<i64: 2, 8, 256>}, {pipeline_mode = #tpu.pipeline_mode<synchronous>, transform_indices = @transform_1, window_bounds = array<i64: 3, 3, 8, 8>}, {pipeline_mode = #tpu.pipeline_mode<synchronous>, transform_indices = @transform_2, window_bounds = array<i64: 8, 1>}, {pipeline_mode = #tpu.pipeline_mode<synchronous>, transform_indices = @transform_3, window_bounds = array<i64: 3, 3, 8, 8>}, {pipeline_mode = #tpu.pipeline_mode<synchronous>, transform_indices = @transform_4, window_bounds = array<i64: 8, 1>}, {transform_indices = @transform_5, window_bounds = array<i64: 2, 8, 256>}]} {
    %cst = arith.constant 0.000000e+00 : bf16
    %0 = vector.broadcast %cst : bf16 to vector<8x17xbf16>
    %c0 = arith.constant 0 : index
    %c0_0 = arith.constant 0 : index
    %1 = vector.load %arg7[%c0, %c0_0] : memref<8x562xbf16, #tpu.memory_space<vmem>>, vector<8x17xbf16>
    tpu.vector_store %arg7[%c0, %c0_0], %0 {strides = array<i32>} : memref<8x562xbf16, #tpu.memory_space<vmem>>, vector<8x17xbf16>,
    %c0_1 = arith.constant 0 : index
    %c545 = arith.constant 545 : index
    %2 = vector.load %arg7[%c0_1, %c545] : memref<8x562xbf16, #tpu.memory_space<vmem>>, vector<8x17xbf16>
    tpu.vector_store %arg7[%c0_1, %c545], %0 {strides = array<i32>} : memref<8x562xbf16, #tpu.memory_space<vmem>>, vector<8x17xbf16>,
    %cst_2 = arith.constant 0.000000e+00 : bf16
    %3 = vector.broadcast %cst_2 : bf16 to vector<8x16xbf16>
    %c0_3 = arith.constant 0 : index
    %c273 = arith.constant 273 : index
    %4 = vector.load %arg7[%c0_3, %c273] : memref<8x562xbf16, #tpu.memory_space<vmem>>, vector<8x16xbf16>
    tpu.vector_store %arg7[%c0_3, %c273], %3 {strides = array<i32>} : memref<8x562xbf16, #tpu.memory_space<vmem>>, vector<8x16xbf16>,
    %c0_4 = arith.constant 0 : index
    %c0_5 = arith.constant 0 : index
    %c0_6 = arith.constant 0 : index
    %5 = vector.load %arg1[%c0_4, %c0_5, %c0_6] : memref<2x8x256xf32, #tpu.memory_space<vmem>>, vector<1x8x256xf32>
    %6 = vector.shape_cast %5 : vector<1x8x256xf32> to vector<8x256xf32>
    %7 = arith.truncf %6 : vector<8x256xf32> to vector<8x256xbf16>
    %c0_7 = arith.constant 0 : index
    %c17 = arith.constant 17 : index
    %8 = vector.load %arg7[%c0_7, %c17] : memref<8x562xbf16, #tpu.memory_space<vmem>>, vector<8x256xbf16>
    tpu.vector_store %arg7[%c0_7, %c17], %7 {strides = array<i32>} : memref<8x562xbf16, #tpu.memory_space<vmem>>, vector<8x256xbf16>,
    %c1 = arith.constant 1 : index
    %c0_8 = arith.constant 0 : index
    %c0_9 = arith.constant 0 : index
    %9 = vector.load %arg1[%c1, %c0_8, %c0_9] : memref<2x8x256xf32, #tpu.memory_space<vmem>>, vector<1x8x256xf32>
    %10 = vector.shape_cast %9 : vector<1x8x256xf32> to vector<8x256xf32>
    %11 = arith.truncf %10 : vector<8x256xf32> to vector<8x256xbf16>
    %c0_10 = arith.constant 0 : index
    %c289 = arith.constant 289 : index
    %12 = vector.load %arg7[%c0_10, %c289] : memref<8x562xbf16, #tpu.memory_space<vmem>>, vector<8x256xbf16>
    tpu.vector_store %arg7[%c0_10, %c289], %11 {strides = array<i32>} : memref<8x562xbf16, #tpu.memory_space<vmem>>, vector<8x256xbf16>,
    %13 = tpu.iota {dimensions = array<i32: 1>} : vector<1x528xi32>
    %c16_i32 = arith.constant 16 : i32
    %c0_i32 = arith.constant 0 : i32
    %14 = arith.cmpi eq, %c16_i32, %c0_i32 : i32
    %c1_i32 = arith.constant 1 : i32
    %15 = arith.select %14, %c1_i32, %c16_i32 : i32
    %16 = vector.broadcast %15 : i32 to vector<1x528xi32>
    %17 = arith.remsi %13, %16 : vector<1x528xi32>
    %c0_i32_11 = arith.constant 0 : i32
    %18 = vector.broadcast %c0_i32_11 : i32 to vector<1x528xi32>
    %19 = arith.cmpi ne, %17, %18 : vector<1x528xi32>
    %c0_i32_12 = arith.constant 0 : i32
    %20 = vector.broadcast %c0_i32_12 : i32 to vector<1x528xi32>
    %21 = arith.cmpi slt, %17, %20 : vector<1x528xi32>
    %c0_i32_13 = arith.constant 0 : i32
    %22 = arith.cmpi slt, %15, %c0_i32_13 : i32
    %23 = vector.broadcast %22 : i1 to vector<1x528xi1>
    %24 = vector.broadcast %23 : vector<1x528xi1> to vector<1x528xi1>
    %25 = arith.xori %21, %24 : vector<1x528xi1>
    %26 = arith.andi %25, %19 : vector<1x528xi1>
    %27 = vector.broadcast %15 : i32 to vector<1x528xi32>
    %28 = arith.addi %17, %27 : vector<1x528xi32>
    %29 = arith.select %26, %28, %17 : vector<1x528xi1>, vector<1x528xi32>
    %c0_i32_14 = arith.constant 0 : i32
    %30 = vector.broadcast %c0_i32_14 : i32 to vector<1x528xi32>
    %31 = arith.cmpi ne, %29, %30 : vector<1x528xi32>
    %c15_i32 = arith.constant 15 : i32
    %32 = vector.broadcast %c15_i32 : i32 to vector<1x528xi32>
    %33 = arith.cmpi ne, %29, %32 : vector<1x528xi32>
    %cst_15 = arith.constant 0.000000e+00 : f32
    %34 = vector.broadcast %cst_15 : f32 to vector<8x528xf32>
    %c0_16 = arith.constant 0 : index
    %c0_17 = arith.constant 0 : index
    %35 = vector.load %arg7[%c0_16, %c0_17] : memref<8x562xbf16, #tpu.memory_space<vmem>>, vector<8x528xbf16>
    %c0_i32_18 = arith.constant 0 : i32
    %36 = arith.sitofp %c0_i32_18 : i32 to bf16
    %37 = vector.shape_cast %31 : vector<1x528xi1> to vector<1x528xi1>
    %38 = vector.broadcast %37 : vector<1x528xi1> to vector<8x528xi1>
    %39 = vector.broadcast %36 : bf16 to vector<8x528xbf16>
    %40 = arith.select %38, %35, %39 : vector<8x528xi1>, vector<8x528xbf16>
    %c0_19 = arith.constant 0 : index
    %c0_20 = arith.constant 0 : index
    %c0_21 = arith.constant 0 : index
    %c0_22 = arith.constant 0 : index
    %41 = vector.load %arg2[%c0_19, %c0_20, %c0_21, %c0_22] : memref<3x3x8x8xbf16, #tpu.memory_space<vmem>>, vector<1x1x8x8xbf16>
    %42 = vector.shape_cast %41 : vector<1x1x8x8xbf16> to vector<8x8xbf16>
    %cst_23 = arith.constant dense<0.000000e+00> : vector<8x528xf32>
    %43 = tpu.matmul %42, %40, %cst_23 {dimension_numbers = #tpu.dot_dimension_numbers<[1], [0], [0], [1], [0, 0, 1, 1], [], []>} : vector<8x8xbf16>, vector<8x528xbf16>, vector<8x528xf32> -> vector<8x528xf32>
    %44 = arith.addf %34, %43 : vector<8x528xf32>
    %c0_24 = arith.constant 0 : index
    %c1_25 = arith.constant 1 : index
    %45 = vector.load %arg7[%c0_24, %c1_25] : memref<8x562xbf16, #tpu.memory_space<vmem>>, vector<8x528xbf16>
    %c0_26 = arith.constant 0 : index
    %c1_27 = arith.constant 1 : index
    %c0_28 = arith.constant 0 : index
    %c0_29 = arith.constant 0 : index
    %46 = vector.load %arg2[%c0_26, %c1_27, %c0_28, %c0_29] : memref<3x3x8x8xbf16, #tpu.memory_space<vmem>>, vector<1x1x8x8xbf16>
    %47 = vector.shape_cast %46 : vector<1x1x8x8xbf16> to vector<8x8xbf16>
    %cst_30 = arith.constant dense<0.000000e+00> : vector<8x528xf32>
    %48 = tpu.matmul %47, %45, %cst_30 {dimension_numbers = #tpu.dot_dimension_numbers<[1], [0], [0], [1], [0, 0, 1, 1], [], []>} : vector<8x8xbf16>, vector<8x528xbf16>, vector<8x528xf32> -> vector<8x528xf32>
    %49 = arith.addf %44, %48 : vector<8x528xf32>
    %c0_31 = arith.constant 0 : index
    %c2 = arith.constant 2 : index
    %50 = vector.load %arg7[%c0_31, %c2] : memref<8x562xbf16, #tpu.memory_space<vmem>>, vector<8x528xbf16>
    %c0_i32_32 = arith.constant 0 : i32
    %51 = arith.sitofp %c0_i32_32 : i32 to bf16
    %52 = vector.shape_cast %33 : vector<1x528xi1> to vector<1x528xi1>
    %53 = vector.broadcast %52 : vector<1x528xi1> to vector<8x528xi1>
    %54 = vector.broadcast %51 : bf16 to vector<8x528xbf16>
    %55 = arith.select %53, %50, %54 : vector<8x528xi1>, vector<8x528xbf16>
    %c0_33 = arith.constant 0 : index
    %c2_34 = arith.constant 2 : index
    %c0_35 = arith.constant 0 : index
    %c0_36 = arith.constant 0 : index
    %56 = vector.load %arg2[%c0_33, %c2_34, %c0_35, %c0_36] : memref<3x3x8x8xbf16, #tpu.memory_space<vmem>>, vector<1x1x8x8xbf16>
    %57 = vector.shape_cast %56 : vector<1x1x8x8xbf16> to vector<8x8xbf16>
    %cst_37 = arith.constant dense<0.000000e+00> : vector<8x528xf32>
    %58 = tpu.matmul %57, %55, %cst_37 {dimension_numbers = #tpu.dot_dimension_numbers<[1], [0], [0], [1], [0, 0, 1, 1], [], []>} : vector<8x8xbf16>, vector<8x528xbf16>, vector<8x528xf32> -> vector<8x528xf32>
    %59 = arith.addf %49, %58 : vector<8x528xf32>
    %c0_38 = arith.constant 0 : index
    %c16 = arith.constant 16 : index
    %60 = vector.load %arg7[%c0_38, %c16] : memref<8x562xbf16, #tpu.memory_space<vmem>>, vector<8x528xbf16>
    %c0_i32_39 = arith.constant 0 : i32
    %61 = arith.sitofp %c0_i32_39 : i32 to bf16
    %62 = vector.shape_cast %31 : vector<1x528xi1> to vector<1x528xi1>
    %63 = vector.broadcast %62 : vector<1x528xi1> to vector<8x528xi1>
    %64 = vector.broadcast %61 : bf16 to vector<8x528xbf16>
    %65 = arith.select %63, %60, %64 : vector<8x528xi1>, vector<8x528xbf16>
    %c1_40 = arith.constant 1 : index
    %c0_41 = arith.constant 0 : index
    %c0_42 = arith.constant 0 : index
    %c0_43 = arith.constant 0 : index
    %66 = vector.load %arg2[%c1_40, %c0_41, %c0_42, %c0_43] : memref<3x3x8x8xbf16, #tpu.memory_space<vmem>>, vector<1x1x8x8xbf16>
    %67 = vector.shape_cast %66 : vector<1x1x8x8xbf16> to vector<8x8xbf16>
    %cst_44 = arith.constant dense<0.000000e+00> : vector<8x528xf32>
    %68 = tpu.matmul %67, %65, %cst_44 {dimension_numbers = #tpu.dot_dimension_numbers<[1], [0], [0], [1], [0, 0, 1, 1], [], []>} : vector<8x8xbf16>, vector<8x528xbf16>, vector<8x528xf32> -> vector<8x528xf32>
    %69 = arith.addf %59, %68 : vector<8x528xf32>
    %c0_45 = arith.constant 0 : index
    %c17_46 = arith.constant 17 : index
    %70 = vector.load %arg7[%c0_45, %c17_46] : memref<8x562xbf16, #tpu.memory_space<vmem>>, vector<8x528xbf16>
    %c1_47 = arith.constant 1 : index
    %c1_48 = arith.constant 1 : index
    %c0_49 = arith.constant 0 : index
    %c0_50 = arith.constant 0 : index
    %71 = vector.load %arg2[%c1_47, %c1_48, %c0_49, %c0_50] : memref<3x3x8x8xbf16, #tpu.memory_space<vmem>>, vector<1x1x8x8xbf16>
    %72 = vector.shape_cast %71 : vector<1x1x8x8xbf16> to vector<8x8xbf16>
    %cst_51 = arith.constant dense<0.000000e+00> : vector<8x528xf32>
    %73 = tpu.matmul %72, %70, %cst_51 {dimension_numbers = #tpu.dot_dimension_numbers<[1], [0], [0], [1], [0, 0, 1, 1], [], []>} : vector<8x8xbf16>, vector<8x528xbf16>, vector<8x528xf32> -> vector<8x528xf32>
    %74 = arith.addf %69, %73 : vector<8x528xf32>
    %c0_52 = arith.constant 0 : index
    %c18 = arith.constant 18 : index
    %75 = vector.load %arg7[%c0_52, %c18] : memref<8x562xbf16, #tpu.memory_space<vmem>>, vector<8x528xbf16>
    %c0_i32_53 = arith.constant 0 : i32
    %76 = arith.sitofp %c0_i32_53 : i32 to bf16
    %77 = vector.shape_cast %33 : vector<1x528xi1> to vector<1x528xi1>
    %78 = vector.broadcast %77 : vector<1x528xi1> to vector<8x528xi1>
    %79 = vector.broadcast %76 : bf16 to vector<8x528xbf16>
    %80 = arith.select %78, %75, %79 : vector<8x528xi1>, vector<8x528xbf16>
    %c1_54 = arith.constant 1 : index
    %c2_55 = arith.constant 2 : index
    %c0_56 = arith.constant 0 : index
    %c0_57 = arith.constant 0 : index
    %81 = vector.load %arg2[%c1_54, %c2_55, %c0_56, %c0_57] : memref<3x3x8x8xbf16, #tpu.memory_space<vmem>>, vector<1x1x8x8xbf16>
    %82 = vector.shape_cast %81 : vector<1x1x8x8xbf16> to vector<8x8xbf16>
    %cst_58 = arith.constant dense<0.000000e+00> : vector<8x528xf32>
    %83 = tpu.matmul %82, %80, %cst_58 {dimension_numbers = #tpu.dot_dimension_numbers<[1], [0], [0], [1], [0, 0, 1, 1], [], []>} : vector<8x8xbf16>, vector<8x528xbf16>, vector<8x528xf32> -> vector<8x528xf32>
    %84 = arith.addf %74, %83 : vector<8x528xf32>
    %c0_59 = arith.constant 0 : index
    %c32 = arith.constant 32 : index
    %85 = vector.load %arg7[%c0_59, %c32] : memref<8x562xbf16, #tpu.memory_space<vmem>>, vector<8x528xbf16>
    %c0_i32_60 = arith.constant 0 : i32
    %86 = arith.sitofp %c0_i32_60 : i32 to bf16
    %87 = vector.shape_cast %31 : vector<1x528xi1> to vector<1x528xi1>
    %88 = vector.broadcast %87 : vector<1x528xi1> to vector<8x528xi1>
    %89 = vector.broadcast %86 : bf16 to vector<8x528xbf16>
    %90 = arith.select %88, %85, %89 : vector<8x528xi1>, vector<8x528xbf16>
    %c2_61 = arith.constant 2 : index
    %c0_62 = arith.constant 0 : index
    %c0_63 = arith.constant 0 : index
    %c0_64 = arith.constant 0 : index
    %91 = vector.load %arg2[%c2_61, %c0_62, %c0_63, %c0_64] : memref<3x3x8x8xbf16, #tpu.memory_space<vmem>>, vector<1x1x8x8xbf16>
    %92 = vector.shape_cast %91 : vector<1x1x8x8xbf16> to vector<8x8xbf16>
    %cst_65 = arith.constant dense<0.000000e+00> : vector<8x528xf32>
    %93 = tpu.matmul %92, %90, %cst_65 {dimension_numbers = #tpu.dot_dimension_numbers<[1], [0], [0], [1], [0, 0, 1, 1], [], []>} : vector<8x8xbf16>, vector<8x528xbf16>, vector<8x528xf32> -> vector<8x528xf32>
    %94 = arith.addf %84, %93 : vector<8x528xf32>
    %c0_66 = arith.constant 0 : index
    %c33 = arith.constant 33 : index
    %95 = vector.load %arg7[%c0_66, %c33] : memref<8x562xbf16, #tpu.memory_space<vmem>>, vector<8x528xbf16>
    %c2_67 = arith.constant 2 : index
    %c1_68 = arith.constant 1 : index
    %c0_69 = arith.constant 0 : index
    %c0_70 = arith.constant 0 : index
    %96 = vector.load %arg2[%c2_67, %c1_68, %c0_69, %c0_70] : memref<3x3x8x8xbf16, #tpu.memory_space<vmem>>, vector<1x1x8x8xbf16>
    %97 = vector.shape_cast %96 : vector<1x1x8x8xbf16> to vector<8x8xbf16>
    %cst_71 = arith.constant dense<0.000000e+00> : vector<8x528xf32>
    %98 = tpu.matmul %97, %95, %cst_71 {dimension_numbers = #tpu.dot_dimension_numbers<[1], [0], [0], [1], [0, 0, 1, 1], [], []>} : vector<8x8xbf16>, vector<8x528xbf16>, vector<8x528xf32> -> vector<8x528xf32>
    %99 = arith.addf %94, %98 : vector<8x528xf32>
    %c0_72 = arith.constant 0 : index
    %c34 = arith.constant 34 : index
    %100 = vector.load %arg7[%c0_72, %c34] : memref<8x562xbf16, #tpu.memory_space<vmem>>, vector<8x528xbf16>
    %c0_i32_73 = arith.constant 0 : i32
    %101 = arith.sitofp %c0_i32_73 : i32 to bf16
    %102 = vector.shape_cast %33 : vector<1x528xi1> to vector<1x528xi1>
    %103 = vector.broadcast %102 : vector<1x528xi1> to vector<8x528xi1>
    %104 = vector.broadcast %101 : bf16 to vector<8x528xbf16>
    %105 = arith.select %103, %100, %104 : vector<8x528xi1>, vector<8x528xbf16>
    %c2_74 = arith.constant 2 : index
    %c2_75 = arith.constant 2 : index
    %c0_76 = arith.constant 0 : index
    %c0_77 = arith.constant 0 : index
    %106 = vector.load %arg2[%c2_74, %c2_75, %c0_76, %c0_77] : memref<3x3x8x8xbf16, #tpu.memory_space<vmem>>, vector<1x1x8x8xbf16>
    %107 = vector.shape_cast %106 : vector<1x1x8x8xbf16> to vector<8x8xbf16>
    %cst_78 = arith.constant dense<0.000000e+00> : vector<8x528xf32>
    %108 = tpu.matmul %107, %105, %cst_78 {dimension_numbers = #tpu.dot_dimension_numbers<[1], [0], [0], [1], [0, 0, 1, 1], [], []>} : vector<8x8xbf16>, vector<8x528xbf16>, vector<8x528xf32> -> vector<8x528xf32>
    %109 = arith.addf %99, %108 : vector<8x528xf32>
    %c0_79 = arith.constant 0 : index
    %c0_80 = arith.constant 0 : index
    %110 = vector.load %arg3[%c0_79, %c0_80] : memref<8x1xf32, #tpu.memory_space<vmem>>, vector<8x1xf32>
    %111 = vector.broadcast %110 : vector<8x1xf32> to vector<8x528xf32>
    %112 = arith.addf %109, %111 : vector<8x528xf32>
    %cst_81 = arith.constant 0.000000e+00 : f32
    %113 = vector.broadcast %cst_81 : f32 to vector<8x528xf32>
    %114 = arith.maximumf %112, %113 : vector<8x528xf32>
    %115 = vector.extract_strided_slice %114 {offsets = [0, 0], sizes = [8, 256], strides = [1, 1]} : vector<8x528xf32> to vector<8x256xf32>
    %116 = arith.truncf %115 : vector<8x256xf32> to vector<8x256xbf16>
    %c0_82 = arith.constant 0 : index
    %c17_83 = arith.constant 17 : index
    %117 = vector.load %arg7[%c0_82, %c17_83] : memref<8x562xbf16, #tpu.memory_space<vmem>>, vector<8x256xbf16>
    tpu.vector_store %arg7[%c0_82, %c17_83], %116 {strides = array<i32>} : memref<8x562xbf16, #tpu.memory_space<vmem>>, vector<8x256xbf16>,
    %118 = vector.extract_strided_slice %114 {offsets = [0, 272], sizes = [8, 256], strides = [1, 1]} : vector<8x528xf32> to vector<8x256xf32>
    %119 = arith.truncf %118 : vector<8x256xf32> to vector<8x256xbf16>
    %c0_84 = arith.constant 0 : index
    %c289_85 = arith.constant 289 : index
    %120 = vector.load %arg7[%c0_84, %c289_85] : memref<8x562xbf16, #tpu.memory_space<vmem>>, vector<8x256xbf16>
    tpu.vector_store %arg7[%c0_84, %c289_85], %119 {strides = array<i32>} : memref<8x562xbf16, #tpu.memory_space<vmem>>, vector<8x256xbf16>,
    %cst_86 = arith.constant 0.000000e+00 : f32
    %121 = vector.broadcast %cst_86 : f32 to vector<8x528xf32>
    %c0_87 = arith.constant 0 : index
    %c0_88 = arith.constant 0 : index
    %122 = vector.load %arg7[%c0_87, %c0_88] : memref<8x562xbf16, #tpu.memory_space<vmem>>, vector<8x528xbf16>
    %c0_i32_89 = arith.constant 0 : i32
    %123 = arith.sitofp %c0_i32_89 : i32 to bf16
    %124 = vector.shape_cast %31 : vector<1x528xi1> to vector<1x528xi1>
    %125 = vector.broadcast %124 : vector<1x528xi1> to vector<8x528xi1>
    %126 = vector.broadcast %123 : bf16 to vector<8x528xbf16>
    %127 = arith.select %125, %122, %126 : vector<8x528xi1>, vector<8x528xbf16>
    %c0_90 = arith.constant 0 : index
    %c0_91 = arith.constant 0 : index
    %c0_92 = arith.constant 0 : index
    %c0_93 = arith.constant 0 : index
    %128 = vector.load %arg4[%c0_90, %c0_91, %c0_92, %c0_93] : memref<3x3x8x8xbf16, #tpu.memory_space<vmem>>, vector<1x1x8x8xbf16>
    %129 = vector.shape_cast %128 : vector<1x1x8x8xbf16> to vector<8x8xbf16>
    %cst_94 = arith.constant dense<0.000000e+00> : vector<8x528xf32>
    %130 = tpu.matmul %129, %127, %cst_94 {dimension_numbers = #tpu.dot_dimension_numbers<[1], [0], [0], [1], [0, 0, 1, 1], [], []>} : vector<8x8xbf16>, vector<8x528xbf16>, vector<8x528xf32> -> vector<8x528xf32>
    %131 = arith.addf %121, %130 : vector<8x528xf32>
    %c0_95 = arith.constant 0 : index
    %c1_96 = arith.constant 1 : index
    %132 = vector.load %arg7[%c0_95, %c1_96] : memref<8x562xbf16, #tpu.memory_space<vmem>>, vector<8x528xbf16>
    %c0_97 = arith.constant 0 : index
    %c1_98 = arith.constant 1 : index
    %c0_99 = arith.constant 0 : index
    %c0_100 = arith.constant 0 : index
    %133 = vector.load %arg4[%c0_97, %c1_98, %c0_99, %c0_100] : memref<3x3x8x8xbf16, #tpu.memory_space<vmem>>, vector<1x1x8x8xbf16>
    %134 = vector.shape_cast %133 : vector<1x1x8x8xbf16> to vector<8x8xbf16>
    %cst_101 = arith.constant dense<0.000000e+00> : vector<8x528xf32>
    %135 = tpu.matmul %134, %132, %cst_101 {dimension_numbers = #tpu.dot_dimension_numbers<[1], [0], [0], [1], [0, 0, 1, 1], [], []>} : vector<8x8xbf16>, vector<8x528xbf16>, vector<8x528xf32> -> vector<8x528xf32>
    %136 = arith.addf %131, %135 : vector<8x528xf32>
    %c0_102 = arith.constant 0 : index
    %c2_103 = arith.constant 2 : index
    %137 = vector.load %arg7[%c0_102, %c2_103] : memref<8x562xbf16, #tpu.memory_space<vmem>>, vector<8x528xbf16>
    %c0_i32_104 = arith.constant 0 : i32
    %138 = arith.sitofp %c0_i32_104 : i32 to bf16
    %139 = vector.shape_cast %33 : vector<1x528xi1> to vector<1x528xi1>
    %140 = vector.broadcast %139 : vector<1x528xi1> to vector<8x528xi1>
    %141 = vector.broadcast %138 : bf16 to vector<8x528xbf16>
    %142 = arith.select %140, %137, %141 : vector<8x528xi1>, vector<8x528xbf16>
    %c0_105 = arith.constant 0 : index
    %c2_106 = arith.constant 2 : index
    %c0_107 = arith.constant 0 : index
    %c0_108 = arith.constant 0 : index
    %143 = vector.load %arg4[%c0_105, %c2_106, %c0_107, %c0_108] : memref<3x3x8x8xbf16, #tpu.memory_space<vmem>>, vector<1x1x8x8xbf16>
    %144 = vector.shape_cast %143 : vector<1x1x8x8xbf16> to vector<8x8xbf16>
    %cst_109 = arith.constant dense<0.000000e+00> : vector<8x528xf32>
    %145 = tpu.matmul %144, %142, %cst_109 {dimension_numbers = #tpu.dot_dimension_numbers<[1], [0], [0], [1], [0, 0, 1, 1], [], []>} : vector<8x8xbf16>, vector<8x528xbf16>, vector<8x528xf32> -> vector<8x528xf32>
    %146 = arith.addf %136, %145 : vector<8x528xf32>
    %c0_110 = arith.constant 0 : index
    %c16_111 = arith.constant 16 : index
    %147 = vector.load %arg7[%c0_110, %c16_111] : memref<8x562xbf16, #tpu.memory_space<vmem>>, vector<8x528xbf16>
    %c0_i32_112 = arith.constant 0 : i32
    %148 = arith.sitofp %c0_i32_112 : i32 to bf16
    %149 = vector.shape_cast %31 : vector<1x528xi1> to vector<1x528xi1>
    %150 = vector.broadcast %149 : vector<1x528xi1> to vector<8x528xi1>
    %151 = vector.broadcast %148 : bf16 to vector<8x528xbf16>
    %152 = arith.select %150, %147, %151 : vector<8x528xi1>, vector<8x528xbf16>
    %c1_113 = arith.constant 1 : index
    %c0_114 = arith.constant 0 : index
    %c0_115 = arith.constant 0 : index
    %c0_116 = arith.constant 0 : index
    %153 = vector.load %arg4[%c1_113, %c0_114, %c0_115, %c0_116] : memref<3x3x8x8xbf16, #tpu.memory_space<vmem>>, vector<1x1x8x8xbf16>
    %154 = vector.shape_cast %153 : vector<1x1x8x8xbf16> to vector<8x8xbf16>
    %cst_117 = arith.constant dense<0.000000e+00> : vector<8x528xf32>
    %155 = tpu.matmul %154, %152, %cst_117 {dimension_numbers = #tpu.dot_dimension_numbers<[1], [0], [0], [1], [0, 0, 1, 1], [], []>} : vector<8x8xbf16>, vector<8x528xbf16>, vector<8x528xf32> -> vector<8x528xf32>
    %156 = arith.addf %146, %155 : vector<8x528xf32>
    %c0_118 = arith.constant 0 : index
    %c17_119 = arith.constant 17 : index
    %157 = vector.load %arg7[%c0_118, %c17_119] : memref<8x562xbf16, #tpu.memory_space<vmem>>, vector<8x528xbf16>
    %c1_120 = arith.constant 1 : index
    %c1_121 = arith.constant 1 : index
    %c0_122 = arith.constant 0 : index
    %c0_123 = arith.constant 0 : index
    %158 = vector.load %arg4[%c1_120, %c1_121, %c0_122, %c0_123] : memref<3x3x8x8xbf16, #tpu.memory_space<vmem>>, vector<1x1x8x8xbf16>
    %159 = vector.shape_cast %158 : vector<1x1x8x8xbf16> to vector<8x8xbf16>
    %cst_124 = arith.constant dense<0.000000e+00> : vector<8x528xf32>
    %160 = tpu.matmul %159, %157, %cst_124 {dimension_numbers = #tpu.dot_dimension_numbers<[1], [0], [0], [1], [0, 0, 1, 1], [], []>} : vector<8x8xbf16>, vector<8x528xbf16>, vector<8x528xf32> -> vector<8x528xf32>
    %161 = arith.addf %156, %160 : vector<8x528xf32>
    %c0_125 = arith.constant 0 : index
    %c18_126 = arith.constant 18 : index
    %162 = vector.load %arg7[%c0_125, %c18_126] : memref<8x562xbf16, #tpu.memory_space<vmem>>, vector<8x528xbf16>
    %c0_i32_127 = arith.constant 0 : i32
    %163 = arith.sitofp %c0_i32_127 : i32 to bf16
    %164 = vector.shape_cast %33 : vector<1x528xi1> to vector<1x528xi1>
    %165 = vector.broadcast %164 : vector<1x528xi1> to vector<8x528xi1>
    %166 = vector.broadcast %163 : bf16 to vector<8x528xbf16>
    %167 = arith.select %165, %162, %166 : vector<8x528xi1>, vector<8x528xbf16>
    %c1_128 = arith.constant 1 : index
    %c2_129 = arith.constant 2 : index
    %c0_130 = arith.constant 0 : index
    %c0_131 = arith.constant 0 : index
    %168 = vector.load %arg4[%c1_128, %c2_129, %c0_130, %c0_131] : memref<3x3x8x8xbf16, #tpu.memory_space<vmem>>, vector<1x1x8x8xbf16>
    %169 = vector.shape_cast %168 : vector<1x1x8x8xbf16> to vector<8x8xbf16>
    %cst_132 = arith.constant dense<0.000000e+00> : vector<8x528xf32>
    %170 = tpu.matmul %169, %167, %cst_132 {dimension_numbers = #tpu.dot_dimension_numbers<[1], [0], [0], [1], [0, 0, 1, 1], [], []>} : vector<8x8xbf16>, vector<8x528xbf16>, vector<8x528xf32> -> vector<8x528xf32>
    %171 = arith.addf %161, %170 : vector<8x528xf32>
    %c0_133 = arith.constant 0 : index
    %c32_134 = arith.constant 32 : index
    %172 = vector.load %arg7[%c0_133, %c32_134] : memref<8x562xbf16, #tpu.memory_space<vmem>>, vector<8x528xbf16>
    %c0_i32_135 = arith.constant 0 : i32
    %173 = arith.sitofp %c0_i32_135 : i32 to bf16
    %174 = vector.shape_cast %31 : vector<1x528xi1> to vector<1x528xi1>
    %175 = vector.broadcast %174 : vector<1x528xi1> to vector<8x528xi1>
    %176 = vector.broadcast %173 : bf16 to vector<8x528xbf16>
    %177 = arith.select %175, %172, %176 : vector<8x528xi1>, vector<8x528xbf16>
    %c2_136 = arith.constant 2 : index
    %c0_137 = arith.constant 0 : index
    %c0_138 = arith.constant 0 : index
    %c0_139 = arith.constant 0 : index
    %178 = vector.load %arg4[%c2_136, %c0_137, %c0_138, %c0_139] : memref<3x3x8x8xbf16, #tpu.memory_space<vmem>>, vector<1x1x8x8xbf16>
    %179 = vector.shape_cast %178 : vector<1x1x8x8xbf16> to vector<8x8xbf16>
    %cst_140 = arith.constant dense<0.000000e+00> : vector<8x528xf32>
    %180 = tpu.matmul %179, %177, %cst_140 {dimension_numbers = #tpu.dot_dimension_numbers<[1], [0], [0], [1], [0, 0, 1, 1], [], []>} : vector<8x8xbf16>, vector<8x528xbf16>, vector<8x528xf32> -> vector<8x528xf32>
    %181 = arith.addf %171, %180 : vector<8x528xf32>
    %c0_141 = arith.constant 0 : index
    %c33_142 = arith.constant 33 : index
    %182 = vector.load %arg7[%c0_141, %c33_142] : memref<8x562xbf16, #tpu.memory_space<vmem>>, vector<8x528xbf16>
    %c2_143 = arith.constant 2 : index
    %c1_144 = arith.constant 1 : index
    %c0_145 = arith.constant 0 : index
    %c0_146 = arith.constant 0 : index
    %183 = vector.load %arg4[%c2_143, %c1_144, %c0_145, %c0_146] : memref<3x3x8x8xbf16, #tpu.memory_space<vmem>>, vector<1x1x8x8xbf16>
    %184 = vector.shape_cast %183 : vector<1x1x8x8xbf16> to vector<8x8xbf16>
    %cst_147 = arith.constant dense<0.000000e+00> : vector<8x528xf32>
    %185 = tpu.matmul %184, %182, %cst_147 {dimension_numbers = #tpu.dot_dimension_numbers<[1], [0], [0], [1], [0, 0, 1, 1], [], []>} : vector<8x8xbf16>, vector<8x528xbf16>, vector<8x528xf32> -> vector<8x528xf32>
    %186 = arith.addf %181, %185 : vector<8x528xf32>
    %c0_148 = arith.constant 0 : index
    %c34_149 = arith.constant 34 : index
    %187 = vector.load %arg7[%c0_148, %c34_149] : memref<8x562xbf16, #tpu.memory_space<vmem>>, vector<8x528xbf16>
    %c0_i32_150 = arith.constant 0 : i32
    %188 = arith.sitofp %c0_i32_150 : i32 to bf16
    %189 = vector.shape_cast %33 : vector<1x528xi1> to vector<1x528xi1>
    %190 = vector.broadcast %189 : vector<1x528xi1> to vector<8x528xi1>
    %191 = vector.broadcast %188 : bf16 to vector<8x528xbf16>
    %192 = arith.select %190, %187, %191 : vector<8x528xi1>, vector<8x528xbf16>
    %c2_151 = arith.constant 2 : index
    %c2_152 = arith.constant 2 : index
    %c0_153 = arith.constant 0 : index
    %c0_154 = arith.constant 0 : index
    %193 = vector.load %arg4[%c2_151, %c2_152, %c0_153, %c0_154] : memref<3x3x8x8xbf16, #tpu.memory_space<vmem>>, vector<1x1x8x8xbf16>
    %194 = vector.shape_cast %193 : vector<1x1x8x8xbf16> to vector<8x8xbf16>
    %cst_155 = arith.constant dense<0.000000e+00> : vector<8x528xf32>
    %195 = tpu.matmul %194, %192, %cst_155 {dimension_numbers = #tpu.dot_dimension_numbers<[1], [0], [0], [1], [0, 0, 1, 1], [], []>} : vector<8x8xbf16>, vector<8x528xbf16>, vector<8x528xf32> -> vector<8x528xf32>
    %196 = arith.addf %186, %195 : vector<8x528xf32>
    %c0_156 = arith.constant 0 : index
    %c0_157 = arith.constant 0 : index
    %197 = vector.load %arg5[%c0_156, %c0_157] : memref<8x1xf32, #tpu.memory_space<vmem>>, vector<8x1xf32>
    %198 = vector.broadcast %197 : vector<8x1xf32> to vector<8x528xf32>
    %199 = arith.addf %196, %198 : vector<8x528xf32>
    %c0_158 = arith.constant 0 : index
    %c0_159 = arith.constant 0 : index
    %c0_160 = arith.constant 0 : index
    %200 = vector.load %arg1[%c0_158, %c0_159, %c0_160] : memref<2x8x256xf32, #tpu.memory_space<vmem>>, vector<1x8x256xf32>
    %201 = vector.shape_cast %200 : vector<1x8x256xf32> to vector<8x256xf32>
    %202 = vector.extract_strided_slice %199 {offsets = [0, 0], sizes = [8, 256], strides = [1, 1]} : vector<8x528xf32> to vector<8x256xf32>
    %203 = arith.addf %202, %201 : vector<8x256xf32>
    %cst_161 = arith.constant 0.000000e+00 : f32
    %204 = vector.broadcast %cst_161 : f32 to vector<8x256xf32>
    %205 = arith.maximumf %203, %204 : vector<8x256xf32>
    %c0_162 = arith.constant 0 : index
    %c0_163 = arith.constant 0 : index
    %c0_164 = arith.constant 0 : index
    %206 = vector.load %arg6[%c0_162, %c0_163, %c0_164] : memref<2x8x256xf32, #tpu.memory_space<vmem>>, vector<1x8x256xf32>
    %207 = vector.shape_cast %206 : vector<1x8x256xf32> to vector<8x256xf32>
    %208 = vector.shape_cast %205 : vector<8x256xf32> to vector<1x8x256xf32>
    tpu.vector_store %arg6[%c0_162, %c0_163, %c0_164], %208 {strides = array<i32>} : memref<2x8x256xf32, #tpu.memory_space<vmem>>, vector<1x8x256xf32>,
    %c1_165 = arith.constant 1 : index
    %c0_166 = arith.constant 0 : index
    %c0_167 = arith.constant 0 : index
    %209 = vector.load %arg1[%c1_165, %c0_166, %c0_167] : memref<2x8x256xf32, #tpu.memory_space<vmem>>, vector<1x8x256xf32>
    %210 = vector.shape_cast %209 : vector<1x8x256xf32> to vector<8x256xf32>
    %211 = vector.extract_strided_slice %199 {offsets = [0, 272], sizes = [8, 256], strides = [1, 1]} : vector<8x528xf32> to vector<8x256xf32>
    %212 = arith.addf %211, %210 : vector<8x256xf32>
    %cst_168 = arith.constant 0.000000e+00 : f32
    %213 = vector.broadcast %cst_168 : f32 to vector<8x256xf32>
    %214 = arith.maximumf %212, %213 : vector<8x256xf32>
    %c1_169 = arith.constant 1 : index
    %c0_170 = arith.constant 0 : index
    %c0_171 = arith.constant 0 : index
    %215 = vector.load %arg6[%c1_169, %c0_170, %c0_171] : memref<2x8x256xf32, #tpu.memory_space<vmem>>, vector<1x8x256xf32>
    %216 = vector.shape_cast %215 : vector<1x8x256xf32> to vector<8x256xf32>
    %217 = vector.shape_cast %214 : vector<8x256xf32> to vector<1x8x256xf32>
    tpu.vector_store %arg6[%c1_169, %c0_170, %c0_171], %217 {strides = array<i32>} : memref<2x8x256xf32, #tpu.memory_space<vmem>>, vector<1x8x256xf32>,
    return
  }
  func.func @transform_0(%arg0: i32) -> (i32, i32, i32) {
    %c0_i32 = arith.constant 0 : i32
    %c0_i32_0 = arith.constant 0 : i32
    %c0_i32_1 = arith.constant 0 : i32
    return %arg0, %c0_i32, %c0_i32_0 : i32, i32, i32
  }
  func.func @transform_1(%arg0: i32) -> (i32, i32, i32, i32) {
    %c0_i32 = arith.constant 0 : i32
    %c0_i32_0 = arith.constant 0 : i32
    %c0_i32_1 = arith.constant 0 : i32
    %c0_i32_2 = arith.constant 0 : i32
    %c0_i32_3 = arith.constant 0 : i32
    return %c0_i32, %c0_i32_0, %c0_i32_1, %c0_i32_2 : i32, i32, i32, i32
  }
  func.func @transform_2(%arg0: i32) -> (i32, i32) {
    %c0_i32 = arith.constant 0 : i32
    %c0_i32_0 = arith.constant 0 : i32
    %c0_i32_1 = arith.constant 0 : i32
    return %c0_i32, %c0_i32_0 : i32, i32
  }
  func.func @transform_3(%arg0: i32) -> (i32, i32, i32, i32) {
    %c0_i32 = arith.constant 0 : i32
    %c0_i32_0 = arith.constant 0 : i32
    %c0_i32_1 = arith.constant 0 : i32
    %c0_i32_2 = arith.constant 0 : i32
    %c0_i32_3 = arith.constant 0 : i32
    return %c0_i32, %c0_i32_0, %c0_i32_1, %c0_i32_2 : i32, i32, i32, i32
  }
  func.func @transform_4(%arg0: i32) -> (i32, i32) {
    %c0_i32 = arith.constant 0 : i32
    %c0_i32_0 = arith.constant 0 : i32
    %c0_i32_1 = arith.constant 0 : i32
    return %c0_i32, %c0_i32_0 : i32, i32
  }
  func.func @transform_5(%arg0: i32) -> (i32, i32, i32) {
    %c0_i32 = arith.constant 0 : i32
    %c0_i32_0 = arith.constant 0 : i32
    %c0_i32_1 = arith.constant 0 : i32
    return %arg0, %c0_i32, %c0_i32_0 : i32, i32, i32
  }
}

module attributes {stable_mosaic.version = 11 : i64} {
  func.func @kernel(%arg0: i32, %arg1: memref<2x8x256xf32, #tpu.memory_space<vmem>>, %arg2: memref<3x3x8x8xbf16, #tpu.memory_space<vmem>>, %arg3: memref<8x1xf32, #tpu.memory_space<vmem>>, %arg4: memref<3x3x8x8xbf16, #tpu.memory_space<vmem>>, %arg5: memref<8x1xf32, #tpu.memory_space<vmem>>, %arg6: memref<2x8x256xf32, #tpu.memory_space<vmem>>, %arg7: memref<8x562xbf16, #tpu.memory_space<vmem>>) attributes {dimension_semantics = [#tpu.dimension_semantics<parallel>], iteration_bounds = array<i64: 2>, scalar_prefetch = 0 : i64, scratch_operands = 1 : i64, tpu.core_type = #tpu.core_type<tc>, window_params = [{transform_indices = @transform_0, window_bounds = array<i64: 2, 8, 256>}, {pipeline_mode = #tpu.pipeline_mode<synchronous>, transform_indices = @transform_1, window_bounds = array<i64: 3, 3, 8, 8>}, {pipeline_mode = #tpu.pipeline_mode<synchronous>, transform_indices = @transform_2, window_bounds = array<i64: 8, 1>}, {pipeline_mode = #tpu.pipeline_mode<synchronous>, transform_indices = @transform_3, window_bounds = array<i64: 3, 3, 8, 8>}, {pipeline_mode = #tpu.pipeline_mode<synchronous>, transform_indices = @transform_4, window_bounds = array<i64: 8, 1>}, {transform_indices = @transform_5, window_bounds = array<i64: 2, 8, 256>}]} {
    %cst = arith.constant 0.000000e+00 : bf16
    %0 = vector.broadcast %cst : bf16 to vector<8x17xbf16>
    %c0 = arith.constant 0 : index
    %c0_0 = arith.constant 0 : index
    %1 = vector.load %arg7[%c0, %c0_0] : memref<8x562xbf16, #tpu.memory_space<vmem>>, vector<8x17xbf16>
    tpu.vector_store %arg7[%c0, %c0_0], %0 {strides = array<i32>} : memref<8x562xbf16, #tpu.memory_space<vmem>>, vector<8x17xbf16>,
    %c0_1 = arith.constant 0 : index
    %c545 = arith.constant 545 : index
    %2 = vector.load %arg7[%c0_1, %c545] : memref<8x562xbf16, #tpu.memory_space<vmem>>, vector<8x17xbf16>
    tpu.vector_store %arg7[%c0_1, %c545], %0 {strides = array<i32>} : memref<8x562xbf16, #tpu.memory_space<vmem>>, vector<8x17xbf16>,
    %cst_2 = arith.constant 0.000000e+00 : bf16
    %3 = vector.broadcast %cst_2 : bf16 to vector<8x16xbf16>
    %c0_3 = arith.constant 0 : index
    %c273 = arith.constant 273 : index
    %4 = vector.load %arg7[%c0_3, %c273] : memref<8x562xbf16, #tpu.memory_space<vmem>>, vector<8x16xbf16>
    tpu.vector_store %arg7[%c0_3, %c273], %3 {strides = array<i32>} : memref<8x562xbf16, #tpu.memory_space<vmem>>, vector<8x16xbf16>,
    %c0_4 = arith.constant 0 : index
    %c0_5 = arith.constant 0 : index
    %c0_6 = arith.constant 0 : index
    %5 = vector.load %arg1[%c0_4, %c0_5, %c0_6] : memref<2x8x256xf32, #tpu.memory_space<vmem>>, vector<1x8x256xf32>
    %6 = vector.shape_cast %5 : vector<1x8x256xf32> to vector<8x256xf32>
    %7 = arith.truncf %6 : vector<8x256xf32> to vector<8x256xbf16>
    %c0_7 = arith.constant 0 : index
    %c17 = arith.constant 17 : index
    %8 = vector.load %arg7[%c0_7, %c17] : memref<8x562xbf16, #tpu.memory_space<vmem>>, vector<8x256xbf16>
    tpu.vector_store %arg7[%c0_7, %c17], %7 {strides = array<i32>} : memref<8x562xbf16, #tpu.memory_space<vmem>>, vector<8x256xbf16>,
    %c1 = arith.constant 1 : index
    %c0_8 = arith.constant 0 : index
    %c0_9 = arith.constant 0 : index
    %9 = vector.load %arg1[%c1, %c0_8, %c0_9] : memref<2x8x256xf32, #tpu.memory_space<vmem>>, vector<1x8x256xf32>
    %10 = vector.shape_cast %9 : vector<1x8x256xf32> to vector<8x256xf32>
    %11 = arith.truncf %10 : vector<8x256xf32> to vector<8x256xbf16>
    %c0_10 = arith.constant 0 : index
    %c289 = arith.constant 289 : index
    %12 = vector.load %arg7[%c0_10, %c289] : memref<8x562xbf16, #tpu.memory_space<vmem>>, vector<8x256xbf16>
    tpu.vector_store %arg7[%c0_10, %c289], %11 {strides = array<i32>} : memref<8x562xbf16, #tpu.memory_space<vmem>>, vector<8x256xbf16>,
    %13 = tpu.iota {dimensions = array<i32: 1>} : vector<1x528xi32>
    %c16_i32 = arith.constant 16 : i32
    %c0_i32 = arith.constant 0 : i32
    %14 = arith.cmpi eq, %c16_i32, %c0_i32 : i32
    %c1_i32 = arith.constant 1 : i32
    %15 = arith.select %14, %c1_i32, %c16_i32 : i32
    %16 = vector.broadcast %15 : i32 to vector<1x528xi32>
    %17 = arith.remsi %13, %16 : vector<1x528xi32>
    %c0_i32_11 = arith.constant 0 : i32
    %18 = vector.broadcast %c0_i32_11 : i32 to vector<1x528xi32>
    %19 = arith.cmpi ne, %17, %18 : vector<1x528xi32>
    %c0_i32_12 = arith.constant 0 : i32
    %20 = vector.broadcast %c0_i32_12 : i32 to vector<1x528xi32>
    %21 = arith.cmpi slt, %17, %20 : vector<1x528xi32>
    %c0_i32_13 = arith.constant 0 : i32
    %22 = arith.cmpi slt, %15, %c0_i32_13 : i32
    %23 = vector.broadcast %22 : i1 to vector<1x528xi1>
    %24 = vector.broadcast %23 : vector<1x528xi1> to vector<1x528xi1>
    %25 = arith.xori %21, %24 : vector<1x528xi1>
    %26 = arith.andi %25, %19 : vector<1x528xi1>
    %27 = vector.broadcast %15 : i32 to vector<1x528xi32>
    %28 = arith.addi %17, %27 : vector<1x528xi32>
    %29 = arith.select %26, %28, %17 : vector<1x528xi1>, vector<1x528xi32>
    %c0_i32_14 = arith.constant 0 : i32
    %30 = vector.broadcast %c0_i32_14 : i32 to vector<1x528xi32>
    %31 = arith.cmpi ne, %29, %30 : vector<1x528xi32>
    %c15_i32 = arith.constant 15 : i32
    %32 = vector.broadcast %c15_i32 : i32 to vector<1x528xi32>
    %33 = arith.cmpi ne, %29, %32 : vector<1x528xi32>
    %cst_15 = arith.constant 0.000000e+00 : f32
    %34 = vector.broadcast %cst_15 : f32 to vector<8x528xf32>
    %c0_16 = arith.constant 0 : index
    %c0_17 = arith.constant 0 : index
    %35 = vector.load %arg7[%c0_16, %c0_17] : memref<8x562xbf16, #tpu.memory_space<vmem>>, vector<8x528xbf16>
    %c0_i32_18 = arith.constant 0 : i32
    %36 = arith.sitofp %c0_i32_18 : i32 to bf16
    %37 = vector.shape_cast %31 : vector<1x528xi1> to vector<1x528xi1>
    %38 = vector.broadcast %37 : vector<1x528xi1> to vector<8x528xi1>
    %39 = vector.broadcast %36 : bf16 to vector<8x528xbf16>
    %40 = arith.select %38, %35, %39 : vector<8x528xi1>, vector<8x528xbf16>
    %c0_19 = arith.constant 0 : index
    %c0_20 = arith.constant 0 : index
    %c0_21 = arith.constant 0 : index
    %c0_22 = arith.constant 0 : index
    %41 = vector.load %arg2[%c0_19, %c0_20, %c0_21, %c0_22] : memref<3x3x8x8xbf16, #tpu.memory_space<vmem>>, vector<1x1x8x8xbf16>
    %42 = vector.shape_cast %41 : vector<1x1x8x8xbf16> to vector<8x8xbf16>
    %cst_23 = arith.constant dense<0.000000e+00> : vector<8x528xf32>
    %43 = tpu.matmul %42, %40, %cst_23 {dimension_numbers = #tpu.dot_dimension_numbers<[1], [0], [0], [1], [0, 0, 1, 1], [], []>} : vector<8x8xbf16>, vector<8x528xbf16>, vector<8x528xf32> -> vector<8x528xf32>
    %44 = arith.addf %34, %43 : vector<8x528xf32>
    %c0_24 = arith.constant 0 : index
    %c1_25 = arith.constant 1 : index
    %45 = vector.load %arg7[%c0_24, %c1_25] : memref<8x562xbf16, #tpu.memory_space<vmem>>, vector<8x528xbf16>
    %c0_26 = arith.constant 0 : index
    %c1_27 = arith.constant 1 : index
    %c0_28 = arith.constant 0 : index
    %c0_29 = arith.constant 0 : index
    %46 = vector.load %arg2[%c0_26, %c1_27, %c0_28, %c0_29] : memref<3x3x8x8xbf16, #tpu.memory_space<vmem>>, vector<1x1x8x8xbf16>
    %47 = vector.shape_cast %46 : vector<1x1x8x8xbf16> to vector<8x8xbf16>
    %cst_30 = arith.constant dense<0.000000e+00> : vector<8x528xf32>
    %48 = tpu.matmul %47, %45, %cst_30 {dimension_numbers = #tpu.dot_dimension_numbers<[1], [0], [0], [1], [0, 0, 1, 1], [], []>} : vector<8x8xbf16>, vector<8x528xbf16>, vector<8x528xf32> -> vector<8x528xf32>
    %49 = arith.addf %44, %48 : vector<8x528xf32>
    %c0_31 = arith.constant 0 : index
    %c2 = arith.constant 2 : index
    %50 = vector.load %arg7[%c0_31, %c2] : memref<8x562xbf16, #tpu.memory_space<vmem>>, vector<8x528xbf16>
    %c0_i32_32 = arith.constant 0 : i32
    %51 = arith.sitofp %c0_i32_32 : i32 to bf16
    %52 = vector.shape_cast %33 : vector<1x528xi1> to vector<1x528xi1>
    %53 = vector.broadcast %52 : vector<1x528xi1> to vector<8x528xi1>
    %54 = vector.broadcast %51 : bf16 to vector<8x528xbf16>
    %55 = arith.select %53, %50, %54 : vector<8x528xi1>, vector<8x528xbf16>
    %c0_33 = arith.constant 0 : index
    %c2_34 = arith.constant 2 : index
    %c0_35 = arith.constant 0 : index
    %c0_36 = arith.constant 0 : index
    %56 = vector.load %arg2[%c0_33, %c2_34, %c0_35, %c0_36] : memref<3x3x8x8xbf16, #tpu.memory_space<vmem>>, vector<1x1x8x8xbf16>
    %57 = vector.shape_cast %56 : vector<1x1x8x8xbf16> to vector<8x8xbf16>
    %cst_37 = arith.constant dense<0.000000e+00> : vector<8x528xf32>
    %58 = tpu.matmul %57, %55, %cst_37 {dimension_numbers = #tpu.dot_dimension_numbers<[1], [0], [0], [1], [0, 0, 1, 1], [], []>} : vector<8x8xbf16>, vector<8x528xbf16>, vector<8x528xf32> -> vector<8x528xf32>
    %59 = arith.addf %49, %58 : vector<8x528xf32>
    %c0_38 = arith.constant 0 : index
    %c16 = arith.constant 16 : index
    %60 = vector.load %arg7[%c0_38, %c16] : memref<8x562xbf16, #tpu.memory_space<vmem>>, vector<8x528xbf16>
    %c0_i32_39 = arith.constant 0 : i32
    %61 = arith.sitofp %c0_i32_39 : i32 to bf16
    %62 = vector.shape_cast %31 : vector<1x528xi1> to vector<1x528xi1>
    %63 = vector.broadcast %62 : vector<1x528xi1> to vector<8x528xi1>
    %64 = vector.broadcast %61 : bf16 to vector<8x528xbf16>
    %65 = arith.select %63, %60, %64 : vector<8x528xi1>, vector<8x528xbf16>
    %c1_40 = arith.constant 1 : index
    %c0_41 = arith.constant 0 : index
    %c0_42 = arith.constant 0 : index
    %c0_43 = arith.constant 0 : index
    %66 = vector.load %arg2[%c1_40, %c0_41, %c0_42, %c0_43] : memref<3x3x8x8xbf16, #tpu.memory_space<vmem>>, vector<1x1x8x8xbf16>
    %67 = vector.shape_cast %66 : vector<1x1x8x8xbf16> to vector<8x8xbf16>
    %cst_44 = arith.constant dense<0.000000e+00> : vector<8x528xf32>
    %68 = tpu.matmul %67, %65, %cst_44 {dimension_numbers = #tpu.dot_dimension_numbers<[1], [0], [0], [1], [0, 0, 1, 1], [], []>} : vector<8x8xbf16>, vector<8x528xbf16>, vector<8x528xf32> -> vector<8x528xf32>
    %69 = arith.addf %59, %68 : vector<8x528xf32>
    %c0_45 = arith.constant 0 : index
    %c17_46 = arith.constant 17 : index
    %70 = vector.load %arg7[%c0_45, %c17_46] : memref<8x562xbf16, #tpu.memory_space<vmem>>, vector<8x528xbf16>
    %c1_47 = arith.constant 1 : index
    %c1_48 = arith.constant 1 : index
    %c0_49 = arith.constant 0 : index
    %c0_50 = arith.constant 0 : index
    %71 = vector.load %arg2[%c1_47, %c1_48, %c0_49, %c0_50] : memref<3x3x8x8xbf16, #tpu.memory_space<vmem>>, vector<1x1x8x8xbf16>
    %72 = vector.shape_cast %71 : vector<1x1x8x8xbf16> to vector<8x8xbf16>
    %cst_51 = arith.constant dense<0.000000e+00> : vector<8x528xf32>
    %73 = tpu.matmul %72, %70, %cst_51 {dimension_numbers = #tpu.dot_dimension_numbers<[1], [0], [0], [1], [0, 0, 1, 1], [], []>} : vector<8x8xbf16>, vector<8x528xbf16>, vector<8x528xf32> -> vector<8x528xf32>
    %74 = arith.addf %69, %73 : vector<8x528xf32>
    %c0_52 = arith.constant 0 : index
    %c18 = arith.constant 18 : index
    %75 = vector.load %arg7[%c0_52, %c18] : memref<8x562xbf16, #tpu.memory_space<vmem>>, vector<8x528xbf16>
    %c0_i32_53 = arith.constant 0 : i32
    %76 = arith.sitofp %c0_i32_53 : i32 to bf16
    %77 = vector.shape_cast %33 : vector<1x528xi1> to vector<1x528xi1>
    %78 = vector.broadcast %77 : vector<1x528xi1> to vector<8x528xi1>
    %79 = vector.broadcast %76 : bf16 to vector<8x528xbf16>
    %80 = arith.select %78, %75, %79 : vector<8x528xi1>, vector<8x528xbf16>
    %c1_54 = arith.constant 1 : index
    %c2_55 = arith.constant 2 : index
    %c0_56 = arith.constant 0 : index
    %c0_57 = arith.constant 0 : index
    %81 = vector.load %arg2[%c1_54, %c2_55, %c0_56, %c0_57] : memref<3x3x8x8xbf16, #tpu.memory_space<vmem>>, vector<1x1x8x8xbf16>
    %82 = vector.shape_cast %81 : vector<1x1x8x8xbf16> to vector<8x8xbf16>
    %cst_58 = arith.constant dense<0.000000e+00> : vector<8x528xf32>
    %83 = tpu.matmul %82, %80, %cst_58 {dimension_numbers = #tpu.dot_dimension_numbers<[1], [0], [0], [1], [0, 0, 1, 1], [], []>} : vector<8x8xbf16>, vector<8x528xbf16>, vector<8x528xf32> -> vector<8x528xf32>
    %84 = arith.addf %74, %83 : vector<8x528xf32>
    %c0_59 = arith.constant 0 : index
    %c32 = arith.constant 32 : index
    %85 = vector.load %arg7[%c0_59, %c32] : memref<8x562xbf16, #tpu.memory_space<vmem>>, vector<8x528xbf16>
    %c0_i32_60 = arith.constant 0 : i32
    %86 = arith.sitofp %c0_i32_60 : i32 to bf16
    %87 = vector.shape_cast %31 : vector<1x528xi1> to vector<1x528xi1>
    %88 = vector.broadcast %87 : vector<1x528xi1> to vector<8x528xi1>
    %89 = vector.broadcast %86 : bf16 to vector<8x528xbf16>
    %90 = arith.select %88, %85, %89 : vector<8x528xi1>, vector<8x528xbf16>
    %c2_61 = arith.constant 2 : index
    %c0_62 = arith.constant 0 : index
    %c0_63 = arith.constant 0 : index
    %c0_64 = arith.constant 0 : index
    %91 = vector.load %arg2[%c2_61, %c0_62, %c0_63, %c0_64] : memref<3x3x8x8xbf16, #tpu.memory_space<vmem>>, vector<1x1x8x8xbf16>
    %92 = vector.shape_cast %91 : vector<1x1x8x8xbf16> to vector<8x8xbf16>
    %cst_65 = arith.constant dense<0.000000e+00> : vector<8x528xf32>
    %93 = tpu.matmul %92, %90, %cst_65 {dimension_numbers = #tpu.dot_dimension_numbers<[1], [0], [0], [1], [0, 0, 1, 1], [], []>} : vector<8x8xbf16>, vector<8x528xbf16>, vector<8x528xf32> -> vector<8x528xf32>
    %94 = arith.addf %84, %93 : vector<8x528xf32>
    %c0_66 = arith.constant 0 : index
    %c33 = arith.constant 33 : index
    %95 = vector.load %arg7[%c0_66, %c33] : memref<8x562xbf16, #tpu.memory_space<vmem>>, vector<8x528xbf16>
    %c2_67 = arith.constant 2 : index
    %c1_68 = arith.constant 1 : index
    %c0_69 = arith.constant 0 : index
    %c0_70 = arith.constant 0 : index
    %96 = vector.load %arg2[%c2_67, %c1_68, %c0_69, %c0_70] : memref<3x3x8x8xbf16, #tpu.memory_space<vmem>>, vector<1x1x8x8xbf16>
    %97 = vector.shape_cast %96 : vector<1x1x8x8xbf16> to vector<8x8xbf16>
    %cst_71 = arith.constant dense<0.000000e+00> : vector<8x528xf32>
    %98 = tpu.matmul %97, %95, %cst_71 {dimension_numbers = #tpu.dot_dimension_numbers<[1], [0], [0], [1], [0, 0, 1, 1], [], []>} : vector<8x8xbf16>, vector<8x528xbf16>, vector<8x528xf32> -> vector<8x528xf32>
    %99 = arith.addf %94, %98 : vector<8x528xf32>
    %c0_72 = arith.constant 0 : index
    %c34 = arith.constant 34 : index
    %100 = vector.load %arg7[%c0_72, %c34] : memref<8x562xbf16, #tpu.memory_space<vmem>>, vector<8x528xbf16>
    %c0_i32_73 = arith.constant 0 : i32
    %101 = arith.sitofp %c0_i32_73 : i32 to bf16
    %102 = vector.shape_cast %33 : vector<1x528xi1> to vector<1x528xi1>
    %103 = vector.broadcast %102 : vector<1x528xi1> to vector<8x528xi1>
    %104 = vector.broadcast %101 : bf16 to vector<8x528xbf16>
    %105 = arith.select %103, %100, %104 : vector<8x528xi1>, vector<8x528xbf16>
    %c2_74 = arith.constant 2 : index
    %c2_75 = arith.constant 2 : index
    %c0_76 = arith.constant 0 : index
    %c0_77 = arith.constant 0 : index
    %106 = vector.load %arg2[%c2_74, %c2_75, %c0_76, %c0_77] : memref<3x3x8x8xbf16, #tpu.memory_space<vmem>>, vector<1x1x8x8xbf16>
    %107 = vector.shape_cast %106 : vector<1x1x8x8xbf16> to vector<8x8xbf16>
    %cst_78 = arith.constant dense<0.000000e+00> : vector<8x528xf32>
    %108 = tpu.matmul %107, %105, %cst_78 {dimension_numbers = #tpu.dot_dimension_numbers<[1], [0], [0], [1], [0, 0, 1, 1], [], []>} : vector<8x8xbf16>, vector<8x528xbf16>, vector<8x528xf32> -> vector<8x528xf32>
    %109 = arith.addf %99, %108 : vector<8x528xf32>
    %c0_79 = arith.constant 0 : index
    %c0_80 = arith.constant 0 : index
    %110 = vector.load %arg3[%c0_79, %c0_80] : memref<8x1xf32, #tpu.memory_space<vmem>>, vector<8x1xf32>
    %111 = vector.broadcast %110 : vector<8x1xf32> to vector<8x528xf32>
    %112 = arith.addf %109, %111 : vector<8x528xf32>
    %cst_81 = arith.constant 0.000000e+00 : f32
    %113 = vector.broadcast %cst_81 : f32 to vector<8x528xf32>
    %114 = arith.maximumf %112, %113 : vector<8x528xf32>
    %115 = vector.extract_strided_slice %114 {offsets = [0, 0], sizes = [8, 256], strides = [1, 1]} : vector<8x528xf32> to vector<8x256xf32>
    %116 = arith.truncf %115 : vector<8x256xf32> to vector<8x256xbf16>
    %c0_82 = arith.constant 0 : index
    %c17_83 = arith.constant 17 : index
    %117 = vector.load %arg7[%c0_82, %c17_83] : memref<8x562xbf16, #tpu.memory_space<vmem>>, vector<8x256xbf16>
    tpu.vector_store %arg7[%c0_82, %c17_83], %116 {strides = array<i32>} : memref<8x562xbf16, #tpu.memory_space<vmem>>, vector<8x256xbf16>,
    %118 = vector.extract_strided_slice %114 {offsets = [0, 272], sizes = [8, 256], strides = [1, 1]} : vector<8x528xf32> to vector<8x256xf32>
    %119 = arith.truncf %118 : vector<8x256xf32> to vector<8x256xbf16>
    %c0_84 = arith.constant 0 : index
    %c289_85 = arith.constant 289 : index
    %120 = vector.load %arg7[%c0_84, %c289_85] : memref<8x562xbf16, #tpu.memory_space<vmem>>, vector<8x256xbf16>
    tpu.vector_store %arg7[%c0_84, %c289_85], %119 {strides = array<i32>} : memref<8x562xbf16, #tpu.memory_space<vmem>>, vector<8x256xbf16>,
    %cst_86 = arith.constant 0.000000e+00 : f32
    %121 = vector.broadcast %cst_86 : f32 to vector<8x528xf32>
    %c0_87 = arith.constant 0 : index
    %c0_88 = arith.constant 0 : index
    %122 = vector.load %arg7[%c0_87, %c0_88] : memref<8x562xbf16, #tpu.memory_space<vmem>>, vector<8x528xbf16>
    %c0_i32_89 = arith.constant 0 : i32
    %123 = arith.sitofp %c0_i32_89 : i32 to bf16
    %124 = vector.shape_cast %31 : vector<1x528xi1> to vector<1x528xi1>
    %125 = vector.broadcast %124 : vector<1x528xi1> to vector<8x528xi1>
    %126 = vector.broadcast %123 : bf16 to vector<8x528xbf16>
    %127 = arith.select %125, %122, %126 : vector<8x528xi1>, vector<8x528xbf16>
    %c0_90 = arith.constant 0 : index
    %c0_91 = arith.constant 0 : index
    %c0_92 = arith.constant 0 : index
    %c0_93 = arith.constant 0 : index
    %128 = vector.load %arg4[%c0_90, %c0_91, %c0_92, %c0_93] : memref<3x3x8x8xbf16, #tpu.memory_space<vmem>>, vector<1x1x8x8xbf16>
    %129 = vector.shape_cast %128 : vector<1x1x8x8xbf16> to vector<8x8xbf16>
    %cst_94 = arith.constant dense<0.000000e+00> : vector<8x528xf32>
    %130 = tpu.matmul %129, %127, %cst_94 {dimension_numbers = #tpu.dot_dimension_numbers<[1], [0], [0], [1], [0, 0, 1, 1], [], []>} : vector<8x8xbf16>, vector<8x528xbf16>, vector<8x528xf32> -> vector<8x528xf32>
    %131 = arith.addf %121, %130 : vector<8x528xf32>
    %c0_95 = arith.constant 0 : index
    %c1_96 = arith.constant 1 : index
    %132 = vector.load %arg7[%c0_95, %c1_96] : memref<8x562xbf16, #tpu.memory_space<vmem>>, vector<8x528xbf16>
    %c0_97 = arith.constant 0 : index
    %c1_98 = arith.constant 1 : index
    %c0_99 = arith.constant 0 : index
    %c0_100 = arith.constant 0 : index
    %133 = vector.load %arg4[%c0_97, %c1_98, %c0_99, %c0_100] : memref<3x3x8x8xbf16, #tpu.memory_space<vmem>>, vector<1x1x8x8xbf16>
    %134 = vector.shape_cast %133 : vector<1x1x8x8xbf16> to vector<8x8xbf16>
    %cst_101 = arith.constant dense<0.000000e+00> : vector<8x528xf32>
    %135 = tpu.matmul %134, %132, %cst_101 {dimension_numbers = #tpu.dot_dimension_numbers<[1], [0], [0], [1], [0, 0, 1, 1], [], []>} : vector<8x8xbf16>, vector<8x528xbf16>, vector<8x528xf32> -> vector<8x528xf32>
    %136 = arith.addf %131, %135 : vector<8x528xf32>
    %c0_102 = arith.constant 0 : index
    %c2_103 = arith.constant 2 : index
    %137 = vector.load %arg7[%c0_102, %c2_103] : memref<8x562xbf16, #tpu.memory_space<vmem>>, vector<8x528xbf16>
    %c0_i32_104 = arith.constant 0 : i32
    %138 = arith.sitofp %c0_i32_104 : i32 to bf16
    %139 = vector.shape_cast %33 : vector<1x528xi1> to vector<1x528xi1>
    %140 = vector.broadcast %139 : vector<1x528xi1> to vector<8x528xi1>
    %141 = vector.broadcast %138 : bf16 to vector<8x528xbf16>
    %142 = arith.select %140, %137, %141 : vector<8x528xi1>, vector<8x528xbf16>
    %c0_105 = arith.constant 0 : index
    %c2_106 = arith.constant 2 : index
    %c0_107 = arith.constant 0 : index
    %c0_108 = arith.constant 0 : index
    %143 = vector.load %arg4[%c0_105, %c2_106, %c0_107, %c0_108] : memref<3x3x8x8xbf16, #tpu.memory_space<vmem>>, vector<1x1x8x8xbf16>
    %144 = vector.shape_cast %143 : vector<1x1x8x8xbf16> to vector<8x8xbf16>
    %cst_109 = arith.constant dense<0.000000e+00> : vector<8x528xf32>
    %145 = tpu.matmul %144, %142, %cst_109 {dimension_numbers = #tpu.dot_dimension_numbers<[1], [0], [0], [1], [0, 0, 1, 1], [], []>} : vector<8x8xbf16>, vector<8x528xbf16>, vector<8x528xf32> -> vector<8x528xf32>
    %146 = arith.addf %136, %145 : vector<8x528xf32>
    %c0_110 = arith.constant 0 : index
    %c16_111 = arith.constant 16 : index
    %147 = vector.load %arg7[%c0_110, %c16_111] : memref<8x562xbf16, #tpu.memory_space<vmem>>, vector<8x528xbf16>
    %c0_i32_112 = arith.constant 0 : i32
    %148 = arith.sitofp %c0_i32_112 : i32 to bf16
    %149 = vector.shape_cast %31 : vector<1x528xi1> to vector<1x528xi1>
    %150 = vector.broadcast %149 : vector<1x528xi1> to vector<8x528xi1>
    %151 = vector.broadcast %148 : bf16 to vector<8x528xbf16>
    %152 = arith.select %150, %147, %151 : vector<8x528xi1>, vector<8x528xbf16>
    %c1_113 = arith.constant 1 : index
    %c0_114 = arith.constant 0 : index
    %c0_115 = arith.constant 0 : index
    %c0_116 = arith.constant 0 : index
    %153 = vector.load %arg4[%c1_113, %c0_114, %c0_115, %c0_116] : memref<3x3x8x8xbf16, #tpu.memory_space<vmem>>, vector<1x1x8x8xbf16>
    %154 = vector.shape_cast %153 : vector<1x1x8x8xbf16> to vector<8x8xbf16>
    %cst_117 = arith.constant dense<0.000000e+00> : vector<8x528xf32>
    %155 = tpu.matmul %154, %152, %cst_117 {dimension_numbers = #tpu.dot_dimension_numbers<[1], [0], [0], [1], [0, 0, 1, 1], [], []>} : vector<8x8xbf16>, vector<8x528xbf16>, vector<8x528xf32> -> vector<8x528xf32>
    %156 = arith.addf %146, %155 : vector<8x528xf32>
    %c0_118 = arith.constant 0 : index
    %c17_119 = arith.constant 17 : index
    %157 = vector.load %arg7[%c0_118, %c17_119] : memref<8x562xbf16, #tpu.memory_space<vmem>>, vector<8x528xbf16>
    %c1_120 = arith.constant 1 : index
    %c1_121 = arith.constant 1 : index
    %c0_122 = arith.constant 0 : index
    %c0_123 = arith.constant 0 : index
    %158 = vector.load %arg4[%c1_120, %c1_121, %c0_122, %c0_123] : memref<3x3x8x8xbf16, #tpu.memory_space<vmem>>, vector<1x1x8x8xbf16>
    %159 = vector.shape_cast %158 : vector<1x1x8x8xbf16> to vector<8x8xbf16>
    %cst_124 = arith.constant dense<0.000000e+00> : vector<8x528xf32>
    %160 = tpu.matmul %159, %157, %cst_124 {dimension_numbers = #tpu.dot_dimension_numbers<[1], [0], [0], [1], [0, 0, 1, 1], [], []>} : vector<8x8xbf16>, vector<8x528xbf16>, vector<8x528xf32> -> vector<8x528xf32>
    %161 = arith.addf %156, %160 : vector<8x528xf32>
    %c0_125 = arith.constant 0 : index
    %c18_126 = arith.constant 18 : index
    %162 = vector.load %arg7[%c0_125, %c18_126] : memref<8x562xbf16, #tpu.memory_space<vmem>>, vector<8x528xbf16>
    %c0_i32_127 = arith.constant 0 : i32
    %163 = arith.sitofp %c0_i32_127 : i32 to bf16
    %164 = vector.shape_cast %33 : vector<1x528xi1> to vector<1x528xi1>
    %165 = vector.broadcast %164 : vector<1x528xi1> to vector<8x528xi1>
    %166 = vector.broadcast %163 : bf16 to vector<8x528xbf16>
    %167 = arith.select %165, %162, %166 : vector<8x528xi1>, vector<8x528xbf16>
    %c1_128 = arith.constant 1 : index
    %c2_129 = arith.constant 2 : index
    %c0_130 = arith.constant 0 : index
    %c0_131 = arith.constant 0 : index
    %168 = vector.load %arg4[%c1_128, %c2_129, %c0_130, %c0_131] : memref<3x3x8x8xbf16, #tpu.memory_space<vmem>>, vector<1x1x8x8xbf16>
    %169 = vector.shape_cast %168 : vector<1x1x8x8xbf16> to vector<8x8xbf16>
    %cst_132 = arith.constant dense<0.000000e+00> : vector<8x528xf32>
    %170 = tpu.matmul %169, %167, %cst_132 {dimension_numbers = #tpu.dot_dimension_numbers<[1], [0], [0], [1], [0, 0, 1, 1], [], []>} : vector<8x8xbf16>, vector<8x528xbf16>, vector<8x528xf32> -> vector<8x528xf32>
    %171 = arith.addf %161, %170 : vector<8x528xf32>
    %c0_133 = arith.constant 0 : index
    %c32_134 = arith.constant 32 : index
    %172 = vector.load %arg7[%c0_133, %c32_134] : memref<8x562xbf16, #tpu.memory_space<vmem>>, vector<8x528xbf16>
    %c0_i32_135 = arith.constant 0 : i32
    %173 = arith.sitofp %c0_i32_135 : i32 to bf16
    %174 = vector.shape_cast %31 : vector<1x528xi1> to vector<1x528xi1>
    %175 = vector.broadcast %174 : vector<1x528xi1> to vector<8x528xi1>
    %176 = vector.broadcast %173 : bf16 to vector<8x528xbf16>
    %177 = arith.select %175, %172, %176 : vector<8x528xi1>, vector<8x528xbf16>
    %c2_136 = arith.constant 2 : index
    %c0_137 = arith.constant 0 : index
    %c0_138 = arith.constant 0 : index
    %c0_139 = arith.constant 0 : index
    %178 = vector.load %arg4[%c2_136, %c0_137, %c0_138, %c0_139] : memref<3x3x8x8xbf16, #tpu.memory_space<vmem>>, vector<1x1x8x8xbf16>
    %179 = vector.shape_cast %178 : vector<1x1x8x8xbf16> to vector<8x8xbf16>
    %cst_140 = arith.constant dense<0.000000e+00> : vector<8x528xf32>
    %180 = tpu.matmul %179, %177, %cst_140 {dimension_numbers = #tpu.dot_dimension_numbers<[1], [0], [0], [1], [0, 0, 1, 1], [], []>} : vector<8x8xbf16>, vector<8x528xbf16>, vector<8x528xf32> -> vector<8x528xf32>
    %181 = arith.addf %171, %180 : vector<8x528xf32>
    %c0_141 = arith.constant 0 : index
    %c33_142 = arith.constant 33 : index
    %182 = vector.load %arg7[%c0_141, %c33_142] : memref<8x562xbf16, #tpu.memory_space<vmem>>, vector<8x528xbf16>
    %c2_143 = arith.constant 2 : index
    %c1_144 = arith.constant 1 : index
    %c0_145 = arith.constant 0 : index
    %c0_146 = arith.constant 0 : index
    %183 = vector.load %arg4[%c2_143, %c1_144, %c0_145, %c0_146] : memref<3x3x8x8xbf16, #tpu.memory_space<vmem>>, vector<1x1x8x8xbf16>
    %184 = vector.shape_cast %183 : vector<1x1x8x8xbf16> to vector<8x8xbf16>
    %cst_147 = arith.constant dense<0.000000e+00> : vector<8x528xf32>
    %185 = tpu.matmul %184, %182, %cst_147 {dimension_numbers = #tpu.dot_dimension_numbers<[1], [0], [0], [1], [0, 0, 1, 1], [], []>} : vector<8x8xbf16>, vector<8x528xbf16>, vector<8x528xf32> -> vector<8x528xf32>
    %186 = arith.addf %181, %185 : vector<8x528xf32>
    %c0_148 = arith.constant 0 : index
    %c34_149 = arith.constant 34 : index
    %187 = vector.load %arg7[%c0_148, %c34_149] : memref<8x562xbf16, #tpu.memory_space<vmem>>, vector<8x528xbf16>
    %c0_i32_150 = arith.constant 0 : i32
    %188 = arith.sitofp %c0_i32_150 : i32 to bf16
    %189 = vector.shape_cast %33 : vector<1x528xi1> to vector<1x528xi1>
    %190 = vector.broadcast %189 : vector<1x528xi1> to vector<8x528xi1>
    %191 = vector.broadcast %188 : bf16 to vector<8x528xbf16>
    %192 = arith.select %190, %187, %191 : vector<8x528xi1>, vector<8x528xbf16>
    %c2_151 = arith.constant 2 : index
    %c2_152 = arith.constant 2 : index
    %c0_153 = arith.constant 0 : index
    %c0_154 = arith.constant 0 : index
    %193 = vector.load %arg4[%c2_151, %c2_152, %c0_153, %c0_154] : memref<3x3x8x8xbf16, #tpu.memory_space<vmem>>, vector<1x1x8x8xbf16>
    %194 = vector.shape_cast %193 : vector<1x1x8x8xbf16> to vector<8x8xbf16>
    %cst_155 = arith.constant dense<0.000000e+00> : vector<8x528xf32>
    %195 = tpu.matmul %194, %192, %cst_155 {dimension_numbers = #tpu.dot_dimension_numbers<[1], [0], [0], [1], [0, 0, 1, 1], [], []>} : vector<8x8xbf16>, vector<8x528xbf16>, vector<8x528xf32> -> vector<8x528xf32>
    %196 = arith.addf %186, %195 : vector<8x528xf32>
    %c0_156 = arith.constant 0 : index
    %c0_157 = arith.constant 0 : index
    %197 = vector.load %arg5[%c0_156, %c0_157] : memref<8x1xf32, #tpu.memory_space<vmem>>, vector<8x1xf32>
    %198 = vector.broadcast %197 : vector<8x1xf32> to vector<8x528xf32>
    %199 = arith.addf %196, %198 : vector<8x528xf32>
    %c0_158 = arith.constant 0 : index
    %c0_159 = arith.constant 0 : index
    %c0_160 = arith.constant 0 : index
    %200 = vector.load %arg1[%c0_158, %c0_159, %c0_160] : memref<2x8x256xf32, #tpu.memory_space<vmem>>, vector<1x8x256xf32>
    %201 = vector.shape_cast %200 : vector<1x8x256xf32> to vector<8x256xf32>
    %202 = vector.extract_strided_slice %199 {offsets = [0, 0], sizes = [8, 256], strides = [1, 1]} : vector<8x528xf32> to vector<8x256xf32>
    %203 = arith.addf %202, %201 : vector<8x256xf32>
    %cst_161 = arith.constant 0.000000e+00 : f32
    %204 = vector.broadcast %cst_161 : f32 to vector<8x256xf32>
    %205 = arith.maximumf %203, %204 : vector<8x256xf32>
    %c0_162 = arith.constant 0 : index
    %c0_163 = arith.constant 0 : index
    %c0_164 = arith.constant 0 : index
    %206 = vector.load %arg6[%c0_162, %c0_163, %c0_164] : memref<2x8x256xf32, #tpu.memory_space<vmem>>, vector<1x8x256xf32>
    %207 = vector.shape_cast %206 : vector<1x8x256xf32> to vector<8x256xf32>
    %208 = vector.shape_cast %205 : vector<8x256xf32> to vector<1x8x256xf32>
    tpu.vector_store %arg6[%c0_162, %c0_163, %c0_164], %208 {strides = array<i32>} : memref<2x8x256xf32, #tpu.memory_space<vmem>>, vector<1x8x256xf32>,
    %c1_165 = arith.constant 1 : index
    %c0_166 = arith.constant 0 : index
    %c0_167 = arith.constant 0 : index
    %209 = vector.load %arg1[%c1_165, %c0_166, %c0_167] : memref<2x8x256xf32, #tpu.memory_space<vmem>>, vector<1x8x256xf32>
    %210 = vector.shape_cast %209 : vector<1x8x256xf32> to vector<8x256xf32>
    %211 = vector.extract_strided_slice %199 {offsets = [0, 272], sizes = [8, 256], strides = [1, 1]} : vector<8x528xf32> to vector<8x256xf32>
    %212 = arith.addf %211, %210 : vector<8x256xf32>
    %cst_168 = arith.constant 0.000000e+00 : f32
    %213 = vector.broadcast %cst_168 : f32 to vector<8x256xf32>
    %214 = arith.maximumf %212, %213 : vector<8x256xf32>
    %c1_169 = arith.constant 1 : index
    %c0_170 = arith.constant 0 : index
    %c0_171 = arith.constant 0 : index
    %215 = vector.load %arg6[%c1_169, %c0_170, %c0_171] : memref<2x8x256xf32, #tpu.memory_space<vmem>>, vector<1x8x256xf32>
    %216 = vector.shape_cast %215 : vector<1x8x256xf32> to vector<8x256xf32>
    %217 = vector.shape_cast %214 : vector<8x256xf32> to vector<1x8x256xf32>
    tpu.vector_store %arg6[%c1_169, %c0_170, %c0_171], %217 {strides = array<i32>} : memref<2x8x256xf32, #tpu.memory_space<vmem>>, vector<1x8x256xf32>,
    return
  }
  func.func @transform_0(%arg0: i32) -> (i32, i32, i32) {
    %c0_i32 = arith.constant 0 : i32
    %c0_i32_0 = arith.constant 0 : i32
    %c0_i32_1 = arith.constant 0 : i32
    return %arg0, %c0_i32, %c0_i32_0 : i32, i32, i32
  }
  func.func @transform_1(%arg0: i32) -> (i32, i32, i32, i32) {
    %c0_i32 = arith.constant 0 : i32
    %c0_i32_0 = arith.constant 0 : i32
    %c0_i32_1 = arith.constant 0 : i32
    %c0_i32_2 = arith.constant 0 : i32
    %c0_i32_3 = arith.constant 0 : i32
    return %c0_i32, %c0_i32_0, %c0_i32_1, %c0_i32_2 : i32, i32, i32, i32
  }
  func.func @transform_2(%arg0: i32) -> (i32, i32) {
    %c0_i32 = arith.constant 0 : i32
    %c0_i32_0 = arith.constant 0 : i32
    %c0_i32_1 = arith.constant 0 : i32
    return %c0_i32, %c0_i32_0 : i32, i32
  }
  func.func @transform_3(%arg0: i32) -> (i32, i32, i32, i32) {
    %c0_i32 = arith.constant 0 : i32
    %c0_i32_0 = arith.constant 0 : i32
    %c0_i32_1 = arith.constant 0 : i32
    %c0_i32_2 = arith.constant 0 : i32
    %c0_i32_3 = arith.constant 0 : i32
    return %c0_i32, %c0_i32_0, %c0_i32_1, %c0_i32_2 : i32, i32, i32, i32
  }
  func.func @transform_4(%arg0: i32) -> (i32, i32) {
    %c0_i32 = arith.constant 0 : i32
    %c0_i32_0 = arith.constant 0 : i32
    %c0_i32_1 = arith.constant 0 : i32
    return %c0_i32, %c0_i32_0 : i32, i32
  }
  func.func @transform_5(%arg0: i32) -> (i32, i32, i32) {
    %c0_i32 = arith.constant 0 : i32
    %c0_i32_0 = arith.constant 0 : i32
    %c0_i32_1 = arith.constant 0 : i32
    return %arg0, %c0_i32, %c0_i32_0 : i32, i32, i32
  }
}

</mosaic_0001>

<llo_original>
// kernel: tpu_custom_call.1
$region0: #{tpu_custom_call.1}
  #allocation0 [shape = 'u32[]', space=smem, size = 0x4, offset = 0x4, fixed_abs, tag = 'smem constant byte address 0x4 - core index']
  #allocation1 [shape = 'u32[144,128]{1,0:T(1,128)}', space=vmem, size = 0x12000, scoped, tag = 'internal scratch']
  #allocation2 [shape = 'bf16[8,562]{1,0:T(8,128)(2,1)}', space=vmem, size = 0x2800, scoped, tag = 'scratch operand']
  %s0 = inlined_call_operand.hbm [shape: f32[4,8,256], index: 0, kind: input, shape index: {}]
  %s1 = inlined_call_operand.hbm [shape: bf16[3,3,8,8], index: 1, kind: input, shape index: {}]
  %s2 = inlined_call_operand.vmem [shape: f32[8,1], index: 2, kind: input, shape index: {}]
  %s3 = inlined_call_operand.hbm [shape: bf16[3,3,8,8], index: 3, kind: input, shape index: {}]
  %s4 = inlined_call_operand.vmem [shape: f32[8,1], index: 4, kind: input, shape index: {}]
  %s5 = inlined_call_operand.hbm [shape: f32[4,8,256], index: 5, kind: output, shape index: {}]
  %s6 = sld [smem:[#allocation0]]
  $region65: #{tpu_custom_call.1} parent=0
    _
  %s8 = ssub.s32 1, %s6
  %s9 = scalar_select 0, %s8, %s6
  $region1: #{tpu_custom_call.1} parent=0
    #allocation3 [shape = 'u8[32768]{0}', space=vmem, size = 0x8000, scoped, tag = 'input window, operand 0']
    #allocation4 [shape = 's32[2]{0}', space=sflag, size = 0x8, scoped, tag = 'scoped memory for tpu_custom_call.1']
    #allocation5 [shape = 's32[2]{0}', space=sflag, size = 0x8, scoped, tag = 'scoped memory for tpu_custom_call.1']
    #allocation6 [shape = 'u8[18432]{0}', space=vmem, size = 0x4800, scoped, tag = 'input window, operand 1, single buffered']
    #allocation7 [shape = 's32[1]{0}', space=sflag, size = 0x4, scoped, tag = 'scoped memory for tpu_custom_call.1']
    #allocation8 [shape = 'u8[18432]{0}', space=vmem, size = 0x4800, scoped, tag = 'input window, operand 3, single buffered']
    #allocation9 [shape = 'u8[32768]{0}', space=vmem, size = 0x8000, scoped, tag = 'output window, operand 0']
    %10 = vsyncpa [#allocation4], 0
    %s11 = scalar_lea.sflag [#allocation4], 1
    %12 = vsyncpa %s11, 0
    %13 = vsyncpa [#allocation7], 0
    %14 = vsyncpa [#allocation5], 0
    %s15 = scalar_lea.sflag [#allocation5], 1
    %16 = vsyncpa %s15, 0
    loop: start=0, step=1, limit=4
    $region2: #{tpu_custom_call.1} parent=1 // loop_pre_header
      _
    $region3: #{tpu_custom_call.1} parent=1 // loop_header
      %s18 = sphi 0, %s22
      %p19 = scmp.ge.s32.totalorder %s18, 4
      %s28 = sphi 0, %s30
      %s31 = sphi 0, %s28
      %s32 = sphi 0, %s31
      %s48 = sphi 0, %s32
      %s52 = sphi 0, %s52
      %s54 = sphi 0, %s52
      %s55 = sphi 0, %s54
      %s69 = sphi 0, %s55
      %s73 = sphi 0, %s73
      %s75 = sphi 0, %s73
      %s76 = sphi 0, %s75
      %s90 = sphi 0, %s76
      %s94 = sphi 0, %s94
      %s96 = sphi 0, %s94
      %s97 = sphi 0, %s96
      %s111 = sphi 0, %s97
      %s115 = sphi 0, %s115
      %s117 = sphi 0, %s115
      %s118 = sphi 0, %s117
      %s132 = sphi 0, %s118
      %s138 = sphi 0, %s140
      %s141 = sphi 0, %s138
      %s142 = sphi 0, %s141
      %s158 = sphi 0, %s142
    $region4: #{tpu_custom_call.1} parent=1 // loop_header_branch
      %21 = sbr.rel (%p19) target = $region8
    $region5: #{tpu_custom_call.1} parent=1 // loop_body
      %s23 = ssub.s32 %s18, 1
      %s24 = ssub.s32 %s18, 2
      %s25 = sadd.s32 %s18, 1
      %s26 = ssub.s32 %s18, %s25
      %p27 = scmp.eq.s32.totalorder %s26, 0
      %s29 = sadd.s32 %s28, 1
      %s30 = scalar_select %p27, %s28, %s29
      %p33 = pneg %p27
      %p34 = scmp.eq.s32.totalorder %s18, 1
      %p35 = por %p33, %p34
      %p36 = scmp.ne.s32.totalorder %s28, %s31
      %p37 = scmp.eq.s32.totalorder %s18, 0
      %p38 = por %p36, %p37
      %p39 = scmp.ne.s32.totalorder %s28, %s31
      %p40 = scmp.eq.s32.totalorder %s23, 1
      %p41 = por %p39, %p40
      %p42 = scmp.ne.s32.totalorder %s31, %s32
      %p43 = scmp.eq.s32.totalorder %s23, 0
      %p44 = por %p42, %p43
      %p45 = scmp.ne.s32.totalorder %s31, %s32
      %p46 = scmp.eq.s32.totalorder %s24, 1
      %p47 = por %p45, %p46
      %p49 = scmp.ne.s32.totalorder %s32, %s48
      %p50 = scmp.eq.s32.totalorder %s24, 0
      %p51 = por %p49, %p50
      %s53 = sadd.s32 %s52, 1
      %p56 = scmp.eq.s32.totalorder %s18, 1
      %p57 = scmp.ne.s32.totalorder %s52, %s54
      %p58 = scmp.eq.s32.totalorder %s18, 0
      %p59 = por %p57, %p58
      %p60 = scmp.ne.s32.totalorder %s52, %s54
      %p61 = scmp.eq.s32.totalorder %s23, 1
      %p62 = por %p60, %p61
      %p63 = scmp.ne.s32.totalorder %s54, %s55
      %p64 = scmp.eq.s32.totalorder %s23, 0
      %p65 = por %p63, %p64
      %p66 = scmp.ne.s32.totalorder %s54, %s55
      %p67 = scmp.eq.s32.totalorder %s24, 1
      %p68 = por %p66, %p67
      %p70 = scmp.ne.s32.totalorder %s55, %s69
      %p71 = scmp.eq.s32.totalorder %s24, 0
      %p72 = por %p70, %p71
      %s74 = sadd.s32 %s73, 1
      %p77 = scmp.eq.s32.totalorder %s18, 1
      %p78 = scmp.ne.s32.totalorder %s73, %s75
      %p79 = scmp.eq.s32.totalorder %s18, 0
      %p80 = por %p78, %p79
      %p81 = scmp.ne.s32.totalorder %s73, %s75
      %p82 = scmp.eq.s32.totalorder %s23, 1
      %p83 = por %p81, %p82
      %p84 = scmp.ne.s32.totalorder %s75, %s76
      %p85 = scmp.eq.s32.totalorder %s23, 0
      %p86 = por %p84, %p85
      %p87 = scmp.ne.s32.totalorder %s75, %s76
      %p88 = scmp.eq.s32.totalorder %s24, 1
      %p89 = por %p87, %p88
      %p91 = scmp.ne.s32.totalorder %s76, %s90
      %p92 = scmp.eq.s32.totalorder %s24, 0
      %p93 = por %p91, %p92
      %s95 = sadd.s32 %s94, 1
      %p98 = scmp.eq.s32.totalorder %s18, 1
      %p99 = scmp.ne.s32.totalorder %s94, %s96
      %p100 = scmp.eq.s32.totalorder %s18, 0
      %p101 = por %p99, %p100
      %p102 = scmp.ne.s32.totalorder %s94, %s96
      %p103 = scmp.eq.s32.totalorder %s23, 1
      %p104 = por %p102, %p103
      %p105 = scmp.ne.s32.totalorder %s96, %s97
      %p106 = scmp.eq.s32.totalorder %s23, 0
      %p107 = por %p105, %p106
      %p108 = scmp.ne.s32.totalorder %s96, %s97
      %p109 = scmp.eq.s32.totalorder %s24, 1
      %p110 = por %p108, %p109
      %p112 = scmp.ne.s32.totalorder %s97, %s111
      %p113 = scmp.eq.s32.totalorder %s24, 0
      %p114 = por %p112, %p113
      %s116 = sadd.s32 %s115, 1
      %p119 = scmp.eq.s32.totalorder %s18, 1
      %p120 = scmp.ne.s32.totalorder %s115, %s117
      %p121 = scmp.eq.s32.totalorder %s18, 0
      %p122 = por %p120, %p121
      %p123 = scmp.ne.s32.totalorder %s115, %s117
      %p124 = scmp.eq.s32.totalorder %s23, 1
      %p125 = por %p123, %p124
      %p126 = scmp.ne.s32.totalorder %s117, %s118
      %p127 = scmp.eq.s32.totalorder %s23, 0
      %p128 = por %p126, %p127
      %p129 = scmp.ne.s32.totalorder %s117, %s118
      %p130 = scmp.eq.s32.totalorder %s24, 1
      %p131 = por %p129, %p130
      %p133 = scmp.ne.s32.totalorder %s118, %s132
      %p134 = scmp.eq.s32.totalorder %s24, 0
      %p135 = por %p133, %p134
      %s136 = ssub.s32 %s18, %s25
      %p137 = scmp.eq.s32.totalorder %s136, 0
      %s139 = sadd.s32 %s138, 1
      %s140 = scalar_select %p137, %s138, %s139
      %p143 = pneg %p137
      %p144 = scmp.eq.s32.totalorder %s18, 1
      %p145 = por %p143, %p144
      %p146 = scmp.ne.s32.totalorder %s138, %s141
      %p147 = scmp.eq.s32.totalorder %s18, 0
      %p148 = por %p146, %p147
      %p149 = scmp.ne.s32.totalorder %s138, %s141
      %p150 = scmp.eq.s32.totalorder %s23, 1
      %p151 = por %p149, %p150
      %p152 = scmp.ne.s32.totalorder %s141, %s142
      %p153 = scmp.eq.s32.totalorder %s23, 0
      %p154 = por %p152, %p153
      %p155 = scmp.ne.s32.totalorder %s141, %s142
      %p156 = scmp.eq.s32.totalorder %s24, 1
      %p157 = por %p155, %p156
      %p159 = scmp.ne.s32.totalorder %s142, %s158
      %p160 = scmp.eq.s32.totalorder %s24, 0
      %p161 = por %p159, %p160
      %p162 = scmp.le.s32.totalorder 1, %s18
      %p163 = scmp.lt.s32.totalorder %s18, 3
      %p164 = pnand %p162, %p163
      %p165 = pneg %p164
      // Predicated region
      $region9: #{tpu_custom_call.1} parent=5 // pred_check
        _
      $region10: #{tpu_custom_call.1} parent=5 // pred_check_branch
        %167 = sbr.rel (%p164) target = $region12
      $region11: #{tpu_custom_call.1} parent=5 // pred_region
        %s168 = ssub.s32 %s18, 1
        // Predicated region
        $region13: #{tpu_custom_call.1} parent=11 // pred_check
          %p169 = pneg %p65
        $region14: #{tpu_custom_call.1} parent=11 // pred_check_branch
          %171 = sbr.rel (%p169) target = $region16
        $region15: #{tpu_custom_call.1} parent=11 // pred_region
          %s173 = ssub.s32 576, 576
          %174 = vsyncadd [#allocation7], %s173
          %s175 = sshll.u32 [#allocation6], 4
          %s176 = int_to_ptr.vmem [resolvable:$true] %s175
          %181 = dma.hbm_to_vmem [thread:$0]  %s1, 576, %s176, [#allocation7], 64, 64, 4
        $region16: #{tpu_custom_call.1} parent=11 // pred_fallthru
          _
        // Predicated region
        $region17: #{tpu_custom_call.1} parent=11 // pred_check
          %p182 = pneg %p86
        $region18: #{tpu_custom_call.1} parent=11 // pred_check_branch
          %184 = sbr.rel (%p182) target = $region20
        $region19: #{tpu_custom_call.1} parent=11 // pred_region
          _
        $region20: #{tpu_custom_call.1} parent=11 // pred_fallthru
          _
        // Predicated region
        $region21: #{tpu_custom_call.1} parent=11 // pred_check
          %p185 = pneg %p107
        $region22: #{tpu_custom_call.1} parent=11 // pred_check_branch
          %187 = sbr.rel (%p185) target = $region24
        $region23: #{tpu_custom_call.1} parent=11 // pred_region
          %s189 = ssub.s32 576, 576
          %190 = vsyncadd [#allocation7], %s189
          %s191 = sshll.u32 [#allocation8], 4
          %s192 = int_to_ptr.vmem [resolvable:$true] %s191
          %197 = dma.hbm_to_vmem [thread:$0]  %s3, 576, %s192, [#allocation7], 64, 64, 4
        $region24: #{tpu_custom_call.1} parent=11 // pred_fallthru
          _
        // Predicated region
        $region25: #{tpu_custom_call.1} parent=11 // pred_check
          %p198 = pneg %p128
        $region26: #{tpu_custom_call.1} parent=11 // pred_check_branch
          %200 = sbr.rel (%p198) target = $region28
        $region27: #{tpu_custom_call.1} parent=11 // pred_region
          _
        $region28: #{tpu_custom_call.1} parent=11 // pred_fallthru
          _
      $region12: #{tpu_custom_call.1} parent=5 // pred_fallthru
        _
      %p201 = scmp.lt.s32.totalorder %s18, 2
      // Predicated region
      $region29: #{tpu_custom_call.1} parent=5 // pred_check
        %p202 = pneg %p201
      $region30: #{tpu_custom_call.1} parent=5 // pred_check_branch
        %204 = sbr.rel (%p202) target = $region32
      $region31: #{tpu_custom_call.1} parent=5 // pred_region
        // Predicated region
        $region33: #{tpu_custom_call.1} parent=31 // pred_check
          %p205 = pneg %p38
        $region34: #{tpu_custom_call.1} parent=31 // pred_check_branch
          %207 = sbr.rel (%p205) target = $region36
        $region35: #{tpu_custom_call.1} parent=31 // pred_region
          %s208 = sand.u32 %s28, 1
          %s209 = scalar_lea.sflag [#allocation4], %s208
          %s210 = sand.u32 %s28, 1
          %s211 = smul.addr %s210, 32
          %s212 = scalar_lea.vmem [#allocation3], %s211
          %s213 = smul.u32 2, %s18
          %s215 = ssub.s32 512, 512
          %216 = vsyncadd %s209, %s215
          %s217 = smul.addr %s213, 2
          %s218 = smul.addr %s217, 128
          %s219 = scalar_lea.hbm %s0, %s218
          %s220 = sshll.u32 %s212, 4
          %s221 = int_to_ptr.vmem [resolvable:$true] %s220
          %226 = dma.hbm_to_vmem [thread:$0]  %s219, 512, %s221, %s209, 256, 256, 16
        $region36: #{tpu_custom_call.1} parent=31 // pred_fallthru
          _
      $region32: #{tpu_custom_call.1} parent=5 // pred_fallthru
        _
      %p227 = scmp.le.s32.totalorder 1, %s18
      %p228 = scmp.lt.s32.totalorder %s18, 3
      %p229 = pnand %p227, %p228
      %p230 = pneg %p229
      // Predicated region
      $region37: #{tpu_custom_call.1} parent=5 // pred_check
        _
      $region38: #{tpu_custom_call.1} parent=5 // pred_check_branch
        %232 = sbr.rel (%p229) target = $region40
      $region39: #{tpu_custom_call.1} parent=5 // pred_region
        %s233 = ssub.s32 %s18, 1
        %s234 = sand.u32 %s31, 1
        %s235 = scalar_lea.sflag [#allocation4], %s234
        %s236 = sand.u32 %s31, 1
        %s237 = smul.addr %s236, 32
        %s238 = scalar_lea.vmem [#allocation3], %s237
        // Predicated region
        $region41: #{tpu_custom_call.1} parent=39 // pred_check
          %p239 = pneg %p44
        $region42: #{tpu_custom_call.1} parent=39 // pred_check_branch
          %241 = sbr.rel (%p239) target = $region44
        $region43: #{tpu_custom_call.1} parent=39 // pred_region
          %242 = dma.done %s235, 512
        $region44: #{tpu_custom_call.1} parent=39 // pred_fallthru
          _
        // Predicated region
        $region45: #{tpu_custom_call.1} parent=39 // pred_check
          %p243 = pneg %p65
        $region46: #{tpu_custom_call.1} parent=39 // pred_check_branch
          %245 = sbr.rel (%p243) target = $region48
        $region47: #{tpu_custom_call.1} parent=39 // pred_region
          %246 = dma.done [#allocation7], 576
        $region48: #{tpu_custom_call.1} parent=39 // pred_fallthru
          _
        // Predicated region
        $region49: #{tpu_custom_call.1} parent=39 // pred_check
          %p247 = pneg %p107
        $region50: #{tpu_custom_call.1} parent=39 // pred_check_branch
          %249 = sbr.rel (%p247) target = $region52
        $region51: #{tpu_custom_call.1} parent=39 // pred_region
          %250 = dma.done [#allocation7], 576
        $region52: #{tpu_custom_call.1} parent=39 // pred_fallthru
          _
        %s251 = sand.u32 %s31, 1
        %s252 = scalar_lea.sflag [#allocation4], %s251
        %s253 = sand.u32 %s31, 1
        %s254 = smul.addr %s253, 32
        %s255 = scalar_lea.vmem [#allocation3], %s254
        %p256 = pneg %p44
        %p257 = pneg %p41
        %p258 = pneg %p65
        %p259 = pneg %p62
        %p260 = pneg %p86
        %p261 = pneg %p83
        %p262 = pneg %p107
        %p263 = pneg %p104
        %p264 = pneg %p128
        %p265 = pneg %p125
        %p266 = pneg %p154
        %p267 = pneg %p151
        %s268 = sand.u32 %s141, 1
        %s269 = scalar_lea.sflag [#allocation5], %s268
        %s270 = sand.u32 %s141, 1
        %s271 = smul.addr %s270, 32
        %s272 = scalar_lea.vmem [#allocation9], %s271
        %s273 = smul.u32 2, %s23
        %s274 = smul.u32 2, %s23
        %vm278 = vcmask 134144
        %279 = vst.msk [vmem:[#allocation2] sm:$0xf] %vm278, 0
        %vm280 = vcmask 404744
        %281 = vst.msk [vmem:[#allocation2 + $0x10] sm:$0xf] %vm280, 0
        %vm282 = vcmask 265352
        %283 = vst.msk [vmem:[#allocation2 + $0x8] sm:$0xf] %vm282, 0
        %v284 = vld [vmem:[%s238] sm:$0xff]
        %v285 = vld [vmem:[%s238 + $0x8] sm:$0xff]
        %v286 = vpack.c.bf16 %v284, %v284
        %v287 = vpack.c.bf16 %v285, %v285
        %v290 = vunpack.c.l.b16 %v286
        %v291 = vunpack.c.l.b16 %v287
        %v292 = vpack.c.b16 %v291, %v290
        %293 = vrot.lane.b32.xlu0 %v292, 17
        %v294 = vpop.permute.xlu0 %293
        %v295 = vrot.slane %v294, 4
        %vm296 = vcmask 138240
        %v297 = vsel %vm296, %v295, %v294
        %vm300 = vcmask 1043592
        %vm301 = vcmask 1047556
        %vm302 = vmor %vm301, %vm300
        %303 = vst.msk [vmem:[#allocation2] sm:$0xff] %vm302, %v297
        %304 = vst.msk [vmem:[#allocation2 + $0x8] sm:$0xf] %vm278, %v295
        %s305 = scalar_lea.vmem %s238, 16 [#allocation3]
        %v306 = vld [vmem:[%s305] sm:$0xff]
        %v307 = vld [vmem:[%s305 + $0x8] sm:$0xff]
        %v308 = vpack.c.bf16 %v306, %v306
        %v309 = vpack.c.bf16 %v307, %v307
        %v312 = vunpack.c.l.b16 %v308
        %v313 = vunpack.c.l.b16 %v309
        %v314 = vpack.c.b16 %v313, %v312
        %315 = vrot.lane.b32.xlu0 %v314, 33
        %v316 = vpop.permute.xlu0 %315
        %v317 = vrot.slane %v316, 4
        %vm318 = vcmask 269312
        %v319 = vsel %vm318, %v317, %v316
        %vm322 = vcmask 1043720
        %vm323 = vmor %vm301, %vm322
        %324 = vst.msk [vmem:[#allocation2 + $0x8] sm:$0xff] %vm323, %v319
        %vm325 = vcmask 265216
        %326 = vst.msk [vmem:[#allocation2 + $0x10] sm:$0xf] %vm325, %v317
        %v327 = vlaneseq
        %v328 = vand.u32 %v327, 127
        %v329 = vadd.s32 %v328, 128
        %v330 = vadd.s32 %v328, 256
        %v331 = vadd.s32 %v328, 384
        %v332 = vadd.s32 %v328, 512
        %vm333 = vcmp.lt.s32.totalorder %v328, 0
        %v334 = vsub.s32 0, %v328
        %v335 = vsel %vm333, %v334, %v328
        %v336 = vshrl.u32 %v335, 4
        %v337 = vand.u32 %v335, 15
        %v338 = vsub.s32 0, %v337
        %v339 = vsel %vm333, %v338, %v337
        %vm340 = vcmp.lt.s32.totalorder %v329, 0
        %v341 = vsub.s32 0, %v329
        %v342 = vsel %vm340, %v341, %v329
        %v343 = vshrl.u32 %v342, 4
        %v344 = vand.u32 %v342, 15
        %v345 = vsub.s32 0, %v344
        %v346 = vsel %vm340, %v345, %v344
        %vm347 = vcmp.lt.s32.totalorder %v330, 0
        %v348 = vsub.s32 0, %v330
        %v349 = vsel %vm347, %v348, %v330
        %v350 = vshrl.u32 %v349, 4
        %v351 = vand.u32 %v349, 15
        %v352 = vsub.s32 0, %v351
        %v353 = vsel %vm347, %v352, %v351
        %vm354 = vcmp.lt.s32.totalorder %v331, 0
        %v355 = vsub.s32 0, %v331
        %v356 = vsel %vm354, %v355, %v331
        %v357 = vshrl.u32 %v356, 4
        %v358 = vand.u32 %v356, 15
        %v359 = vsub.s32 0, %v358
        %v360 = vsel %vm354, %v359, %v358
        %vm361 = vcmp.lt.s32.totalorder %v332, 0
        %v362 = vsub.s32 0, %v332
        %v363 = vsel %vm361, %v362, %v332
        %v364 = vshrl.u32 %v363, 4
        %v365 = vand.u32 %v363, 15
        %v366 = vsub.s32 0, %v365
        %v367 = vsel %vm361, %v366, %v365
        %vm368 = vcmp.ne.s32.totalorder %v339, 0
        %vm369 = vcmp.ne.s32.totalorder %v346, 0
        %vm370 = vcmp.ne.s32.totalorder %v353, 0
        %vm371 = vcmp.ne.s32.totalorder %v360, 0
        %vm372 = vcmp.ne.s32.totalorder %v367, 0
        %vm373 = vcmp.lt.s32.totalorder %v339, 0
        %vm374 = vcmp.lt.s32.totalorder %v346, 0
        %vm375 = vcmp.lt.s32.totalorder %v353, 0
        %vm376 = vcmp.lt.s32.totalorder %v360, 0
        %vm377 = vcmp.lt.s32.totalorder %v367, 0
        %vm378 = vmand %vm373, %vm368
        %vm379 = vmand %vm374, %vm369
        %vm380 = vmand %vm375, %vm370
        %vm381 = vmand %vm376, %vm371
        %vm382 = vmand %vm377, %vm372
        %v383 = vadd.s32 %v339, 16
        %v384 = vadd.s32 %v346, 16
        %v385 = vadd.s32 %v353, 16
        %v386 = vadd.s32 %v360, 16
        %v387 = vadd.s32 %v367, 16
        %v388 = vsel %vm378, %v383, %v339
        %v389 = vsel %vm379, %v384, %v346
        %v390 = vsel %vm380, %v385, %v353
        %v391 = vsel %vm381, %v386, %v360
        %v392 = vsel %vm382, %v387, %v367
        %vm393 = vcmp.ne.s32.totalorder %v388, 0
        %vm394 = vcmp.ne.s32.totalorder %v389, 0
        %vm395 = vcmp.ne.s32.totalorder %v390, 0
        %vm396 = vcmp.ne.s32.totalorder %v391, 0
        %vm397 = vcmp.ne.s32.totalorder %v392, 0
        %vm398 = vcmp.ne.s32.totalorder %v388, 15
        %vm399 = vcmp.ne.s32.totalorder %v389, 15
        %vm400 = vcmp.ne.s32.totalorder %v390, 15
        %vm401 = vcmp.ne.s32.totalorder %v391, 15
        %vm402 = vcmp.ne.s32.totalorder %v392, 15
        %v403 = vld [vmem:[#allocation2] sm:$0xff]
        %v404 = vld [vmem:[#allocation2 + $0x8] sm:$0xff]
        %v405 = vld [vmem:[#allocation2 + $0x10] sm:$0xf]
        %v406 = vsel %vm393, 1, 0
        %v407 = vsel %vm394, 1, 0
        %v408 = vsel %vm395, 1, 0
        %v409 = vsel %vm396, 1, 0
        %v410 = vsel %vm397, 1, 0
        %vm411 = vcmp.eq.s32.totalorder %v406, 1
        %vm412 = vcmp.eq.s32.totalorder %v407, 1
        %vm413 = vcmp.eq.s32.totalorder %v408, 1
        %vm414 = vcmp.eq.s32.totalorder %v409, 1
        %vm415 = vcmp.eq.s32.totalorder %v410, 1
        %vm416 = vmpackc.low %vm412, %vm411
        %vm417 = vmpackc.low %vm414, %vm413
        %vm418 = vmpackc.low %vm415, %vm415
        %v419 = vsel %vm416, %v403, 0
        %v420 = vsel %vm417, %v404, 0
        %v421 = vsel %vm418, %v405, 0
        %v422 = vld [vmem:[#allocation6] sm:$0xf]
        %s423 = scalar_lea.vmem [#allocation6], 4
        %v424 = vld [vmem:[%s423] sm:$0xf]
        %v428 = vunpack.c.l.b16 %v403
        %v429 = vunpack.c.h.b16 %v403
        %v430 = vunpack.c.l.b16 %v404
        %v431 = vunpack.c.h.b16 %v404
        %v432 = vunpack.c.l.b16 %v405
        %v433 = vpack.c.b16 %v428, %v428
        %v434 = vpack.c.b16 %v429, %v429
        %v435 = vpack.c.b16 %v430, %v430
        %v436 = vpack.c.b16 %v431, %v431
        %v437 = vpack.c.b16 %v432, %v432
        %438 = vrot.lane.b32.xlu0 %v433, 127
        %v439 = vpop.permute.xlu0 %438
        %440 = vrot.lane.b32.xlu0 %v434, 127
        %v441 = vpop.permute.xlu0 %440
        %442 = vrot.lane.b32.xlu0 %v435, 127
        %v443 = vpop.permute.xlu0 %442
        %444 = vrot.lane.b32.xlu0 %v436, 127
        %v445 = vpop.permute.xlu0 %444
        %446 = vrot.lane.b32.xlu0 %v437, 127
        %v447 = vpop.permute.xlu0 %446
        %vm448 = vcmask 1039360
        %v449 = vsel %vm448, %v439, %v441
        %v450 = vsel %vm448, %v441, %v443
        %v451 = vsel %vm448, %v443, %v445
        %v452 = vsel %vm448, %v445, %v447
        %vm453 = vcmask 64512
        %v455 = vsel %vm453, %v424, 0
        %vm457 = vcmask 1043456
        %v459 = vsel %vm457, %v449, 0
        %v462 = vsel %vm457, %v450, 0
        %v465 = vsel %vm457, %v451, 0
        %v468 = vsel %vm457, %v452, 0
        %v471 = vsel %vm457, %v447, 0
        %473 = vmatprep.subr.bf16.mxu0 0
        %474 = vmatpush1.bf16.msra.mxu0 0
        %475 = vmatprep.subr.bf16.mxu0 0
        %476 = vmatpush1.bf16.msra.mxu0 0
        %477 = vmatprep.subr.bf16.mxu0 0
        %478 = vmatpush1.bf16.msra.mxu0 0
        %479 = vmatprep.subr.bf16.mxu0 0
        %480 = vmatpush1.bf16.msra.mxu0 0
        %481 = vmatprep.subr.bf16.mxu0 0
        %482 = vmatpush1.bf16.msra.mxu0 0
        %483 = vmatprep.subr.bf16.mxu0 0
        %484 = vmatpush1.bf16.msra.mxu0 0
        %485 = vmatprep.subr.bf16.mxu0 0
        %486 = vmatpush1.bf16.msra.mxu0 0
        %487 = vmatprep.subr.bf16.mxu0 %v462
        %488 = vmatpush1.bf16.msra.mxu0 %v459
        %489 = vmatprep.subr.bf16.mxu0 0
        %490 = vmatpush2.bf16.msra.mxu0 0
        %491 = vmatprep.subr.bf16.mxu0 0
        %492 = vmatpush2.bf16.msra.mxu0 0
        %493 = vmatprep.subr.bf16.mxu0 0
        %494 = vmatpush2.bf16.msra.mxu0 0
        %495 = vmatprep.subr.bf16.mxu0 0
        %496 = vmatpush2.bf16.msra.mxu0 0
        %497 = vmatprep.subr.bf16.mxu0 0
        %498 = vmatpush2.bf16.msra.mxu0 0
        %499 = vmatprep.subr.bf16.mxu0 0
        %500 = vmatpush2.bf16.msra.mxu0 0
        %501 = vmatprep.subr.bf16.mxu0 0
        %502 = vmatpush2.bf16.msra.mxu0 0
        %503 = vmatprep.subr.bf16.mxu0 0
        %504 = vmatpush2.bf16.msra.mxu0 0
        %505 = vmatprep.mubr.bf16.mxu0 0
        %506 = vmatmul.mubr.bf16.gmra.mxu0 %v455
        %v507 = vpop.f32.mrf.mxu0
        %v508 = vadd.f32 0.0, %v507
        %v509 = vpop.f32.mrf.mxu0
        %v510 = vadd.f32 0.0, %v509
        %v511 = vpop.f32.mrf.mxu0
        %v512 = vpop.f32.mrf.mxu0
        %513 = vdwg.mxu0
        %514 = vmatprep.subr.bf16.mxu0 0
        %515 = vmatpush1.bf16.msra.mxu0 0
        %516 = vmatprep.subr.bf16.mxu0 0
        %517 = vmatpush1.bf16.msra.mxu0 0
        %518 = vmatprep.subr.bf16.mxu0 0
        %519 = vmatpush1.bf16.msra.mxu0 0
        %520 = vmatprep.subr.bf16.mxu0 0
        %521 = vmatpush1.bf16.msra.mxu0 0
        %522 = vmatprep.subr.bf16.mxu0 0
        %523 = vmatpush1.bf16.msra.mxu0 0
        %524 = vmatprep.subr.bf16.mxu0 0
        %525 = vmatpush1.bf16.msra.mxu0 0
        %526 = vmatprep.subr.bf16.mxu0 0
        %527 = vmatpush1.bf16.msra.mxu0 0
        %528 = vmatprep.subr.bf16.mxu0 %v468
        %529 = vmatpush1.bf16.msra.mxu0 %v465
        %530 = vmatprep.subr.bf16.mxu0 0
        %531 = vmatpush2.bf16.msra.mxu0 0
        %532 = vmatprep.subr.bf16.mxu0 0
        %533 = vmatpush2.bf16.msra.mxu0 0
        %534 = vmatprep.subr.bf16.mxu0 0
        %535 = vmatpush2.bf16.msra.mxu0 0
        %536 = vmatprep.subr.bf16.mxu0 0
        %537 = vmatpush2.bf16.msra.mxu0 0
        %538 = vmatprep.subr.bf16.mxu0 0
        %539 = vmatpush2.bf16.msra.mxu0 0
        %540 = vmatprep.subr.bf16.mxu0 0
        %541 = vmatpush2.bf16.msra.mxu0 0
        %542 = vmatprep.subr.bf16.mxu0 0
        %543 = vmatpush2.bf16.msra.mxu0 0
        %544 = vmatprep.subr.bf16.mxu0 0
        %545 = vmatpush2.bf16.msra.mxu0 0
        %546 = vmatprep.mubr.bf16.mxu0 0
        %547 = vmatmul.mubr.bf16.gmra.mxu0 %v455
        %v548 = vpop.f32.mrf.mxu0
        %v549 = vadd.f32 0.0, %v548
        %v550 = vpop.f32.mrf.mxu0
        %v551 = vadd.f32 0.0, %v550
        %v552 = vpop.f32.mrf.mxu0
        %v553 = vpop.f32.mrf.mxu0
        %554 = vdwg.mxu0
        %555 = vmatprep.subr.bf16.mxu0 0
        %556 = vmatpush1.bf16.msra.mxu0 0
        %557 = vmatprep.subr.bf16.mxu0 0
        %558 = vmatpush1.bf16.msra.mxu0 0
        %559 = vmatprep.subr.bf16.mxu0 0
        %560 = vmatpush1.bf16.msra.mxu0 0
        %561 = vmatprep.subr.bf16.mxu0 0
        %562 = vmatpush1.bf16.msra.mxu0 0
        %563 = vmatprep.subr.bf16.mxu0 0
        %564 = vmatpush1.bf16.msra.mxu0 0
        %565 = vmatprep.subr.bf16.mxu0 0
        %566 = vmatpush1.bf16.msra.mxu0 0
        %567 = vmatprep.subr.bf16.mxu0 0
        %568 = vmatpush1.bf16.msra.mxu0 0
        %569 = vmatprep.subr.bf16.mxu0 0
        %570 = vmatpush1.bf16.msra.mxu0 %v471
        %571 = vmatprep.subr.bf16.mxu0 0
        %572 = vmatpush2.bf16.msra.mxu0 0
        %573 = vmatprep.subr.bf16.mxu0 0
        %574 = vmatpush2.bf16.msra.mxu0 0
        %575 = vmatprep.subr.bf16.mxu0 0
        %576 = vmatpush2.bf16.msra.mxu0 0
        %577 = vmatprep.subr.bf16.mxu0 0
        %578 = vmatpush2.bf16.msra.mxu0 0
        %579 = vmatprep.subr.bf16.mxu0 0
        %580 = vmatpush2.bf16.msra.mxu0 0
        %581 = vmatprep.subr.bf16.mxu0 0
        %582 = vmatpush2.bf16.msra.mxu0 0
        %583 = vmatprep.subr.bf16.mxu0 0
        %584 = vmatpush2.bf16.msra.mxu0 0
        %585 = vmatprep.subr.bf16.mxu0 0
        %586 = vmatpush2.bf16.msra.mxu0 0
        %587 = vmatprep.mubr.bf16.mxu0 0
        %588 = vmatmul.mubr.bf16.gmra.mxu0 %v455
        %v589 = vpop.f32.mrf.mxu0
        %v590 = vadd.f32 0.0, %v589
        %v591 = vpop.f32.mrf.mxu0
        %v592 = vpop.f32.mrf.mxu0
        %v593 = vpop.f32.mrf.mxu0
        %594 = vdwg.mxu0
        %v598 = vunpack.c.l.b16 %v419
        %v599 = vunpack.c.h.b16 %v419
        %v600 = vunpack.c.l.b16 %v420
        %v601 = vunpack.c.h.b16 %v420
        %v602 = vunpack.c.l.b16 %v421
        %v603 = vpack.c.b16 %v598, %v598
        %v604 = vpack.c.b16 %v599, %v599
        %v605 = vpack.c.b16 %v600, %v600
        %v606 = vpack.c.b16 %v601, %v601
        %v607 = vpack.c.b16 %v602, %v602
        %v609 = vsel %vm453, %v422, 0
        %v612 = vsel %vm457, %v603, 0
        %v615 = vsel %vm457, %v604, 0
        %v618 = vsel %vm457, %v605, 0
        %v621 = vsel %vm457, %v606, 0
        %v624 = vsel %vm457, %v607, 0
        %626 = vmatprep.subr.bf16.mxu0 0
        %627 = vmatpush1.bf16.msra.mxu0 0
        %628 = vmatprep.subr.bf16.mxu0 0
        %629 = vmatpush1.bf16.msra.mxu0 0
        %630 = vmatprep.subr.bf16.mxu0 0
        %631 = vmatpush1.bf16.msra.mxu0 0
        %632 = vmatprep.subr.bf16.mxu0 0
        %633 = vmatpush1.bf16.msra.mxu0 0
        %634 = vmatprep.subr.bf16.mxu0 0
        %635 = vmatpush1.bf16.msra.mxu0 0
        %636 = vmatprep.subr.bf16.mxu0 0
        %637 = vmatpush1.bf16.msra.mxu0 0
        %638 = vmatprep.subr.bf16.mxu0 0
        %639 = vmatpush1.bf16.msra.mxu0 0
        %640 = vmatprep.subr.bf16.mxu0 %v615
        %641 = vmatpush1.bf16.msra.mxu0 %v612
        %642 = vmatprep.subr.bf16.mxu0 0
        %643 = vmatpush2.bf16.msra.mxu0 0
        %644 = vmatprep.subr.bf16.mxu0 0
        %645 = vmatpush2.bf16.msra.mxu0 0
        %646 = vmatprep.subr.bf16.mxu0 0
        %647 = vmatpush2.bf16.msra.mxu0 0
        %648 = vmatprep.subr.bf16.mxu0 0
        %649 = vmatpush2.bf16.msra.mxu0 0
        %650 = vmatprep.subr.bf16.mxu0 0
        %651 = vmatpush2.bf16.msra.mxu0 0
        %652 = vmatprep.subr.bf16.mxu0 0
        %653 = vmatpush2.bf16.msra.mxu0 0
        %654 = vmatprep.subr.bf16.mxu0 0
        %655 = vmatpush2.bf16.msra.mxu0 0
        %656 = vmatprep.subr.bf16.mxu0 0
        %657 = vmatpush2.bf16.msra.mxu0 0
        %658 = vmatprep.mubr.bf16.mxu0 0
        %659 = vmatmul.mubr.bf16.gmra.mxu0 %v609
        %v660 = vpop.f32.mrf.mxu0
        %v661 = vadd.f32 %v508, %v660
        %v662 = vpop.f32.mrf.mxu0
        %v663 = vadd.f32 %v510, %v662
        %v664 = vpop.f32.mrf.mxu0
        %v665 = vpop.f32.mrf.mxu0
        %666 = vdwg.mxu0
        %667 = vmatprep.subr.bf16.mxu0 0
        %668 = vmatpush1.bf16.msra.mxu0 0
        %669 = vmatprep.subr.bf16.mxu0 0
        %670 = vmatpush1.bf16.msra.mxu0 0
        %671 = vmatprep.subr.bf16.mxu0 0
        %672 = vmatpush1.bf16.msra.mxu0 0
        %673 = vmatprep.subr.bf16.mxu0 0
        %674 = vmatpush1.bf16.msra.mxu0 0
        %675 = vmatprep.subr.bf16.mxu0 0
        %676 = vmatpush1.bf16.msra.mxu0 0
        %677 = vmatprep.subr.bf16.mxu0 0
        %678 = vmatpush1.bf16.msra.mxu0 0
        %679 = vmatprep.subr.bf16.mxu0 0
        %680 = vmatpush1.bf16.msra.mxu0 0
        %681 = vmatprep.subr.bf16.mxu0 %v621
        %682 = vmatpush1.bf16.msra.mxu0 %v618
        %683 = vmatprep.subr.bf16.mxu0 0
        %684 = vmatpush2.bf16.msra.mxu0 0
        %685 = vmatprep.subr.bf16.mxu0 0
        %686 = vmatpush2.bf16.msra.mxu0 0
        %687 = vmatprep.subr.bf16.mxu0 0
        %688 = vmatpush2.bf16.msra.mxu0 0
        %689 = vmatprep.subr.bf16.mxu0 0
        %690 = vmatpush2.bf16.msra.mxu0 0
        %691 = vmatprep.subr.bf16.mxu0 0
        %692 = vmatpush2.bf16.msra.mxu0 0
        %693 = vmatprep.subr.bf16.mxu0 0
        %694 = vmatpush2.bf16.msra.mxu0 0
        %695 = vmatprep.subr.bf16.mxu0 0
        %696 = vmatpush2.bf16.msra.mxu0 0
        %697 = vmatprep.subr.bf16.mxu0 0
        %698 = vmatpush2.bf16.msra.mxu0 0
        %699 = vmatprep.mubr.bf16.mxu0 0
        %700 = vmatmul.mubr.bf16.gmra.mxu0 %v609
        %v701 = vpop.f32.mrf.mxu0
        %v702 = vadd.f32 %v549, %v701
        %v703 = vpop.f32.mrf.mxu0
        %v704 = vadd.f32 %v551, %v703
        %v705 = vpop.f32.mrf.mxu0
        %v706 = vpop.f32.mrf.mxu0
        %707 = vdwg.mxu0
        %708 = vmatprep.subr.bf16.mxu0 0
        %709 = vmatpush1.bf16.msra.mxu0 0
        %710 = vmatprep.subr.bf16.mxu0 0
        %711 = vmatpush1.bf16.msra.mxu0 0
        %712 = vmatprep.subr.bf16.mxu0 0
        %713 = vmatpush1.bf16.msra.mxu0 0
        %714 = vmatprep.subr.bf16.mxu0 0
        %715 = vmatpush1.bf16.msra.mxu0 0
        %716 = vmatprep.subr.bf16.mxu0 0
        %717 = vmatpush1.bf16.msra.mxu0 0
        %718 = vmatprep.subr.bf16.mxu0 0
        %719 = vmatpush1.bf16.msra.mxu0 0
        %720 = vmatprep.subr.bf16.mxu0 0
        %721 = vmatpush1.bf16.msra.mxu0 0
        %722 = vmatprep.subr.bf16.mxu0 0
        %723 = vmatpush1.bf16.msra.mxu0 %v624
        %724 = vmatprep.subr.bf16.mxu0 0
        %725 = vmatpush2.bf16.msra.mxu0 0
        %726 = vmatprep.subr.bf16.mxu0 0
        %727 = vmatpush2.bf16.msra.mxu0 0
        %728 = vmatprep.subr.bf16.mxu0 0
        %729 = vmatpush2.bf16.msra.mxu0 0
        %730 = vmatprep.subr.bf16.mxu0 0
        %731 = vmatpush2.bf16.msra.mxu0 0
        %732 = vmatprep.subr.bf16.mxu0 0
        %733 = vmatpush2.bf16.msra.mxu0 0
        %734 = vmatprep.subr.bf16.mxu0 0
        %735 = vmatpush2.bf16.msra.mxu0 0
        %736 = vmatprep.subr.bf16.mxu0 0
        %737 = vmatpush2.bf16.msra.mxu0 0
        %738 = vmatprep.subr.bf16.mxu0 0
        %739 = vmatpush2.bf16.msra.mxu0 0
        %740 = vmatprep.mubr.bf16.mxu0 0
        %741 = vmatmul.mubr.bf16.gmra.mxu0 %v609
        %v742 = vpop.f32.mrf.mxu0
        %v743 = vadd.f32 %v590, %v742
        %v744 = vpop.f32.mrf.mxu0
        %v745 = vpop.f32.mrf.mxu0
        %v746 = vpop.f32.mrf.mxu0
        %747 = vdwg.mxu0
        %v748 = vsel %vm398, 1, 0
        %v749 = vsel %vm399, 1, 0
        %v750 = vsel %vm400, 1, 0
        %v751 = vsel %vm401, 1, 0
        %v752 = vsel %vm402, 1, 0
        %vm753 = vcmp.eq.s32.totalorder %v748, 1
        %vm754 = vcmp.eq.s32.totalorder %v749, 1
        %vm755 = vcmp.eq.s32.totalorder %v750, 1
        %vm756 = vcmp.eq.s32.totalorder %v751, 1
        %vm757 = vcmp.eq.s32.totalorder %v752, 1
        %vm758 = vmpackc.low %vm754, %vm753
        %vm759 = vmpackc.low %vm756, %vm755
        %vm760 = vmpackc.low %vm757, %vm757
        %v761 = vsel %vm758, 65537, 0
        %v762 = vsel %vm759, 65537, 0
        %v763 = vsel %vm760, 65537, 0
        %764 = vrot.lane.b32.xlu0 %v761, 2
        %v765 = vpop.permute.xlu0 %764
        %766 = vrot.lane.b32.xlu0 %v762, 2
        %v767 = vpop.permute.xlu0 %766
        %768 = vrot.lane.b32.xlu0 %v763, 2
        %v769 = vpop.permute.xlu0 %768
        %v770 = vrot.slane %v765, 4
        %v771 = vrot.slane %v767, 4
        %vm772 = vcmask 15360
        %v773 = vsel %vm772, %v770, %v765
        %vm774 = vcmask 1043456
        %v775 = vsel %vm774, %v770, %v771
        %v776 = vsel %vm772, %v775, %v767
        %v777 = vsel %vm772, %v771, %v769
        %vm778 = vcmp.ne.s16.totalorder %v773, 0
        %vm779 = vcmp.ne.s16.totalorder %v776, 0
        %vm780 = vcmp.ne.s16.totalorder %v777, 0
        %v781 = vsel %vm778, %v403, 0
        %v782 = vsel %vm779, %v404, 0
        %v783 = vsel %vm780, %v405, 0
        %s784 = scalar_lea.vmem [#allocation6], 8
        %v785 = vld [vmem:[%s784] sm:$0xf]
        %v789 = vunpack.c.l.b16 %v781
        %v790 = vunpack.c.h.b16 %v781
        %v791 = vunpack.c.l.b16 %v782
        %v792 = vunpack.c.h.b16 %v782
        %v793 = vunpack.c.l.b16 %v783
        %v794 = vpack.c.b16 %v789, %v789
        %v795 = vpack.c.b16 %v790, %v790
        %v796 = vpack.c.b16 %v791, %v791
        %v797 = vpack.c.b16 %v792, %v792
        %v798 = vpack.c.b16 %v793, %v793
        %799 = vrot.lane.b32.xlu0 %v794, 126
        %v800 = vpop.permute.xlu0 %799
        %801 = vrot.lane.b32.xlu0 %v795, 126
        %v802 = vpop.permute.xlu0 %801
        %803 = vrot.lane.b32.xlu0 %v796, 126
        %v804 = vpop.permute.xlu0 %803
        %805 = vrot.lane.b32.xlu0 %v797, 126
        %v806 = vpop.permute.xlu0 %805
        %807 = vrot.lane.b32.xlu0 %v798, 126
        %v808 = vpop.permute.xlu0 %807
        %vm809 = vcmask 1031168
        %v810 = vsel %vm809, %v800, %v802
        %v811 = vsel %vm809, %v802, %v804
        %v812 = vsel %vm809, %v804, %v806
        %v813 = vsel %vm809, %v806, %v808
        %v815 = vsel %vm453, %v785, 0
        %v818 = vsel %vm457, %v810, 0
        %v821 = vsel %vm457, %v811, 0
        %v824 = vsel %vm457, %v812, 0
        %v827 = vsel %vm457, %v813, 0
        %v830 = vsel %vm457, %v808, 0
        %832 = vmatprep.subr.bf16.mxu0 0
        %833 = vmatpush1.bf16.msra.mxu0 0
        %834 = vmatprep.subr.bf16.mxu0 0
        %835 = vmatpush1.bf16.msra.mxu0 0
        %836 = vmatprep.subr.bf16.mxu0 0
        %837 = vmatpush1.bf16.msra.mxu0 0
        %838 = vmatprep.subr.bf16.mxu0 0
        %839 = vmatpush1.bf16.msra.mxu0 0
        %840 = vmatprep.subr.bf16.mxu0 0
        %841 = vmatpush1.bf16.msra.mxu0 0
        %842 = vmatprep.subr.bf16.mxu0 0
        %843 = vmatpush1.bf16.msra.mxu0 0
        %844 = vmatprep.subr.bf16.mxu0 0
        %845 = vmatpush1.bf16.msra.mxu0 0
        %846 = vmatprep.subr.bf16.mxu0 %v821
        %847 = vmatpush1.bf16.msra.mxu0 %v818
        %848 = vmatprep.subr.bf16.mxu0 0
        %849 = vmatpush2.bf16.msra.mxu0 0
        %850 = vmatprep.subr.bf16.mxu0 0
        %851 = vmatpush2.bf16.msra.mxu0 0
        %852 = vmatprep.subr.bf16.mxu0 0
        %853 = vmatpush2.bf16.msra.mxu0 0
        %854 = vmatprep.subr.bf16.mxu0 0
        %855 = vmatpush2.bf16.msra.mxu0 0
        %856 = vmatprep.subr.bf16.mxu0 0
        %857 = vmatpush2.bf16.msra.mxu0 0
        %858 = vmatprep.subr.bf16.mxu0 0
        %859 = vmatpush2.bf16.msra.mxu0 0
        %860 = vmatprep.subr.bf16.mxu0 0
        %861 = vmatpush2.bf16.msra.mxu0 0
        %862 = vmatprep.subr.bf16.mxu0 0
        %863 = vmatpush2.bf16.msra.mxu0 0
        %864 = vmatprep.mubr.bf16.mxu0 0
        %865 = vmatmul.mubr.bf16.gmra.mxu0 %v815
        %v866 = vpop.f32.mrf.mxu0
        %v867 = vadd.f32 0.0, %v866
        %v868 = vpop.f32.mrf.mxu0
        %v869 = vadd.f32 0.0, %v868
        %v870 = vpop.f32.mrf.mxu0
        %v871 = vpop.f32.mrf.mxu0
        %872 = vdwg.mxu0
        %873 = vmatprep.subr.bf16.mxu0 0
        %874 = vmatpush1.bf16.msra.mxu0 0
        %875 = vmatprep.subr.bf16.mxu0 0
        %876 = vmatpush1.bf16.msra.mxu0 0
        %877 = vmatprep.subr.bf16.mxu0 0
        %878 = vmatpush1.bf16.msra.mxu0 0
        %879 = vmatprep.subr.bf16.mxu0 0
        %880 = vmatpush1.bf16.msra.mxu0 0
        %881 = vmatprep.subr.bf16.mxu0 0
        %882 = vmatpush1.bf16.msra.mxu0 0
        %883 = vmatprep.subr.bf16.mxu0 0
        %884 = vmatpush1.bf16.msra.mxu0 0
        %885 = vmatprep.subr.bf16.mxu0 0
        %886 = vmatpush1.bf16.msra.mxu0 0
        %887 = vmatprep.subr.bf16.mxu0 %v827
        %888 = vmatpush1.bf16.msra.mxu0 %v824
        %889 = vmatprep.subr.bf16.mxu0 0
        %890 = vmatpush2.bf16.msra.mxu0 0
        %891 = vmatprep.subr.bf16.mxu0 0
        %892 = vmatpush2.bf16.msra.mxu0 0
        %893 = vmatprep.subr.bf16.mxu0 0
        %894 = vmatpush2.bf16.msra.mxu0 0
        %895 = vmatprep.subr.bf16.mxu0 0
        %896 = vmatpush2.bf16.msra.mxu0 0
        %897 = vmatprep.subr.bf16.mxu0 0
        %898 = vmatpush2.bf16.msra.mxu0 0
        %899 = vmatprep.subr.bf16.mxu0 0
        %900 = vmatpush2.bf16.msra.mxu0 0
        %901 = vmatprep.subr.bf16.mxu0 0
        %902 = vmatpush2.bf16.msra.mxu0 0
        %903 = vmatprep.subr.bf16.mxu0 0
        %904 = vmatpush2.bf16.msra.mxu0 0
        %905 = vmatprep.mubr.bf16.mxu0 0
        %906 = vmatmul.mubr.bf16.gmra.mxu0 %v815
        %v907 = vpop.f32.mrf.mxu0
        %v908 = vadd.f32 0.0, %v907
        %v909 = vpop.f32.mrf.mxu0
        %v910 = vadd.f32 0.0, %v909
        %v911 = vpop.f32.mrf.mxu0
        %v912 = vpop.f32.mrf.mxu0
        %913 = vdwg.mxu0
        %914 = vmatprep.subr.bf16.mxu0 0
        %915 = vmatpush1.bf16.msra.mxu0 0
        %916 = vmatprep.subr.bf16.mxu0 0
        %917 = vmatpush1.bf16.msra.mxu0 0
        %918 = vmatprep.subr.bf16.mxu0 0
        %919 = vmatpush1.bf16.msra.mxu0 0
        %920 = vmatprep.subr.bf16.mxu0 0
        %921 = vmatpush1.bf16.msra.mxu0 0
        %922 = vmatprep.subr.bf16.mxu0 0
        %923 = vmatpush1.bf16.msra.mxu0 0
        %924 = vmatprep.subr.bf16.mxu0 0
        %925 = vmatpush1.bf16.msra.mxu0 0
        %926 = vmatprep.subr.bf16.mxu0 0
        %927 = vmatpush1.bf16.msra.mxu0 0
        %928 = vmatprep.subr.bf16.mxu0 0
        %929 = vmatpush1.bf16.msra.mxu0 %v830
        %930 = vmatprep.subr.bf16.mxu0 0
        %931 = vmatpush2.bf16.msra.mxu0 0
        %932 = vmatprep.subr.bf16.mxu0 0
        %933 = vmatpush2.bf16.msra.mxu0 0
        %934 = vmatprep.subr.bf16.mxu0 0
        %935 = vmatpush2.bf16.msra.mxu0 0
        %936 = vmatprep.subr.bf16.mxu0 0
        %937 = vmatpush2.bf16.msra.mxu0 0
        %938 = vmatprep.subr.bf16.mxu0 0
        %939 = vmatpush2.bf16.msra.mxu0 0
        %940 = vmatprep.subr.bf16.mxu0 0
        %941 = vmatpush2.bf16.msra.mxu0 0
        %942 = vmatprep.subr.bf16.mxu0 0
        %943 = vmatpush2.bf16.msra.mxu0 0
        %944 = vmatprep.subr.bf16.mxu0 0
        %945 = vmatpush2.bf16.msra.mxu0 0
        %946 = vmatprep.mubr.bf16.mxu0 0
        %947 = vmatmul.mubr.bf16.gmra.mxu0 %v815
        %v948 = vpop.f32.mrf.mxu0
        %v949 = vadd.f32 0.0, %v948
        %v950 = vpop.f32.mrf.mxu0
        %v951 = vpop.f32.mrf.mxu0
        %v952 = vpop.f32.mrf.mxu0
        %953 = vdwg.mxu0
        %v954 = vadd.f32 %v661, %v867
        %v955 = vadd.f32 %v663, %v869
        %v956 = vadd.f32 %v702, %v908
        %v957 = vadd.f32 %v704, %v910
        %v958 = vadd.f32 %v743, %v949
        %v959 = vsel %vm416, 65537, 0
        %v960 = vsel %vm417, 65537, 0
        %v961 = vsel %vm418, 65537, 0
        %962 = vrot.lane.b32.xlu0 %v959, 16
        %v963 = vpop.permute.xlu0 %962
        %964 = vrot.lane.b32.xlu0 %v960, 16
        %v965 = vpop.permute.xlu0 %964
        %966 = vrot.lane.b32.xlu0 %v961, 16
        %v967 = vpop.permute.xlu0 %966
        %v968 = vrot.slane %v963, 4
        %v969 = vrot.slane %v965, 4
        %vm970 = vcmask 130048
        %v971 = vsel %vm970, %v968, %v963
        %v972 = vsel %vm774, %v968, %v969
        %v973 = vsel %vm970, %v972, %v965
        %v974 = vsel %vm970, %v969, %v967
        %vm975 = vcmp.ne.s16.totalorder %v971, 0
        %vm976 = vcmp.ne.s16.totalorder %v973, 0
        %vm977 = vcmp.ne.s16.totalorder %v974, 0
        %v978 = vsel %vm975, %v403, 0
        %v979 = vsel %vm976, %v404, 0
        %v980 = vsel %vm977, %v405, 0
        %s981 = scalar_lea.vmem [#allocation6], 12
        %v982 = vld [vmem:[%s981] sm:$0xf]
        %v986 = vunpack.c.l.b16 %v978
        %v987 = vunpack.c.h.b16 %v978
        %v988 = vunpack.c.l.b16 %v979
        %v989 = vunpack.c.h.b16 %v979
        %v990 = vunpack.c.l.b16 %v980
        %v991 = vpack.c.b16 %v986, %v986
        %v992 = vpack.c.b16 %v987, %v987
        %v993 = vpack.c.b16 %v988, %v988
        %v994 = vpack.c.b16 %v989, %v989
        %v995 = vpack.c.b16 %v990, %v990
        %996 = vrot.lane.b32.xlu0 %v991, 112
        %v997 = vpop.permute.xlu0 %996
        %998 = vrot.lane.b32.xlu0 %v992, 112
        %v999 = vpop.permute.xlu0 %998
        %1000 = vrot.lane.b32.xlu0 %v993, 112
        %v1001 = vpop.permute.xlu0 %1000
        %1002 = vrot.lane.b32.xlu0 %v994, 112
        %v1003 = vpop.permute.xlu0 %1002
        %1004 = vrot.lane.b32.xlu0 %v995, 112
        %v1005 = vpop.permute.xlu0 %1004
        %vm1006 = vcmask 916480
        %v1007 = vsel %vm1006, %v997, %v999
        %v1008 = vsel %vm1006, %v999, %v1001
        %v1009 = vsel %vm1006, %v1001, %v1003
        %v1010 = vsel %vm1006, %v1003, %v1005
        %v1012 = vsel %vm453, %v982, 0
        %v1015 = vsel %vm457, %v1007, 0
        %v1018 = vsel %vm457, %v1008, 0
        %v1021 = vsel %vm457, %v1009, 0
        %v1024 = vsel %vm457, %v1010, 0
        %v1027 = vsel %vm457, %v1005, 0
        %1029 = vmatprep.subr.bf16.mxu0 0
        %1030 = vmatpush1.bf16.msra.mxu0 0
        %1031 = vmatprep.subr.bf16.mxu0 0
        %1032 = vmatpush1.bf16.msra.mxu0 0
        %1033 = vmatprep.subr.bf16.mxu0 0
        %1034 = vmatpush1.bf16.msra.mxu0 0
        %1035 = vmatprep.subr.bf16.mxu0 0
        %1036 = vmatpush1.bf16.msra.mxu0 0
        %1037 = vmatprep.subr.bf16.mxu0 0
        %1038 = vmatpush1.bf16.msra.mxu0 0
        %1039 = vmatprep.subr.bf16.mxu0 0
        %1040 = vmatpush1.bf16.msra.mxu0 0
        %1041 = vmatprep.subr.bf16.mxu0 0
        %1042 = vmatpush1.bf16.msra.mxu0 0
        %1043 = vmatprep.subr.bf16.mxu0 %v1018
        %1044 = vmatpush1.bf16.msra.mxu0 %v1015
        %1045 = vmatprep.subr.bf16.mxu0 0
        %1046 = vmatpush2.bf16.msra.mxu0 0
        %1047 = vmatprep.subr.bf16.mxu0 0
        %1048 = vmatpush2.bf16.msra.mxu0 0
        %1049 = vmatprep.subr.bf16.mxu0 0
        %1050 = vmatpush2.bf16.msra.mxu0 0
        %1051 = vmatprep.subr.bf16.mxu0 0
        %1052 = vmatpush2.bf16.msra.mxu0 0
        %1053 = vmatprep.subr.bf16.mxu0 0
        %1054 = vmatpush2.bf16.msra.mxu0 0
        %1055 = vmatprep.subr.bf16.mxu0 0
        %1056 = vmatpush2.bf16.msra.mxu0 0
        %1057 = vmatprep.subr.bf16.mxu0 0
        %1058 = vmatpush2.bf16.msra.mxu0 0
        %1059 = vmatprep.subr.bf16.mxu0 0
        %1060 = vmatpush2.bf16.msra.mxu0 0
        %1061 = vmatprep.mubr.bf16.mxu0 0
        %1062 = vmatmul.mubr.bf16.gmra.mxu0 %v1012
        %v1063 = vpop.f32.mrf.mxu0
        %v1064 = vadd.f32 0.0, %v1063
        %v1065 = vpop.f32.mrf.mxu0
        %v1066 = vadd.f32 0.0, %v1065
        %v1067 = vpop.f32.mrf.mxu0
        %v1068 = vpop.f32.mrf.mxu0
        %1069 = vdwg.mxu0
        %1070 = vmatprep.subr.bf16.mxu0 0
        %1071 = vmatpush1.bf16.msra.mxu0 0
        %1072 = vmatprep.subr.bf16.mxu0 0
        %1073 = vmatpush1.bf16.msra.mxu0 0
        %1074 = vmatprep.subr.bf16.mxu0 0
        %1075 = vmatpush1.bf16.msra.mxu0 0
        %1076 = vmatprep.subr.bf16.mxu0 0
        %1077 = vmatpush1.bf16.msra.mxu0 0
        %1078 = vmatprep.subr.bf16.mxu0 0
        %1079 = vmatpush1.bf16.msra.mxu0 0
        %1080 = vmatprep.subr.bf16.mxu0 0
        %1081 = vmatpush1.bf16.msra.mxu0 0
        %1082 = vmatprep.subr.bf16.mxu0 0
        %1083 = vmatpush1.bf16.msra.mxu0 0
        %1084 = vmatprep.subr.bf16.mxu0 %v1024
        %1085 = vmatpush1.bf16.msra.mxu0 %v1021
        %1086 = vmatprep.subr.bf16.mxu0 0
        %1087 = vmatpush2.bf16.msra.mxu0 0
        %1088 = vmatprep.subr.bf16.mxu0 0
        %1089 = vmatpush2.bf16.msra.mxu0 0
        %1090 = vmatprep.subr.bf16.mxu0 0
        %1091 = vmatpush2.bf16.msra.mxu0 0
        %1092 = vmatprep.subr.bf16.mxu0 0
        %1093 = vmatpush2.bf16.msra.mxu0 0
        %1094 = vmatprep.subr.bf16.mxu0 0
        %1095 = vmatpush2.bf16.msra.mxu0 0
        %1096 = vmatprep.subr.bf16.mxu0 0
        %1097 = vmatpush2.bf16.msra.mxu0 0
        %1098 = vmatprep.subr.bf16.mxu0 0
        %1099 = vmatpush2.bf16.msra.mxu0 0
        %1100 = vmatprep.subr.bf16.mxu0 0
        %1101 = vmatpush2.bf16.msra.mxu0 0
        %1102 = vmatprep.mubr.bf16.mxu0 0
        %1103 = vmatmul.mubr.bf16.gmra.mxu0 %v1012
        %v1104 = vpop.f32.mrf.mxu0
        %v1105 = vadd.f32 0.0, %v1104
        %v1106 = vpop.f32.mrf.mxu0
        %v1107 = vadd.f32 0.0, %v1106
        %v1108 = vpop.f32.mrf.mxu0
        %v1109 = vpop.f32.mrf.mxu0
        %1110 = vdwg.mxu0
        %1111 = vmatprep.subr.bf16.mxu0 0
        %1112 = vmatpush1.bf16.msra.mxu0 0
        %1113 = vmatprep.subr.bf16.mxu0 0
        %1114 = vmatpush1.bf16.msra.mxu0 0
        %1115 = vmatprep.subr.bf16.mxu0 0
        %1116 = vmatpush1.bf16.msra.mxu0 0
        %1117 = vmatprep.subr.bf16.mxu0 0
        %1118 = vmatpush1.bf16.msra.mxu0 0
        %1119 = vmatprep.subr.bf16.mxu0 0
        %1120 = vmatpush1.bf16.msra.mxu0 0
        %1121 = vmatprep.subr.bf16.mxu0 0
        %1122 = vmatpush1.bf16.msra.mxu0 0
        %1123 = vmatprep.subr.bf16.mxu0 0
        %1124 = vmatpush1.bf16.msra.mxu0 0
        %1125 = vmatprep.subr.bf16.mxu0 0
        %1126 = vmatpush1.bf16.msra.mxu0 %v1027
        %1127 = vmatprep.subr.bf16.mxu0 0
        %1128 = vmatpush2.bf16.msra.mxu0 0
        %1129 = vmatprep.subr.bf16.mxu0 0
        %1130 = vmatpush2.bf16.msra.mxu0 0
        %1131 = vmatprep.subr.bf16.mxu0 0
        %1132 = vmatpush2.bf16.msra.mxu0 0
        %1133 = vmatprep.subr.bf16.mxu0 0
        %1134 = vmatpush2.bf16.msra.mxu0 0
        %1135 = vmatprep.subr.bf16.mxu0 0
        %1136 = vmatpush2.bf16.msra.mxu0 0
        %1137 = vmatprep.subr.bf16.mxu0 0
        %1138 = vmatpush2.bf16.msra.mxu0 0
        %1139 = vmatprep.subr.bf16.mxu0 0
        %1140 = vmatpush2.bf16.msra.mxu0 0
        %1141 = vmatprep.subr.bf16.mxu0 0
        %1142 = vmatpush2.bf16.msra.mxu0 0
        %1143 = vmatprep.mubr.bf16.mxu0 0
        %1144 = vmatmul.mubr.bf16.gmra.mxu0 %v1012
        %v1145 = vpop.f32.mrf.mxu0
        %v1146 = vadd.f32 0.0, %v1145
        %v1147 = vpop.f32.mrf.mxu0
        %v1148 = vpop.f32.mrf.mxu0
        %v1149 = vpop.f32.mrf.mxu0
        %1150 = vdwg.mxu0
        %v1151 = vadd.f32 %v954, %v1064
        %v1152 = vadd.f32 %v955, %v1066
        %v1153 = vadd.f32 %v956, %v1105
        %v1154 = vadd.f32 %v957, %v1107
        %v1155 = vadd.f32 %v958, %v1146
        %s1156 = scalar_lea.vmem [#allocation6], 16
        %v1157 = vld [vmem:[%s1156] sm:$0xf]
        %1158 = vrot.lane.b32.xlu0 %v433, 111
        %v1159 = vpop.permute.xlu0 %1158
        %1160 = vrot.lane.b32.xlu0 %v434, 111
        %v1161 = vpop.permute.xlu0 %1160
        %1162 = vrot.lane.b32.xlu0 %v435, 111
        %v1163 = vpop.permute.xlu0 %1162
        %1164 = vrot.lane.b32.xlu0 %v436, 111
        %v1165 = vpop.permute.xlu0 %1164
        %1166 = vrot.lane.b32.xlu0 %v437, 111
        %v1167 = vpop.permute.xlu0 %1166
        %vm1168 = vcmask 908288
        %v1169 = vsel %vm1168, %v1159, %v1161
        %v1170 = vsel %vm1168, %v1161, %v1163
        %v1171 = vsel %vm1168, %v1163, %v1165
        %v1172 = vsel %vm1168, %v1165, %v1167
        %v1174 = vsel %vm453, %v1157, 0
        %v1177 = vsel %vm457, %v1169, 0
        %v1180 = vsel %vm457, %v1170, 0
        %v1183 = vsel %vm457, %v1171, 0
        %v1186 = vsel %vm457, %v1172, 0
        %v1189 = vsel %vm457, %v1167, 0
        %1191 = vmatprep.subr.bf16.mxu0 0
        %1192 = vmatpush1.bf16.msra.mxu0 0
        %1193 = vmatprep.subr.bf16.mxu0 0
        %1194 = vmatpush1.bf16.msra.mxu0 0
        %1195 = vmatprep.subr.bf16.mxu0 0
        %1196 = vmatpush1.bf16.msra.mxu0 0
        %1197 = vmatprep.subr.bf16.mxu0 0
        %1198 = vmatpush1.bf16.msra.mxu0 0
        %1199 = vmatprep.subr.bf16.mxu0 0
        %1200 = vmatpush1.bf16.msra.mxu0 0
        %1201 = vmatprep.subr.bf16.mxu0 0
        %1202 = vmatpush1.bf16.msra.mxu0 0
        %1203 = vmatprep.subr.bf16.mxu0 0
        %1204 = vmatpush1.bf16.msra.mxu0 0
        %1205 = vmatprep.subr.bf16.mxu0 %v1180
        %1206 = vmatpush1.bf16.msra.mxu0 %v1177
        %1207 = vmatprep.subr.bf16.mxu0 0
        %1208 = vmatpush2.bf16.msra.mxu0 0
        %1209 = vmatprep.subr.bf16.mxu0 0
        %1210 = vmatpush2.bf16.msra.mxu0 0
        %1211 = vmatprep.subr.bf16.mxu0 0
        %1212 = vmatpush2.bf16.msra.mxu0 0
        %1213 = vmatprep.subr.bf16.mxu0 0
        %1214 = vmatpush2.bf16.msra.mxu0 0
        %1215 = vmatprep.subr.bf16.mxu0 0
        %1216 = vmatpush2.bf16.msra.mxu0 0
        %1217 = vmatprep.subr.bf16.mxu0 0
        %1218 = vmatpush2.bf16.msra.mxu0 0
        %1219 = vmatprep.subr.bf16.mxu0 0
        %1220 = vmatpush2.bf16.msra.mxu0 0
        %1221 = vmatprep.subr.bf16.mxu0 0
        %1222 = vmatpush2.bf16.msra.mxu0 0
        %1223 = vmatprep.mubr.bf16.mxu0 0
        %1224 = vmatmul.mubr.bf16.gmra.mxu0 %v1174
        %v1225 = vpop.f32.mrf.mxu0
        %v1226 = vadd.f32 0.0, %v1225
        %v1227 = vpop.f32.mrf.mxu0
        %v1228 = vadd.f32 0.0, %v1227
        %v1229 = vpop.f32.mrf.mxu0
        %v1230 = vpop.f32.mrf.mxu0
        %1231 = vdwg.mxu0
        %1232 = vmatprep.subr.bf16.mxu0 0
        %1233 = vmatpush1.bf16.msra.mxu0 0
        %1234 = vmatprep.subr.bf16.mxu0 0
        %1235 = vmatpush1.bf16.msra.mxu0 0
        %1236 = vmatprep.subr.bf16.mxu0 0
        %1237 = vmatpush1.bf16.msra.mxu0 0
        %1238 = vmatprep.subr.bf16.mxu0 0
        %1239 = vmatpush1.bf16.msra.mxu0 0
        %1240 = vmatprep.subr.bf16.mxu0 0
        %1241 = vmatpush1.bf16.msra.mxu0 0
        %1242 = vmatprep.subr.bf16.mxu0 0
        %1243 = vmatpush1.bf16.msra.mxu0 0
        %1244 = vmatprep.subr.bf16.mxu0 0
        %1245 = vmatpush1.bf16.msra.mxu0 0
        %1246 = vmatprep.subr.bf16.mxu0 %v1186
        %1247 = vmatpush1.bf16.msra.mxu0 %v1183
        %1248 = vmatprep.subr.bf16.mxu0 0
        %1249 = vmatpush2.bf16.msra.mxu0 0
        %1250 = vmatprep.subr.bf16.mxu0 0
        %1251 = vmatpush2.bf16.msra.mxu0 0
        %1252 = vmatprep.subr.bf16.mxu0 0
        %1253 = vmatpush2.bf16.msra.mxu0 0
        %1254 = vmatprep.subr.bf16.mxu0 0
        %1255 = vmatpush2.bf16.msra.mxu0 0
        %1256 = vmatprep.subr.bf16.mxu0 0
        %1257 = vmatpush2.bf16.msra.mxu0 0
        %1258 = vmatprep.subr.bf16.mxu0 0
        %1259 = vmatpush2.bf16.msra.mxu0 0
        %1260 = vmatprep.subr.bf16.mxu0 0
        %1261 = vmatpush2.bf16.msra.mxu0 0
        %1262 = vmatprep.subr.bf16.mxu0 0
        %1263 = vmatpush2.bf16.msra.mxu0 0
        %1264 = vmatprep.mubr.bf16.mxu0 0
        %1265 = vmatmul.mubr.bf16.gmra.mxu0 %v1174
        %v1266 = vpop.f32.mrf.mxu0
        %v1267 = vadd.f32 0.0, %v1266
        %v1268 = vpop.f32.mrf.mxu0
        %v1269 = vadd.f32 0.0, %v1268
        %v1270 = vpop.f32.mrf.mxu0
        %v1271 = vpop.f32.mrf.mxu0
        %1272 = vdwg.mxu0
        %1273 = vmatprep.subr.bf16.mxu0 0
        %1274 = vmatpush1.bf16.msra.mxu0 0
        %1275 = vmatprep.subr.bf16.mxu0 0
        %1276 = vmatpush1.bf16.msra.mxu0 0
        %1277 = vmatprep.subr.bf16.mxu0 0
        %1278 = vmatpush1.bf16.msra.mxu0 0
        %1279 = vmatprep.subr.bf16.mxu0 0
        %1280 = vmatpush1.bf16.msra.mxu0 0
        %1281 = vmatprep.subr.bf16.mxu0 0
        %1282 = vmatpush1.bf16.msra.mxu0 0
        %1283 = vmatprep.subr.bf16.mxu0 0
        %1284 = vmatpush1.bf16.msra.mxu0 0
        %1285 = vmatprep.subr.bf16.mxu0 0
        %1286 = vmatpush1.bf16.msra.mxu0 0
        %1287 = vmatprep.subr.bf16.mxu0 0
        %1288 = vmatpush1.bf16.msra.mxu0 %v1189
        %1289 = vmatprep.subr.bf16.mxu0 0
        %1290 = vmatpush2.bf16.msra.mxu0 0
        %1291 = vmatprep.subr.bf16.mxu0 0
        %1292 = vmatpush2.bf16.msra.mxu0 0
        %1293 = vmatprep.subr.bf16.mxu0 0
        %1294 = vmatpush2.bf16.msra.mxu0 0
        %1295 = vmatprep.subr.bf16.mxu0 0
        %1296 = vmatpush2.bf16.msra.mxu0 0
        %1297 = vmatprep.subr.bf16.mxu0 0
        %1298 = vmatpush2.bf16.msra.mxu0 0
        %1299 = vmatprep.subr.bf16.mxu0 0
        %1300 = vmatpush2.bf16.msra.mxu0 0
        %1301 = vmatprep.subr.bf16.mxu0 0
        %1302 = vmatpush2.bf16.msra.mxu0 0
        %1303 = vmatprep.subr.bf16.mxu0 0
        %1304 = vmatpush2.bf16.msra.mxu0 0
        %1305 = vmatprep.mubr.bf16.mxu0 0
        %1306 = vmatmul.mubr.bf16.gmra.mxu0 %v1174
        %v1307 = vpop.f32.mrf.mxu0
        %v1308 = vadd.f32 0.0, %v1307
        %v1309 = vpop.f32.mrf.mxu0
        %v1310 = vpop.f32.mrf.mxu0
        %v1311 = vpop.f32.mrf.mxu0
        %1312 = vdwg.mxu0
        %v1313 = vadd.f32 %v1151, %v1226
        %v1314 = vadd.f32 %v1152, %v1228
        %v1315 = vadd.f32 %v1153, %v1267
        %v1316 = vadd.f32 %v1154, %v1269
        %v1317 = vadd.f32 %v1155, %v1308
        %1318 = vrot.lane.b32.xlu0 %v761, 18
        %v1319 = vpop.permute.xlu0 %1318
        %1320 = vrot.lane.b32.xlu0 %v762, 18
        %v1321 = vpop.permute.xlu0 %1320
        %1322 = vrot.lane.b32.xlu0 %v763, 18
        %v1323 = vpop.permute.xlu0 %1322
        %v1324 = vrot.slane %v1319, 4
        %v1325 = vrot.slane %v1321, 4
        %vm1326 = vcmask 146432
        %v1327 = vsel %vm1326, %v1324, %v1319
        %v1328 = vsel %vm774, %v1324, %v1325
        %v1329 = vsel %vm1326, %v1328, %v1321
        %v1330 = vsel %vm1326, %v1325, %v1323
        %vm1331 = vcmp.ne.s16.totalorder %v1327, 0
        %vm1332 = vcmp.ne.s16.totalorder %v1329, 0
        %vm1333 = vcmp.ne.s16.totalorder %v1330, 0
        %v1334 = vsel %vm1331, %v403, 0
        %v1335 = vsel %vm1332, %v404, 0
        %v1336 = vsel %vm1333, %v405, 0
        %s1337 = scalar_lea.vmem [#allocation6], 20
        %v1338 = vld [vmem:[%s1337] sm:$0xf]
        %v1342 = vunpack.c.l.b16 %v1334
        %v1343 = vunpack.c.h.b16 %v1334
        %v1344 = vunpack.c.l.b16 %v1335
        %v1345 = vunpack.c.h.b16 %v1335
        %v1346 = vunpack.c.l.b16 %v1336
        %v1347 = vpack.c.b16 %v1342, %v1342
        %v1348 = vpack.c.b16 %v1343, %v1343
        %v1349 = vpack.c.b16 %v1344, %v1344
        %v1350 = vpack.c.b16 %v1345, %v1345
        %v1351 = vpack.c.b16 %v1346, %v1346
        %1352 = vrot.lane.b32.xlu0 %v1347, 110
        %v1353 = vpop.permute.xlu0 %1352
        %1354 = vrot.lane.b32.xlu0 %v1348, 110
        %v1355 = vpop.permute.xlu0 %1354
        %1356 = vrot.lane.b32.xlu0 %v1349, 110
        %v1357 = vpop.permute.xlu0 %1356
        %1358 = vrot.lane.b32.xlu0 %v1350, 110
        %v1359 = vpop.permute.xlu0 %1358
        %1360 = vrot.lane.b32.xlu0 %v1351, 110
        %v1361 = vpop.permute.xlu0 %1360
        %vm1362 = vcmask 900096
        %v1363 = vsel %vm1362, %v1353, %v1355
        %v1364 = vsel %vm1362, %v1355, %v1357
        %v1365 = vsel %vm1362, %v1357, %v1359
        %v1366 = vsel %vm1362, %v1359, %v1361
        %v1368 = vsel %vm453, %v1338, 0
        %v1371 = vsel %vm457, %v1363, 0
        %v1374 = vsel %vm457, %v1364, 0
        %v1377 = vsel %vm457, %v1365, 0
        %v1380 = vsel %vm457, %v1366, 0
        %v1383 = vsel %vm457, %v1361, 0
        %1385 = vmatprep.subr.bf16.mxu0 0
        %1386 = vmatpush1.bf16.msra.mxu0 0
        %1387 = vmatprep.subr.bf16.mxu0 0
        %1388 = vmatpush1.bf16.msra.mxu0 0
        %1389 = vmatprep.subr.bf16.mxu0 0
        %1390 = vmatpush1.bf16.msra.mxu0 0
        %1391 = vmatprep.subr.bf16.mxu0 0
        %1392 = vmatpush1.bf16.msra.mxu0 0
        %1393 = vmatprep.subr.bf16.mxu0 0
        %1394 = vmatpush1.bf16.msra.mxu0 0
        %1395 = vmatprep.subr.bf16.mxu0 0
        %1396 = vmatpush1.bf16.msra.mxu0 0
        %1397 = vmatprep.subr.bf16.mxu0 0
        %1398 = vmatpush1.bf16.msra.mxu0 0
        %1399 = vmatprep.subr.bf16.mxu0 %v1374
        %1400 = vmatpush1.bf16.msra.mxu0 %v1371
        %1401 = vmatprep.subr.bf16.mxu0 0
        %1402 = vmatpush2.bf16.msra.mxu0 0
        %1403 = vmatprep.subr.bf16.mxu0 0
        %1404 = vmatpush2.bf16.msra.mxu0 0
        %1405 = vmatprep.subr.bf16.mxu0 0
        %1406 = vmatpush2.bf16.msra.mxu0 0
        %1407 = vmatprep.subr.bf16.mxu0 0
        %1408 = vmatpush2.bf16.msra.mxu0 0
        %1409 = vmatprep.subr.bf16.mxu0 0
        %1410 = vmatpush2.bf16.msra.mxu0 0
        %1411 = vmatprep.subr.bf16.mxu0 0
        %1412 = vmatpush2.bf16.msra.mxu0 0
        %1413 = vmatprep.subr.bf16.mxu0 0
        %1414 = vmatpush2.bf16.msra.mxu0 0
        %1415 = vmatprep.subr.bf16.mxu0 0
        %1416 = vmatpush2.bf16.msra.mxu0 0
        %1417 = vmatprep.mubr.bf16.mxu0 0
        %1418 = vmatmul.mubr.bf16.gmra.mxu0 %v1368
        %v1419 = vpop.f32.mrf.mxu0
        %v1420 = vadd.f32 0.0, %v1419
        %v1421 = vpop.f32.mrf.mxu0
        %v1422 = vadd.f32 0.0, %v1421
        %v1423 = vpop.f32.mrf.mxu0
        %v1424 = vpop.f32.mrf.mxu0
        %1425 = vdwg.mxu0
        %1426 = vmatprep.subr.bf16.mxu0 0
        %1427 = vmatpush1.bf16.msra.mxu0 0
        %1428 = vmatprep.subr.bf16.mxu0 0
        %1429 = vmatpush1.bf16.msra.mxu0 0
        %1430 = vmatprep.subr.bf16.mxu0 0
        %1431 = vmatpush1.bf16.msra.mxu0 0
        %1432 = vmatprep.subr.bf16.mxu0 0
        %1433 = vmatpush1.bf16.msra.mxu0 0
        %1434 = vmatprep.subr.bf16.mxu0 0
        %1435 = vmatpush1.bf16.msra.mxu0 0
        %1436 = vmatprep.subr.bf16.mxu0 0
        %1437 = vmatpush1.bf16.msra.mxu0 0
        %1438 = vmatprep.subr.bf16.mxu0 0
        %1439 = vmatpush1.bf16.msra.mxu0 0
        %1440 = vmatprep.subr.bf16.mxu0 %v1380
        %1441 = vmatpush1.bf16.msra.mxu0 %v1377
        %1442 = vmatprep.subr.bf16.mxu0 0
        %1443 = vmatpush2.bf16.msra.mxu0 0
        %1444 = vmatprep.subr.bf16.mxu0 0
        %1445 = vmatpush2.bf16.msra.mxu0 0
        %1446 = vmatprep.subr.bf16.mxu0 0
        %1447 = vmatpush2.bf16.msra.mxu0 0
        %1448 = vmatprep.subr.bf16.mxu0 0
        %1449 = vmatpush2.bf16.msra.mxu0 0
        %1450 = vmatprep.subr.bf16.mxu0 0
        %1451 = vmatpush2.bf16.msra.mxu0 0
        %1452 = vmatprep.subr.bf16.mxu0 0
        %1453 = vmatpush2.bf16.msra.mxu0 0
        %1454 = vmatprep.subr.bf16.mxu0 0
        %1455 = vmatpush2.bf16.msra.mxu0 0
        %1456 = vmatprep.subr.bf16.mxu0 0
        %1457 = vmatpush2.bf16.msra.mxu0 0
        %1458 = vmatprep.mubr.bf16.mxu0 0
        %1459 = vmatmul.mubr.bf16.gmra.mxu0 %v1368
        %v1460 = vpop.f32.mrf.mxu0
        %v1461 = vadd.f32 0.0, %v1460
        %v1462 = vpop.f32.mrf.mxu0
        %v1463 = vadd.f32 0.0, %v1462
        %v1464 = vpop.f32.mrf.mxu0
        %v1465 = vpop.f32.mrf.mxu0
        %1466 = vdwg.mxu0
        %1467 = vmatprep.subr.bf16.mxu0 0
        %1468 = vmatpush1.bf16.msra.mxu0 0
        %1469 = vmatprep.subr.bf16.mxu0 0
        %1470 = vmatpush1.bf16.msra.mxu0 0
        %1471 = vmatprep.subr.bf16.mxu0 0
        %1472 = vmatpush1.bf16.msra.mxu0 0
        %1473 = vmatprep.subr.bf16.mxu0 0
        %1474 = vmatpush1.bf16.msra.mxu0 0
        %1475 = vmatprep.subr.bf16.mxu0 0
        %1476 = vmatpush1.bf16.msra.mxu0 0
        %1477 = vmatprep.subr.bf16.mxu0 0
        %1478 = vmatpush1.bf16.msra.mxu0 0
        %1479 = vmatprep.subr.bf16.mxu0 0
        %1480 = vmatpush1.bf16.msra.mxu0 0
        %1481 = vmatprep.subr.bf16.mxu0 0
        %1482 = vmatpush1.bf16.msra.mxu0 %v1383
        %1483 = vmatprep.subr.bf16.mxu0 0
        %1484 = vmatpush2.bf16.msra.mxu0 0
        %1485 = vmatprep.subr.bf16.mxu0 0
        %1486 = vmatpush2.bf16.msra.mxu0 0
        %1487 = vmatprep.subr.bf16.mxu0 0
        %1488 = vmatpush2.bf16.msra.mxu0 0
        %1489 = vmatprep.subr.bf16.mxu0 0
        %1490 = vmatpush2.bf16.msra.mxu0 0
        %1491 = vmatprep.subr.bf16.mxu0 0
        %1492 = vmatpush2.bf16.msra.mxu0 0
        %1493 = vmatprep.subr.bf16.mxu0 0
        %1494 = vmatpush2.bf16.msra.mxu0 0
        %1495 = vmatprep.subr.bf16.mxu0 0
        %1496 = vmatpush2.bf16.msra.mxu0 0
        %1497 = vmatprep.subr.bf16.mxu0 0
        %1498 = vmatpush2.bf16.msra.mxu0 0
        %1499 = vmatprep.mubr.bf16.mxu0 0
        %1500 = vmatmul.mubr.bf16.gmra.mxu0 %v1368
        %v1501 = vpop.f32.mrf.mxu0
        %v1502 = vadd.f32 0.0, %v1501
        %v1503 = vpop.f32.mrf.mxu0
        %v1504 = vpop.f32.mrf.mxu0
        %v1505 = vpop.f32.mrf.mxu0
        %1506 = vdwg.mxu0
        %v1507 = vadd.f32 %v1313, %v1420
        %v1508 = vadd.f32 %v1314, %v1422
        %v1509 = vadd.f32 %v1315, %v1461
        %v1510 = vadd.f32 %v1316, %v1463
        %v1511 = vadd.f32 %v1317, %v1502
        %1512 = vrot.lane.b32.xlu0 %v959, 32
        %v1513 = vpop.permute.xlu0 %1512
        %1514 = vrot.lane.b32.xlu0 %v960, 32
        %v1515 = vpop.permute.xlu0 %1514
        %1516 = vrot.lane.b32.xlu0 %v961, 32
        %v1517 = vpop.permute.xlu0 %1516
        %v1518 = vrot.slane %v1513, 4
        %v1519 = vrot.slane %v1515, 4
        %vm1520 = vcmask 261120
        %v1521 = vsel %vm1520, %v1518, %v1513
        %v1522 = vsel %vm774, %v1518, %v1519
        %v1523 = vsel %vm1520, %v1522, %v1515
        %v1524 = vsel %vm1520, %v1519, %v1517
        %vm1525 = vcmp.ne.s16.totalorder %v1521, 0
        %vm1526 = vcmp.ne.s16.totalorder %v1523, 0
        %vm1527 = vcmp.ne.s16.totalorder %v1524, 0
        %v1528 = vsel %vm1525, %v403, 0
        %v1529 = vsel %vm1526, %v404, 0
        %v1530 = vsel %vm1527, %v405, 0
        %s1531 = scalar_lea.vmem [#allocation6], 24
        %v1532 = vld [vmem:[%s1531] sm:$0xf]
        %v1536 = vunpack.c.l.b16 %v1528
        %v1537 = vunpack.c.h.b16 %v1528
        %v1538 = vunpack.c.l.b16 %v1529
        %v1539 = vunpack.c.h.b16 %v1529
        %v1540 = vunpack.c.l.b16 %v1530
        %v1541 = vpack.c.b16 %v1536, %v1536
        %v1542 = vpack.c.b16 %v1537, %v1537
        %v1543 = vpack.c.b16 %v1538, %v1538
        %v1544 = vpack.c.b16 %v1539, %v1539
        %v1545 = vpack.c.b16 %v1540, %v1540
        %1546 = vrot.lane.b32.xlu0 %v1541, 96
        %v1547 = vpop.permute.xlu0 %1546
        %1548 = vrot.lane.b32.xlu0 %v1542, 96
        %v1549 = vpop.permute.xlu0 %1548
        %1550 = vrot.lane.b32.xlu0 %v1543, 96
        %v1551 = vpop.permute.xlu0 %1550
        %1552 = vrot.lane.b32.xlu0 %v1544, 96
        %v1553 = vpop.permute.xlu0 %1552
        %1554 = vrot.lane.b32.xlu0 %v1545, 96
        %v1555 = vpop.permute.xlu0 %1554
        %vm1556 = vcmask 785408
        %v1557 = vsel %vm1556, %v1547, %v1549
        %v1558 = vsel %vm1556, %v1549, %v1551
        %v1559 = vsel %vm1556, %v1551, %v1553
        %v1560 = vsel %vm1556, %v1553, %v1555
        %v1562 = vsel %vm453, %v1532, 0
        %v1565 = vsel %vm457, %v1557, 0
        %v1568 = vsel %vm457, %v1558, 0
        %v1571 = vsel %vm457, %v1559, 0
        %v1574 = vsel %vm457, %v1560, 0
        %v1577 = vsel %vm457, %v1555, 0
        %1579 = vmatprep.subr.bf16.mxu0 0
        %1580 = vmatpush1.bf16.msra.mxu0 0
        %1581 = vmatprep.subr.bf16.mxu0 0
        %1582 = vmatpush1.bf16.msra.mxu0 0
        %1583 = vmatprep.subr.bf16.mxu0 0
        %1584 = vmatpush1.bf16.msra.mxu0 0
        %1585 = vmatprep.subr.bf16.mxu0 0
        %1586 = vmatpush1.bf16.msra.mxu0 0
        %1587 = vmatprep.subr.bf16.mxu0 0
        %1588 = vmatpush1.bf16.msra.mxu0 0
        %1589 = vmatprep.subr.bf16.mxu0 0
        %1590 = vmatpush1.bf16.msra.mxu0 0
        %1591 = vmatprep.subr.bf16.mxu0 0
        %1592 = vmatpush1.bf16.msra.mxu0 0
        %1593 = vmatprep.subr.bf16.mxu0 %v1568
        %1594 = vmatpush1.bf16.msra.mxu0 %v1565
        %1595 = vmatprep.subr.bf16.mxu0 0
        %1596 = vmatpush2.bf16.msra.mxu0 0
        %1597 = vmatprep.subr.bf16.mxu0 0
        %1598 = vmatpush2.bf16.msra.mxu0 0
        %1599 = vmatprep.subr.bf16.mxu0 0
        %1600 = vmatpush2.bf16.msra.mxu0 0
        %1601 = vmatprep.subr.bf16.mxu0 0
        %1602 = vmatpush2.bf16.msra.mxu0 0
        %1603 = vmatprep.subr.bf16.mxu0 0
        %1604 = vmatpush2.bf16.msra.mxu0 0
        %1605 = vmatprep.subr.bf16.mxu0 0
        %1606 = vmatpush2.bf16.msra.mxu0 0
        %1607 = vmatprep.subr.bf16.mxu0 0
        %1608 = vmatpush2.bf16.msra.mxu0 0
        %1609 = vmatprep.subr.bf16.mxu0 0
        %1610 = vmatpush2.bf16.msra.mxu0 0
        %1611 = vmatprep.mubr.bf16.mxu0 0
        %1612 = vmatmul.mubr.bf16.gmra.mxu0 %v1562
        %v1613 = vpop.f32.mrf.mxu0
        %v1614 = vadd.f32 0.0, %v1613
        %v1615 = vpop.f32.mrf.mxu0
        %v1616 = vadd.f32 0.0, %v1615
        %v1617 = vpop.f32.mrf.mxu0
        %v1618 = vpop.f32.mrf.mxu0
        %1619 = vdwg.mxu0
        %1620 = vmatprep.subr.bf16.mxu0 0
        %1621 = vmatpush1.bf16.msra.mxu0 0
        %1622 = vmatprep.subr.bf16.mxu0 0
        %1623 = vmatpush1.bf16.msra.mxu0 0
        %1624 = vmatprep.subr.bf16.mxu0 0
        %1625 = vmatpush1.bf16.msra.mxu0 0
        %1626 = vmatprep.subr.bf16.mxu0 0
        %1627 = vmatpush1.bf16.msra.mxu0 0
        %1628 = vmatprep.subr.bf16.mxu0 0
        %1629 = vmatpush1.bf16.msra.mxu0 0
        %1630 = vmatprep.subr.bf16.mxu0 0
        %1631 = vmatpush1.bf16.msra.mxu0 0
        %1632 = vmatprep.subr.bf16.mxu0 0
        %1633 = vmatpush1.bf16.msra.mxu0 0
        %1634 = vmatprep.subr.bf16.mxu0 %v1574
        %1635 = vmatpush1.bf16.msra.mxu0 %v1571
        %1636 = vmatprep.subr.bf16.mxu0 0
        %1637 = vmatpush2.bf16.msra.mxu0 0
        %1638 = vmatprep.subr.bf16.mxu0 0
        %1639 = vmatpush2.bf16.msra.mxu0 0
        %1640 = vmatprep.subr.bf16.mxu0 0
        %1641 = vmatpush2.bf16.msra.mxu0 0
        %1642 = vmatprep.subr.bf16.mxu0 0
        %1643 = vmatpush2.bf16.msra.mxu0 0
        %1644 = vmatprep.subr.bf16.mxu0 0
        %1645 = vmatpush2.bf16.msra.mxu0 0
        %1646 = vmatprep.subr.bf16.mxu0 0
        %1647 = vmatpush2.bf16.msra.mxu0 0
        %1648 = vmatprep.subr.bf16.mxu0 0
        %1649 = vmatpush2.bf16.msra.mxu0 0
        %1650 = vmatprep.subr.bf16.mxu0 0
        %1651 = vmatpush2.bf16.msra.mxu0 0
        %1652 = vmatprep.mubr.bf16.mxu0 0
        %1653 = vmatmul.mubr.bf16.gmra.mxu0 %v1562
        %v1654 = vpop.f32.mrf.mxu0
        %v1655 = vadd.f32 0.0, %v1654
        %v1656 = vpop.f32.mrf.mxu0
        %v1657 = vadd.f32 0.0, %v1656
        %v1658 = vpop.f32.mrf.mxu0
        %v1659 = vpop.f32.mrf.mxu0
        %1660 = vdwg.mxu0
        %1661 = vmatprep.subr.bf16.mxu0 0
        %1662 = vmatpush1.bf16.msra.mxu0 0
        %1663 = vmatprep.subr.bf16.mxu0 0
        %1664 = vmatpush1.bf16.msra.mxu0 0
        %1665 = vmatprep.subr.bf16.mxu0 0
        %1666 = vmatpush1.bf16.msra.mxu0 0
        %1667 = vmatprep.subr.bf16.mxu0 0
        %1668 = vmatpush1.bf16.msra.mxu0 0
        %1669 = vmatprep.subr.bf16.mxu0 0
        %1670 = vmatpush1.bf16.msra.mxu0 0
        %1671 = vmatprep.subr.bf16.mxu0 0
        %1672 = vmatpush1.bf16.msra.mxu0 0
        %1673 = vmatprep.subr.bf16.mxu0 0
        %1674 = vmatpush1.bf16.msra.mxu0 0
        %1675 = vmatprep.subr.bf16.mxu0 0
        %1676 = vmatpush1.bf16.msra.mxu0 %v1577
        %1677 = vmatprep.subr.bf16.mxu0 0
        %1678 = vmatpush2.bf16.msra.mxu0 0
        %1679 = vmatprep.subr.bf16.mxu0 0
        %1680 = vmatpush2.bf16.msra.mxu0 0
        %1681 = vmatprep.subr.bf16.mxu0 0
        %1682 = vmatpush2.bf16.msra.mxu0 0
        %1683 = vmatprep.subr.bf16.mxu0 0
        %1684 = vmatpush2.bf16.msra.mxu0 0
        %1685 = vmatprep.subr.bf16.mxu0 0
        %1686 = vmatpush2.bf16.msra.mxu0 0
        %1687 = vmatprep.subr.bf16.mxu0 0
        %1688 = vmatpush2.bf16.msra.mxu0 0
        %1689 = vmatprep.subr.bf16.mxu0 0
        %1690 = vmatpush2.bf16.msra.mxu0 0
        %1691 = vmatprep.subr.bf16.mxu0 0
        %1692 = vmatpush2.bf16.msra.mxu0 0
        %1693 = vmatprep.mubr.bf16.mxu0 0
        %1694 = vmatmul.mubr.bf16.gmra.mxu0 %v1562
        %v1695 = vpop.f32.mrf.mxu0
        %v1696 = vadd.f32 0.0, %v1695
        %v1697 = vpop.f32.mrf.mxu0
        %v1698 = vpop.f32.mrf.mxu0
        %v1699 = vpop.f32.mrf.mxu0
        %1700 = vdwg.mxu0
        %v1701 = vadd.f32 %v1507, %v1614
        %v1702 = vadd.f32 %v1508, %v1616
        %v1703 = vadd.f32 %v1509, %v1655
        %v1704 = vadd.f32 %v1510, %v1657
        %v1705 = vadd.f32 %v1511, %v1696
        %s1706 = scalar_lea.vmem [#allocation6], 28
        %v1707 = vld [vmem:[%s1706] sm:$0xf]
        %1708 = vrot.lane.b32.xlu0 %v433, 95
        %v1709 = vpop.permute.xlu0 %1708
        %1710 = vrot.lane.b32.xlu0 %v434, 95
        %v1711 = vpop.permute.xlu0 %1710
        %1712 = vrot.lane.b32.xlu0 %v435, 95
        %v1713 = vpop.permute.xlu0 %1712
        %1714 = vrot.lane.b32.xlu0 %v436, 95
        %v1715 = vpop.permute.xlu0 %1714
        %1716 = vrot.lane.b32.xlu0 %v437, 95
        %v1717 = vpop.permute.xlu0 %1716
        %vm1718 = vcmask 777216
        %v1719 = vsel %vm1718, %v1709, %v1711
        %v1720 = vsel %vm1718, %v1711, %v1713
        %v1721 = vsel %vm1718, %v1713, %v1715
        %v1722 = vsel %vm1718, %v1715, %v1717
        %v1724 = vsel %vm453, %v1707, 0
        %v1727 = vsel %vm457, %v1719, 0
        %v1730 = vsel %vm457, %v1720, 0
        %v1733 = vsel %vm457, %v1721, 0
        %v1736 = vsel %vm457, %v1722, 0
        %v1739 = vsel %vm457, %v1717, 0
        %1741 = vmatprep.subr.bf16.mxu0 0
        %1742 = vmatpush1.bf16.msra.mxu0 0
        %1743 = vmatprep.subr.bf16.mxu0 0
        %1744 = vmatpush1.bf16.msra.mxu0 0
        %1745 = vmatprep.subr.bf16.mxu0 0
        %1746 = vmatpush1.bf16.msra.mxu0 0
        %1747 = vmatprep.subr.bf16.mxu0 0
        %1748 = vmatpush1.bf16.msra.mxu0 0
        %1749 = vmatprep.subr.bf16.mxu0 0
        %1750 = vmatpush1.bf16.msra.mxu0 0
        %1751 = vmatprep.subr.bf16.mxu0 0
        %1752 = vmatpush1.bf16.msra.mxu0 0
        %1753 = vmatprep.subr.bf16.mxu0 0
        %1754 = vmatpush1.bf16.msra.mxu0 0
        %1755 = vmatprep.subr.bf16.mxu0 %v1730
        %1756 = vmatpush1.bf16.msra.mxu0 %v1727
        %1757 = vmatprep.subr.bf16.mxu0 0
        %1758 = vmatpush2.bf16.msra.mxu0 0
        %1759 = vmatprep.subr.bf16.mxu0 0
        %1760 = vmatpush2.bf16.msra.mxu0 0
        %1761 = vmatprep.subr.bf16.mxu0 0
        %1762 = vmatpush2.bf16.msra.mxu0 0
        %1763 = vmatprep.subr.bf16.mxu0 0
        %1764 = vmatpush2.bf16.msra.mxu0 0
        %1765 = vmatprep.subr.bf16.mxu0 0
        %1766 = vmatpush2.bf16.msra.mxu0 0
        %1767 = vmatprep.subr.bf16.mxu0 0
        %1768 = vmatpush2.bf16.msra.mxu0 0
        %1769 = vmatprep.subr.bf16.mxu0 0
        %1770 = vmatpush2.bf16.msra.mxu0 0
        %1771 = vmatprep.subr.bf16.mxu0 0
        %1772 = vmatpush2.bf16.msra.mxu0 0
        %1773 = vmatprep.mubr.bf16.mxu0 0
        %1774 = vmatmul.mubr.bf16.gmra.mxu0 %v1724
        %v1775 = vpop.f32.mrf.mxu0
        %v1776 = vadd.f32 0.0, %v1775
        %v1777 = vpop.f32.mrf.mxu0
        %v1778 = vadd.f32 0.0, %v1777
        %v1779 = vpop.f32.mrf.mxu0
        %v1780 = vpop.f32.mrf.mxu0
        %1781 = vdwg.mxu0
        %1782 = vmatprep.subr.bf16.mxu0 0
        %1783 = vmatpush1.bf16.msra.mxu0 0
        %1784 = vmatprep.subr.bf16.mxu0 0
        %1785 = vmatpush1.bf16.msra.mxu0 0
        %1786 = vmatprep.subr.bf16.mxu0 0
        %1787 = vmatpush1.bf16.msra.mxu0 0
        %1788 = vmatprep.subr.bf16.mxu0 0
        %1789 = vmatpush1.bf16.msra.mxu0 0
        %1790 = vmatprep.subr.bf16.mxu0 0
        %1791 = vmatpush1.bf16.msra.mxu0 0
        %1792 = vmatprep.subr.bf16.mxu0 0
        %1793 = vmatpush1.bf16.msra.mxu0 0
        %1794 = vmatprep.subr.bf16.mxu0 0
        %1795 = vmatpush1.bf16.msra.mxu0 0
        %1796 = vmatprep.subr.bf16.mxu0 %v1736
        %1797 = vmatpush1.bf16.msra.mxu0 %v1733
        %1798 = vmatprep.subr.bf16.mxu0 0
        %1799 = vmatpush2.bf16.msra.mxu0 0
        %1800 = vmatprep.subr.bf16.mxu0 0
        %1801 = vmatpush2.bf16.msra.mxu0 0
        %1802 = vmatprep.subr.bf16.mxu0 0
        %1803 = vmatpush2.bf16.msra.mxu0 0
        %1804 = vmatprep.subr.bf16.mxu0 0
        %1805 = vmatpush2.bf16.msra.mxu0 0
        %1806 = vmatprep.subr.bf16.mxu0 0
        %1807 = vmatpush2.bf16.msra.mxu0 0
        %1808 = vmatprep.subr.bf16.mxu0 0
        %1809 = vmatpush2.bf16.msra.mxu0 0
        %1810 = vmatprep.subr.bf16.mxu0 0
        %1811 = vmatpush2.bf16.msra.mxu0 0
        %1812 = vmatprep.subr.bf16.mxu0 0
        %1813 = vmatpush2.bf16.msra.mxu0 0
        %1814 = vmatprep.mubr.bf16.mxu0 0
        %1815 = vmatmul.mubr.bf16.gmra.mxu0 %v1724
        %v1816 = vpop.f32.mrf.mxu0
        %v1817 = vadd.f32 0.0, %v1816
        %v1818 = vpop.f32.mrf.mxu0
        %v1819 = vadd.f32 0.0, %v1818
        %v1820 = vpop.f32.mrf.mxu0
        %v1821 = vpop.f32.mrf.mxu0
        %1822 = vdwg.mxu0
        %1823 = vmatprep.subr.bf16.mxu0 0
        %1824 = vmatpush1.bf16.msra.mxu0 0
        %1825 = vmatprep.subr.bf16.mxu0 0
        %1826 = vmatpush1.bf16.msra.mxu0 0
        %1827 = vmatprep.subr.bf16.mxu0 0
        %1828 = vmatpush1.bf16.msra.mxu0 0
        %1829 = vmatprep.subr.bf16.mxu0 0
        %1830 = vmatpush1.bf16.msra.mxu0 0
        %1831 = vmatprep.subr.bf16.mxu0 0
        %1832 = vmatpush1.bf16.msra.mxu0 0
        %1833 = vmatprep.subr.bf16.mxu0 0
        %1834 = vmatpush1.bf16.msra.mxu0 0
        %1835 = vmatprep.subr.bf16.mxu0 0
        %1836 = vmatpush1.bf16.msra.mxu0 0
        %1837 = vmatprep.subr.bf16.mxu0 0
        %1838 = vmatpush1.bf16.msra.mxu0 %v1739
        %1839 = vmatprep.subr.bf16.mxu0 0
        %1840 = vmatpush2.bf16.msra.mxu0 0
        %1841 = vmatprep.subr.bf16.mxu0 0
        %1842 = vmatpush2.bf16.msra.mxu0 0
        %1843 = vmatprep.subr.bf16.mxu0 0
        %1844 = vmatpush2.bf16.msra.mxu0 0
        %1845 = vmatprep.subr.bf16.mxu0 0
        %1846 = vmatpush2.bf16.msra.mxu0 0
        %1847 = vmatprep.subr.bf16.mxu0 0
        %1848 = vmatpush2.bf16.msra.mxu0 0
        %1849 = vmatprep.subr.bf16.mxu0 0
        %1850 = vmatpush2.bf16.msra.mxu0 0
        %1851 = vmatprep.subr.bf16.mxu0 0
        %1852 = vmatpush2.bf16.msra.mxu0 0
        %1853 = vmatprep.subr.bf16.mxu0 0
        %1854 = vmatpush2.bf16.msra.mxu0 0
        %1855 = vmatprep.mubr.bf16.mxu0 0
        %1856 = vmatmul.mubr.bf16.gmra.mxu0 %v1724
        %v1857 = vpop.f32.mrf.mxu0
        %v1858 = vadd.f32 0.0, %v1857
        %v1859 = vpop.f32.mrf.mxu0
        %v1860 = vpop.f32.mrf.mxu0
        %v1861 = vpop.f32.mrf.mxu0
        %1862 = vdwg.mxu0
        %v1863 = vadd.f32 %v1701, %v1776
        %v1864 = vadd.f32 %v1702, %v1778
        %v1865 = vadd.f32 %v1703, %v1817
        %v1866 = vadd.f32 %v1704, %v1819
        %v1867 = vadd.f32 %v1705, %v1858
        %1868 = vrot.lane.b32.xlu0 %v761, 34
        %v1869 = vpop.permute.xlu0 %1868
        %1870 = vrot.lane.b32.xlu0 %v762, 34
        %v1871 = vpop.permute.xlu0 %1870
        %1872 = vrot.lane.b32.xlu0 %v763, 34
        %v1873 = vpop.permute.xlu0 %1872
        %v1874 = vrot.slane %v1869, 4
        %v1875 = vrot.slane %v1871, 4
        %vm1876 = vcmask 277504
        %v1877 = vsel %vm1876, %v1874, %v1869
        %v1878 = vsel %vm774, %v1874, %v1875
        %v1879 = vsel %vm1876, %v1878, %v1871
        %v1880 = vsel %vm1876, %v1875, %v1873
        %vm1881 = vcmp.ne.s16.totalorder %v1877, 0
        %vm1882 = vcmp.ne.s16.totalorder %v1879, 0
        %vm1883 = vcmp.ne.s16.totalorder %v1880, 0
        %v1884 = vsel %vm1881, %v403, 0
        %v1885 = vsel %vm1882, %v404, 0
        %v1886 = vsel %vm1883, %v405, 0
        %s1887 = scalar_lea.vmem [#allocation6], 32
        %v1888 = vld [vmem:[%s1887] sm:$0xf]
        %v1892 = vunpack.c.l.b16 %v1884
        %v1893 = vunpack.c.h.b16 %v1884
        %v1894 = vunpack.c.l.b16 %v1885
        %v1895 = vunpack.c.h.b16 %v1885
        %v1896 = vunpack.c.l.b16 %v1886
        %v1897 = vpack.c.b16 %v1892, %v1892
        %v1898 = vpack.c.b16 %v1893, %v1893
        %v1899 = vpack.c.b16 %v1894, %v1894
        %v1900 = vpack.c.b16 %v1895, %v1895
        %v1901 = vpack.c.b16 %v1896, %v1896
        %1902 = vrot.lane.b32.xlu0 %v1897, 94
        %v1903 = vpop.permute.xlu0 %1902
        %1904 = vrot.lane.b32.xlu0 %v1898, 94
        %v1905 = vpop.permute.xlu0 %1904
        %1906 = vrot.lane.b32.xlu0 %v1899, 94
        %v1907 = vpop.permute.xlu0 %1906
        %1908 = vrot.lane.b32.xlu0 %v1900, 94
        %v1909 = vpop.permute.xlu0 %1908
        %1910 = vrot.lane.b32.xlu0 %v1901, 94
        %v1911 = vpop.permute.xlu0 %1910
        %vm1912 = vcmask 769024
        %v1913 = vsel %vm1912, %v1903, %v1905
        %v1914 = vsel %vm1912, %v1905, %v1907
        %v1915 = vsel %vm1912, %v1907, %v1909
        %v1916 = vsel %vm1912, %v1909, %v1911
        %v1918 = vsel %vm453, %v1888, 0
        %v1921 = vsel %vm457, %v1913, 0
        %v1924 = vsel %vm457, %v1914, 0
        %v1927 = vsel %vm457, %v1915, 0
        %v1930 = vsel %vm457, %v1916, 0
        %v1933 = vsel %vm457, %v1911, 0
        %1935 = vmatprep.subr.bf16.mxu0 0
        %1936 = vmatpush1.bf16.msra.mxu0 0
        %1937 = vmatprep.subr.bf16.mxu0 0
        %1938 = vmatpush1.bf16.msra.mxu0 0
        %1939 = vmatprep.subr.bf16.mxu0 0
        %1940 = vmatpush1.bf16.msra.mxu0 0
        %1941 = vmatprep.subr.bf16.mxu0 0
        %1942 = vmatpush1.bf16.msra.mxu0 0
        %1943 = vmatprep.subr.bf16.mxu0 0
        %1944 = vmatpush1.bf16.msra.mxu0 0
        %1945 = vmatprep.subr.bf16.mxu0 0
        %1946 = vmatpush1.bf16.msra.mxu0 0
        %1947 = vmatprep.subr.bf16.mxu0 0
        %1948 = vmatpush1.bf16.msra.mxu0 0
        %1949 = vmatprep.subr.bf16.mxu0 %v1924
        %1950 = vmatpush1.bf16.msra.mxu0 %v1921
        %1951 = vmatprep.subr.bf16.mxu0 0
        %1952 = vmatpush2.bf16.msra.mxu0 0
        %1953 = vmatprep.subr.bf16.mxu0 0
        %1954 = vmatpush2.bf16.msra.mxu0 0
        %1955 = vmatprep.subr.bf16.mxu0 0
        %1956 = vmatpush2.bf16.msra.mxu0 0
        %1957 = vmatprep.subr.bf16.mxu0 0
        %1958 = vmatpush2.bf16.msra.mxu0 0
        %1959 = vmatprep.subr.bf16.mxu0 0
        %1960 = vmatpush2.bf16.msra.mxu0 0
        %1961 = vmatprep.subr.bf16.mxu0 0
        %1962 = vmatpush2.bf16.msra.mxu0 0
        %1963 = vmatprep.subr.bf16.mxu0 0
        %1964 = vmatpush2.bf16.msra.mxu0 0
        %1965 = vmatprep.subr.bf16.mxu0 0
        %1966 = vmatpush2.bf16.msra.mxu0 0
        %1967 = vmatprep.mubr.bf16.mxu0 0
        %1968 = vmatmul.mubr.bf16.gmra.mxu0 %v1918
        %v1969 = vpop.f32.mrf.mxu0
        %v1970 = vadd.f32 0.0, %v1969
        %v1971 = vpop.f32.mrf.mxu0
        %v1972 = vadd.f32 0.0, %v1971
        %v1973 = vpop.f32.mrf.mxu0
        %v1974 = vpop.f32.mrf.mxu0
        %1975 = vdwg.mxu0
        %1976 = vmatprep.subr.bf16.mxu0 0
        %1977 = vmatpush1.bf16.msra.mxu0 0
        %1978 = vmatprep.subr.bf16.mxu0 0
        %1979 = vmatpush1.bf16.msra.mxu0 0
        %1980 = vmatprep.subr.bf16.mxu0 0
        %1981 = vmatpush1.bf16.msra.mxu0 0
        %1982 = vmatprep.subr.bf16.mxu0 0
        %1983 = vmatpush1.bf16.msra.mxu0 0
        %1984 = vmatprep.subr.bf16.mxu0 0
        %1985 = vmatpush1.bf16.msra.mxu0 0
        %1986 = vmatprep.subr.bf16.mxu0 0
        %1987 = vmatpush1.bf16.msra.mxu0 0
        %1988 = vmatprep.subr.bf16.mxu0 0
        %1989 = vmatpush1.bf16.msra.mxu0 0
        %1990 = vmatprep.subr.bf16.mxu0 %v1930
        %1991 = vmatpush1.bf16.msra.mxu0 %v1927
        %1992 = vmatprep.subr.bf16.mxu0 0
        %1993 = vmatpush2.bf16.msra.mxu0 0
        %1994 = vmatprep.subr.bf16.mxu0 0
        %1995 = vmatpush2.bf16.msra.mxu0 0
        %1996 = vmatprep.subr.bf16.mxu0 0
        %1997 = vmatpush2.bf16.msra.mxu0 0
        %1998 = vmatprep.subr.bf16.mxu0 0
        %1999 = vmatpush2.bf16.msra.mxu0 0
        %2000 = vmatprep.subr.bf16.mxu0 0
        %2001 = vmatpush2.bf16.msra.mxu0 0
        %2002 = vmatprep.subr.bf16.mxu0 0
        %2003 = vmatpush2.bf16.msra.mxu0 0
        %2004 = vmatprep.subr.bf16.mxu0 0
        %2005 = vmatpush2.bf16.msra.mxu0 0
        %2006 = vmatprep.subr.bf16.mxu0 0
        %2007 = vmatpush2.bf16.msra.mxu0 0
        %2008 = vmatprep.mubr.bf16.mxu0 0
        %2009 = vmatmul.mubr.bf16.gmra.mxu0 %v1918
        %v2010 = vpop.f32.mrf.mxu0
        %v2011 = vadd.f32 0.0, %v2010
        %v2012 = vpop.f32.mrf.mxu0
        %v2013 = vadd.f32 0.0, %v2012
        %v2014 = vpop.f32.mrf.mxu0
        %v2015 = vpop.f32.mrf.mxu0
        %2016 = vdwg.mxu0
        %2017 = vmatprep.subr.bf16.mxu0 0
        %2018 = vmatpush1.bf16.msra.mxu0 0
        %2019 = vmatprep.subr.bf16.mxu0 0
        %2020 = vmatpush1.bf16.msra.mxu0 0
        %2021 = vmatprep.subr.bf16.mxu0 0
        %2022 = vmatpush1.bf16.msra.mxu0 0
        %2023 = vmatprep.subr.bf16.mxu0 0
        %2024 = vmatpush1.bf16.msra.mxu0 0
        %2025 = vmatprep.subr.bf16.mxu0 0
        %2026 = vmatpush1.bf16.msra.mxu0 0
        %2027 = vmatprep.subr.bf16.mxu0 0
        %2028 = vmatpush1.bf16.msra.mxu0 0
        %2029 = vmatprep.subr.bf16.mxu0 0
        %2030 = vmatpush1.bf16.msra.mxu0 0
        %2031 = vmatprep.subr.bf16.mxu0 0
        %2032 = vmatpush1.bf16.msra.mxu0 %v1933
        %2033 = vmatprep.subr.bf16.mxu0 0
        %2034 = vmatpush2.bf16.msra.mxu0 0
        %2035 = vmatprep.subr.bf16.mxu0 0
        %2036 = vmatpush2.bf16.msra.mxu0 0
        %2037 = vmatprep.subr.bf16.mxu0 0
        %2038 = vmatpush2.bf16.msra.mxu0 0
        %2039 = vmatprep.subr.bf16.mxu0 0
        %2040 = vmatpush2.bf16.msra.mxu0 0
        %2041 = vmatprep.subr.bf16.mxu0 0
        %2042 = vmatpush2.bf16.msra.mxu0 0
        %2043 = vmatprep.subr.bf16.mxu0 0
        %2044 = vmatpush2.bf16.msra.mxu0 0
        %2045 = vmatprep.subr.bf16.mxu0 0
        %2046 = vmatpush2.bf16.msra.mxu0 0
        %2047 = vmatprep.subr.bf16.mxu0 0
        %2048 = vmatpush2.bf16.msra.mxu0 0
        %2049 = vmatprep.mubr.bf16.mxu0 0
        %2050 = vmatmul.mubr.bf16.gmra.mxu0 %v1918
        %v2051 = vpop.f32.mrf.mxu0
        %v2052 = vadd.f32 0.0, %v2051
        %v2053 = vpop.f32.mrf.mxu0
        %v2054 = vpop.f32.mrf.mxu0
        %v2055 = vpop.f32.mrf.mxu0
        %2056 = vdwg.mxu0
        %v2057 = vadd.f32 %v1863, %v1970
        %v2058 = vadd.f32 %v1864, %v1972
        %v2059 = vadd.f32 %v1865, %v2011
        %v2060 = vadd.f32 %v1866, %v2013
        %v2061 = vadd.f32 %v1867, %v2052
        %v2062 = vld [vmem:[%s2] sm:$0xff]
        %2064 = vset.pattern.permute.xlu0 0
        %2065 = vperm.xlu0 %2064, %v2062
        %v2066 = vpop.permute.xlu0 %2065
        %v2068 = vadd.f32 %v2057, %v2066
        %v2069 = vadd.f32 %v2058, %v2066
        %v2070 = vadd.f32 %v2059, %v2066
        %v2071 = vadd.f32 %v2060, %v2066
        %v2072 = vadd.f32 %v2061, %v2066
        %v2073 = vmax.f32 %v2068, 0.0
        %v2074 = vmax.f32 %v2069, 0.0
        %v2075 = vmax.f32 %v2070, 0.0
        %v2076 = vmax.f32 %v2071, 0.0
        %v2077 = vmax.f32 %v2072, 0.0
        %v2078 = vpack.c.bf16 %v2073, %v2073
        %v2079 = vpack.c.bf16 %v2074, %v2074
        %v2082 = vunpack.c.l.b16 %v2078
        %v2083 = vunpack.c.l.b16 %v2079
        %v2084 = vpack.c.b16 %v2083, %v2082
        %2085 = vrot.lane.b32.xlu0 %v2084, 17
        %v2086 = vpop.permute.xlu0 %2085
        %v2087 = vrot.slane %v2086, 4
        %v2088 = vsel %vm296, %v2087, %v2086
        %2091 = vst.msk [vmem:[#allocation2] sm:$0xff] %vm302, %v2088
        %2092 = vst.msk [vmem:[#allocation2 + $0x8] sm:$0xf] %vm278, %v2087
        %v2093 = vpack.c.bf16 %v2075, %v2075
        %v2094 = vpack.c.bf16 %v2076, %v2076
        %v2095 = vpack.c.bf16 %v2077, %v2077
        %v2099 = vunpack.c.l.b16 %v2093
        %v2100 = vunpack.c.l.b16 %v2094
        %v2101 = vunpack.c.l.b16 %v2095
        %v2102 = vpack.c.b16 %v2100, %v2099
        %v2103 = vpack.c.b16 %v2101, %v2101
        %2104 = vrot.lane.b32.xlu0 %v2102, 17
        %v2105 = vpop.permute.xlu0 %2104
        %2106 = vrot.lane.b32.xlu0 %v2103, 17
        %v2107 = vpop.permute.xlu0 %2106
        %v2108 = vrot.slane %v2105, 4
        %v2109 = vsel %vm296, %v2108, %v2105
        %v2110 = vsel %vm296, %v2108, %v2107
        %2113 = vst.msk [vmem:[#allocation2 + $0x8] sm:$0xff] %vm323, %v2109
        %2114 = vst.msk [vmem:[#allocation2 + $0x10] sm:$0xf] %vm325, %v2110
        %v2115 = vld [vmem:[#allocation2] sm:$0xff]
        %v2116 = vld [vmem:[#allocation2 + $0x8] sm:$0xff]
        %v2117 = vld [vmem:[#allocation2 + $0x10] sm:$0xf]
        %v2118 = vsel %vm416, %v2115, 0
        %v2119 = vsel %vm417, %v2116, 0
        %v2120 = vsel %vm418, %v2117, 0
        %v2121 = vld [vmem:[#allocation8] sm:$0xf]
        %s2122 = scalar_lea.vmem [#allocation8], 4
        %v2123 = vld [vmem:[%s2122] sm:$0xf]
        %v2127 = vunpack.c.l.b16 %v2115
        %v2128 = vunpack.c.h.b16 %v2115
        %v2129 = vunpack.c.l.b16 %v2116
        %v2130 = vunpack.c.h.b16 %v2116
        %v2131 = vunpack.c.l.b16 %v2117
        %v2132 = vpack.c.b16 %v2127, %v2127
        %v2133 = vpack.c.b16 %v2128, %v2128
        %v2134 = vpack.c.b16 %v2129, %v2129
        %v2135 = vpack.c.b16 %v2130, %v2130
        %v2136 = vpack.c.b16 %v2131, %v2131
        %2137 = vrot.lane.b32.xlu0 %v2132, 127
        %v2138 = vpop.permute.xlu0 %2137
        %2139 = vrot.lane.b32.xlu0 %v2133, 127
        %v2140 = vpop.permute.xlu0 %2139
        %2141 = vrot.lane.b32.xlu0 %v2134, 127
        %v2142 = vpop.permute.xlu0 %2141
        %2143 = vrot.lane.b32.xlu0 %v2135, 127
        %v2144 = vpop.permute.xlu0 %2143
        %2145 = vrot.lane.b32.xlu0 %v2136, 127
        %v2146 = vpop.permute.xlu0 %2145
        %v2147 = vsel %vm448, %v2138, %v2140
        %v2148 = vsel %vm448, %v2140, %v2142
        %v2149 = vsel %vm448, %v2142, %v2144
        %v2150 = vsel %vm448, %v2144, %v2146
        %v2152 = vsel %vm453, %v2123, 0
        %v2155 = vsel %vm457, %v2147, 0
        %v2158 = vsel %vm457, %v2148, 0
        %v2161 = vsel %vm457, %v2149, 0
        %v2164 = vsel %vm457, %v2150, 0
        %v2167 = vsel %vm457, %v2146, 0
        %2169 = vmatprep.subr.bf16.mxu0 0
        %2170 = vmatpush1.bf16.msra.mxu0 0
        %2171 = vmatprep.subr.bf16.mxu0 0
        %2172 = vmatpush1.bf16.msra.mxu0 0
        %2173 = vmatprep.subr.bf16.mxu0 0
        %2174 = vmatpush1.bf16.msra.mxu0 0
        %2175 = vmatprep.subr.bf16.mxu0 0
        %2176 = vmatpush1.bf16.msra.mxu0 0
        %2177 = vmatprep.subr.bf16.mxu0 0
        %2178 = vmatpush1.bf16.msra.mxu0 0
        %2179 = vmatprep.subr.bf16.mxu0 0
        %2180 = vmatpush1.bf16.msra.mxu0 0
        %2181 = vmatprep.subr.bf16.mxu0 0
        %2182 = vmatpush1.bf16.msra.mxu0 0
        %2183 = vmatprep.subr.bf16.mxu0 %v2158
        %2184 = vmatpush1.bf16.msra.mxu0 %v2155
        %2185 = vmatprep.subr.bf16.mxu0 0
        %2186 = vmatpush2.bf16.msra.mxu0 0
        %2187 = vmatprep.subr.bf16.mxu0 0
        %2188 = vmatpush2.bf16.msra.mxu0 0
        %2189 = vmatprep.subr.bf16.mxu0 0
        %2190 = vmatpush2.bf16.msra.mxu0 0
        %2191 = vmatprep.subr.bf16.mxu0 0
        %2192 = vmatpush2.bf16.msra.mxu0 0
        %2193 = vmatprep.subr.bf16.mxu0 0
        %2194 = vmatpush2.bf16.msra.mxu0 0
        %2195 = vmatprep.subr.bf16.mxu0 0
        %2196 = vmatpush2.bf16.msra.mxu0 0
        %2197 = vmatprep.subr.bf16.mxu0 0
        %2198 = vmatpush2.bf16.msra.mxu0 0
        %2199 = vmatprep.subr.bf16.mxu0 0
        %2200 = vmatpush2.bf16.msra.mxu0 0
        %2201 = vmatprep.mubr.bf16.mxu0 0
        %2202 = vmatmul.mubr.bf16.gmra.mxu0 %v2152
        %v2203 = vpop.f32.mrf.mxu0
        %v2204 = vadd.f32 0.0, %v2203
        %v2205 = vpop.f32.mrf.mxu0
        %v2206 = vadd.f32 0.0, %v2205
        %v2207 = vpop.f32.mrf.mxu0
        %v2208 = vpop.f32.mrf.mxu0
        %2209 = vdwg.mxu0
        %2210 = vmatprep.subr.bf16.mxu0 0
        %2211 = vmatpush1.bf16.msra.mxu0 0
        %2212 = vmatprep.subr.bf16.mxu0 0
        %2213 = vmatpush1.bf16.msra.mxu0 0
        %2214 = vmatprep.subr.bf16.mxu0 0
        %2215 = vmatpush1.bf16.msra.mxu0 0
        %2216 = vmatprep.subr.bf16.mxu0 0
        %2217 = vmatpush1.bf16.msra.mxu0 0
        %2218 = vmatprep.subr.bf16.mxu0 0
        %2219 = vmatpush1.bf16.msra.mxu0 0
        %2220 = vmatprep.subr.bf16.mxu0 0
        %2221 = vmatpush1.bf16.msra.mxu0 0
        %2222 = vmatprep.subr.bf16.mxu0 0
        %2223 = vmatpush1.bf16.msra.mxu0 0
        %2224 = vmatprep.subr.bf16.mxu0 %v2164
        %2225 = vmatpush1.bf16.msra.mxu0 %v2161
        %2226 = vmatprep.subr.bf16.mxu0 0
        %2227 = vmatpush2.bf16.msra.mxu0 0
        %2228 = vmatprep.subr.bf16.mxu0 0
        %2229 = vmatpush2.bf16.msra.mxu0 0
        %2230 = vmatprep.subr.bf16.mxu0 0
        %2231 = vmatpush2.bf16.msra.mxu0 0
        %2232 = vmatprep.subr.bf16.mxu0 0
        %2233 = vmatpush2.bf16.msra.mxu0 0
        %2234 = vmatprep.subr.bf16.mxu0 0
        %2235 = vmatpush2.bf16.msra.mxu0 0
        %2236 = vmatprep.subr.bf16.mxu0 0
        %2237 = vmatpush2.bf16.msra.mxu0 0
        %2238 = vmatprep.subr.bf16.mxu0 0
        %2239 = vmatpush2.bf16.msra.mxu0 0
        %2240 = vmatprep.subr.bf16.mxu0 0
        %2241 = vmatpush2.bf16.msra.mxu0 0
        %2242 = vmatprep.mubr.bf16.mxu0 0
        %2243 = vmatmul.mubr.bf16.gmra.mxu0 %v2152
        %v2244 = vpop.f32.mrf.mxu0
        %v2245 = vadd.f32 0.0, %v2244
        %v2246 = vpop.f32.mrf.mxu0
        %v2247 = vadd.f32 0.0, %v2246
        %v2248 = vpop.f32.mrf.mxu0
        %v2249 = vpop.f32.mrf.mxu0
        %2250 = vdwg.mxu0
        %2251 = vmatprep.subr.bf16.mxu0 0
        %2252 = vmatpush1.bf16.msra.mxu0 0
        %2253 = vmatprep.subr.bf16.mxu0 0
        %2254 = vmatpush1.bf16.msra.mxu0 0
        %2255 = vmatprep.subr.bf16.mxu0 0
        %2256 = vmatpush1.bf16.msra.mxu0 0
        %2257 = vmatprep.subr.bf16.mxu0 0
        %2258 = vmatpush1.bf16.msra.mxu0 0
        %2259 = vmatprep.subr.bf16.mxu0 0
        %2260 = vmatpush1.bf16.msra.mxu0 0
        %2261 = vmatprep.subr.bf16.mxu0 0
        %2262 = vmatpush1.bf16.msra.mxu0 0
        %2263 = vmatprep.subr.bf16.mxu0 0
        %2264 = vmatpush1.bf16.msra.mxu0 0
        %2265 = vmatprep.subr.bf16.mxu0 0
        %2266 = vmatpush1.bf16.msra.mxu0 %v2167
        %2267 = vmatprep.subr.bf16.mxu0 0
        %2268 = vmatpush2.bf16.msra.mxu0 0
        %2269 = vmatprep.subr.bf16.mxu0 0
        %2270 = vmatpush2.bf16.msra.mxu0 0
        %2271 = vmatprep.subr.bf16.mxu0 0
        %2272 = vmatpush2.bf16.msra.mxu0 0
        %2273 = vmatprep.subr.bf16.mxu0 0
        %2274 = vmatpush2.bf16.msra.mxu0 0
        %2275 = vmatprep.subr.bf16.mxu0 0
        %2276 = vmatpush2.bf16.msra.mxu0 0
        %2277 = vmatprep.subr.bf16.mxu0 0
        %2278 = vmatpush2.bf16.msra.mxu0 0
        %2279 = vmatprep.subr.bf16.mxu0 0
        %2280 = vmatpush2.bf16.msra.mxu0 0
        %2281 = vmatprep.subr.bf16.mxu0 0
        %2282 = vmatpush2.bf16.msra.mxu0 0
        %2283 = vmatprep.mubr.bf16.mxu0 0
        %2284 = vmatmul.mubr.bf16.gmra.mxu0 %v2152
        %v2285 = vpop.f32.mrf.mxu0
        %v2286 = vadd.f32 0.0, %v2285
        %v2287 = vpop.f32.mrf.mxu0
        %v2288 = vpop.f32.mrf.mxu0
        %v2289 = vpop.f32.mrf.mxu0
        %2290 = vdwg.mxu0
        %v2294 = vunpack.c.l.b16 %v2118
        %v2295 = vunpack.c.h.b16 %v2118
        %v2296 = vunpack.c.l.b16 %v2119
        %v2297 = vunpack.c.h.b16 %v2119
        %v2298 = vunpack.c.l.b16 %v2120
        %v2299 = vpack.c.b16 %v2294, %v2294
        %v2300 = vpack.c.b16 %v2295, %v2295
        %v2301 = vpack.c.b16 %v2296, %v2296
        %v2302 = vpack.c.b16 %v2297, %v2297
        %v2303 = vpack.c.b16 %v2298, %v2298
        %v2305 = vsel %vm453, %v2121, 0
        %v2308 = vsel %vm457, %v2299, 0
        %v2311 = vsel %vm457, %v2300, 0
        %v2314 = vsel %vm457, %v2301, 0
        %v2317 = vsel %vm457, %v2302, 0
        %v2320 = vsel %vm457, %v2303, 0
        %2322 = vmatprep.subr.bf16.mxu0 0
        %2323 = vmatpush1.bf16.msra.mxu0 0
        %2324 = vmatprep.subr.bf16.mxu0 0
        %2325 = vmatpush1.bf16.msra.mxu0 0
        %2326 = vmatprep.subr.bf16.mxu0 0
        %2327 = vmatpush1.bf16.msra.mxu0 0
        %2328 = vmatprep.subr.bf16.mxu0 0
        %2329 = vmatpush1.bf16.msra.mxu0 0
        %2330 = vmatprep.subr.bf16.mxu0 0
        %2331 = vmatpush1.bf16.msra.mxu0 0
        %2332 = vmatprep.subr.bf16.mxu0 0
        %2333 = vmatpush1.bf16.msra.mxu0 0
        %2334 = vmatprep.subr.bf16.mxu0 0
        %2335 = vmatpush1.bf16.msra.mxu0 0
        %2336 = vmatprep.subr.bf16.mxu0 %v2311
        %2337 = vmatpush1.bf16.msra.mxu0 %v2308
        %2338 = vmatprep.subr.bf16.mxu0 0
        %2339 = vmatpush2.bf16.msra.mxu0 0
        %2340 = vmatprep.subr.bf16.mxu0 0
        %2341 = vmatpush2.bf16.msra.mxu0 0
        %2342 = vmatprep.subr.bf16.mxu0 0
        %2343 = vmatpush2.bf16.msra.mxu0 0
        %2344 = vmatprep.subr.bf16.mxu0 0
        %2345 = vmatpush2.bf16.msra.mxu0 0
        %2346 = vmatprep.subr.bf16.mxu0 0
        %2347 = vmatpush2.bf16.msra.mxu0 0
        %2348 = vmatprep.subr.bf16.mxu0 0
        %2349 = vmatpush2.bf16.msra.mxu0 0
        %2350 = vmatprep.subr.bf16.mxu0 0
        %2351 = vmatpush2.bf16.msra.mxu0 0
        %2352 = vmatprep.subr.bf16.mxu0 0
        %2353 = vmatpush2.bf16.msra.mxu0 0
        %2354 = vmatprep.mubr.bf16.mxu0 0
        %2355 = vmatmul.mubr.bf16.gmra.mxu0 %v2305
        %v2356 = vpop.f32.mrf.mxu0
        %v2357 = vadd.f32 %v2204, %v2356
        %v2358 = vpop.f32.mrf.mxu0
        %v2359 = vadd.f32 %v2206, %v2358
        %v2360 = vpop.f32.mrf.mxu0
        %v2361 = vpop.f32.mrf.mxu0
        %2362 = vdwg.mxu0
        %2363 = vmatprep.subr.bf16.mxu0 0
        %2364 = vmatpush1.bf16.msra.mxu0 0
        %2365 = vmatprep.subr.bf16.mxu0 0
        %2366 = vmatpush1.bf16.msra.mxu0 0
        %2367 = vmatprep.subr.bf16.mxu0 0
        %2368 = vmatpush1.bf16.msra.mxu0 0
        %2369 = vmatprep.subr.bf16.mxu0 0
        %2370 = vmatpush1.bf16.msra.mxu0 0
        %2371 = vmatprep.subr.bf16.mxu0 0
        %2372 = vmatpush1.bf16.msra.mxu0 0
        %2373 = vmatprep.subr.bf16.mxu0 0
        %2374 = vmatpush1.bf16.msra.mxu0 0
        %2375 = vmatprep.subr.bf16.mxu0 0
        %2376 = vmatpush1.bf16.msra.mxu0 0
        %2377 = vmatprep.subr.bf16.mxu0 %v2317
        %2378 = vmatpush1.bf16.msra.mxu0 %v2314
        %2379 = vmatprep.subr.bf16.mxu0 0
        %2380 = vmatpush2.bf16.msra.mxu0 0
        %2381 = vmatprep.subr.bf16.mxu0 0
        %2382 = vmatpush2.bf16.msra.mxu0 0
        %2383 = vmatprep.subr.bf16.mxu0 0
        %2384 = vmatpush2.bf16.msra.mxu0 0
        %2385 = vmatprep.subr.bf16.mxu0 0
        %2386 = vmatpush2.bf16.msra.mxu0 0
        %2387 = vmatprep.subr.bf16.mxu0 0
        %2388 = vmatpush2.bf16.msra.mxu0 0
        %2389 = vmatprep.subr.bf16.mxu0 0
        %2390 = vmatpush2.bf16.msra.mxu0 0
        %2391 = vmatprep.subr.bf16.mxu0 0
        %2392 = vmatpush2.bf16.msra.mxu0 0
        %2393 = vmatprep.subr.bf16.mxu0 0
        %2394 = vmatpush2.bf16.msra.mxu0 0
        %2395 = vmatprep.mubr.bf16.mxu0 0
        %2396 = vmatmul.mubr.bf16.gmra.mxu0 %v2305
        %v2397 = vpop.f32.mrf.mxu0
        %v2398 = vadd.f32 %v2245, %v2397
        %v2399 = vpop.f32.mrf.mxu0
        %v2400 = vadd.f32 %v2247, %v2399
        %v2401 = vpop.f32.mrf.mxu0
        %v2402 = vpop.f32.mrf.mxu0
        %2403 = vdwg.mxu0
        %2404 = vmatprep.subr.bf16.mxu0 0
        %2405 = vmatpush1.bf16.msra.mxu0 0
        %2406 = vmatprep.subr.bf16.mxu0 0
        %2407 = vmatpush1.bf16.msra.mxu0 0
        %2408 = vmatprep.subr.bf16.mxu0 0
        %2409 = vmatpush1.bf16.msra.mxu0 0
        %2410 = vmatprep.subr.bf16.mxu0 0
        %2411 = vmatpush1.bf16.msra.mxu0 0
        %2412 = vmatprep.subr.bf16.mxu0 0
        %2413 = vmatpush1.bf16.msra.mxu0 0
        %2414 = vmatprep.subr.bf16.mxu0 0
        %2415 = vmatpush1.bf16.msra.mxu0 0
        %2416 = vmatprep.subr.bf16.mxu0 0
        %2417 = vmatpush1.bf16.msra.mxu0 0
        %2418 = vmatprep.subr.bf16.mxu0 0
        %2419 = vmatpush1.bf16.msra.mxu0 %v2320
        %2420 = vmatprep.subr.bf16.mxu0 0
        %2421 = vmatpush2.bf16.msra.mxu0 0
        %2422 = vmatprep.subr.bf16.mxu0 0
        %2423 = vmatpush2.bf16.msra.mxu0 0
        %2424 = vmatprep.subr.bf16.mxu0 0
        %2425 = vmatpush2.bf16.msra.mxu0 0
        %2426 = vmatprep.subr.bf16.mxu0 0
        %2427 = vmatpush2.bf16.msra.mxu0 0
        %2428 = vmatprep.subr.bf16.mxu0 0
        %2429 = vmatpush2.bf16.msra.mxu0 0
        %2430 = vmatprep.subr.bf16.mxu0 0
        %2431 = vmatpush2.bf16.msra.mxu0 0
        %2432 = vmatprep.subr.bf16.mxu0 0
        %2433 = vmatpush2.bf16.msra.mxu0 0
        %2434 = vmatprep.subr.bf16.mxu0 0
        %2435 = vmatpush2.bf16.msra.mxu0 0
        %2436 = vmatprep.mubr.bf16.mxu0 0
        %2437 = vmatmul.mubr.bf16.gmra.mxu0 %v2305
        %v2438 = vpop.f32.mrf.mxu0
        %v2439 = vadd.f32 %v2286, %v2438
        %v2440 = vpop.f32.mrf.mxu0
        %v2441 = vpop.f32.mrf.mxu0
        %v2442 = vpop.f32.mrf.mxu0
        %2443 = vdwg.mxu0
        %v2444 = vsel %vm778, %v2115, 0
        %v2445 = vsel %vm779, %v2116, 0
        %v2446 = vsel %vm780, %v2117, 0
        %s2447 = scalar_lea.vmem [#allocation8], 8
        %v2448 = vld [vmem:[%s2447] sm:$0xf]
        %v2452 = vunpack.c.l.b16 %v2444
        %v2453 = vunpack.c.h.b16 %v2444
        %v2454 = vunpack.c.l.b16 %v2445
        %v2455 = vunpack.c.h.b16 %v2445
        %v2456 = vunpack.c.l.b16 %v2446
        %v2457 = vpack.c.b16 %v2452, %v2452
        %v2458 = vpack.c.b16 %v2453, %v2453
        %v2459 = vpack.c.b16 %v2454, %v2454
        %v2460 = vpack.c.b16 %v2455, %v2455
        %v2461 = vpack.c.b16 %v2456, %v2456
        %2462 = vrot.lane.b32.xlu0 %v2457, 126
        %v2463 = vpop.permute.xlu0 %2462
        %2464 = vrot.lane.b32.xlu0 %v2458, 126
        %v2465 = vpop.permute.xlu0 %2464
        %2466 = vrot.lane.b32.xlu0 %v2459, 126
        %v2467 = vpop.permute.xlu0 %2466
        %2468 = vrot.lane.b32.xlu0 %v2460, 126
        %v2469 = vpop.permute.xlu0 %2468
        %2470 = vrot.lane.b32.xlu0 %v2461, 126
        %v2471 = vpop.permute.xlu0 %2470
        %v2472 = vsel %vm809, %v2463, %v2465
        %v2473 = vsel %vm809, %v2465, %v2467
        %v2474 = vsel %vm809, %v2467, %v2469
        %v2475 = vsel %vm809, %v2469, %v2471
        %v2477 = vsel %vm453, %v2448, 0
        %v2480 = vsel %vm457, %v2472, 0
        %v2483 = vsel %vm457, %v2473, 0
        %v2486 = vsel %vm457, %v2474, 0
        %v2489 = vsel %vm457, %v2475, 0
        %v2492 = vsel %vm457, %v2471, 0
        %2494 = vmatprep.subr.bf16.mxu0 0
        %2495 = vmatpush1.bf16.msra.mxu0 0
        %2496 = vmatprep.subr.bf16.mxu0 0
        %2497 = vmatpush1.bf16.msra.mxu0 0
        %2498 = vmatprep.subr.bf16.mxu0 0
        %2499 = vmatpush1.bf16.msra.mxu0 0
        %2500 = vmatprep.subr.bf16.mxu0 0
        %2501 = vmatpush1.bf16.msra.mxu0 0
        %2502 = vmatprep.subr.bf16.mxu0 0
        %2503 = vmatpush1.bf16.msra.mxu0 0
        %2504 = vmatprep.subr.bf16.mxu0 0
        %2505 = vmatpush1.bf16.msra.mxu0 0
        %2506 = vmatprep.subr.bf16.mxu0 0
        %2507 = vmatpush1.bf16.msra.mxu0 0
        %2508 = vmatprep.subr.bf16.mxu0 %v2483
        %2509 = vmatpush1.bf16.msra.mxu0 %v2480
        %2510 = vmatprep.subr.bf16.mxu0 0
        %2511 = vmatpush2.bf16.msra.mxu0 0
        %2512 = vmatprep.subr.bf16.mxu0 0
        %2513 = vmatpush2.bf16.msra.mxu0 0
        %2514 = vmatprep.subr.bf16.mxu0 0
        %2515 = vmatpush2.bf16.msra.mxu0 0
        %2516 = vmatprep.subr.bf16.mxu0 0
        %2517 = vmatpush2.bf16.msra.mxu0 0
        %2518 = vmatprep.subr.bf16.mxu0 0
        %2519 = vmatpush2.bf16.msra.mxu0 0
        %2520 = vmatprep.subr.bf16.mxu0 0
        %2521 = vmatpush2.bf16.msra.mxu0 0
        %2522 = vmatprep.subr.bf16.mxu0 0
        %2523 = vmatpush2.bf16.msra.mxu0 0
        %2524 = vmatprep.subr.bf16.mxu0 0
        %2525 = vmatpush2.bf16.msra.mxu0 0
        %2526 = vmatprep.mubr.bf16.mxu0 0
        %2527 = vmatmul.mubr.bf16.gmra.mxu0 %v2477
        %v2528 = vpop.f32.mrf.mxu0
        %v2529 = vadd.f32 0.0, %v2528
        %v2530 = vpop.f32.mrf.mxu0
        %v2531 = vadd.f32 0.0, %v2530
        %v2532 = vpop.f32.mrf.mxu0
        %v2533 = vpop.f32.mrf.mxu0
        %2534 = vdwg.mxu0
        %2535 = vmatprep.subr.bf16.mxu0 0
        %2536 = vmatpush1.bf16.msra.mxu0 0
        %2537 = vmatprep.subr.bf16.mxu0 0
        %2538 = vmatpush1.bf16.msra.mxu0 0
        %2539 = vmatprep.subr.bf16.mxu0 0
        %2540 = vmatpush1.bf16.msra.mxu0 0
        %2541 = vmatprep.subr.bf16.mxu0 0
        %2542 = vmatpush1.bf16.msra.mxu0 0
        %2543 = vmatprep.subr.bf16.mxu0 0
        %2544 = vmatpush1.bf16.msra.mxu0 0
        %2545 = vmatprep.subr.bf16.mxu0 0
        %2546 = vmatpush1.bf16.msra.mxu0 0
        %2547 = vmatprep.subr.bf16.mxu0 0
        %2548 = vmatpush1.bf16.msra.mxu0 0
        %2549 = vmatprep.subr.bf16.mxu0 %v2489
        %2550 = vmatpush1.bf16.msra.mxu0 %v2486
        %2551 = vmatprep.subr.bf16.mxu0 0
        %2552 = vmatpush2.bf16.msra.mxu0 0
        %2553 = vmatprep.subr.bf16.mxu0 0
        %2554 = vmatpush2.bf16.msra.mxu0 0
        %2555 = vmatprep.subr.bf16.mxu0 0
        %2556 = vmatpush2.bf16.msra.mxu0 0
        %2557 = vmatprep.subr.bf16.mxu0 0
        %2558 = vmatpush2.bf16.msra.mxu0 0
        %2559 = vmatprep.subr.bf16.mxu0 0
        %2560 = vmatpush2.bf16.msra.mxu0 0
        %2561 = vmatprep.subr.bf16.mxu0 0
        %2562 = vmatpush2.bf16.msra.mxu0 0
        %2563 = vmatprep.subr.bf16.mxu0 0
        %2564 = vmatpush2.bf16.msra.mxu0 0
        %2565 = vmatprep.subr.bf16.mxu0 0
        %2566 = vmatpush2.bf16.msra.mxu0 0
        %2567 = vmatprep.mubr.bf16.mxu0 0
        %2568 = vmatmul.mubr.bf16.gmra.mxu0 %v2477
        %v2569 = vpop.f32.mrf.mxu0
        %v2570 = vadd.f32 0.0, %v2569
        %v2571 = vpop.f32.mrf.mxu0
        %v2572 = vadd.f32 0.0, %v2571
        %v2573 = vpop.f32.mrf.mxu0
        %v2574 = vpop.f32.mrf.mxu0
        %2575 = vdwg.mxu0
        %2576 = vmatprep.subr.bf16.mxu0 0
        %2577 = vmatpush1.bf16.msra.mxu0 0
        %2578 = vmatprep.subr.bf16.mxu0 0
        %2579 = vmatpush1.bf16.msra.mxu0 0
        %2580 = vmatprep.subr.bf16.mxu0 0
        %2581 = vmatpush1.bf16.msra.mxu0 0
        %2582 = vmatprep.subr.bf16.mxu0 0
        %2583 = vmatpush1.bf16.msra.mxu0 0
        %2584 = vmatprep.subr.bf16.mxu0 0
        %2585 = vmatpush1.bf16.msra.mxu0 0
        %2586 = vmatprep.subr.bf16.mxu0 0
        %2587 = vmatpush1.bf16.msra.mxu0 0
        %2588 = vmatprep.subr.bf16.mxu0 0
        %2589 = vmatpush1.bf16.msra.mxu0 0
        %2590 = vmatprep.subr.bf16.mxu0 0
        %2591 = vmatpush1.bf16.msra.mxu0 %v2492
        %2592 = vmatprep.subr.bf16.mxu0 0
        %2593 = vmatpush2.bf16.msra.mxu0 0
        %2594 = vmatprep.subr.bf16.mxu0 0
        %2595 = vmatpush2.bf16.msra.mxu0 0
        %2596 = vmatprep.subr.bf16.mxu0 0
        %2597 = vmatpush2.bf16.msra.mxu0 0
        %2598 = vmatprep.subr.bf16.mxu0 0
        %2599 = vmatpush2.bf16.msra.mxu0 0
        %2600 = vmatprep.subr.bf16.mxu0 0
        %2601 = vmatpush2.bf16.msra.mxu0 0
        %2602 = vmatprep.subr.bf16.mxu0 0
        %2603 = vmatpush2.bf16.msra.mxu0 0
        %2604 = vmatprep.subr.bf16.mxu0 0
        %2605 = vmatpush2.bf16.msra.mxu0 0
        %2606 = vmatprep.subr.bf16.mxu0 0
        %2607 = vmatpush2.bf16.msra.mxu0 0
        %2608 = vmatprep.mubr.bf16.mxu0 0
        %2609 = vmatmul.mubr.bf16.gmra.mxu0 %v2477
        %v2610 = vpop.f32.mrf.mxu0
        %v2611 = vadd.f32 0.0, %v2610
        %v2612 = vpop.f32.mrf.mxu0
        %v2613 = vpop.f32.mrf.mxu0
        %v2614 = vpop.f32.mrf.mxu0
        %2615 = vdwg.mxu0
        %v2616 = vadd.f32 %v2357, %v2529
        %v2617 = vadd.f32 %v2359, %v2531
        %v2618 = vadd.f32 %v2398, %v2570
        %v2619 = vadd.f32 %v2400, %v2572
        %v2620 = vadd.f32 %v2439, %v2611
        %v2621 = vsel %vm975, %v2115, 0
        %v2622 = vsel %vm976, %v2116, 0
        %v2623 = vsel %vm977, %v2117, 0
        %s2624 = scalar_lea.vmem [#allocation8], 12
        %v2625 = vld [vmem:[%s2624] sm:$0xf]
        %v2629 = vunpack.c.l.b16 %v2621
        %v2630 = vunpack.c.h.b16 %v2621
        %v2631 = vunpack.c.l.b16 %v2622
        %v2632 = vunpack.c.h.b16 %v2622
        %v2633 = vunpack.c.l.b16 %v2623
        %v2634 = vpack.c.b16 %v2629, %v2629
        %v2635 = vpack.c.b16 %v2630, %v2630
        %v2636 = vpack.c.b16 %v2631, %v2631
        %v2637 = vpack.c.b16 %v2632, %v2632
        %v2638 = vpack.c.b16 %v2633, %v2633
        %2639 = vrot.lane.b32.xlu0 %v2634, 112
        %v2640 = vpop.permute.xlu0 %2639
        %2641 = vrot.lane.b32.xlu0 %v2635, 112
        %v2642 = vpop.permute.xlu0 %2641
        %2643 = vrot.lane.b32.xlu0 %v2636, 112
        %v2644 = vpop.permute.xlu0 %2643
        %2645 = vrot.lane.b32.xlu0 %v2637, 112
        %v2646 = vpop.permute.xlu0 %2645
        %2647 = vrot.lane.b32.xlu0 %v2638, 112
        %v2648 = vpop.permute.xlu0 %2647
        %v2649 = vsel %vm1006, %v2640, %v2642
        %v2650 = vsel %vm1006, %v2642, %v2644
        %v2651 = vsel %vm1006, %v2644, %v2646
        %v2652 = vsel %vm1006, %v2646, %v2648
        %v2654 = vsel %vm453, %v2625, 0
        %v2657 = vsel %vm457, %v2649, 0
        %v2660 = vsel %vm457, %v2650, 0
        %v2663 = vsel %vm457, %v2651, 0
        %v2666 = vsel %vm457, %v2652, 0
        %v2669 = vsel %vm457, %v2648, 0
        %2671 = vmatprep.subr.bf16.mxu0 0
        %2672 = vmatpush1.bf16.msra.mxu0 0
        %2673 = vmatprep.subr.bf16.mxu0 0
        %2674 = vmatpush1.bf16.msra.mxu0 0
        %2675 = vmatprep.subr.bf16.mxu0 0
        %2676 = vmatpush1.bf16.msra.mxu0 0
        %2677 = vmatprep.subr.bf16.mxu0 0
        %2678 = vmatpush1.bf16.msra.mxu0 0
        %2679 = vmatprep.subr.bf16.mxu0 0
        %2680 = vmatpush1.bf16.msra.mxu0 0
        %2681 = vmatprep.subr.bf16.mxu0 0
        %2682 = vmatpush1.bf16.msra.mxu0 0
        %2683 = vmatprep.subr.bf16.mxu0 0
        %2684 = vmatpush1.bf16.msra.mxu0 0
        %2685 = vmatprep.subr.bf16.mxu0 %v2660
        %2686 = vmatpush1.bf16.msra.mxu0 %v2657
        %2687 = vmatprep.subr.bf16.mxu0 0
        %2688 = vmatpush2.bf16.msra.mxu0 0
        %2689 = vmatprep.subr.bf16.mxu0 0
        %2690 = vmatpush2.bf16.msra.mxu0 0
        %2691 = vmatprep.subr.bf16.mxu0 0
        %2692 = vmatpush2.bf16.msra.mxu0 0
        %2693 = vmatprep.subr.bf16.mxu0 0
        %2694 = vmatpush2.bf16.msra.mxu0 0
        %2695 = vmatprep.subr.bf16.mxu0 0
        %2696 = vmatpush2.bf16.msra.mxu0 0
        %2697 = vmatprep.subr.bf16.mxu0 0
        %2698 = vmatpush2.bf16.msra.mxu0 0
        %2699 = vmatprep.subr.bf16.mxu0 0
        %2700 = vmatpush2.bf16.msra.mxu0 0
        %2701 = vmatprep.subr.bf16.mxu0 0
        %2702 = vmatpush2.bf16.msra.mxu0 0
        %2703 = vmatprep.mubr.bf16.mxu0 0
        %2704 = vmatmul.mubr.bf16.gmra.mxu0 %v2654
        %v2705 = vpop.f32.mrf.mxu0
        %v2706 = vadd.f32 0.0, %v2705
        %v2707 = vpop.f32.mrf.mxu0
        %v2708 = vadd.f32 0.0, %v2707
        %v2709 = vpop.f32.mrf.mxu0
        %v2710 = vpop.f32.mrf.mxu0
        %2711 = vdwg.mxu0
        %2712 = vmatprep.subr.bf16.mxu0 0
        %2713 = vmatpush1.bf16.msra.mxu0 0
        %2714 = vmatprep.subr.bf16.mxu0 0
        %2715 = vmatpush1.bf16.msra.mxu0 0
        %2716 = vmatprep.subr.bf16.mxu0 0
        %2717 = vmatpush1.bf16.msra.mxu0 0
        %2718 = vmatprep.subr.bf16.mxu0 0
        %2719 = vmatpush1.bf16.msra.mxu0 0
        %2720 = vmatprep.subr.bf16.mxu0 0
        %2721 = vmatpush1.bf16.msra.mxu0 0
        %2722 = vmatprep.subr.bf16.mxu0 0
        %2723 = vmatpush1.bf16.msra.mxu0 0
        %2724 = vmatprep.subr.bf16.mxu0 0
        %2725 = vmatpush1.bf16.msra.mxu0 0
        %2726 = vmatprep.subr.bf16.mxu0 %v2666
        %2727 = vmatpush1.bf16.msra.mxu0 %v2663
        %2728 = vmatprep.subr.bf16.mxu0 0
        %2729 = vmatpush2.bf16.msra.mxu0 0
        %2730 = vmatprep.subr.bf16.mxu0 0
        %2731 = vmatpush2.bf16.msra.mxu0 0
        %2732 = vmatprep.subr.bf16.mxu0 0
        %2733 = vmatpush2.bf16.msra.mxu0 0
        %2734 = vmatprep.subr.bf16.mxu0 0
        %2735 = vmatpush2.bf16.msra.mxu0 0
        %2736 = vmatprep.subr.bf16.mxu0 0
        %2737 = vmatpush2.bf16.msra.mxu0 0
        %2738 = vmatprep.subr.bf16.mxu0 0
        %2739 = vmatpush2.bf16.msra.mxu0 0
        %2740 = vmatprep.subr.bf16.mxu0 0
        %2741 = vmatpush2.bf16.msra.mxu0 0
        %2742 = vmatprep.subr.bf16.mxu0 0
        %2743 = vmatpush2.bf16.msra.mxu0 0
        %2744 = vmatprep.mubr.bf16.mxu0 0
        %2745 = vmatmul.mubr.bf16.gmra.mxu0 %v2654
        %v2746 = vpop.f32.mrf.mxu0
        %v2747 = vadd.f32 0.0, %v2746
        %v2748 = vpop.f32.mrf.mxu0
        %v2749 = vadd.f32 0.0, %v2748
        %v2750 = vpop.f32.mrf.mxu0
        %v2751 = vpop.f32.mrf.mxu0
        %2752 = vdwg.mxu0
        %2753 = vmatprep.subr.bf16.mxu0 0
        %2754 = vmatpush1.bf16.msra.mxu0 0
        %2755 = vmatprep.subr.bf16.mxu0 0
        %2756 = vmatpush1.bf16.msra.mxu0 0
        %2757 = vmatprep.subr.bf16.mxu0 0
        %2758 = vmatpush1.bf16.msra.mxu0 0
        %2759 = vmatprep.subr.bf16.mxu0 0
        %2760 = vmatpush1.bf16.msra.mxu0 0
        %2761 = vmatprep.subr.bf16.mxu0 0
        %2762 = vmatpush1.bf16.msra.mxu0 0
        %2763 = vmatprep.subr.bf16.mxu0 0
        %2764 = vmatpush1.bf16.msra.mxu0 0
        %2765 = vmatprep.subr.bf16.mxu0 0
        %2766 = vmatpush1.bf16.msra.mxu0 0
        %2767 = vmatprep.subr.bf16.mxu0 0
        %2768 = vmatpush1.bf16.msra.mxu0 %v2669
        %2769 = vmatprep.subr.bf16.mxu0 0
        %2770 = vmatpush2.bf16.msra.mxu0 0
        %2771 = vmatprep.subr.bf16.mxu0 0
        %2772 = vmatpush2.bf16.msra.mxu0 0
        %2773 = vmatprep.subr.bf16.mxu0 0
        %2774 = vmatpush2.bf16.msra.mxu0 0
        %2775 = vmatprep.subr.bf16.mxu0 0
        %2776 = vmatpush2.bf16.msra.mxu0 0
        %2777 = vmatprep.subr.bf16.mxu0 0
        %2778 = vmatpush2.bf16.msra.mxu0 0
        %2779 = vmatprep.subr.bf16.mxu0 0
        %2780 = vmatpush2.bf16.msra.mxu0 0
        %2781 = vmatprep.subr.bf16.mxu0 0
        %2782 = vmatpush2.bf16.msra.mxu0 0
        %2783 = vmatprep.subr.bf16.mxu0 0
        %2784 = vmatpush2.bf16.msra.mxu0 0
        %2785 = vmatprep.mubr.bf16.mxu0 0
        %2786 = vmatmul.mubr.bf16.gmra.mxu0 %v2654
        %v2787 = vpop.f32.mrf.mxu0
        %v2788 = vadd.f32 0.0, %v2787
        %v2789 = vpop.f32.mrf.mxu0
        %v2790 = vpop.f32.mrf.mxu0
        %v2791 = vpop.f32.mrf.mxu0
        %2792 = vdwg.mxu0
        %v2793 = vadd.f32 %v2616, %v2706
        %v2794 = vadd.f32 %v2617, %v2708
        %v2795 = vadd.f32 %v2618, %v2747
        %v2796 = vadd.f32 %v2619, %v2749
        %v2797 = vadd.f32 %v2620, %v2788
        %s2798 = scalar_lea.vmem [#allocation8], 16
        %v2799 = vld [vmem:[%s2798] sm:$0xf]
        %2800 = vrot.lane.b32.xlu0 %v2132, 111
        %v2801 = vpop.permute.xlu0 %2800
        %2802 = vrot.lane.b32.xlu0 %v2133, 111
        %v2803 = vpop.permute.xlu0 %2802
        %2804 = vrot.lane.b32.xlu0 %v2134, 111
        %v2805 = vpop.permute.xlu0 %2804
        %2806 = vrot.lane.b32.xlu0 %v2135, 111
        %v2807 = vpop.permute.xlu0 %2806
        %2808 = vrot.lane.b32.xlu0 %v2136, 111
        %v2809 = vpop.permute.xlu0 %2808
        %v2810 = vsel %vm1168, %v2801, %v2803
        %v2811 = vsel %vm1168, %v2803, %v2805
        %v2812 = vsel %vm1168, %v2805, %v2807
        %v2813 = vsel %vm1168, %v2807, %v2809
        %v2815 = vsel %vm453, %v2799, 0
        %v2818 = vsel %vm457, %v2810, 0
        %v2821 = vsel %vm457, %v2811, 0
        %v2824 = vsel %vm457, %v2812, 0
        %v2827 = vsel %vm457, %v2813, 0
        %v2830 = vsel %vm457, %v2809, 0
        %2832 = vmatprep.subr.bf16.mxu0 0
        %2833 = vmatpush1.bf16.msra.mxu0 0
        %2834 = vmatprep.subr.bf16.mxu0 0
        %2835 = vmatpush1.bf16.msra.mxu0 0
        %2836 = vmatprep.subr.bf16.mxu0 0
        %2837 = vmatpush1.bf16.msra.mxu0 0
        %2838 = vmatprep.subr.bf16.mxu0 0
        %2839 = vmatpush1.bf16.msra.mxu0 0
        %2840 = vmatprep.subr.bf16.mxu0 0
        %2841 = vmatpush1.bf16.msra.mxu0 0
        %2842 = vmatprep.subr.bf16.mxu0 0
        %2843 = vmatpush1.bf16.msra.mxu0 0
        %2844 = vmatprep.subr.bf16.mxu0 0
        %2845 = vmatpush1.bf16.msra.mxu0 0
        %2846 = vmatprep.subr.bf16.mxu0 %v2821
        %2847 = vmatpush1.bf16.msra.mxu0 %v2818
        %2848 = vmatprep.subr.bf16.mxu0 0
        %2849 = vmatpush2.bf16.msra.mxu0 0
        %2850 = vmatprep.subr.bf16.mxu0 0
        %2851 = vmatpush2.bf16.msra.mxu0 0
        %2852 = vmatprep.subr.bf16.mxu0 0
        %2853 = vmatpush2.bf16.msra.mxu0 0
        %2854 = vmatprep.subr.bf16.mxu0 0
        %2855 = vmatpush2.bf16.msra.mxu0 0
        %2856 = vmatprep.subr.bf16.mxu0 0
        %2857 = vmatpush2.bf16.msra.mxu0 0
        %2858 = vmatprep.subr.bf16.mxu0 0
        %2859 = vmatpush2.bf16.msra.mxu0 0
        %2860 = vmatprep.subr.bf16.mxu0 0
        %2861 = vmatpush2.bf16.msra.mxu0 0
        %2862 = vmatprep.subr.bf16.mxu0 0
        %2863 = vmatpush2.bf16.msra.mxu0 0
        %2864 = vmatprep.mubr.bf16.mxu0 0
        %2865 = vmatmul.mubr.bf16.gmra.mxu0 %v2815
        %v2866 = vpop.f32.mrf.mxu0
        %v2867 = vadd.f32 0.0, %v2866
        %v2868 = vpop.f32.mrf.mxu0
        %v2869 = vadd.f32 0.0, %v2868
        %v2870 = vpop.f32.mrf.mxu0
        %v2871 = vpop.f32.mrf.mxu0
        %2872 = vdwg.mxu0
        %2873 = vmatprep.subr.bf16.mxu0 0
        %2874 = vmatpush1.bf16.msra.mxu0 0
        %2875 = vmatprep.subr.bf16.mxu0 0
        %2876 = vmatpush1.bf16.msra.mxu0 0
        %2877 = vmatprep.subr.bf16.mxu0 0
        %2878 = vmatpush1.bf16.msra.mxu0 0
        %2879 = vmatprep.subr.bf16.mxu0 0
        %2880 = vmatpush1.bf16.msra.mxu0 0
        %2881 = vmatprep.subr.bf16.mxu0 0
        %2882 = vmatpush1.bf16.msra.mxu0 0
        %2883 = vmatprep.subr.bf16.mxu0 0
        %2884 = vmatpush1.bf16.msra.mxu0 0
        %2885 = vmatprep.subr.bf16.mxu0 0
        %2886 = vmatpush1.bf16.msra.mxu0 0
        %2887 = vmatprep.subr.bf16.mxu0 %v2827
        %2888 = vmatpush1.bf16.msra.mxu0 %v2824
        %2889 = vmatprep.subr.bf16.mxu0 0
        %2890 = vmatpush2.bf16.msra.mxu0 0
        %2891 = vmatprep.subr.bf16.mxu0 0
        %2892 = vmatpush2.bf16.msra.mxu0 0
        %2893 = vmatprep.subr.bf16.mxu0 0
        %2894 = vmatpush2.bf16.msra.mxu0 0
        %2895 = vmatprep.subr.bf16.mxu0 0
        %2896 = vmatpush2.bf16.msra.mxu0 0
        %2897 = vmatprep.subr.bf16.mxu0 0
        %2898 = vmatpush2.bf16.msra.mxu0 0
        %2899 = vmatprep.subr.bf16.mxu0 0
        %2900 = vmatpush2.bf16.msra.mxu0 0
        %2901 = vmatprep.subr.bf16.mxu0 0
        %2902 = vmatpush2.bf16.msra.mxu0 0
        %2903 = vmatprep.subr.bf16.mxu0 0
        %2904 = vmatpush2.bf16.msra.mxu0 0
        %2905 = vmatprep.mubr.bf16.mxu0 0
        %2906 = vmatmul.mubr.bf16.gmra.mxu0 %v2815
        %v2907 = vpop.f32.mrf.mxu0
        %v2908 = vadd.f32 0.0, %v2907
        %v2909 = vpop.f32.mrf.mxu0
        %v2910 = vadd.f32 0.0, %v2909
        %v2911 = vpop.f32.mrf.mxu0
        %v2912 = vpop.f32.mrf.mxu0
        %2913 = vdwg.mxu0
        %2914 = vmatprep.subr.bf16.mxu0 0
        %2915 = vmatpush1.bf16.msra.mxu0 0
        %2916 = vmatprep.subr.bf16.mxu0 0
        %2917 = vmatpush1.bf16.msra.mxu0 0
        %2918 = vmatprep.subr.bf16.mxu0 0
        %2919 = vmatpush1.bf16.msra.mxu0 0
        %2920 = vmatprep.subr.bf16.mxu0 0
        %2921 = vmatpush1.bf16.msra.mxu0 0
        %2922 = vmatprep.subr.bf16.mxu0 0
        %2923 = vmatpush1.bf16.msra.mxu0 0
        %2924 = vmatprep.subr.bf16.mxu0 0
        %2925 = vmatpush1.bf16.msra.mxu0 0
        %2926 = vmatprep.subr.bf16.mxu0 0
        %2927 = vmatpush1.bf16.msra.mxu0 0
        %2928 = vmatprep.subr.bf16.mxu0 0
        %2929 = vmatpush1.bf16.msra.mxu0 %v2830
        %2930 = vmatprep.subr.bf16.mxu0 0
        %2931 = vmatpush2.bf16.msra.mxu0 0
        %2932 = vmatprep.subr.bf16.mxu0 0
        %2933 = vmatpush2.bf16.msra.mxu0 0
        %2934 = vmatprep.subr.bf16.mxu0 0
        %2935 = vmatpush2.bf16.msra.mxu0 0
        %2936 = vmatprep.subr.bf16.mxu0 0
        %2937 = vmatpush2.bf16.msra.mxu0 0
        %2938 = vmatprep.subr.bf16.mxu0 0
        %2939 = vmatpush2.bf16.msra.mxu0 0
        %2940 = vmatprep.subr.bf16.mxu0 0
        %2941 = vmatpush2.bf16.msra.mxu0 0
        %2942 = vmatprep.subr.bf16.mxu0 0
        %2943 = vmatpush2.bf16.msra.mxu0 0
        %2944 = vmatprep.subr.bf16.mxu0 0
        %2945 = vmatpush2.bf16.msra.mxu0 0
        %2946 = vmatprep.mubr.bf16.mxu0 0
        %2947 = vmatmul.mubr.bf16.gmra.mxu0 %v2815
        %v2948 = vpop.f32.mrf.mxu0
        %v2949 = vadd.f32 0.0, %v2948
        %v2950 = vpop.f32.mrf.mxu0
        %v2951 = vpop.f32.mrf.mxu0
        %v2952 = vpop.f32.mrf.mxu0
        %2953 = vdwg.mxu0
        %v2954 = vadd.f32 %v2793, %v2867
        %v2955 = vadd.f32 %v2794, %v2869
        %v2956 = vadd.f32 %v2795, %v2908
        %v2957 = vadd.f32 %v2796, %v2910
        %v2958 = vadd.f32 %v2797, %v2949
        %v2959 = vsel %vm1331, %v2115, 0
        %v2960 = vsel %vm1332, %v2116, 0
        %v2961 = vsel %vm1333, %v2117, 0
        %s2962 = scalar_lea.vmem [#allocation8], 20
        %v2963 = vld [vmem:[%s2962] sm:$0xf]
        %v2967 = vunpack.c.l.b16 %v2959
        %v2968 = vunpack.c.h.b16 %v2959
        %v2969 = vunpack.c.l.b16 %v2960
        %v2970 = vunpack.c.h.b16 %v2960
        %v2971 = vunpack.c.l.b16 %v2961
        %v2972 = vpack.c.b16 %v2967, %v2967
        %v2973 = vpack.c.b16 %v2968, %v2968
        %v2974 = vpack.c.b16 %v2969, %v2969
        %v2975 = vpack.c.b16 %v2970, %v2970
        %v2976 = vpack.c.b16 %v2971, %v2971
        %2977 = vrot.lane.b32.xlu0 %v2972, 110
        %v2978 = vpop.permute.xlu0 %2977
        %2979 = vrot.lane.b32.xlu0 %v2973, 110
        %v2980 = vpop.permute.xlu0 %2979
        %2981 = vrot.lane.b32.xlu0 %v2974, 110
        %v2982 = vpop.permute.xlu0 %2981
        %2983 = vrot.lane.b32.xlu0 %v2975, 110
        %v2984 = vpop.permute.xlu0 %2983
        %2985 = vrot.lane.b32.xlu0 %v2976, 110
        %v2986 = vpop.permute.xlu0 %2985
        %v2987 = vsel %vm1362, %v2978, %v2980
        %v2988 = vsel %vm1362, %v2980, %v2982
        %v2989 = vsel %vm1362, %v2982, %v2984
        %v2990 = vsel %vm1362, %v2984, %v2986
        %v2992 = vsel %vm453, %v2963, 0
        %v2995 = vsel %vm457, %v2987, 0
        %v2998 = vsel %vm457, %v2988, 0
        %v3001 = vsel %vm457, %v2989, 0
        %v3004 = vsel %vm457, %v2990, 0
        %v3007 = vsel %vm457, %v2986, 0
        %3009 = vmatprep.subr.bf16.mxu0 0
        %3010 = vmatpush1.bf16.msra.mxu0 0
        %3011 = vmatprep.subr.bf16.mxu0 0
        %3012 = vmatpush1.bf16.msra.mxu0 0
        %3013 = vmatprep.subr.bf16.mxu0 0
        %3014 = vmatpush1.bf16.msra.mxu0 0
        %3015 = vmatprep.subr.bf16.mxu0 0
        %3016 = vmatpush1.bf16.msra.mxu0 0
        %3017 = vmatprep.subr.bf16.mxu0 0
        %3018 = vmatpush1.bf16.msra.mxu0 0
        %3019 = vmatprep.subr.bf16.mxu0 0
        %3020 = vmatpush1.bf16.msra.mxu0 0
        %3021 = vmatprep.subr.bf16.mxu0 0
        %3022 = vmatpush1.bf16.msra.mxu0 0
        %3023 = vmatprep.subr.bf16.mxu0 %v2998
        %3024 = vmatpush1.bf16.msra.mxu0 %v2995
        %3025 = vmatprep.subr.bf16.mxu0 0
        %3026 = vmatpush2.bf16.msra.mxu0 0
        %3027 = vmatprep.subr.bf16.mxu0 0
        %3028 = vmatpush2.bf16.msra.mxu0 0
        %3029 = vmatprep.subr.bf16.mxu0 0
        %3030 = vmatpush2.bf16.msra.mxu0 0
        %3031 = vmatprep.subr.bf16.mxu0 0
        %3032 = vmatpush2.bf16.msra.mxu0 0
        %3033 = vmatprep.subr.bf16.mxu0 0
        %3034 = vmatpush2.bf16.msra.mxu0 0
        %3035 = vmatprep.subr.bf16.mxu0 0
        %3036 = vmatpush2.bf16.msra.mxu0 0
        %3037 = vmatprep.subr.bf16.mxu0 0
        %3038 = vmatpush2.bf16.msra.mxu0 0
        %3039 = vmatprep.subr.bf16.mxu0 0
        %3040 = vmatpush2.bf16.msra.mxu0 0
        %3041 = vmatprep.mubr.bf16.mxu0 0
        %3042 = vmatmul.mubr.bf16.gmra.mxu0 %v2992
        %v3043 = vpop.f32.mrf.mxu0
        %v3044 = vadd.f32 0.0, %v3043
        %v3045 = vpop.f32.mrf.mxu0
        %v3046 = vadd.f32 0.0, %v3045
        %v3047 = vpop.f32.mrf.mxu0
        %v3048 = vpop.f32.mrf.mxu0
        %3049 = vdwg.mxu0
        %3050 = vmatprep.subr.bf16.mxu0 0
        %3051 = vmatpush1.bf16.msra.mxu0 0
        %3052 = vmatprep.subr.bf16.mxu0 0
        %3053 = vmatpush1.bf16.msra.mxu0 0
        %3054 = vmatprep.subr.bf16.mxu0 0
        %3055 = vmatpush1.bf16.msra.mxu0 0
        %3056 = vmatprep.subr.bf16.mxu0 0
        %3057 = vmatpush1.bf16.msra.mxu0 0
        %3058 = vmatprep.subr.bf16.mxu0 0
        %3059 = vmatpush1.bf16.msra.mxu0 0
        %3060 = vmatprep.subr.bf16.mxu0 0
        %3061 = vmatpush1.bf16.msra.mxu0 0
        %3062 = vmatprep.subr.bf16.mxu0 0
        %3063 = vmatpush1.bf16.msra.mxu0 0
        %3064 = vmatprep.subr.bf16.mxu0 %v3004
        %3065 = vmatpush1.bf16.msra.mxu0 %v3001
        %3066 = vmatprep.subr.bf16.mxu0 0
        %3067 = vmatpush2.bf16.msra.mxu0 0
        %3068 = vmatprep.subr.bf16.mxu0 0
        %3069 = vmatpush2.bf16.msra.mxu0 0
        %3070 = vmatprep.subr.bf16.mxu0 0
        %3071 = vmatpush2.bf16.msra.mxu0 0
        %3072 = vmatprep.subr.bf16.mxu0 0
        %3073 = vmatpush2.bf16.msra.mxu0 0
        %3074 = vmatprep.subr.bf16.mxu0 0
        %3075 = vmatpush2.bf16.msra.mxu0 0
        %3076 = vmatprep.subr.bf16.mxu0 0
        %3077 = vmatpush2.bf16.msra.mxu0 0
        %3078 = vmatprep.subr.bf16.mxu0 0
        %3079 = vmatpush2.bf16.msra.mxu0 0
        %3080 = vmatprep.subr.bf16.mxu0 0
        %3081 = vmatpush2.bf16.msra.mxu0 0
        %3082 = vmatprep.mubr.bf16.mxu0 0
        %3083 = vmatmul.mubr.bf16.gmra.mxu0 %v2992
        %v3084 = vpop.f32.mrf.mxu0
        %v3085 = vadd.f32 0.0, %v3084
        %v3086 = vpop.f32.mrf.mxu0
        %v3087 = vadd.f32 0.0, %v3086
        %v3088 = vpop.f32.mrf.mxu0
        %v3089 = vpop.f32.mrf.mxu0
        %3090 = vdwg.mxu0
        %3091 = vmatprep.subr.bf16.mxu0 0
        %3092 = vmatpush1.bf16.msra.mxu0 0
        %3093 = vmatprep.subr.bf16.mxu0 0
        %3094 = vmatpush1.bf16.msra.mxu0 0
        %3095 = vmatprep.subr.bf16.mxu0 0
        %3096 = vmatpush1.bf16.msra.mxu0 0
        %3097 = vmatprep.subr.bf16.mxu0 0
        %3098 = vmatpush1.bf16.msra.mxu0 0
        %3099 = vmatprep.subr.bf16.mxu0 0
        %3100 = vmatpush1.bf16.msra.mxu0 0
        %3101 = vmatprep.subr.bf16.mxu0 0
        %3102 = vmatpush1.bf16.msra.mxu0 0
        %3103 = vmatprep.subr.bf16.mxu0 0
        %3104 = vmatpush1.bf16.msra.mxu0 0
        %3105 = vmatprep.subr.bf16.mxu0 0
        %3106 = vmatpush1.bf16.msra.mxu0 %v3007
        %3107 = vmatprep.subr.bf16.mxu0 0
        %3108 = vmatpush2.bf16.msra.mxu0 0
        %3109 = vmatprep.subr.bf16.mxu0 0
        %3110 = vmatpush2.bf16.msra.mxu0 0
        %3111 = vmatprep.subr.bf16.mxu0 0
        %3112 = vmatpush2.bf16.msra.mxu0 0
        %3113 = vmatprep.subr.bf16.mxu0 0
        %3114 = vmatpush2.bf16.msra.mxu0 0
        %3115 = vmatprep.subr.bf16.mxu0 0
        %3116 = vmatpush2.bf16.msra.mxu0 0
        %3117 = vmatprep.subr.bf16.mxu0 0
        %3118 = vmatpush2.bf16.msra.mxu0 0
        %3119 = vmatprep.subr.bf16.mxu0 0
        %3120 = vmatpush2.bf16.msra.mxu0 0
        %3121 = vmatprep.subr.bf16.mxu0 0
        %3122 = vmatpush2.bf16.msra.mxu0 0
        %3123 = vmatprep.mubr.bf16.mxu0 0
        %3124 = vmatmul.mubr.bf16.gmra.mxu0 %v2992
        %v3125 = vpop.f32.mrf.mxu0
        %v3126 = vadd.f32 0.0, %v3125
        %v3127 = vpop.f32.mrf.mxu0
        %v3128 = vpop.f32.mrf.mxu0
        %v3129 = vpop.f32.mrf.mxu0
        %3130 = vdwg.mxu0
        %v3131 = vadd.f32 %v2954, %v3044
        %v3132 = vadd.f32 %v2955, %v3046
        %v3133 = vadd.f32 %v2956, %v3085
        %v3134 = vadd.f32 %v2957, %v3087
        %v3135 = vadd.f32 %v2958, %v3126
        %v3136 = vsel %vm1525, %v2115, 0
        %v3137 = vsel %vm1526, %v2116, 0
        %v3138 = vsel %vm1527, %v2117, 0
        %s3139 = scalar_lea.vmem [#allocation8], 24
        %v3140 = vld [vmem:[%s3139] sm:$0xf]
        %v3144 = vunpack.c.l.b16 %v3136
        %v3145 = vunpack.c.h.b16 %v3136
        %v3146 = vunpack.c.l.b16 %v3137
        %v3147 = vunpack.c.h.b16 %v3137
        %v3148 = vunpack.c.l.b16 %v3138
        %v3149 = vpack.c.b16 %v3144, %v3144
        %v3150 = vpack.c.b16 %v3145, %v3145
        %v3151 = vpack.c.b16 %v3146, %v3146
        %v3152 = vpack.c.b16 %v3147, %v3147
        %v3153 = vpack.c.b16 %v3148, %v3148
        %3154 = vrot.lane.b32.xlu0 %v3149, 96
        %v3155 = vpop.permute.xlu0 %3154
        %3156 = vrot.lane.b32.xlu0 %v3150, 96
        %v3157 = vpop.permute.xlu0 %3156
        %3158 = vrot.lane.b32.xlu0 %v3151, 96
        %v3159 = vpop.permute.xlu0 %3158
        %3160 = vrot.lane.b32.xlu0 %v3152, 96
        %v3161 = vpop.permute.xlu0 %3160
        %3162 = vrot.lane.b32.xlu0 %v3153, 96
        %v3163 = vpop.permute.xlu0 %3162
        %v3164 = vsel %vm1556, %v3155, %v3157
        %v3165 = vsel %vm1556, %v3157, %v3159
        %v3166 = vsel %vm1556, %v3159, %v3161
        %v3167 = vsel %vm1556, %v3161, %v3163
        %v3169 = vsel %vm453, %v3140, 0
        %v3172 = vsel %vm457, %v3164, 0
        %v3175 = vsel %vm457, %v3165, 0
        %v3178 = vsel %vm457, %v3166, 0
        %v3181 = vsel %vm457, %v3167, 0
        %v3184 = vsel %vm457, %v3163, 0
        %3186 = vmatprep.subr.bf16.mxu0 0
        %3187 = vmatpush1.bf16.msra.mxu0 0
        %3188 = vmatprep.subr.bf16.mxu0 0
        %3189 = vmatpush1.bf16.msra.mxu0 0
        %3190 = vmatprep.subr.bf16.mxu0 0
        %3191 = vmatpush1.bf16.msra.mxu0 0
        %3192 = vmatprep.subr.bf16.mxu0 0
        %3193 = vmatpush1.bf16.msra.mxu0 0
        %3194 = vmatprep.subr.bf16.mxu0 0
        %3195 = vmatpush1.bf16.msra.mxu0 0
        %3196 = vmatprep.subr.bf16.mxu0 0
        %3197 = vmatpush1.bf16.msra.mxu0 0
        %3198 = vmatprep.subr.bf16.mxu0 0
        %3199 = vmatpush1.bf16.msra.mxu0 0
        %3200 = vmatprep.subr.bf16.mxu0 %v3175
        %3201 = vmatpush1.bf16.msra.mxu0 %v3172
        %3202 = vmatprep.subr.bf16.mxu0 0
        %3203 = vmatpush2.bf16.msra.mxu0 0
        %3204 = vmatprep.subr.bf16.mxu0 0
        %3205 = vmatpush2.bf16.msra.mxu0 0
        %3206 = vmatprep.subr.bf16.mxu0 0
        %3207 = vmatpush2.bf16.msra.mxu0 0
        %3208 = vmatprep.subr.bf16.mxu0 0
        %3209 = vmatpush2.bf16.msra.mxu0 0
        %3210 = vmatprep.subr.bf16.mxu0 0
        %3211 = vmatpush2.bf16.msra.mxu0 0
        %3212 = vmatprep.subr.bf16.mxu0 0
        %3213 = vmatpush2.bf16.msra.mxu0 0
        %3214 = vmatprep.subr.bf16.mxu0 0
        %3215 = vmatpush2.bf16.msra.mxu0 0
        %3216 = vmatprep.subr.bf16.mxu0 0
        %3217 = vmatpush2.bf16.msra.mxu0 0
        %3218 = vmatprep.mubr.bf16.mxu0 0
        %3219 = vmatmul.mubr.bf16.gmra.mxu0 %v3169
        %v3220 = vpop.f32.mrf.mxu0
        %v3221 = vadd.f32 0.0, %v3220
        %v3222 = vpop.f32.mrf.mxu0
        %v3223 = vadd.f32 0.0, %v3222
        %v3224 = vpop.f32.mrf.mxu0
        %v3225 = vpop.f32.mrf.mxu0
        %3226 = vdwg.mxu0
        %3227 = vmatprep.subr.bf16.mxu0 0
        %3228 = vmatpush1.bf16.msra.mxu0 0
        %3229 = vmatprep.subr.bf16.mxu0 0
        %3230 = vmatpush1.bf16.msra.mxu0 0
        %3231 = vmatprep.subr.bf16.mxu0 0
        %3232 = vmatpush1.bf16.msra.mxu0 0
        %3233 = vmatprep.subr.bf16.mxu0 0
        %3234 = vmatpush1.bf16.msra.mxu0 0
        %3235 = vmatprep.subr.bf16.mxu0 0
        %3236 = vmatpush1.bf16.msra.mxu0 0
        %3237 = vmatprep.subr.bf16.mxu0 0
        %3238 = vmatpush1.bf16.msra.mxu0 0
        %3239 = vmatprep.subr.bf16.mxu0 0
        %3240 = vmatpush1.bf16.msra.mxu0 0
        %3241 = vmatprep.subr.bf16.mxu0 %v3181
        %3242 = vmatpush1.bf16.msra.mxu0 %v3178
        %3243 = vmatprep.subr.bf16.mxu0 0
        %3244 = vmatpush2.bf16.msra.mxu0 0
        %3245 = vmatprep.subr.bf16.mxu0 0
        %3246 = vmatpush2.bf16.msra.mxu0 0
        %3247 = vmatprep.subr.bf16.mxu0 0
        %3248 = vmatpush2.bf16.msra.mxu0 0
        %3249 = vmatprep.subr.bf16.mxu0 0
        %3250 = vmatpush2.bf16.msra.mxu0 0
        %3251 = vmatprep.subr.bf16.mxu0 0
        %3252 = vmatpush2.bf16.msra.mxu0 0
        %3253 = vmatprep.subr.bf16.mxu0 0
        %3254 = vmatpush2.bf16.msra.mxu0 0
        %3255 = vmatprep.subr.bf16.mxu0 0
        %3256 = vmatpush2.bf16.msra.mxu0 0
        %3257 = vmatprep.subr.bf16.mxu0 0
        %3258 = vmatpush2.bf16.msra.mxu0 0
        %3259 = vmatprep.mubr.bf16.mxu0 0
        %3260 = vmatmul.mubr.bf16.gmra.mxu0 %v3169
        %v3261 = vpop.f32.mrf.mxu0
        %v3262 = vadd.f32 0.0, %v3261
        %v3263 = vpop.f32.mrf.mxu0
        %v3264 = vadd.f32 0.0, %v3263
        %v3265 = vpop.f32.mrf.mxu0
        %v3266 = vpop.f32.mrf.mxu0
        %3267 = vdwg.mxu0
        %3268 = vmatprep.subr.bf16.mxu0 0
        %3269 = vmatpush1.bf16.msra.mxu0 0
        %3270 = vmatprep.subr.bf16.mxu0 0
        %3271 = vmatpush1.bf16.msra.mxu0 0
        %3272 = vmatprep.subr.bf16.mxu0 0
        %3273 = vmatpush1.bf16.msra.mxu0 0
        %3274 = vmatprep.subr.bf16.mxu0 0
        %3275 = vmatpush1.bf16.msra.mxu0 0
        %3276 = vmatprep.subr.bf16.mxu0 0
        %3277 = vmatpush1.bf16.msra.mxu0 0
        %3278 = vmatprep.subr.bf16.mxu0 0
        %3279 = vmatpush1.bf16.msra.mxu0 0
        %3280 = vmatprep.subr.bf16.mxu0 0
        %3281 = vmatpush1.bf16.msra.mxu0 0
        %3282 = vmatprep.subr.bf16.mxu0 0
        %3283 = vmatpush1.bf16.msra.mxu0 %v3184
        %3284 = vmatprep.subr.bf16.mxu0 0
        %3285 = vmatpush2.bf16.msra.mxu0 0
        %3286 = vmatprep.subr.bf16.mxu0 0
        %3287 = vmatpush2.bf16.msra.mxu0 0
        %3288 = vmatprep.subr.bf16.mxu0 0
        %3289 = vmatpush2.bf16.msra.mxu0 0
        %3290 = vmatprep.subr.bf16.mxu0 0
        %3291 = vmatpush2.bf16.msra.mxu0 0
        %3292 = vmatprep.subr.bf16.mxu0 0
        %3293 = vmatpush2.bf16.msra.mxu0 0
        %3294 = vmatprep.subr.bf16.mxu0 0
        %3295 = vmatpush2.bf16.msra.mxu0 0
        %3296 = vmatprep.subr.bf16.mxu0 0
        %3297 = vmatpush2.bf16.msra.mxu0 0
        %3298 = vmatprep.subr.bf16.mxu0 0
        %3299 = vmatpush2.bf16.msra.mxu0 0
        %3300 = vmatprep.mubr.bf16.mxu0 0
        %3301 = vmatmul.mubr.bf16.gmra.mxu0 %v3169
        %v3302 = vpop.f32.mrf.mxu0
        %v3303 = vadd.f32 0.0, %v3302
        %v3304 = vpop.f32.mrf.mxu0
        %v3305 = vpop.f32.mrf.mxu0
        %v3306 = vpop.f32.mrf.mxu0
        %3307 = vdwg.mxu0
        %v3308 = vadd.f32 %v3131, %v3221
        %v3309 = vadd.f32 %v3132, %v3223
        %v3310 = vadd.f32 %v3133, %v3262
        %v3311 = vadd.f32 %v3134, %v3264
        %v3312 = vadd.f32 %v3135, %v3303
        %s3313 = scalar_lea.vmem [#allocation8], 28
        %v3314 = vld [vmem:[%s3313] sm:$0xf]
        %3315 = vrot.lane.b32.xlu0 %v2132, 95
        %v3316 = vpop.permute.xlu0 %3315
        %3317 = vrot.lane.b32.xlu0 %v2133, 95
        %v3318 = vpop.permute.xlu0 %3317
        %3319 = vrot.lane.b32.xlu0 %v2134, 95
        %v3320 = vpop.permute.xlu0 %3319
        %3321 = vrot.lane.b32.xlu0 %v2135, 95
        %v3322 = vpop.permute.xlu0 %3321
        %3323 = vrot.lane.b32.xlu0 %v2136, 95
        %v3324 = vpop.permute.xlu0 %3323
        %v3325 = vsel %vm1718, %v3316, %v3318
        %v3326 = vsel %vm1718, %v3318, %v3320
        %v3327 = vsel %vm1718, %v3320, %v3322
        %v3328 = vsel %vm1718, %v3322, %v3324
        %v3330 = vsel %vm453, %v3314, 0
        %v3333 = vsel %vm457, %v3325, 0
        %v3336 = vsel %vm457, %v3326, 0
        %v3339 = vsel %vm457, %v3327, 0
        %v3342 = vsel %vm457, %v3328, 0
        %v3345 = vsel %vm457, %v3324, 0
        %3347 = vmatprep.subr.bf16.mxu0 0
        %3348 = vmatpush1.bf16.msra.mxu0 0
        %3349 = vmatprep.subr.bf16.mxu0 0
        %3350 = vmatpush1.bf16.msra.mxu0 0
        %3351 = vmatprep.subr.bf16.mxu0 0
        %3352 = vmatpush1.bf16.msra.mxu0 0
        %3353 = vmatprep.subr.bf16.mxu0 0
        %3354 = vmatpush1.bf16.msra.mxu0 0
        %3355 = vmatprep.subr.bf16.mxu0 0
        %3356 = vmatpush1.bf16.msra.mxu0 0
        %3357 = vmatprep.subr.bf16.mxu0 0
        %3358 = vmatpush1.bf16.msra.mxu0 0
        %3359 = vmatprep.subr.bf16.mxu0 0
        %3360 = vmatpush1.bf16.msra.mxu0 0
        %3361 = vmatprep.subr.bf16.mxu0 %v3336
        %3362 = vmatpush1.bf16.msra.mxu0 %v3333
        %3363 = vmatprep.subr.bf16.mxu0 0
        %3364 = vmatpush2.bf16.msra.mxu0 0
        %3365 = vmatprep.subr.bf16.mxu0 0
        %3366 = vmatpush2.bf16.msra.mxu0 0
        %3367 = vmatprep.subr.bf16.mxu0 0
        %3368 = vmatpush2.bf16.msra.mxu0 0
        %3369 = vmatprep.subr.bf16.mxu0 0
        %3370 = vmatpush2.bf16.msra.mxu0 0
        %3371 = vmatprep.subr.bf16.mxu0 0
        %3372 = vmatpush2.bf16.msra.mxu0 0
        %3373 = vmatprep.subr.bf16.mxu0 0
        %3374 = vmatpush2.bf16.msra.mxu0 0
        %3375 = vmatprep.subr.bf16.mxu0 0
        %3376 = vmatpush2.bf16.msra.mxu0 0
        %3377 = vmatprep.subr.bf16.mxu0 0
        %3378 = vmatpush2.bf16.msra.mxu0 0
        %3379 = vmatprep.mubr.bf16.mxu0 0
        %3380 = vmatmul.mubr.bf16.gmra.mxu0 %v3330
        %v3381 = vpop.f32.mrf.mxu0
        %v3382 = vadd.f32 0.0, %v3381
        %v3383 = vpop.f32.mrf.mxu0
        %v3384 = vadd.f32 0.0, %v3383
        %v3385 = vpop.f32.mrf.mxu0
        %v3386 = vpop.f32.mrf.mxu0
        %3387 = vdwg.mxu0
        %3388 = vmatprep.subr.bf16.mxu0 0
        %3389 = vmatpush1.bf16.msra.mxu0 0
        %3390 = vmatprep.subr.bf16.mxu0 0
        %3391 = vmatpush1.bf16.msra.mxu0 0
        %3392 = vmatprep.subr.bf16.mxu0 0
        %3393 = vmatpush1.bf16.msra.mxu0 0
        %3394 = vmatprep.subr.bf16.mxu0 0
        %3395 = vmatpush1.bf16.msra.mxu0 0
        %3396 = vmatprep.subr.bf16.mxu0 0
        %3397 = vmatpush1.bf16.msra.mxu0 0
        %3398 = vmatprep.subr.bf16.mxu0 0
        %3399 = vmatpush1.bf16.msra.mxu0 0
        %3400 = vmatprep.subr.bf16.mxu0 0
        %3401 = vmatpush1.bf16.msra.mxu0 0
        %3402 = vmatprep.subr.bf16.mxu0 %v3342
        %3403 = vmatpush1.bf16.msra.mxu0 %v3339
        %3404 = vmatprep.subr.bf16.mxu0 0
        %3405 = vmatpush2.bf16.msra.mxu0 0
        %3406 = vmatprep.subr.bf16.mxu0 0
        %3407 = vmatpush2.bf16.msra.mxu0 0
        %3408 = vmatprep.subr.bf16.mxu0 0
        %3409 = vmatpush2.bf16.msra.mxu0 0
        %3410 = vmatprep.subr.bf16.mxu0 0
        %3411 = vmatpush2.bf16.msra.mxu0 0
        %3412 = vmatprep.subr.bf16.mxu0 0
        %3413 = vmatpush2.bf16.msra.mxu0 0
        %3414 = vmatprep.subr.bf16.mxu0 0
        %3415 = vmatpush2.bf16.msra.mxu0 0
        %3416 = vmatprep.subr.bf16.mxu0 0
        %3417 = vmatpush2.bf16.msra.mxu0 0
        %3418 = vmatprep.subr.bf16.mxu0 0
        %3419 = vmatpush2.bf16.msra.mxu0 0
        %3420 = vmatprep.mubr.bf16.mxu0 0
        %3421 = vmatmul.mubr.bf16.gmra.mxu0 %v3330
        %v3422 = vpop.f32.mrf.mxu0
        %v3423 = vadd.f32 0.0, %v3422
        %v3424 = vpop.f32.mrf.mxu0
        %v3425 = vadd.f32 0.0, %v3424
        %v3426 = vpop.f32.mrf.mxu0
        %v3427 = vpop.f32.mrf.mxu0
        %3428 = vdwg.mxu0
        %3429 = vmatprep.subr.bf16.mxu0 0
        %3430 = vmatpush1.bf16.msra.mxu0 0
        %3431 = vmatprep.subr.bf16.mxu0 0
        %3432 = vmatpush1.bf16.msra.mxu0 0
        %3433 = vmatprep.subr.bf16.mxu0 0
        %3434 = vmatpush1.bf16.msra.mxu0 0
        %3435 = vmatprep.subr.bf16.mxu0 0
        %3436 = vmatpush1.bf16.msra.mxu0 0
        %3437 = vmatprep.subr.bf16.mxu0 0
        %3438 = vmatpush1.bf16.msra.mxu0 0
        %3439 = vmatprep.subr.bf16.mxu0 0
        %3440 = vmatpush1.bf16.msra.mxu0 0
        %3441 = vmatprep.subr.bf16.mxu0 0
        %3442 = vmatpush1.bf16.msra.mxu0 0
        %3443 = vmatprep.subr.bf16.mxu0 0
        %3444 = vmatpush1.bf16.msra.mxu0 %v3345
        %3445 = vmatprep.subr.bf16.mxu0 0
        %3446 = vmatpush2.bf16.msra.mxu0 0
        %3447 = vmatprep.subr.bf16.mxu0 0
        %3448 = vmatpush2.bf16.msra.mxu0 0
        %3449 = vmatprep.subr.bf16.mxu0 0
        %3450 = vmatpush2.bf16.msra.mxu0 0
        %3451 = vmatprep.subr.bf16.mxu0 0
        %3452 = vmatpush2.bf16.msra.mxu0 0
        %3453 = vmatprep.subr.bf16.mxu0 0
        %3454 = vmatpush2.bf16.msra.mxu0 0
        %3455 = vmatprep.subr.bf16.mxu0 0
        %3456 = vmatpush2.bf16.msra.mxu0 0
        %3457 = vmatprep.subr.bf16.mxu0 0
        %3458 = vmatpush2.bf16.msra.mxu0 0
        %3459 = vmatprep.subr.bf16.mxu0 0
        %3460 = vmatpush2.bf16.msra.mxu0 0
        %3461 = vmatprep.mubr.bf16.mxu0 0
        %3462 = vmatmul.mubr.bf16.gmra.mxu0 %v3330
        %v3463 = vpop.f32.mrf.mxu0
        %v3464 = vadd.f32 0.0, %v3463
        %v3465 = vpop.f32.mrf.mxu0
        %v3466 = vpop.f32.mrf.mxu0
        %v3467 = vpop.f32.mrf.mxu0
        %3468 = vdwg.mxu0
        %v3469 = vadd.f32 %v3308, %v3382
        %v3470 = vadd.f32 %v3309, %v3384
        %v3471 = vadd.f32 %v3310, %v3423
        %v3472 = vadd.f32 %v3311, %v3425
        %v3473 = vadd.f32 %v3312, %v3464
        %v3474 = vsel %vm1881, %v2115, 0
        %v3475 = vsel %vm1882, %v2116, 0
        %v3476 = vsel %vm1883, %v2117, 0
        %s3477 = scalar_lea.vmem [#allocation8], 32
        %v3478 = vld [vmem:[%s3477] sm:$0xf]
        %v3482 = vunpack.c.l.b16 %v3474
        %v3483 = vunpack.c.h.b16 %v3474
        %v3484 = vunpack.c.l.b16 %v3475
        %v3485 = vunpack.c.h.b16 %v3475
        %v3486 = vunpack.c.l.b16 %v3476
        %v3487 = vpack.c.b16 %v3482, %v3482
        %v3488 = vpack.c.b16 %v3483, %v3483
        %v3489 = vpack.c.b16 %v3484, %v3484
        %v3490 = vpack.c.b16 %v3485, %v3485
        %v3491 = vpack.c.b16 %v3486, %v3486
        %3492 = vrot.lane.b32.xlu0 %v3487, 94
        %v3493 = vpop.permute.xlu0 %3492
        %3494 = vrot.lane.b32.xlu0 %v3488, 94
        %v3495 = vpop.permute.xlu0 %3494
        %3496 = vrot.lane.b32.xlu0 %v3489, 94
        %v3497 = vpop.permute.xlu0 %3496
        %3498 = vrot.lane.b32.xlu0 %v3490, 94
        %v3499 = vpop.permute.xlu0 %3498
        %3500 = vrot.lane.b32.xlu0 %v3491, 94
        %v3501 = vpop.permute.xlu0 %3500
        %v3502 = vsel %vm1912, %v3493, %v3495
        %v3503 = vsel %vm1912, %v3495, %v3497
        %v3504 = vsel %vm1912, %v3497, %v3499
        %v3505 = vsel %vm1912, %v3499, %v3501
        %v3507 = vsel %vm453, %v3478, 0
        %v3510 = vsel %vm457, %v3502, 0
        %v3513 = vsel %vm457, %v3503, 0
        %v3516 = vsel %vm457, %v3504, 0
        %v3519 = vsel %vm457, %v3505, 0
        %v3522 = vsel %vm457, %v3501, 0
        %3524 = vmatprep.subr.bf16.mxu0 0
        %3525 = vmatpush1.bf16.msra.mxu0 0
        %3526 = vmatprep.subr.bf16.mxu0 0
        %3527 = vmatpush1.bf16.msra.mxu0 0
        %3528 = vmatprep.subr.bf16.mxu0 0
        %3529 = vmatpush1.bf16.msra.mxu0 0
        %3530 = vmatprep.subr.bf16.mxu0 0
        %3531 = vmatpush1.bf16.msra.mxu0 0
        %3532 = vmatprep.subr.bf16.mxu0 0
        %3533 = vmatpush1.bf16.msra.mxu0 0
        %3534 = vmatprep.subr.bf16.mxu0 0
        %3535 = vmatpush1.bf16.msra.mxu0 0
        %3536 = vmatprep.subr.bf16.mxu0 0
        %3537 = vmatpush1.bf16.msra.mxu0 0
        %3538 = vmatprep.subr.bf16.mxu0 %v3513
        %3539 = vmatpush1.bf16.msra.mxu0 %v3510
        %3540 = vmatprep.subr.bf16.mxu0 0
        %3541 = vmatpush2.bf16.msra.mxu0 0
        %3542 = vmatprep.subr.bf16.mxu0 0
        %3543 = vmatpush2.bf16.msra.mxu0 0
        %3544 = vmatprep.subr.bf16.mxu0 0
        %3545 = vmatpush2.bf16.msra.mxu0 0
        %3546 = vmatprep.subr.bf16.mxu0 0
        %3547 = vmatpush2.bf16.msra.mxu0 0
        %3548 = vmatprep.subr.bf16.mxu0 0
        %3549 = vmatpush2.bf16.msra.mxu0 0
        %3550 = vmatprep.subr.bf16.mxu0 0
        %3551 = vmatpush2.bf16.msra.mxu0 0
        %3552 = vmatprep.subr.bf16.mxu0 0
        %3553 = vmatpush2.bf16.msra.mxu0 0
        %3554 = vmatprep.subr.bf16.mxu0 0
        %3555 = vmatpush2.bf16.msra.mxu0 0
        %3556 = vmatprep.mubr.bf16.mxu0 0
        %3557 = vmatmul.mubr.bf16.gmra.mxu0 %v3507
        %v3558 = vpop.f32.mrf.mxu0
        %v3559 = vadd.f32 0.0, %v3558
        %v3560 = vpop.f32.mrf.mxu0
        %v3561 = vadd.f32 0.0, %v3560
        %v3562 = vpop.f32.mrf.mxu0
        %v3563 = vpop.f32.mrf.mxu0
        %3564 = vdwg.mxu0
        %3565 = vmatprep.subr.bf16.mxu0 0
        %3566 = vmatpush1.bf16.msra.mxu0 0
        %3567 = vmatprep.subr.bf16.mxu0 0
        %3568 = vmatpush1.bf16.msra.mxu0 0
        %3569 = vmatprep.subr.bf16.mxu0 0
        %3570 = vmatpush1.bf16.msra.mxu0 0
        %3571 = vmatprep.subr.bf16.mxu0 0
        %3572 = vmatpush1.bf16.msra.mxu0 0
        %3573 = vmatprep.subr.bf16.mxu0 0
        %3574 = vmatpush1.bf16.msra.mxu0 0
        %3575 = vmatprep.subr.bf16.mxu0 0
        %3576 = vmatpush1.bf16.msra.mxu0 0
        %3577 = vmatprep.subr.bf16.mxu0 0
        %3578 = vmatpush1.bf16.msra.mxu0 0
        %3579 = vmatprep.subr.bf16.mxu0 %v3519
        %3580 = vmatpush1.bf16.msra.mxu0 %v3516
        %3581 = vmatprep.subr.bf16.mxu0 0
        %3582 = vmatpush2.bf16.msra.mxu0 0
        %3583 = vmatprep.subr.bf16.mxu0 0
        %3584 = vmatpush2.bf16.msra.mxu0 0
        %3585 = vmatprep.subr.bf16.mxu0 0
        %3586 = vmatpush2.bf16.msra.mxu0 0
        %3587 = vmatprep.subr.bf16.mxu0 0
        %3588 = vmatpush2.bf16.msra.mxu0 0
        %3589 = vmatprep.subr.bf16.mxu0 0
        %3590 = vmatpush2.bf16.msra.mxu0 0
        %3591 = vmatprep.subr.bf16.mxu0 0
        %3592 = vmatpush2.bf16.msra.mxu0 0
        %3593 = vmatprep.subr.bf16.mxu0 0
        %3594 = vmatpush2.bf16.msra.mxu0 0
        %3595 = vmatprep.subr.bf16.mxu0 0
        %3596 = vmatpush2.bf16.msra.mxu0 0
        %3597 = vmatprep.mubr.bf16.mxu0 0
        %3598 = vmatmul.mubr.bf16.gmra.mxu0 %v3507
        %v3599 = vpop.f32.mrf.mxu0
        %v3600 = vadd.f32 0.0, %v3599
        %v3601 = vpop.f32.mrf.mxu0
        %v3602 = vadd.f32 0.0, %v3601
        %v3603 = vpop.f32.mrf.mxu0
        %v3604 = vpop.f32.mrf.mxu0
        %3605 = vdwg.mxu0
        %3606 = vmatprep.subr.bf16.mxu0 0
        %3607 = vmatpush1.bf16.msra.mxu0 0
        %3608 = vmatprep.subr.bf16.mxu0 0
        %3609 = vmatpush1.bf16.msra.mxu0 0
        %3610 = vmatprep.subr.bf16.mxu0 0
        %3611 = vmatpush1.bf16.msra.mxu0 0
        %3612 = vmatprep.subr.bf16.mxu0 0
        %3613 = vmatpush1.bf16.msra.mxu0 0
        %3614 = vmatprep.subr.bf16.mxu0 0
        %3615 = vmatpush1.bf16.msra.mxu0 0
        %3616 = vmatprep.subr.bf16.mxu0 0
        %3617 = vmatpush1.bf16.msra.mxu0 0
        %3618 = vmatprep.subr.bf16.mxu0 0
        %3619 = vmatpush1.bf16.msra.mxu0 0
        %3620 = vmatprep.subr.bf16.mxu0 0
        %3621 = vmatpush1.bf16.msra.mxu0 %v3522
        %3622 = vmatprep.subr.bf16.mxu0 0
        %3623 = vmatpush2.bf16.msra.mxu0 0
        %3624 = vmatprep.subr.bf16.mxu0 0
        %3625 = vmatpush2.bf16.msra.mxu0 0
        %3626 = vmatprep.subr.bf16.mxu0 0
        %3627 = vmatpush2.bf16.msra.mxu0 0
        %3628 = vmatprep.subr.bf16.mxu0 0
        %3629 = vmatpush2.bf16.msra.mxu0 0
        %3630 = vmatprep.subr.bf16.mxu0 0
        %3631 = vmatpush2.bf16.msra.mxu0 0
        %3632 = vmatprep.subr.bf16.mxu0 0
        %3633 = vmatpush2.bf16.msra.mxu0 0
        %3634 = vmatprep.subr.bf16.mxu0 0
        %3635 = vmatpush2.bf16.msra.mxu0 0
        %3636 = vmatprep.subr.bf16.mxu0 0
        %3637 = vmatpush2.bf16.msra.mxu0 0
        %3638 = vmatprep.mubr.bf16.mxu0 0
        %3639 = vmatmul.mubr.bf16.gmra.mxu0 %v3507
        %v3640 = vpop.f32.mrf.mxu0
        %v3641 = vadd.f32 0.0, %v3640
        %v3642 = vpop.f32.mrf.mxu0
        %v3643 = vpop.f32.mrf.mxu0
        %v3644 = vpop.f32.mrf.mxu0
        %3645 = vdwg.mxu0
        %v3646 = vadd.f32 %v3469, %v3559
        %v3647 = vadd.f32 %v3470, %v3561
        %v3648 = vadd.f32 %v3471, %v3600
        %v3649 = vadd.f32 %v3472, %v3602
        %v3650 = vadd.f32 %v3473, %v3641
        %v3651 = vld [vmem:[%s4] sm:$0xff]
        %3653 = vset.pattern.permute.xlu0 0
        %3654 = vperm.xlu0 %3653, %v3651
        %v3655 = vpop.permute.xlu0 %3654
        %v3657 = vadd.f32 %v3646, %v3655
        %v3658 = vadd.f32 %v3647, %v3655
        %v3659 = vadd.f32 %v3648, %v3655
        %v3660 = vadd.f32 %v3649, %v3655
        %v3661 = vadd.f32 %v3650, %v3655
        %v3662 = vld [vmem:[%s238] sm:$0xff]
        %v3663 = vld [vmem:[%s238 + $0x8] sm:$0xff]
        %v3664 = vadd.f32 %v3657, %v3662
        %v3665 = vadd.f32 %v3658, %v3663
        %v3666 = vmax.f32 %v3664, 0.0
        %v3667 = vmax.f32 %v3665, 0.0
        %3668 = vst [vmem:[%s272] sm:$0xff] %v3666
        %3669 = vst [vmem:[%s272 + $0x8] sm:$0xff] %v3667
        %v3670 = vld [vmem:[%s305] sm:$0xff]
        %v3671 = vld [vmem:[%s305 + $0x8] sm:$0xff]
        %3674 = vrot.lane.b32.xlu0 %v3670, 16
        %v3675 = vpop.permute.xlu0 %3674
        %3676 = vrot.lane.b32.xlu0 %v3671, 16
        %v3677 = vpop.permute.xlu0 %3676
        %vm3678 = vcmask 130048
        %v3679 = vsel %vm3678, %v3675, %v3677
        %v3683 = vadd.f32 %v3659, %v3675
        %v3684 = vadd.f32 %v3660, %v3679
        %v3685 = vadd.f32 %v3661, %v3677
        %v3686 = vmax.f32 %v3683, 0.0
        %v3687 = vmax.f32 %v3684, 0.0
        %v3688 = vmax.f32 %v3685, 0.0
        %3692 = vrot.lane.b32.xlu0 %v3686, 112
        %v3693 = vpop.permute.xlu0 %3692
        %3694 = vrot.lane.b32.xlu0 %v3687, 112
        %v3695 = vpop.permute.xlu0 %3694
        %3696 = vrot.lane.b32.xlu0 %v3688, 112
        %v3697 = vpop.permute.xlu0 %3696
        %vm3698 = vcmask 916480
        %v3699 = vsel %vm3698, %v3693, %v3695
        %v3700 = vsel %vm3698, %v3695, %v3697
        %s3703 = scalar_lea.vmem %s272, 16 [#allocation9]
        %3704 = vst [vmem:[%s3703] sm:$0xff] %v3699
        %3705 = vst [vmem:[%s3703 + $0x8] sm:$0xff] %v3700
        %s3706 = sand.u32 %s141, 1
        %s3707 = scalar_lea.sflag [#allocation5], %s3706
        %s3708 = sand.u32 %s141, 1
        %s3709 = smul.addr %s3708, 32
        %s3710 = scalar_lea.vmem [#allocation9], %s3709
        // Predicated region
        $region53: #{tpu_custom_call.1} parent=39 // pred_check
          %p3711 = pneg %p151
        $region54: #{tpu_custom_call.1} parent=39 // pred_check_branch
          %3713 = sbr.rel (%p3711) target = $region56
        $region55: #{tpu_custom_call.1} parent=39 // pred_region
          %s3714 = smul.u32 2, %s23
          %s3716 = ssub.s32 512, 512
          %3717 = vsyncadd %s3707, %s3716
          %s3718 = smul.addr %s3714, 2
          %s3719 = smul.addr %s3718, 128
          %s3720 = scalar_lea.hbm %s5, %s3719
          %s3721 = sshll.u32 %s3710, 4
          %s3722 = int_to_ptr.vmem [resolvable:$true] %s3721
          %3727 = dma.vmem_to_hbm [thread:$0]  %s3722, 512, %s3720, %s3707, 256, 256, 16
        $region56: #{tpu_custom_call.1} parent=39 // pred_fallthru
          _
      $region40: #{tpu_custom_call.1} parent=5 // pred_fallthru
        _
      %p3728 = scmp.le.s32.totalorder 2, %s18
      // Predicated region
      $region57: #{tpu_custom_call.1} parent=5 // pred_check
        %p3729 = pneg %p3728
      $region58: #{tpu_custom_call.1} parent=5 // pred_check_branch
        %3731 = sbr.rel (%p3729) target = $region60
      $region59: #{tpu_custom_call.1} parent=5 // pred_region
        %s3732 = ssub.s32 %s18, 2
        // Predicated region
        $region61: #{tpu_custom_call.1} parent=59 // pred_check
          %p3733 = pneg %p157
        $region62: #{tpu_custom_call.1} parent=59 // pred_check_branch
          %3735 = sbr.rel (%p3733) target = $region64
        $region63: #{tpu_custom_call.1} parent=59 // pred_region
          %s3736 = sand.u32 %s142, 1
          %s3737 = scalar_lea.sflag [#allocation5], %s3736
          %s3738 = sand.u32 %s142, 1
          %s3739 = smul.addr %s3738, 32
          %s3740 = scalar_lea.vmem [#allocation9], %s3739
          %3741 = dma.done %s3737, 512
        $region64: #{tpu_custom_call.1} parent=59 // pred_fallthru
          _
      $region60: #{tpu_custom_call.1} parent=5 // pred_fallthru
        _
    $region6: #{tpu_custom_call.1} parent=1 // loop_footer
      %s22 = sadd.s32 1, %s18
    $region7: #{tpu_custom_call.1} parent=1 // loop_footer_branch
      %17 = sbr.rel target = $region3
    $region8: #{tpu_custom_call.1} parent=1 // loop_exit
      _
    %3742 = vsyncpa [#allocation4], 1
    %s3743 = scalar_lea.sflag [#allocation4], 1
    %3744 = vsyncpa %s3743, 1
    %3745 = vsyncpa [#allocation7], 1
    %3746 = vsyncpa [#allocation5], 1
    %s3747 = scalar_lea.sflag [#allocation5], 1
    %3748 = vsyncpa %s3747, 1

// kernel: tpu_custom_call.1
$region0: #{tpu_custom_call.1}
  #allocation0 [shape = 'u32[]', space=smem, size = 0x4, offset = 0x4, fixed_abs, tag = 'smem constant byte address 0x4 - core index']
  #allocation1 [shape = 'u32[144,128]{1,0:T(1,128)}', space=vmem, size = 0x12000, scoped, tag = 'internal scratch']
  #allocation2 [shape = 'bf16[8,562]{1,0:T(8,128)(2,1)}', space=vmem, size = 0x2800, scoped, tag = 'scratch operand']
  %s0 = inlined_call_operand.hbm [shape: f32[4,8,256], index: 0, kind: input, shape index: {}]
  %s1 = inlined_call_operand.hbm [shape: bf16[3,3,8,8], index: 1, kind: input, shape index: {}]
  %s2 = inlined_call_operand.vmem [shape: f32[8,1], index: 2, kind: input, shape index: {}]
  %s3 = inlined_call_operand.hbm [shape: bf16[3,3,8,8], index: 3, kind: input, shape index: {}]
  %s4 = inlined_call_operand.vmem [shape: f32[8,1], index: 4, kind: input, shape index: {}]
  %s5 = inlined_call_operand.hbm [shape: f32[4,8,256], index: 5, kind: output, shape index: {}]
  %s6 = sld [smem:[#allocation0]]
  $region65: #{tpu_custom_call.1} parent=0
    _
  %s8 = ssub.s32 1, %s6
  %s9 = scalar_select 0, %s8, %s6
  $region1: #{tpu_custom_call.1} parent=0
    #allocation3 [shape = 'u8[32768]{0}', space=vmem, size = 0x8000, scoped, tag = 'input window, operand 0']
    #allocation4 [shape = 's32[2]{0}', space=sflag, size = 0x8, scoped, tag = 'scoped memory for tpu_custom_call.1']
    #allocation5 [shape = 's32[2]{0}', space=sflag, size = 0x8, scoped, tag = 'scoped memory for tpu_custom_call.1']
    #allocation6 [shape = 'u8[18432]{0}', space=vmem, size = 0x4800, scoped, tag = 'input window, operand 1, single buffered']
    #allocation7 [shape = 's32[1]{0}', space=sflag, size = 0x4, scoped, tag = 'scoped memory for tpu_custom_call.1']
    #allocation8 [shape = 'u8[18432]{0}', space=vmem, size = 0x4800, scoped, tag = 'input window, operand 3, single buffered']
    #allocation9 [shape = 'u8[32768]{0}', space=vmem, size = 0x8000, scoped, tag = 'output window, operand 0']
    %10 = vsyncpa [#allocation4], 0
    %s11 = scalar_lea.sflag [#allocation4], 1
    %12 = vsyncpa %s11, 0
    %13 = vsyncpa [#allocation7], 0
    %14 = vsyncpa [#allocation5], 0
    %s15 = scalar_lea.sflag [#allocation5], 1
    %16 = vsyncpa %s15, 0
    loop: start=0, step=1, limit=4
    $region2: #{tpu_custom_call.1} parent=1 // loop_pre_header
      _
    $region3: #{tpu_custom_call.1} parent=1 // loop_header
      %s18 = sphi 0, %s22
      %p19 = scmp.ge.s32.totalorder %s18, 4
      %s28 = sphi 0, %s30
      %s31 = sphi 0, %s28
      %s32 = sphi 0, %s31
      %s48 = sphi 0, %s32
      %s52 = sphi 0, %s52
      %s54 = sphi 0, %s52
      %s55 = sphi 0, %s54
      %s69 = sphi 0, %s55
      %s73 = sphi 0, %s73
      %s75 = sphi 0, %s73
      %s76 = sphi 0, %s75
      %s90 = sphi 0, %s76
      %s94 = sphi 0, %s94
      %s96 = sphi 0, %s94
      %s97 = sphi 0, %s96
      %s111 = sphi 0, %s97
      %s115 = sphi 0, %s115
      %s117 = sphi 0, %s115
      %s118 = sphi 0, %s117
      %s132 = sphi 0, %s118
      %s138 = sphi 0, %s140
      %s141 = sphi 0, %s138
      %s142 = sphi 0, %s141
      %s158 = sphi 0, %s142
    $region4: #{tpu_custom_call.1} parent=1 // loop_header_branch
      %21 = sbr.rel (%p19) target = $region8
    $region5: #{tpu_custom_call.1} parent=1 // loop_body
      %s23 = ssub.s32 %s18, 1
      %s24 = ssub.s32 %s18, 2
      %s25 = sadd.s32 %s18, 1
      %s26 = ssub.s32 %s18, %s25
      %p27 = scmp.eq.s32.totalorder %s26, 0
      %s29 = sadd.s32 %s28, 1
      %s30 = scalar_select %p27, %s28, %s29
      %p33 = pneg %p27
      %p34 = scmp.eq.s32.totalorder %s18, 1
      %p35 = por %p33, %p34
      %p36 = scmp.ne.s32.totalorder %s28, %s31
      %p37 = scmp.eq.s32.totalorder %s18, 0
      %p38 = por %p36, %p37
      %p39 = scmp.ne.s32.totalorder %s28, %s31
      %p40 = scmp.eq.s32.totalorder %s23, 1
      %p41 = por %p39, %p40
      %p42 = scmp.ne.s32.totalorder %s31, %s32
      %p43 = scmp.eq.s32.totalorder %s23, 0
      %p44 = por %p42, %p43
      %p45 = scmp.ne.s32.totalorder %s31, %s32
      %p46 = scmp.eq.s32.totalorder %s24, 1
      %p47 = por %p45, %p46
      %p49 = scmp.ne.s32.totalorder %s32, %s48
      %p50 = scmp.eq.s32.totalorder %s24, 0
      %p51 = por %p49, %p50
      %s53 = sadd.s32 %s52, 1
      %p56 = scmp.eq.s32.totalorder %s18, 1
      %p57 = scmp.ne.s32.totalorder %s52, %s54
      %p58 = scmp.eq.s32.totalorder %s18, 0
      %p59 = por %p57, %p58
      %p60 = scmp.ne.s32.totalorder %s52, %s54
      %p61 = scmp.eq.s32.totalorder %s23, 1
      %p62 = por %p60, %p61
      %p63 = scmp.ne.s32.totalorder %s54, %s55
      %p64 = scmp.eq.s32.totalorder %s23, 0
      %p65 = por %p63, %p64
      %p66 = scmp.ne.s32.totalorder %s54, %s55
      %p67 = scmp.eq.s32.totalorder %s24, 1
      %p68 = por %p66, %p67
      %p70 = scmp.ne.s32.totalorder %s55, %s69
      %p71 = scmp.eq.s32.totalorder %s24, 0
      %p72 = por %p70, %p71
      %s74 = sadd.s32 %s73, 1
      %p77 = scmp.eq.s32.totalorder %s18, 1
      %p78 = scmp.ne.s32.totalorder %s73, %s75
      %p79 = scmp.eq.s32.totalorder %s18, 0
      %p80 = por %p78, %p79
      %p81 = scmp.ne.s32.totalorder %s73, %s75
      %p82 = scmp.eq.s32.totalorder %s23, 1
      %p83 = por %p81, %p82
      %p84 = scmp.ne.s32.totalorder %s75, %s76
      %p85 = scmp.eq.s32.totalorder %s23, 0
      %p86 = por %p84, %p85
      %p87 = scmp.ne.s32.totalorder %s75, %s76
      %p88 = scmp.eq.s32.totalorder %s24, 1
      %p89 = por %p87, %p88
      %p91 = scmp.ne.s32.totalorder %s76, %s90
      %p92 = scmp.eq.s32.totalorder %s24, 0
      %p93 = por %p91, %p92
      %s95 = sadd.s32 %s94, 1
      %p98 = scmp.eq.s32.totalorder %s18, 1
      %p99 = scmp.ne.s32.totalorder %s94, %s96
      %p100 = scmp.eq.s32.totalorder %s18, 0
      %p101 = por %p99, %p100
      %p102 = scmp.ne.s32.totalorder %s94, %s96
      %p103 = scmp.eq.s32.totalorder %s23, 1
      %p104 = por %p102, %p103
      %p105 = scmp.ne.s32.totalorder %s96, %s97
      %p106 = scmp.eq.s32.totalorder %s23, 0
      %p107 = por %p105, %p106
      %p108 = scmp.ne.s32.totalorder %s96, %s97
      %p109 = scmp.eq.s32.totalorder %s24, 1
      %p110 = por %p108, %p109
      %p112 = scmp.ne.s32.totalorder %s97, %s111
      %p113 = scmp.eq.s32.totalorder %s24, 0
      %p114 = por %p112, %p113
      %s116 = sadd.s32 %s115, 1
      %p119 = scmp.eq.s32.totalorder %s18, 1
      %p120 = scmp.ne.s32.totalorder %s115, %s117
      %p121 = scmp.eq.s32.totalorder %s18, 0
      %p122 = por %p120, %p121
      %p123 = scmp.ne.s32.totalorder %s115, %s117
      %p124 = scmp.eq.s32.totalorder %s23, 1
      %p125 = por %p123, %p124
      %p126 = scmp.ne.s32.totalorder %s117, %s118
      %p127 = scmp.eq.s32.totalorder %s23, 0
      %p128 = por %p126, %p127
      %p129 = scmp.ne.s32.totalorder %s117, %s118
      %p130 = scmp.eq.s32.totalorder %s24, 1
      %p131 = por %p129, %p130
      %p133 = scmp.ne.s32.totalorder %s118, %s132
      %p134 = scmp.eq.s32.totalorder %s24, 0
      %p135 = por %p133, %p134
      %s136 = ssub.s32 %s18, %s25
      %p137 = scmp.eq.s32.totalorder %s136, 0
      %s139 = sadd.s32 %s138, 1
      %s140 = scalar_select %p137, %s138, %s139
      %p143 = pneg %p137
      %p144 = scmp.eq.s32.totalorder %s18, 1
      %p145 = por %p143, %p144
      %p146 = scmp.ne.s32.totalorder %s138, %s141
      %p147 = scmp.eq.s32.totalorder %s18, 0
      %p148 = por %p146, %p147
      %p149 = scmp.ne.s32.totalorder %s138, %s141
      %p150 = scmp.eq.s32.totalorder %s23, 1
      %p151 = por %p149, %p150
      %p152 = scmp.ne.s32.totalorder %s141, %s142
      %p153 = scmp.eq.s32.totalorder %s23, 0
      %p154 = por %p152, %p153
      %p155 = scmp.ne.s32.totalorder %s141, %s142
      %p156 = scmp.eq.s32.totalorder %s24, 1
      %p157 = por %p155, %p156
      %p159 = scmp.ne.s32.totalorder %s142, %s158
      %p160 = scmp.eq.s32.totalorder %s24, 0
      %p161 = por %p159, %p160
      %p162 = scmp.le.s32.totalorder 1, %s18
      %p163 = scmp.lt.s32.totalorder %s18, 3
      %p164 = pnand %p162, %p163
      %p165 = pneg %p164
      // Predicated region
      $region9: #{tpu_custom_call.1} parent=5 // pred_check
        _
      $region10: #{tpu_custom_call.1} parent=5 // pred_check_branch
        %167 = sbr.rel (%p164) target = $region12
      $region11: #{tpu_custom_call.1} parent=5 // pred_region
        %s168 = ssub.s32 %s18, 1
        // Predicated region
        $region13: #{tpu_custom_call.1} parent=11 // pred_check
          %p169 = pneg %p65
        $region14: #{tpu_custom_call.1} parent=11 // pred_check_branch
          %171 = sbr.rel (%p169) target = $region16
        $region15: #{tpu_custom_call.1} parent=11 // pred_region
          %s173 = ssub.s32 576, 576
          %174 = vsyncadd [#allocation7], %s173
          %s175 = sshll.u32 [#allocation6], 4
          %s176 = int_to_ptr.vmem [resolvable:$true] %s175
          %181 = dma.hbm_to_vmem [thread:$0]  %s1, 576, %s176, [#allocation7], 64, 64, 4
        $region16: #{tpu_custom_call.1} parent=11 // pred_fallthru
          _
        // Predicated region
        $region17: #{tpu_custom_call.1} parent=11 // pred_check
          %p182 = pneg %p86
        $region18: #{tpu_custom_call.1} parent=11 // pred_check_branch
          %184 = sbr.rel (%p182) target = $region20
        $region19: #{tpu_custom_call.1} parent=11 // pred_region
          _
        $region20: #{tpu_custom_call.1} parent=11 // pred_fallthru
          _
        // Predicated region
        $region21: #{tpu_custom_call.1} parent=11 // pred_check
          %p185 = pneg %p107
        $region22: #{tpu_custom_call.1} parent=11 // pred_check_branch
          %187 = sbr.rel (%p185) target = $region24
        $region23: #{tpu_custom_call.1} parent=11 // pred_region
          %s189 = ssub.s32 576, 576
          %190 = vsyncadd [#allocation7], %s189
          %s191 = sshll.u32 [#allocation8], 4
          %s192 = int_to_ptr.vmem [resolvable:$true] %s191
          %197 = dma.hbm_to_vmem [thread:$0]  %s3, 576, %s192, [#allocation7], 64, 64, 4
        $region24: #{tpu_custom_call.1} parent=11 // pred_fallthru
          _
        // Predicated region
        $region25: #{tpu_custom_call.1} parent=11 // pred_check
          %p198 = pneg %p128
        $region26: #{tpu_custom_call.1} parent=11 // pred_check_branch
          %200 = sbr.rel (%p198) target = $region28
        $region27: #{tpu_custom_call.1} parent=11 // pred_region
          _
        $region28: #{tpu_custom_call.1} parent=11 // pred_fallthru
          _
      $region12: #{tpu_custom_call.1} parent=5 // pred_fallthru
        _
      %p201 = scmp.lt.s32.totalorder %s18, 2
      // Predicated region
      $region29: #{tpu_custom_call.1} parent=5 // pred_check
        %p202 = pneg %p201
      $region30: #{tpu_custom_call.1} parent=5 // pred_check_branch
        %204 = sbr.rel (%p202) target = $region32
      $region31: #{tpu_custom_call.1} parent=5 // pred_region
        // Predicated region
        $region33: #{tpu_custom_call.1} parent=31 // pred_check
          %p205 = pneg %p38
        $region34: #{tpu_custom_call.1} parent=31 // pred_check_branch
          %207 = sbr.rel (%p205) target = $region36
        $region35: #{tpu_custom_call.1} parent=31 // pred_region
          %s208 = sand.u32 %s28, 1
          %s209 = scalar_lea.sflag [#allocation4], %s208
          %s210 = sand.u32 %s28, 1
          %s211 = smul.addr %s210, 32
          %s212 = scalar_lea.vmem [#allocation3], %s211
          %s213 = smul.u32 2, %s18
          %s215 = ssub.s32 512, 512
          %216 = vsyncadd %s209, %s215
          %s217 = smul.addr %s213, 2
          %s218 = smul.addr %s217, 128
          %s219 = scalar_lea.hbm %s0, %s218
          %s220 = sshll.u32 %s212, 4
          %s221 = int_to_ptr.vmem [resolvable:$true] %s220
          %226 = dma.hbm_to_vmem [thread:$0]  %s219, 512, %s221, %s209, 256, 256, 16
        $region36: #{tpu_custom_call.1} parent=31 // pred_fallthru
          _
      $region32: #{tpu_custom_call.1} parent=5 // pred_fallthru
        _
      %p227 = scmp.le.s32.totalorder 1, %s18
      %p228 = scmp.lt.s32.totalorder %s18, 3
      %p229 = pnand %p227, %p228
      %p230 = pneg %p229
      // Predicated region
      $region37: #{tpu_custom_call.1} parent=5 // pred_check
        _
      $region38: #{tpu_custom_call.1} parent=5 // pred_check_branch
        %232 = sbr.rel (%p229) target = $region40
      $region39: #{tpu_custom_call.1} parent=5 // pred_region
        %s233 = ssub.s32 %s18, 1
        %s234 = sand.u32 %s31, 1
        %s235 = scalar_lea.sflag [#allocation4], %s234
        %s236 = sand.u32 %s31, 1
        %s237 = smul.addr %s236, 32
        %s238 = scalar_lea.vmem [#allocation3], %s237
        // Predicated region
        $region41: #{tpu_custom_call.1} parent=39 // pred_check
          %p239 = pneg %p44
        $region42: #{tpu_custom_call.1} parent=39 // pred_check_branch
          %241 = sbr.rel (%p239) target = $region44
        $region43: #{tpu_custom_call.1} parent=39 // pred_region
          %242 = dma.done %s235, 512
        $region44: #{tpu_custom_call.1} parent=39 // pred_fallthru
          _
        // Predicated region
        $region45: #{tpu_custom_call.1} parent=39 // pred_check
          %p243 = pneg %p65
        $region46: #{tpu_custom_call.1} parent=39 // pred_check_branch
          %245 = sbr.rel (%p243) target = $region48
        $region47: #{tpu_custom_call.1} parent=39 // pred_region
          %246 = dma.done [#allocation7], 576
        $region48: #{tpu_custom_call.1} parent=39 // pred_fallthru
          _
        // Predicated region
        $region49: #{tpu_custom_call.1} parent=39 // pred_check
          %p247 = pneg %p107
        $region50: #{tpu_custom_call.1} parent=39 // pred_check_branch
          %249 = sbr.rel (%p247) target = $region52
        $region51: #{tpu_custom_call.1} parent=39 // pred_region
          %250 = dma.done [#allocation7], 576
        $region52: #{tpu_custom_call.1} parent=39 // pred_fallthru
          _
        %s251 = sand.u32 %s31, 1
        %s252 = scalar_lea.sflag [#allocation4], %s251
        %s253 = sand.u32 %s31, 1
        %s254 = smul.addr %s253, 32
        %s255 = scalar_lea.vmem [#allocation3], %s254
        %p256 = pneg %p44
        %p257 = pneg %p41
        %p258 = pneg %p65
        %p259 = pneg %p62
        %p260 = pneg %p86
        %p261 = pneg %p83
        %p262 = pneg %p107
        %p263 = pneg %p104
        %p264 = pneg %p128
        %p265 = pneg %p125
        %p266 = pneg %p154
        %p267 = pneg %p151
        %s268 = sand.u32 %s141, 1
        %s269 = scalar_lea.sflag [#allocation5], %s268
        %s270 = sand.u32 %s141, 1
        %s271 = smul.addr %s270, 32
        %s272 = scalar_lea.vmem [#allocation9], %s271
        %s273 = smul.u32 2, %s23
        %s274 = smul.u32 2, %s23
        %vm278 = vcmask 134144
        %279 = vst.msk [vmem:[#allocation2] sm:$0xf] %vm278, 0
        %vm280 = vcmask 404744
        %281 = vst.msk [vmem:[#allocation2 + $0x10] sm:$0xf] %vm280, 0
        %vm282 = vcmask 265352
        %283 = vst.msk [vmem:[#allocation2 + $0x8] sm:$0xf] %vm282, 0
        %v284 = vld [vmem:[%s238] sm:$0xff]
        %v285 = vld [vmem:[%s238 + $0x8] sm:$0xff]
        %v286 = vpack.c.bf16 %v284, %v284
        %v287 = vpack.c.bf16 %v285, %v285
        %v290 = vunpack.c.l.b16 %v286
        %v291 = vunpack.c.l.b16 %v287
        %v292 = vpack.c.b16 %v291, %v290
        %293 = vrot.lane.b32.xlu0 %v292, 17
        %v294 = vpop.permute.xlu0 %293
        %v295 = vrot.slane %v294, 4
        %vm296 = vcmask 138240
        %v297 = vsel %vm296, %v295, %v294
        %vm300 = vcmask 1043592
        %vm301 = vcmask 1047556
        %vm302 = vmor %vm301, %vm300
        %303 = vst.msk [vmem:[#allocation2] sm:$0xff] %vm302, %v297
        %304 = vst.msk [vmem:[#allocation2 + $0x8] sm:$0xf] %vm278, %v295
        %s305 = scalar_lea.vmem %s238, 16 [#allocation3]
        %v306 = vld [vmem:[%s305] sm:$0xff]
        %v307 = vld [vmem:[%s305 + $0x8] sm:$0xff]
        %v308 = vpack.c.bf16 %v306, %v306
        %v309 = vpack.c.bf16 %v307, %v307
        %v312 = vunpack.c.l.b16 %v308
        %v313 = vunpack.c.l.b16 %v309
        %v314 = vpack.c.b16 %v313, %v312
        %315 = vrot.lane.b32.xlu0 %v314, 33
        %v316 = vpop.permute.xlu0 %315
        %v317 = vrot.slane %v316, 4
        %vm318 = vcmask 269312
        %v319 = vsel %vm318, %v317, %v316
        %vm322 = vcmask 1043720
        %vm323 = vmor %vm301, %vm322
        %324 = vst.msk [vmem:[#allocation2 + $0x8] sm:$0xff] %vm323, %v319
        %vm325 = vcmask 265216
        %326 = vst.msk [vmem:[#allocation2 + $0x10] sm:$0xf] %vm325, %v317
        %v327 = vlaneseq
        %v328 = vand.u32 %v327, 127
        %v329 = vadd.s32 %v328, 128
        %v330 = vadd.s32 %v328, 256
        %v331 = vadd.s32 %v328, 384
        %v332 = vadd.s32 %v328, 512
        %vm333 = vcmp.lt.s32.totalorder %v328, 0
        %v334 = vsub.s32 0, %v328
        %v335 = vsel %vm333, %v334, %v328
        %v336 = vshrl.u32 %v335, 4
        %v337 = vand.u32 %v335, 15
        %v338 = vsub.s32 0, %v337
        %v339 = vsel %vm333, %v338, %v337
        %vm340 = vcmp.lt.s32.totalorder %v329, 0
        %v341 = vsub.s32 0, %v329
        %v342 = vsel %vm340, %v341, %v329
        %v343 = vshrl.u32 %v342, 4
        %v344 = vand.u32 %v342, 15
        %v345 = vsub.s32 0, %v344
        %v346 = vsel %vm340, %v345, %v344
        %vm347 = vcmp.lt.s32.totalorder %v330, 0
        %v348 = vsub.s32 0, %v330
        %v349 = vsel %vm347, %v348, %v330
        %v350 = vshrl.u32 %v349, 4
        %v351 = vand.u32 %v349, 15
        %v352 = vsub.s32 0, %v351
        %v353 = vsel %vm347, %v352, %v351
        %vm354 = vcmp.lt.s32.totalorder %v331, 0
        %v355 = vsub.s32 0, %v331
        %v356 = vsel %vm354, %v355, %v331
        %v357 = vshrl.u32 %v356, 4
        %v358 = vand.u32 %v356, 15
        %v359 = vsub.s32 0, %v358
        %v360 = vsel %vm354, %v359, %v358
        %vm361 = vcmp.lt.s32.totalorder %v332, 0
        %v362 = vsub.s32 0, %v332
        %v363 = vsel %vm361, %v362, %v332
        %v364 = vshrl.u32 %v363, 4
        %v365 = vand.u32 %v363, 15
        %v366 = vsub.s32 0, %v365
        %v367 = vsel %vm361, %v366, %v365
        %vm368 = vcmp.ne.s32.totalorder %v339, 0
        %vm369 = vcmp.ne.s32.totalorder %v346, 0
        %vm370 = vcmp.ne.s32.totalorder %v353, 0
        %vm371 = vcmp.ne.s32.totalorder %v360, 0
        %vm372 = vcmp.ne.s32.totalorder %v367, 0
        %vm373 = vcmp.lt.s32.totalorder %v339, 0
        %vm374 = vcmp.lt.s32.totalorder %v346, 0
        %vm375 = vcmp.lt.s32.totalorder %v353, 0
        %vm376 = vcmp.lt.s32.totalorder %v360, 0
        %vm377 = vcmp.lt.s32.totalorder %v367, 0
        %vm378 = vmand %vm373, %vm368
        %vm379 = vmand %vm374, %vm369
        %vm380 = vmand %vm375, %vm370
        %vm381 = vmand %vm376, %vm371
        %vm382 = vmand %vm377, %vm372
        %v383 = vadd.s32 %v339, 16
        %v384 = vadd.s32 %v346, 16
        %v385 = vadd.s32 %v353, 16
        %v386 = vadd.s32 %v360, 16
        %v387 = vadd.s32 %v367, 16
        %v388 = vsel %vm378, %v383, %v339
        %v389 = vsel %vm379, %v384, %v346
        %v390 = vsel %vm380, %v385, %v353
        %v391 = vsel %vm381, %v386, %v360
        %v392 = vsel %vm382, %v387, %v367
        %vm393 = vcmp.ne.s32.totalorder %v388, 0
        %vm394 = vcmp.ne.s32.totalorder %v389, 0
        %vm395 = vcmp.ne.s32.totalorder %v390, 0
        %vm396 = vcmp.ne.s32.totalorder %v391, 0
        %vm397 = vcmp.ne.s32.totalorder %v392, 0
        %vm398 = vcmp.ne.s32.totalorder %v388, 15
        %vm399 = vcmp.ne.s32.totalorder %v389, 15
        %vm400 = vcmp.ne.s32.totalorder %v390, 15
        %vm401 = vcmp.ne.s32.totalorder %v391, 15
        %vm402 = vcmp.ne.s32.totalorder %v392, 15
        %v403 = vld [vmem:[#allocation2] sm:$0xff]
        %v404 = vld [vmem:[#allocation2 + $0x8] sm:$0xff]
        %v405 = vld [vmem:[#allocation2 + $0x10] sm:$0xf]
        %v406 = vsel %vm393, 1, 0
        %v407 = vsel %vm394, 1, 0
        %v408 = vsel %vm395, 1, 0
        %v409 = vsel %vm396, 1, 0
        %v410 = vsel %vm397, 1, 0
        %vm411 = vcmp.eq.s32.totalorder %v406, 1
        %vm412 = vcmp.eq.s32.totalorder %v407, 1
        %vm413 = vcmp.eq.s32.totalorder %v408, 1
        %vm414 = vcmp.eq.s32.totalorder %v409, 1
        %vm415 = vcmp.eq.s32.totalorder %v410, 1
        %vm416 = vmpackc.low %vm412, %vm411
        %vm417 = vmpackc.low %vm414, %vm413
        %vm418 = vmpackc.low %vm415, %vm415
        %v419 = vsel %vm416, %v403, 0
        %v420 = vsel %vm417, %v404, 0
        %v421 = vsel %vm418, %v405, 0
        %v422 = vld [vmem:[#allocation6] sm:$0xf]
        %s423 = scalar_lea.vmem [#allocation6], 4
        %v424 = vld [vmem:[%s423] sm:$0xf]
        %v428 = vunpack.c.l.b16 %v403
        %v429 = vunpack.c.h.b16 %v403
        %v430 = vunpack.c.l.b16 %v404
        %v431 = vunpack.c.h.b16 %v404
        %v432 = vunpack.c.l.b16 %v405
        %v433 = vpack.c.b16 %v428, %v428
        %v434 = vpack.c.b16 %v429, %v429
        %v435 = vpack.c.b16 %v430, %v430
        %v436 = vpack.c.b16 %v431, %v431
        %v437 = vpack.c.b16 %v432, %v432
        %438 = vrot.lane.b32.xlu0 %v433, 127
        %v439 = vpop.permute.xlu0 %438
        %440 = vrot.lane.b32.xlu0 %v434, 127
        %v441 = vpop.permute.xlu0 %440
        %442 = vrot.lane.b32.xlu0 %v435, 127
        %v443 = vpop.permute.xlu0 %442
        %444 = vrot.lane.b32.xlu0 %v436, 127
        %v445 = vpop.permute.xlu0 %444
        %446 = vrot.lane.b32.xlu0 %v437, 127
        %v447 = vpop.permute.xlu0 %446
        %vm448 = vcmask 1039360
        %v449 = vsel %vm448, %v439, %v441
        %v450 = vsel %vm448, %v441, %v443
        %v451 = vsel %vm448, %v443, %v445
        %v452 = vsel %vm448, %v445, %v447
        %vm453 = vcmask 64512
        %v455 = vsel %vm453, %v424, 0
        %vm457 = vcmask 1043456
        %v459 = vsel %vm457, %v449, 0
        %v462 = vsel %vm457, %v450, 0
        %v465 = vsel %vm457, %v451, 0
        %v468 = vsel %vm457, %v452, 0
        %v471 = vsel %vm457, %v447, 0
        %473 = vmatprep.subr.bf16.mxu0 0
        %474 = vmatpush1.bf16.msra.mxu0 0
        %475 = vmatprep.subr.bf16.mxu0 0
        %476 = vmatpush1.bf16.msra.mxu0 0
        %477 = vmatprep.subr.bf16.mxu0 0
        %478 = vmatpush1.bf16.msra.mxu0 0
        %479 = vmatprep.subr.bf16.mxu0 0
        %480 = vmatpush1.bf16.msra.mxu0 0
        %481 = vmatprep.subr.bf16.mxu0 0
        %482 = vmatpush1.bf16.msra.mxu0 0
        %483 = vmatprep.subr.bf16.mxu0 0
        %484 = vmatpush1.bf16.msra.mxu0 0
        %485 = vmatprep.subr.bf16.mxu0 0
        %486 = vmatpush1.bf16.msra.mxu0 0
        %487 = vmatprep.subr.bf16.mxu0 %v462
        %488 = vmatpush1.bf16.msra.mxu0 %v459
        %489 = vmatprep.subr.bf16.mxu0 0
        %490 = vmatpush2.bf16.msra.mxu0 0
        %491 = vmatprep.subr.bf16.mxu0 0
        %492 = vmatpush2.bf16.msra.mxu0 0
        %493 = vmatprep.subr.bf16.mxu0 0
        %494 = vmatpush2.bf16.msra.mxu0 0
        %495 = vmatprep.subr.bf16.mxu0 0
        %496 = vmatpush2.bf16.msra.mxu0 0
        %497 = vmatprep.subr.bf16.mxu0 0
        %498 = vmatpush2.bf16.msra.mxu0 0
        %499 = vmatprep.subr.bf16.mxu0 0
        %500 = vmatpush2.bf16.msra.mxu0 0
        %501 = vmatprep.subr.bf16.mxu0 0
        %502 = vmatpush2.bf16.msra.mxu0 0
        %503 = vmatprep.subr.bf16.mxu0 0
        %504 = vmatpush2.bf16.msra.mxu0 0
        %505 = vmatprep.mubr.bf16.mxu0 0
        %506 = vmatmul.mubr.bf16.gmra.mxu0 %v455
        %v507 = vpop.f32.mrf.mxu0
        %v508 = vadd.f32 0.0, %v507
        %v509 = vpop.f32.mrf.mxu0
        %v510 = vadd.f32 0.0, %v509
        %v511 = vpop.f32.mrf.mxu0
        %v512 = vpop.f32.mrf.mxu0
        %513 = vdwg.mxu0
        %514 = vmatprep.subr.bf16.mxu0 0
        %515 = vmatpush1.bf16.msra.mxu0 0
        %516 = vmatprep.subr.bf16.mxu0 0
        %517 = vmatpush1.bf16.msra.mxu0 0
        %518 = vmatprep.subr.bf16.mxu0 0
        %519 = vmatpush1.bf16.msra.mxu0 0
        %520 = vmatprep.subr.bf16.mxu0 0
        %521 = vmatpush1.bf16.msra.mxu0 0
        %522 = vmatprep.subr.bf16.mxu0 0
        %523 = vmatpush1.bf16.msra.mxu0 0
        %524 = vmatprep.subr.bf16.mxu0 0
        %525 = vmatpush1.bf16.msra.mxu0 0
        %526 = vmatprep.subr.bf16.mxu0 0
        %527 = vmatpush1.bf16.msra.mxu0 0
        %528 = vmatprep.subr.bf16.mxu0 %v468
        %529 = vmatpush1.bf16.msra.mxu0 %v465
        %530 = vmatprep.subr.bf16.mxu0 0
        %531 = vmatpush2.bf16.msra.mxu0 0
        %532 = vmatprep.subr.bf16.mxu0 0
        %533 = vmatpush2.bf16.msra.mxu0 0
        %534 = vmatprep.subr.bf16.mxu0 0
        %535 = vmatpush2.bf16.msra.mxu0 0
        %536 = vmatprep.subr.bf16.mxu0 0
        %537 = vmatpush2.bf16.msra.mxu0 0
        %538 = vmatprep.subr.bf16.mxu0 0
        %539 = vmatpush2.bf16.msra.mxu0 0
        %540 = vmatprep.subr.bf16.mxu0 0
        %541 = vmatpush2.bf16.msra.mxu0 0
        %542 = vmatprep.subr.bf16.mxu0 0
        %543 = vmatpush2.bf16.msra.mxu0 0
        %544 = vmatprep.subr.bf16.mxu0 0
        %545 = vmatpush2.bf16.msra.mxu0 0
        %546 = vmatprep.mubr.bf16.mxu0 0
        %547 = vmatmul.mubr.bf16.gmra.mxu0 %v455
        %v548 = vpop.f32.mrf.mxu0
        %v549 = vadd.f32 0.0, %v548
        %v550 = vpop.f32.mrf.mxu0
        %v551 = vadd.f32 0.0, %v550
        %v552 = vpop.f32.mrf.mxu0
        %v553 = vpop.f32.mrf.mxu0
        %554 = vdwg.mxu0
        %555 = vmatprep.subr.bf16.mxu0 0
        %556 = vmatpush1.bf16.msra.mxu0 0
        %557 = vmatprep.subr.bf16.mxu0 0
        %558 = vmatpush1.bf16.msra.mxu0 0
        %559 = vmatprep.subr.bf16.mxu0 0
        %560 = vmatpush1.bf16.msra.mxu0 0
        %561 = vmatprep.subr.bf16.mxu0 0
        %562 = vmatpush1.bf16.msra.mxu0 0
        %563 = vmatprep.subr.bf16.mxu0 0
        %564 = vmatpush1.bf16.msra.mxu0 0
        %565 = vmatprep.subr.bf16.mxu0 0
        %566 = vmatpush1.bf16.msra.mxu0 0
        %567 = vmatprep.subr.bf16.mxu0 0
        %568 = vmatpush1.bf16.msra.mxu0 0
        %569 = vmatprep.subr.bf16.mxu0 0
        %570 = vmatpush1.bf16.msra.mxu0 %v471
        %571 = vmatprep.subr.bf16.mxu0 0
        %572 = vmatpush2.bf16.msra.mxu0 0
        %573 = vmatprep.subr.bf16.mxu0 0
        %574 = vmatpush2.bf16.msra.mxu0 0
        %575 = vmatprep.subr.bf16.mxu0 0
        %576 = vmatpush2.bf16.msra.mxu0 0
        %577 = vmatprep.subr.bf16.mxu0 0
        %578 = vmatpush2.bf16.msra.mxu0 0
        %579 = vmatprep.subr.bf16.mxu0 0
        %580 = vmatpush2.bf16.msra.mxu0 0
        %581 = vmatprep.subr.bf16.mxu0 0
        %582 = vmatpush2.bf16.msra.mxu0 0
        %583 = vmatprep.subr.bf16.mxu0 0
        %584 = vmatpush2.bf16.msra.mxu0 0
        %585 = vmatprep.subr.bf16.mxu0 0
        %586 = vmatpush2.bf16.msra.mxu0 0
        %587 = vmatprep.mubr.bf16.mxu0 0
        %588 = vmatmul.mubr.bf16.gmra.mxu0 %v455
        %v589 = vpop.f32.mrf.mxu0
        %v590 = vadd.f32 0.0, %v589
        %v591 = vpop.f32.mrf.mxu0
        %v592 = vpop.f32.mrf.mxu0
        %v593 = vpop.f32.mrf.mxu0
        %594 = vdwg.mxu0
        %v598 = vunpack.c.l.b16 %v419
        %v599 = vunpack.c.h.b16 %v419
        %v600 = vunpack.c.l.b16 %v420
        %v601 = vunpack.c.h.b16 %v420
        %v602 = vunpack.c.l.b16 %v421
        %v603 = vpack.c.b16 %v598, %v598
        %v604 = vpack.c.b16 %v599, %v599
        %v605 = vpack.c.b16 %v600, %v600
        %v606 = vpack.c.b16 %v601, %v601
        %v607 = vpack.c.b16 %v602, %v602
        %v609 = vsel %vm453, %v422, 0
        %v612 = vsel %vm457, %v603, 0
        %v615 = vsel %vm457, %v604, 0
        %v618 = vsel %vm457, %v605, 0
        %v621 = vsel %vm457, %v606, 0
        %v624 = vsel %vm457, %v607, 0
        %626 = vmatprep.subr.bf16.mxu0 0
        %627 = vmatpush1.bf16.msra.mxu0 0
        %628 = vmatprep.subr.bf16.mxu0 0
        %629 = vmatpush1.bf16.msra.mxu0 0
        %630 = vmatprep.subr.bf16.mxu0 0
        %631 = vmatpush1.bf16.msra.mxu0 0
        %632 = vmatprep.subr.bf16.mxu0 0
        %633 = vmatpush1.bf16.msra.mxu0 0
        %634 = vmatprep.subr.bf16.mxu0 0
        %635 = vmatpush1.bf16.msra.mxu0 0
        %636 = vmatprep.subr.bf16.mxu0 0
        %637 = vmatpush1.bf16.msra.mxu0 0
        %638 = vmatprep.subr.bf16.mxu0 0
        %639 = vmatpush1.bf16.msra.mxu0 0
        %640 = vmatprep.subr.bf16.mxu0 %v615
        %641 = vmatpush1.bf16.msra.mxu0 %v612
        %642 = vmatprep.subr.bf16.mxu0 0
        %643 = vmatpush2.bf16.msra.mxu0 0
        %644 = vmatprep.subr.bf16.mxu0 0
        %645 = vmatpush2.bf16.msra.mxu0 0
        %646 = vmatprep.subr.bf16.mxu0 0
        %647 = vmatpush2.bf16.msra.mxu0 0
        %648 = vmatprep.subr.bf16.mxu0 0
        %649 = vmatpush2.bf16.msra.mxu0 0
        %650 = vmatprep.subr.bf16.mxu0 0
        %651 = vmatpush2.bf16.msra.mxu0 0
        %652 = vmatprep.subr.bf16.mxu0 0
        %653 = vmatpush2.bf16.msra.mxu0 0
        %654 = vmatprep.subr.bf16.mxu0 0
        %655 = vmatpush2.bf16.msra.mxu0 0
        %656 = vmatprep.subr.bf16.mxu0 0
        %657 = vmatpush2.bf16.msra.mxu0 0
        %658 = vmatprep.mubr.bf16.mxu0 0
        %659 = vmatmul.mubr.bf16.gmra.mxu0 %v609
        %v660 = vpop.f32.mrf.mxu0
        %v661 = vadd.f32 %v508, %v660
        %v662 = vpop.f32.mrf.mxu0
        %v663 = vadd.f32 %v510, %v662
        %v664 = vpop.f32.mrf.mxu0
        %v665 = vpop.f32.mrf.mxu0
        %666 = vdwg.mxu0
        %667 = vmatprep.subr.bf16.mxu0 0
        %668 = vmatpush1.bf16.msra.mxu0 0
        %669 = vmatprep.subr.bf16.mxu0 0
        %670 = vmatpush1.bf16.msra.mxu0 0
        %671 = vmatprep.subr.bf16.mxu0 0
        %672 = vmatpush1.bf16.msra.mxu0 0
        %673 = vmatprep.subr.bf16.mxu0 0
        %674 = vmatpush1.bf16.msra.mxu0 0
        %675 = vmatprep.subr.bf16.mxu0 0
        %676 = vmatpush1.bf16.msra.mxu0 0
        %677 = vmatprep.subr.bf16.mxu0 0
        %678 = vmatpush1.bf16.msra.mxu0 0
        %679 = vmatprep.subr.bf16.mxu0 0
        %680 = vmatpush1.bf16.msra.mxu0 0
        %681 = vmatprep.subr.bf16.mxu0 %v621
        %682 = vmatpush1.bf16.msra.mxu0 %v618
        %683 = vmatprep.subr.bf16.mxu0 0
        %684 = vmatpush2.bf16.msra.mxu0 0
        %685 = vmatprep.subr.bf16.mxu0 0
        %686 = vmatpush2.bf16.msra.mxu0 0
        %687 = vmatprep.subr.bf16.mxu0 0
        %688 = vmatpush2.bf16.msra.mxu0 0
        %689 = vmatprep.subr.bf16.mxu0 0
        %690 = vmatpush2.bf16.msra.mxu0 0
        %691 = vmatprep.subr.bf16.mxu0 0
        %692 = vmatpush2.bf16.msra.mxu0 0
        %693 = vmatprep.subr.bf16.mxu0 0
        %694 = vmatpush2.bf16.msra.mxu0 0
        %695 = vmatprep.subr.bf16.mxu0 0
        %696 = vmatpush2.bf16.msra.mxu0 0
        %697 = vmatprep.subr.bf16.mxu0 0
        %698 = vmatpush2.bf16.msra.mxu0 0
        %699 = vmatprep.mubr.bf16.mxu0 0
        %700 = vmatmul.mubr.bf16.gmra.mxu0 %v609
        %v701 = vpop.f32.mrf.mxu0
        %v702 = vadd.f32 %v549, %v701
        %v703 = vpop.f32.mrf.mxu0
        %v704 = vadd.f32 %v551, %v703
        %v705 = vpop.f32.mrf.mxu0
        %v706 = vpop.f32.mrf.mxu0
        %707 = vdwg.mxu0
        %708 = vmatprep.subr.bf16.mxu0 0
        %709 = vmatpush1.bf16.msra.mxu0 0
        %710 = vmatprep.subr.bf16.mxu0 0
        %711 = vmatpush1.bf16.msra.mxu0 0
        %712 = vmatprep.subr.bf16.mxu0 0
        %713 = vmatpush1.bf16.msra.mxu0 0
        %714 = vmatprep.subr.bf16.mxu0 0
        %715 = vmatpush1.bf16.msra.mxu0 0
        %716 = vmatprep.subr.bf16.mxu0 0
        %717 = vmatpush1.bf16.msra.mxu0 0
        %718 = vmatprep.subr.bf16.mxu0 0
        %719 = vmatpush1.bf16.msra.mxu0 0
        %720 = vmatprep.subr.bf16.mxu0 0
        %721 = vmatpush1.bf16.msra.mxu0 0
        %722 = vmatprep.subr.bf16.mxu0 0
        %723 = vmatpush1.bf16.msra.mxu0 %v624
        %724 = vmatprep.subr.bf16.mxu0 0
        %725 = vmatpush2.bf16.msra.mxu0 0
        %726 = vmatprep.subr.bf16.mxu0 0
        %727 = vmatpush2.bf16.msra.mxu0 0
        %728 = vmatprep.subr.bf16.mxu0 0
        %729 = vmatpush2.bf16.msra.mxu0 0
        %730 = vmatprep.subr.bf16.mxu0 0
        %731 = vmatpush2.bf16.msra.mxu0 0
        %732 = vmatprep.subr.bf16.mxu0 0
        %733 = vmatpush2.bf16.msra.mxu0 0
        %734 = vmatprep.subr.bf16.mxu0 0
        %735 = vmatpush2.bf16.msra.mxu0 0
        %736 = vmatprep.subr.bf16.mxu0 0
        %737 = vmatpush2.bf16.msra.mxu0 0
        %738 = vmatprep.subr.bf16.mxu0 0
        %739 = vmatpush2.bf16.msra.mxu0 0
        %740 = vmatprep.mubr.bf16.mxu0 0
        %741 = vmatmul.mubr.bf16.gmra.mxu0 %v609
        %v742 = vpop.f32.mrf.mxu0
        %v743 = vadd.f32 %v590, %v742
        %v744 = vpop.f32.mrf.mxu0
        %v745 = vpop.f32.mrf.mxu0
        %v746 = vpop.f32.mrf.mxu0
        %747 = vdwg.mxu0
        %v748 = vsel %vm398, 1, 0
        %v749 = vsel %vm399, 1, 0
        %v750 = vsel %vm400, 1, 0
        %v751 = vsel %vm401, 1, 0
        %v752 = vsel %vm402, 1, 0
        %vm753 = vcmp.eq.s32.totalorder %v748, 1
        %vm754 = vcmp.eq.s32.totalorder %v749, 1
        %vm755 = vcmp.eq.s32.totalorder %v750, 1
        %vm756 = vcmp.eq.s32.totalorder %v751, 1
        %vm757 = vcmp.eq.s32.totalorder %v752, 1
        %vm758 = vmpackc.low %vm754, %vm753
        %vm759 = vmpackc.low %vm756, %vm755
        %vm760 = vmpackc.low %vm757, %vm757
        %v761 = vsel %vm758, 65537, 0
        %v762 = vsel %vm759, 65537, 0
        %v763 = vsel %vm760, 65537, 0
        %764 = vrot.lane.b32.xlu0 %v761, 2
        %v765 = vpop.permute.xlu0 %764
        %766 = vrot.lane.b32.xlu0 %v762, 2
        %v767 = vpop.permute.xlu0 %766
        %768 = vrot.lane.b32.xlu0 %v763, 2
        %v769 = vpop.permute.xlu0 %768
        %v770 = vrot.slane %v765, 4
        %v771 = vrot.slane %v767, 4
        %vm772 = vcmask 15360
        %v773 = vsel %vm772, %v770, %v765
        %vm774 = vcmask 1043456
        %v775 = vsel %vm774, %v770, %v771
        %v776 = vsel %vm772, %v775, %v767
        %v777 = vsel %vm772, %v771, %v769
        %vm778 = vcmp.ne.s16.totalorder %v773, 0
        %vm779 = vcmp.ne.s16.totalorder %v776, 0
        %vm780 = vcmp.ne.s16.totalorder %v777, 0
        %v781 = vsel %vm778, %v403, 0
        %v782 = vsel %vm779, %v404, 0
        %v783 = vsel %vm780, %v405, 0
        %s784 = scalar_lea.vmem [#allocation6], 8
        %v785 = vld [vmem:[%s784] sm:$0xf]
        %v789 = vunpack.c.l.b16 %v781
        %v790 = vunpack.c.h.b16 %v781
        %v791 = vunpack.c.l.b16 %v782
        %v792 = vunpack.c.h.b16 %v782
        %v793 = vunpack.c.l.b16 %v783
        %v794 = vpack.c.b16 %v789, %v789
        %v795 = vpack.c.b16 %v790, %v790
        %v796 = vpack.c.b16 %v791, %v791
        %v797 = vpack.c.b16 %v792, %v792
        %v798 = vpack.c.b16 %v793, %v793
        %799 = vrot.lane.b32.xlu0 %v794, 126
        %v800 = vpop.permute.xlu0 %799
        %801 = vrot.lane.b32.xlu0 %v795, 126
        %v802 = vpop.permute.xlu0 %801
        %803 = vrot.lane.b32.xlu0 %v796, 126
        %v804 = vpop.permute.xlu0 %803
        %805 = vrot.lane.b32.xlu0 %v797, 126
        %v806 = vpop.permute.xlu0 %805
        %807 = vrot.lane.b32.xlu0 %v798, 126
        %v808 = vpop.permute.xlu0 %807
        %vm809 = vcmask 1031168
        %v810 = vsel %vm809, %v800, %v802
        %v811 = vsel %vm809, %v802, %v804
        %v812 = vsel %vm809, %v804, %v806
        %v813 = vsel %vm809, %v806, %v808
        %v815 = vsel %vm453, %v785, 0
        %v818 = vsel %vm457, %v810, 0
        %v821 = vsel %vm457, %v811, 0
        %v824 = vsel %vm457, %v812, 0
        %v827 = vsel %vm457, %v813, 0
        %v830 = vsel %vm457, %v808, 0
        %832 = vmatprep.subr.bf16.mxu0 0
        %833 = vmatpush1.bf16.msra.mxu0 0
        %834 = vmatprep.subr.bf16.mxu0 0
        %835 = vmatpush1.bf16.msra.mxu0 0
        %836 = vmatprep.subr.bf16.mxu0 0
        %837 = vmatpush1.bf16.msra.mxu0 0
        %838 = vmatprep.subr.bf16.mxu0 0
        %839 = vmatpush1.bf16.msra.mxu0 0
        %840 = vmatprep.subr.bf16.mxu0 0
        %841 = vmatpush1.bf16.msra.mxu0 0
        %842 = vmatprep.subr.bf16.mxu0 0
        %843 = vmatpush1.bf16.msra.mxu0 0
        %844 = vmatprep.subr.bf16.mxu0 0
        %845 = vmatpush1.bf16.msra.mxu0 0
        %846 = vmatprep.subr.bf16.mxu0 %v821
        %847 = vmatpush1.bf16.msra.mxu0 %v818
        %848 = vmatprep.subr.bf16.mxu0 0
        %849 = vmatpush2.bf16.msra.mxu0 0
        %850 = vmatprep.subr.bf16.mxu0 0
        %851 = vmatpush2.bf16.msra.mxu0 0
        %852 = vmatprep.subr.bf16.mxu0 0
        %853 = vmatpush2.bf16.msra.mxu0 0
        %854 = vmatprep.subr.bf16.mxu0 0
        %855 = vmatpush2.bf16.msra.mxu0 0
        %856 = vmatprep.subr.bf16.mxu0 0
        %857 = vmatpush2.bf16.msra.mxu0 0
        %858 = vmatprep.subr.bf16.mxu0 0
        %859 = vmatpush2.bf16.msra.mxu0 0
        %860 = vmatprep.subr.bf16.mxu0 0
        %861 = vmatpush2.bf16.msra.mxu0 0
        %862 = vmatprep.subr.bf16.mxu0 0
        %863 = vmatpush2.bf16.msra.mxu0 0
        %864 = vmatprep.mubr.bf16.mxu0 0
        %865 = vmatmul.mubr.bf16.gmra.mxu0 %v815
        %v866 = vpop.f32.mrf.mxu0
        %v867 = vadd.f32 0.0, %v866
        %v868 = vpop.f32.mrf.mxu0
        %v869 = vadd.f32 0.0, %v868
        %v870 = vpop.f32.mrf.mxu0
        %v871 = vpop.f32.mrf.mxu0
        %872 = vdwg.mxu0
        %873 = vmatprep.subr.bf16.mxu0 0
        %874 = vmatpush1.bf16.msra.mxu0 0
        %875 = vmatprep.subr.bf16.mxu0 0
        %876 = vmatpush1.bf16.msra.mxu0 0
        %877 = vmatprep.subr.bf16.mxu0 0
        %878 = vmatpush1.bf16.msra.mxu0 0
        %879 = vmatprep.subr.bf16.mxu0 0
        %880 = vmatpush1.bf16.msra.mxu0 0
        %881 = vmatprep.subr.bf16.mxu0 0
        %882 = vmatpush1.bf16.msra.mxu0 0
        %883 = vmatprep.subr.bf16.mxu0 0
        %884 = vmatpush1.bf16.msra.mxu0 0
        %885 = vmatprep.subr.bf16.mxu0 0
        %886 = vmatpush1.bf16.msra.mxu0 0
        %887 = vmatprep.subr.bf16.mxu0 %v827
        %888 = vmatpush1.bf16.msra.mxu0 %v824
        %889 = vmatprep.subr.bf16.mxu0 0
        %890 = vmatpush2.bf16.msra.mxu0 0
        %891 = vmatprep.subr.bf16.mxu0 0
        %892 = vmatpush2.bf16.msra.mxu0 0
        %893 = vmatprep.subr.bf16.mxu0 0
        %894 = vmatpush2.bf16.msra.mxu0 0
        %895 = vmatprep.subr.bf16.mxu0 0
        %896 = vmatpush2.bf16.msra.mxu0 0
        %897 = vmatprep.subr.bf16.mxu0 0
        %898 = vmatpush2.bf16.msra.mxu0 0
        %899 = vmatprep.subr.bf16.mxu0 0
        %900 = vmatpush2.bf16.msra.mxu0 0
        %901 = vmatprep.subr.bf16.mxu0 0
        %902 = vmatpush2.bf16.msra.mxu0 0
        %903 = vmatprep.subr.bf16.mxu0 0
        %904 = vmatpush2.bf16.msra.mxu0 0
        %905 = vmatprep.mubr.bf16.mxu0 0
        %906 = vmatmul.mubr.bf16.gmra.mxu0 %v815
        %v907 = vpop.f32.mrf.mxu0
        %v908 = vadd.f32 0.0, %v907
        %v909 = vpop.f32.mrf.mxu0
        %v910 = vadd.f32 0.0, %v909
        %v911 = vpop.f32.mrf.mxu0
        %v912 = vpop.f32.mrf.mxu0
        %913 = vdwg.mxu0
        %914 = vmatprep.subr.bf16.mxu0 0
        %915 = vmatpush1.bf16.msra.mxu0 0
        %916 = vmatprep.subr.bf16.mxu0 0
        %917 = vmatpush1.bf16.msra.mxu0 0
        %918 = vmatprep.subr.bf16.mxu0 0
        %919 = vmatpush1.bf16.msra.mxu0 0
        %920 = vmatprep.subr.bf16.mxu0 0
        %921 = vmatpush1.bf16.msra.mxu0 0
        %922 = vmatprep.subr.bf16.mxu0 0
        %923 = vmatpush1.bf16.msra.mxu0 0
        %924 = vmatprep.subr.bf16.mxu0 0
        %925 = vmatpush1.bf16.msra.mxu0 0
        %926 = vmatprep.subr.bf16.mxu0 0
        %927 = vmatpush1.bf16.msra.mxu0 0
        %928 = vmatprep.subr.bf16.mxu0 0
        %929 = vmatpush1.bf16.msra.mxu0 %v830
        %930 = vmatprep.subr.bf16.mxu0 0
        %931 = vmatpush2.bf16.msra.mxu0 0
        %932 = vmatprep.subr.bf16.mxu0 0
        %933 = vmatpush2.bf16.msra.mxu0 0
        %934 = vmatprep.subr.bf16.mxu0 0
        %935 = vmatpush2.bf16.msra.mxu0 0
        %936 = vmatprep.subr.bf16.mxu0 0
        %937 = vmatpush2.bf16.msra.mxu0 0
        %938 = vmatprep.subr.bf16.mxu0 0
        %939 = vmatpush2.bf16.msra.mxu0 0
        %940 = vmatprep.subr.bf16.mxu0 0
        %941 = vmatpush2.bf16.msra.mxu0 0
        %942 = vmatprep.subr.bf16.mxu0 0
        %943 = vmatpush2.bf16.msra.mxu0 0
        %944 = vmatprep.subr.bf16.mxu0 0
        %945 = vmatpush2.bf16.msra.mxu0 0
        %946 = vmatprep.mubr.bf16.mxu0 0
        %947 = vmatmul.mubr.bf16.gmra.mxu0 %v815
        %v948 = vpop.f32.mrf.mxu0
        %v949 = vadd.f32 0.0, %v948
        %v950 = vpop.f32.mrf.mxu0
        %v951 = vpop.f32.mrf.mxu0
        %v952 = vpop.f32.mrf.mxu0
        %953 = vdwg.mxu0
        %v954 = vadd.f32 %v661, %v867
        %v955 = vadd.f32 %v663, %v869
        %v956 = vadd.f32 %v702, %v908
        %v957 = vadd.f32 %v704, %v910
        %v958 = vadd.f32 %v743, %v949
        %v959 = vsel %vm416, 65537, 0
        %v960 = vsel %vm417, 65537, 0
        %v961 = vsel %vm418, 65537, 0
        %962 = vrot.lane.b32.xlu0 %v959, 16
        %v963 = vpop.permute.xlu0 %962
        %964 = vrot.lane.b32.xlu0 %v960, 16
        %v965 = vpop.permute.xlu0 %964
        %966 = vrot.lane.b32.xlu0 %v961, 16
        %v967 = vpop.permute.xlu0 %966
        %v968 = vrot.slane %v963, 4
        %v969 = vrot.slane %v965, 4
        %vm970 = vcmask 130048
        %v971 = vsel %vm970, %v968, %v963
        %v972 = vsel %vm774, %v968, %v969
        %v973 = vsel %vm970, %v972, %v965
        %v974 = vsel %vm970, %v969, %v967
        %vm975 = vcmp.ne.s16.totalorder %v971, 0
        %vm976 = vcmp.ne.s16.totalorder %v973, 0
        %vm977 = vcmp.ne.s16.totalorder %v974, 0
        %v978 = vsel %vm975, %v403, 0
        %v979 = vsel %vm976, %v404, 0
        %v980 = vsel %vm977, %v405, 0
        %s981 = scalar_lea.vmem [#allocation6], 12
        %v982 = vld [vmem:[%s981] sm:$0xf]
        %v986 = vunpack.c.l.b16 %v978
        %v987 = vunpack.c.h.b16 %v978
        %v988 = vunpack.c.l.b16 %v979
        %v989 = vunpack.c.h.b16 %v979
        %v990 = vunpack.c.l.b16 %v980
        %v991 = vpack.c.b16 %v986, %v986
        %v992 = vpack.c.b16 %v987, %v987
        %v993 = vpack.c.b16 %v988, %v988
        %v994 = vpack.c.b16 %v989, %v989
        %v995 = vpack.c.b16 %v990, %v990
        %996 = vrot.lane.b32.xlu0 %v991, 112
        %v997 = vpop.permute.xlu0 %996
        %998 = vrot.lane.b32.xlu0 %v992, 112
        %v999 = vpop.permute.xlu0 %998
        %1000 = vrot.lane.b32.xlu0 %v993, 112
        %v1001 = vpop.permute.xlu0 %1000
        %1002 = vrot.lane.b32.xlu0 %v994, 112
        %v1003 = vpop.permute.xlu0 %1002
        %1004 = vrot.lane.b32.xlu0 %v995, 112
        %v1005 = vpop.permute.xlu0 %1004
        %vm1006 = vcmask 916480
        %v1007 = vsel %vm1006, %v997, %v999
        %v1008 = vsel %vm1006, %v999, %v1001
        %v1009 = vsel %vm1006, %v1001, %v1003
        %v1010 = vsel %vm1006, %v1003, %v1005
        %v1012 = vsel %vm453, %v982, 0
        %v1015 = vsel %vm457, %v1007, 0
        %v1018 = vsel %vm457, %v1008, 0
        %v1021 = vsel %vm457, %v1009, 0
        %v1024 = vsel %vm457, %v1010, 0
        %v1027 = vsel %vm457, %v1005, 0
        %1029 = vmatprep.subr.bf16.mxu0 0
        %1030 = vmatpush1.bf16.msra.mxu0 0
        %1031 = vmatprep.subr.bf16.mxu0 0
        %1032 = vmatpush1.bf16.msra.mxu0 0
        %1033 = vmatprep.subr.bf16.mxu0 0
        %1034 = vmatpush1.bf16.msra.mxu0 0
        %1035 = vmatprep.subr.bf16.mxu0 0
        %1036 = vmatpush1.bf16.msra.mxu0 0
        %1037 = vmatprep.subr.bf16.mxu0 0
        %1038 = vmatpush1.bf16.msra.mxu0 0
        %1039 = vmatprep.subr.bf16.mxu0 0
        %1040 = vmatpush1.bf16.msra.mxu0 0
        %1041 = vmatprep.subr.bf16.mxu0 0
        %1042 = vmatpush1.bf16.msra.mxu0 0
        %1043 = vmatprep.subr.bf16.mxu0 %v1018
        %1044 = vmatpush1.bf16.msra.mxu0 %v1015
        %1045 = vmatprep.subr.bf16.mxu0 0
        %1046 = vmatpush2.bf16.msra.mxu0 0
        %1047 = vmatprep.subr.bf16.mxu0 0
        %1048 = vmatpush2.bf16.msra.mxu0 0
        %1049 = vmatprep.subr.bf16.mxu0 0
        %1050 = vmatpush2.bf16.msra.mxu0 0
        %1051 = vmatprep.subr.bf16.mxu0 0
        %1052 = vmatpush2.bf16.msra.mxu0 0
        %1053 = vmatprep.subr.bf16.mxu0 0
        %1054 = vmatpush2.bf16.msra.mxu0 0
        %1055 = vmatprep.subr.bf16.mxu0 0
        %1056 = vmatpush2.bf16.msra.mxu0 0
        %1057 = vmatprep.subr.bf16.mxu0 0
        %1058 = vmatpush2.bf16.msra.mxu0 0
        %1059 = vmatprep.subr.bf16.mxu0 0
        %1060 = vmatpush2.bf16.msra.mxu0 0
        %1061 = vmatprep.mubr.bf16.mxu0 0
        %1062 = vmatmul.mubr.bf16.gmra.mxu0 %v1012
        %v1063 = vpop.f32.mrf.mxu0
        %v1064 = vadd.f32 0.0, %v1063
        %v1065 = vpop.f32.mrf.mxu0
        %v1066 = vadd.f32 0.0, %v1065
        %v1067 = vpop.f32.mrf.mxu0
        %v1068 = vpop.f32.mrf.mxu0
        %1069 = vdwg.mxu0
        %1070 = vmatprep.subr.bf16.mxu0 0
        %1071 = vmatpush1.bf16.msra.mxu0 0
        %1072 = vmatprep.subr.bf16.mxu0 0
        %1073 = vmatpush1.bf16.msra.mxu0 0
        %1074 = vmatprep.subr.bf16.mxu0 0
        %1075 = vmatpush1.bf16.msra.mxu0 0
        %1076 = vmatprep.subr.bf16.mxu0 0
        %1077 = vmatpush1.bf16.msra.mxu0 0
        %1078 = vmatprep.subr.bf16.mxu0 0
        %1079 = vmatpush1.bf16.msra.mxu0 0
        %1080 = vmatprep.subr.bf16.mxu0 0
        %1081 = vmatpush1.bf16.msra.mxu0 0
        %1082 = vmatprep.subr.bf16.mxu0 0
        %1083 = vmatpush1.bf16.msra.mxu0 0
        %1084 = vmatprep.subr.bf16.mxu0 %v1024
        %1085 = vmatpush1.bf16.msra.mxu0 %v1021
        %1086 = vmatprep.subr.bf16.mxu0 0
        %1087 = vmatpush2.bf16.msra.mxu0 0
        %1088 = vmatprep.subr.bf16.mxu0 0
        %1089 = vmatpush2.bf16.msra.mxu0 0
        %1090 = vmatprep.subr.bf16.mxu0 0
        %1091 = vmatpush2.bf16.msra.mxu0 0
        %1092 = vmatprep.subr.bf16.mxu0 0
        %1093 = vmatpush2.bf16.msra.mxu0 0
        %1094 = vmatprep.subr.bf16.mxu0 0
        %1095 = vmatpush2.bf16.msra.mxu0 0
        %1096 = vmatprep.subr.bf16.mxu0 0
        %1097 = vmatpush2.bf16.msra.mxu0 0
        %1098 = vmatprep.subr.bf16.mxu0 0
        %1099 = vmatpush2.bf16.msra.mxu0 0
        %1100 = vmatprep.subr.bf16.mxu0 0
        %1101 = vmatpush2.bf16.msra.mxu0 0
        %1102 = vmatprep.mubr.bf16.mxu0 0
        %1103 = vmatmul.mubr.bf16.gmra.mxu0 %v1012
        %v1104 = vpop.f32.mrf.mxu0
        %v1105 = vadd.f32 0.0, %v1104
        %v1106 = vpop.f32.mrf.mxu0
        %v1107 = vadd.f32 0.0, %v1106
        %v1108 = vpop.f32.mrf.mxu0
        %v1109 = vpop.f32.mrf.mxu0
        %1110 = vdwg.mxu0
        %1111 = vmatprep.subr.bf16.mxu0 0
        %1112 = vmatpush1.bf16.msra.mxu0 0
        %1113 = vmatprep.subr.bf16.mxu0 0
        %1114 = vmatpush1.bf16.msra.mxu0 0
        %1115 = vmatprep.subr.bf16.mxu0 0
        %1116 = vmatpush1.bf16.msra.mxu0 0
        %1117 = vmatprep.subr.bf16.mxu0 0
        %1118 = vmatpush1.bf16.msra.mxu0 0
        %1119 = vmatprep.subr.bf16.mxu0 0
        %1120 = vmatpush1.bf16.msra.mxu0 0
        %1121 = vmatprep.subr.bf16.mxu0 0
        %1122 = vmatpush1.bf16.msra.mxu0 0
        %1123 = vmatprep.subr.bf16.mxu0 0
        %1124 = vmatpush1.bf16.msra.mxu0 0
        %1125 = vmatprep.subr.bf16.mxu0 0
        %1126 = vmatpush1.bf16.msra.mxu0 %v1027
        %1127 = vmatprep.subr.bf16.mxu0 0
        %1128 = vmatpush2.bf16.msra.mxu0 0
        %1129 = vmatprep.subr.bf16.mxu0 0
        %1130 = vmatpush2.bf16.msra.mxu0 0
        %1131 = vmatprep.subr.bf16.mxu0 0
        %1132 = vmatpush2.bf16.msra.mxu0 0
        %1133 = vmatprep.subr.bf16.mxu0 0
        %1134 = vmatpush2.bf16.msra.mxu0 0
        %1135 = vmatprep.subr.bf16.mxu0 0
        %1136 = vmatpush2.bf16.msra.mxu0 0
        %1137 = vmatprep.subr.bf16.mxu0 0
        %1138 = vmatpush2.bf16.msra.mxu0 0
        %1139 = vmatprep.subr.bf16.mxu0 0
        %1140 = vmatpush2.bf16.msra.mxu0 0
        %1141 = vmatprep.subr.bf16.mxu0 0
        %1142 = vmatpush2.bf16.msra.mxu0 0
        %1143 = vmatprep.mubr.bf16.mxu0 0
        %1144 = vmatmul.mubr.bf16.gmra.mxu0 %v1012
        %v1145 = vpop.f32.mrf.mxu0
        %v1146 = vadd.f32 0.0, %v1145
        %v1147 = vpop.f32.mrf.mxu0
        %v1148 = vpop.f32.mrf.mxu0
        %v1149 = vpop.f32.mrf.mxu0
        %1150 = vdwg.mxu0
        %v1151 = vadd.f32 %v954, %v1064
        %v1152 = vadd.f32 %v955, %v1066
        %v1153 = vadd.f32 %v956, %v1105
        %v1154 = vadd.f32 %v957, %v1107
        %v1155 = vadd.f32 %v958, %v1146
        %s1156 = scalar_lea.vmem [#allocation6], 16
        %v1157 = vld [vmem:[%s1156] sm:$0xf]
        %1158 = vrot.lane.b32.xlu0 %v433, 111
        %v1159 = vpop.permute.xlu0 %1158
        %1160 = vrot.lane.b32.xlu0 %v434, 111
        %v1161 = vpop.permute.xlu0 %1160
        %1162 = vrot.lane.b32.xlu0 %v435, 111
        %v1163 = vpop.permute.xlu0 %1162
        %1164 = vrot.lane.b32.xlu0 %v436, 111
        %v1165 = vpop.permute.xlu0 %1164
        %1166 = vrot.lane.b32.xlu0 %v437, 111
        %v1167 = vpop.permute.xlu0 %1166
        %vm1168 = vcmask 908288
        %v1169 = vsel %vm1168, %v1159, %v1161
        %v1170 = vsel %vm1168, %v1161, %v1163
        %v1171 = vsel %vm1168, %v1163, %v1165
        %v1172 = vsel %vm1168, %v1165, %v1167
        %v1174 = vsel %vm453, %v1157, 0
        %v1177 = vsel %vm457, %v1169, 0
        %v1180 = vsel %vm457, %v1170, 0
        %v1183 = vsel %vm457, %v1171, 0
        %v1186 = vsel %vm457, %v1172, 0
        %v1189 = vsel %vm457, %v1167, 0
        %1191 = vmatprep.subr.bf16.mxu0 0
        %1192 = vmatpush1.bf16.msra.mxu0 0
        %1193 = vmatprep.subr.bf16.mxu0 0
        %1194 = vmatpush1.bf16.msra.mxu0 0
        %1195 = vmatprep.subr.bf16.mxu0 0
        %1196 = vmatpush1.bf16.msra.mxu0 0
        %1197 = vmatprep.subr.bf16.mxu0 0
        %1198 = vmatpush1.bf16.msra.mxu0 0
        %1199 = vmatprep.subr.bf16.mxu0 0
        %1200 = vmatpush1.bf16.msra.mxu0 0
        %1201 = vmatprep.subr.bf16.mxu0 0
        %1202 = vmatpush1.bf16.msra.mxu0 0
        %1203 = vmatprep.subr.bf16.mxu0 0
        %1204 = vmatpush1.bf16.msra.mxu0 0
        %1205 = vmatprep.subr.bf16.mxu0 %v1180
        %1206 = vmatpush1.bf16.msra.mxu0 %v1177
        %1207 = vmatprep.subr.bf16.mxu0 0
        %1208 = vmatpush2.bf16.msra.mxu0 0
        %1209 = vmatprep.subr.bf16.mxu0 0
        %1210 = vmatpush2.bf16.msra.mxu0 0
        %1211 = vmatprep.subr.bf16.mxu0 0
        %1212 = vmatpush2.bf16.msra.mxu0 0
        %1213 = vmatprep.subr.bf16.mxu0 0
        %1214 = vmatpush2.bf16.msra.mxu0 0
        %1215 = vmatprep.subr.bf16.mxu0 0
        %1216 = vmatpush2.bf16.msra.mxu0 0
        %1217 = vmatprep.subr.bf16.mxu0 0
        %1218 = vmatpush2.bf16.msra.mxu0 0
        %1219 = vmatprep.subr.bf16.mxu0 0
        %1220 = vmatpush2.bf16.msra.mxu0 0
        %1221 = vmatprep.subr.bf16.mxu0 0
        %1222 = vmatpush2.bf16.msra.mxu0 0
        %1223 = vmatprep.mubr.bf16.mxu0 0
        %1224 = vmatmul.mubr.bf16.gmra.mxu0 %v1174
        %v1225 = vpop.f32.mrf.mxu0
        %v1226 = vadd.f32 0.0, %v1225
        %v1227 = vpop.f32.mrf.mxu0
        %v1228 = vadd.f32 0.0, %v1227
        %v1229 = vpop.f32.mrf.mxu0
        %v1230 = vpop.f32.mrf.mxu0
        %1231 = vdwg.mxu0
        %1232 = vmatprep.subr.bf16.mxu0 0
        %1233 = vmatpush1.bf16.msra.mxu0 0
        %1234 = vmatprep.subr.bf16.mxu0 0
        %1235 = vmatpush1.bf16.msra.mxu0 0
        %1236 = vmatprep.subr.bf16.mxu0 0
        %1237 = vmatpush1.bf16.msra.mxu0 0
        %1238 = vmatprep.subr.bf16.mxu0 0
        %1239 = vmatpush1.bf16.msra.mxu0 0
        %1240 = vmatprep.subr.bf16.mxu0 0
        %1241 = vmatpush1.bf16.msra.mxu0 0
        %1242 = vmatprep.subr.bf16.mxu0 0
        %1243 = vmatpush1.bf16.msra.mxu0 0
        %1244 = vmatprep.subr.bf16.mxu0 0
        %1245 = vmatpush1.bf16.msra.mxu0 0
        %1246 = vmatprep.subr.bf16.mxu0 %v1186
        %1247 = vmatpush1.bf16.msra.mxu0 %v1183
        %1248 = vmatprep.subr.bf16.mxu0 0
        %1249 = vmatpush2.bf16.msra.mxu0 0
        %1250 = vmatprep.subr.bf16.mxu0 0
        %1251 = vmatpush2.bf16.msra.mxu0 0
        %1252 = vmatprep.subr.bf16.mxu0 0
        %1253 = vmatpush2.bf16.msra.mxu0 0
        %1254 = vmatprep.subr.bf16.mxu0 0
        %1255 = vmatpush2.bf16.msra.mxu0 0
        %1256 = vmatprep.subr.bf16.mxu0 0
        %1257 = vmatpush2.bf16.msra.mxu0 0
        %1258 = vmatprep.subr.bf16.mxu0 0
        %1259 = vmatpush2.bf16.msra.mxu0 0
        %1260 = vmatprep.subr.bf16.mxu0 0
        %1261 = vmatpush2.bf16.msra.mxu0 0
        %1262 = vmatprep.subr.bf16.mxu0 0
        %1263 = vmatpush2.bf16.msra.mxu0 0
        %1264 = vmatprep.mubr.bf16.mxu0 0
        %1265 = vmatmul.mubr.bf16.gmra.mxu0 %v1174
        %v1266 = vpop.f32.mrf.mxu0
        %v1267 = vadd.f32 0.0, %v1266
        %v1268 = vpop.f32.mrf.mxu0
        %v1269 = vadd.f32 0.0, %v1268
        %v1270 = vpop.f32.mrf.mxu0
        %v1271 = vpop.f32.mrf.mxu0
        %1272 = vdwg.mxu0
        %1273 = vmatprep.subr.bf16.mxu0 0
        %1274 = vmatpush1.bf16.msra.mxu0 0
        %1275 = vmatprep.subr.bf16.mxu0 0
        %1276 = vmatpush1.bf16.msra.mxu0 0
        %1277 = vmatprep.subr.bf16.mxu0 0
        %1278 = vmatpush1.bf16.msra.mxu0 0
        %1279 = vmatprep.subr.bf16.mxu0 0
        %1280 = vmatpush1.bf16.msra.mxu0 0
        %1281 = vmatprep.subr.bf16.mxu0 0
        %1282 = vmatpush1.bf16.msra.mxu0 0
        %1283 = vmatprep.subr.bf16.mxu0 0
        %1284 = vmatpush1.bf16.msra.mxu0 0
        %1285 = vmatprep.subr.bf16.mxu0 0
        %1286 = vmatpush1.bf16.msra.mxu0 0
        %1287 = vmatprep.subr.bf16.mxu0 0
        %1288 = vmatpush1.bf16.msra.mxu0 %v1189
        %1289 = vmatprep.subr.bf16.mxu0 0
        %1290 = vmatpush2.bf16.msra.mxu0 0
        %1291 = vmatprep.subr.bf16.mxu0 0
        %1292 = vmatpush2.bf16.msra.mxu0 0
        %1293 = vmatprep.subr.bf16.mxu0 0
        %1294 = vmatpush2.bf16.msra.mxu0 0
        %1295 = vmatprep.subr.bf16.mxu0 0
        %1296 = vmatpush2.bf16.msra.mxu0 0
        %1297 = vmatprep.subr.bf16.mxu0 0
        %1298 = vmatpush2.bf16.msra.mxu0 0
        %1299 = vmatprep.subr.bf16.mxu0 0
        %1300 = vmatpush2.bf16.msra.mxu0 0
        %1301 = vmatprep.subr.bf16.mxu0 0
        %1302 = vmatpush2.bf16.msra.mxu0 0
        %1303 = vmatprep.subr.bf16.mxu0 0
        %1304 = vmatpush2.bf16.msra.mxu0 0
        %1305 = vmatprep.mubr.bf16.mxu0 0
        %1306 = vmatmul.mubr.bf16.gmra.mxu0 %v1174
        %v1307 = vpop.f32.mrf.mxu0
        %v1308 = vadd.f32 0.0, %v1307
        %v1309 = vpop.f32.mrf.mxu0
        %v1310 = vpop.f32.mrf.mxu0
        %v1311 = vpop.f32.mrf.mxu0
        %1312 = vdwg.mxu0
        %v1313 = vadd.f32 %v1151, %v1226
        %v1314 = vadd.f32 %v1152, %v1228
        %v1315 = vadd.f32 %v1153, %v1267
        %v1316 = vadd.f32 %v1154, %v1269
        %v1317 = vadd.f32 %v1155, %v1308
        %1318 = vrot.lane.b32.xlu0 %v761, 18
        %v1319 = vpop.permute.xlu0 %1318
        %1320 = vrot.lane.b32.xlu0 %v762, 18
        %v1321 = vpop.permute.xlu0 %1320
        %1322 = vrot.lane.b32.xlu0 %v763, 18
        %v1323 = vpop.permute.xlu0 %1322
        %v1324 = vrot.slane %v1319, 4
        %v1325 = vrot.slane %v1321, 4
        %vm1326 = vcmask 146432
        %v1327 = vsel %vm1326, %v1324, %v1319
        %v1328 = vsel %vm774, %v1324, %v1325
        %v1329 = vsel %vm1326, %v1328, %v1321
        %v1330 = vsel %vm1326, %v1325, %v1323
        %vm1331 = vcmp.ne.s16.totalorder %v1327, 0
        %vm1332 = vcmp.ne.s16.totalorder %v1329, 0
        %vm1333 = vcmp.ne.s16.totalorder %v1330, 0
        %v1334 = vsel %vm1331, %v403, 0
        %v1335 = vsel %vm1332, %v404, 0
        %v1336 = vsel %vm1333, %v405, 0
        %s1337 = scalar_lea.vmem [#allocation6], 20
        %v1338 = vld [vmem:[%s1337] sm:$0xf]
        %v1342 = vunpack.c.l.b16 %v1334
        %v1343 = vunpack.c.h.b16 %v1334
        %v1344 = vunpack.c.l.b16 %v1335
        %v1345 = vunpack.c.h.b16 %v1335
        %v1346 = vunpack.c.l.b16 %v1336
        %v1347 = vpack.c.b16 %v1342, %v1342
        %v1348 = vpack.c.b16 %v1343, %v1343
        %v1349 = vpack.c.b16 %v1344, %v1344
        %v1350 = vpack.c.b16 %v1345, %v1345
        %v1351 = vpack.c.b16 %v1346, %v1346
        %1352 = vrot.lane.b32.xlu0 %v1347, 110
        %v1353 = vpop.permute.xlu0 %1352
        %1354 = vrot.lane.b32.xlu0 %v1348, 110
        %v1355 = vpop.permute.xlu0 %1354
        %1356 = vrot.lane.b32.xlu0 %v1349, 110
        %v1357 = vpop.permute.xlu0 %1356
        %1358 = vrot.lane.b32.xlu0 %v1350, 110
        %v1359 = vpop.permute.xlu0 %1358
        %1360 = vrot.lane.b32.xlu0 %v1351, 110
        %v1361 = vpop.permute.xlu0 %1360
        %vm1362 = vcmask 900096
        %v1363 = vsel %vm1362, %v1353, %v1355
        %v1364 = vsel %vm1362, %v1355, %v1357
        %v1365 = vsel %vm1362, %v1357, %v1359
        %v1366 = vsel %vm1362, %v1359, %v1361
        %v1368 = vsel %vm453, %v1338, 0
        %v1371 = vsel %vm457, %v1363, 0
        %v1374 = vsel %vm457, %v1364, 0
        %v1377 = vsel %vm457, %v1365, 0
        %v1380 = vsel %vm457, %v1366, 0
        %v1383 = vsel %vm457, %v1361, 0
        %1385 = vmatprep.subr.bf16.mxu0 0
        %1386 = vmatpush1.bf16.msra.mxu0 0
        %1387 = vmatprep.subr.bf16.mxu0 0
        %1388 = vmatpush1.bf16.msra.mxu0 0
        %1389 = vmatprep.subr.bf16.mxu0 0
        %1390 = vmatpush1.bf16.msra.mxu0 0
        %1391 = vmatprep.subr.bf16.mxu0 0
        %1392 = vmatpush1.bf16.msra.mxu0 0
        %1393 = vmatprep.subr.bf16.mxu0 0
        %1394 = vmatpush1.bf16.msra.mxu0 0
        %1395 = vmatprep.subr.bf16.mxu0 0
        %1396 = vmatpush1.bf16.msra.mxu0 0
        %1397 = vmatprep.subr.bf16.mxu0 0
        %1398 = vmatpush1.bf16.msra.mxu0 0
        %1399 = vmatprep.subr.bf16.mxu0 %v1374
        %1400 = vmatpush1.bf16.msra.mxu0 %v1371
        %1401 = vmatprep.subr.bf16.mxu0 0
        %1402 = vmatpush2.bf16.msra.mxu0 0
        %1403 = vmatprep.subr.bf16.mxu0 0
        %1404 = vmatpush2.bf16.msra.mxu0 0
        %1405 = vmatprep.subr.bf16.mxu0 0
        %1406 = vmatpush2.bf16.msra.mxu0 0
        %1407 = vmatprep.subr.bf16.mxu0 0
        %1408 = vmatpush2.bf16.msra.mxu0 0
        %1409 = vmatprep.subr.bf16.mxu0 0
        %1410 = vmatpush2.bf16.msra.mxu0 0
        %1411 = vmatprep.subr.bf16.mxu0 0
        %1412 = vmatpush2.bf16.msra.mxu0 0
        %1413 = vmatprep.subr.bf16.mxu0 0
        %1414 = vmatpush2.bf16.msra.mxu0 0
        %1415 = vmatprep.subr.bf16.mxu0 0
        %1416 = vmatpush2.bf16.msra.mxu0 0
        %1417 = vmatprep.mubr.bf16.mxu0 0
        %1418 = vmatmul.mubr.bf16.gmra.mxu0 %v1368
        %v1419 = vpop.f32.mrf.mxu0
        %v1420 = vadd.f32 0.0, %v1419
        %v1421 = vpop.f32.mrf.mxu0
        %v1422 = vadd.f32 0.0, %v1421
        %v1423 = vpop.f32.mrf.mxu0
        %v1424 = vpop.f32.mrf.mxu0
        %1425 = vdwg.mxu0
        %1426 = vmatprep.subr.bf16.mxu0 0
        %1427 = vmatpush1.bf16.msra.mxu0 0
        %1428 = vmatprep.subr.bf16.mxu0 0
        %1429 = vmatpush1.bf16.msra.mxu0 0
        %1430 = vmatprep.subr.bf16.mxu0 0
        %1431 = vmatpush1.bf16.msra.mxu0 0
        %1432 = vmatprep.subr.bf16.mxu0 0
        %1433 = vmatpush1.bf16.msra.mxu0 0
        %1434 = vmatprep.subr.bf16.mxu0 0
        %1435 = vmatpush1.bf16.msra.mxu0 0
        %1436 = vmatprep.subr.bf16.mxu0 0
        %1437 = vmatpush1.bf16.msra.mxu0 0
        %1438 = vmatprep.subr.bf16.mxu0 0
        %1439 = vmatpush1.bf16.msra.mxu0 0
        %1440 = vmatprep.subr.bf16.mxu0 %v1380
        %1441 = vmatpush1.bf16.msra.mxu0 %v1377
        %1442 = vmatprep.subr.bf16.mxu0 0
        %1443 = vmatpush2.bf16.msra.mxu0 0
        %1444 = vmatprep.subr.bf16.mxu0 0
        %1445 = vmatpush2.bf16.msra.mxu0 0
        %1446 = vmatprep.subr.bf16.mxu0 0
        %1447 = vmatpush2.bf16.msra.mxu0 0
        %1448 = vmatprep.subr.bf16.mxu0 0
        %1449 = vmatpush2.bf16.msra.mxu0 0
        %1450 = vmatprep.subr.bf16.mxu0 0
        %1451 = vmatpush2.bf16.msra.mxu0 0
        %1452 = vmatprep.subr.bf16.mxu0 0
        %1453 = vmatpush2.bf16.msra.mxu0 0
        %1454 = vmatprep.subr.bf16.mxu0 0
        %1455 = vmatpush2.bf16.msra.mxu0 0
        %1456 = vmatprep.subr.bf16.mxu0 0
        %1457 = vmatpush2.bf16.msra.mxu0 0
        %1458 = vmatprep.mubr.bf16.mxu0 0
        %1459 = vmatmul.mubr.bf16.gmra.mxu0 %v1368
        %v1460 = vpop.f32.mrf.mxu0
        %v1461 = vadd.f32 0.0, %v1460
        %v1462 = vpop.f32.mrf.mxu0
        %v1463 = vadd.f32 0.0, %v1462
        %v1464 = vpop.f32.mrf.mxu0
        %v1465 = vpop.f32.mrf.mxu0
        %1466 = vdwg.mxu0
        %1467 = vmatprep.subr.bf16.mxu0 0
        %1468 = vmatpush1.bf16.msra.mxu0 0
        %1469 = vmatprep.subr.bf16.mxu0 0
        %1470 = vmatpush1.bf16.msra.mxu0 0
        %1471 = vmatprep.subr.bf16.mxu0 0
        %1472 = vmatpush1.bf16.msra.mxu0 0
        %1473 = vmatprep.subr.bf16.mxu0 0
        %1474 = vmatpush1.bf16.msra.mxu0 0
        %1475 = vmatprep.subr.bf16.mxu0 0
        %1476 = vmatpush1.bf16.msra.mxu0 0
        %1477 = vmatprep.subr.bf16.mxu0 0
        %1478 = vmatpush1.bf16.msra.mxu0 0
        %1479 = vmatprep.subr.bf16.mxu0 0
        %1480 = vmatpush1.bf16.msra.mxu0 0
        %1481 = vmatprep.subr.bf16.mxu0 0
        %1482 = vmatpush1.bf16.msra.mxu0 %v1383
        %1483 = vmatprep.subr.bf16.mxu0 0
        %1484 = vmatpush2.bf16.msra.mxu0 0
        %1485 = vmatprep.subr.bf16.mxu0 0
        %1486 = vmatpush2.bf16.msra.mxu0 0
        %1487 = vmatprep.subr.bf16.mxu0 0
        %1488 = vmatpush2.bf16.msra.mxu0 0
        %1489 = vmatprep.subr.bf16.mxu0 0
        %1490 = vmatpush2.bf16.msra.mxu0 0
        %1491 = vmatprep.subr.bf16.mxu0 0
        %1492 = vmatpush2.bf16.msra.mxu0 0
        %1493 = vmatprep.subr.bf16.mxu0 0
        %1494 = vmatpush2.bf16.msra.mxu0 0
        %1495 = vmatprep.subr.bf16.mxu0 0
        %1496 = vmatpush2.bf16.msra.mxu0 0
        %1497 = vmatprep.subr.bf16.mxu0 0
        %1498 = vmatpush2.bf16.msra.mxu0 0
        %1499 = vmatprep.mubr.bf16.mxu0 0
        %1500 = vmatmul.mubr.bf16.gmra.mxu0 %v1368
        %v1501 = vpop.f32.mrf.mxu0
        %v1502 = vadd.f32 0.0, %v1501
        %v1503 = vpop.f32.mrf.mxu0
        %v1504 = vpop.f32.mrf.mxu0
        %v1505 = vpop.f32.mrf.mxu0
        %1506 = vdwg.mxu0
        %v1507 = vadd.f32 %v1313, %v1420
        %v1508 = vadd.f32 %v1314, %v1422
        %v1509 = vadd.f32 %v1315, %v1461
        %v1510 = vadd.f32 %v1316, %v1463
        %v1511 = vadd.f32 %v1317, %v1502
        %1512 = vrot.lane.b32.xlu0 %v959, 32
        %v1513 = vpop.permute.xlu0 %1512
        %1514 = vrot.lane.b32.xlu0 %v960, 32
        %v1515 = vpop.permute.xlu0 %1514
        %1516 = vrot.lane.b32.xlu0 %v961, 32
        %v1517 = vpop.permute.xlu0 %1516
        %v1518 = vrot.slane %v1513, 4
        %v1519 = vrot.slane %v1515, 4
        %vm1520 = vcmask 261120
        %v1521 = vsel %vm1520, %v1518, %v1513
        %v1522 = vsel %vm774, %v1518, %v1519
        %v1523 = vsel %vm1520, %v1522, %v1515
        %v1524 = vsel %vm1520, %v1519, %v1517
        %vm1525 = vcmp.ne.s16.totalorder %v1521, 0
        %vm1526 = vcmp.ne.s16.totalorder %v1523, 0
        %vm1527 = vcmp.ne.s16.totalorder %v1524, 0
        %v1528 = vsel %vm1525, %v403, 0
        %v1529 = vsel %vm1526, %v404, 0
        %v1530 = vsel %vm1527, %v405, 0
        %s1531 = scalar_lea.vmem [#allocation6], 24
        %v1532 = vld [vmem:[%s1531] sm:$0xf]
        %v1536 = vunpack.c.l.b16 %v1528
        %v1537 = vunpack.c.h.b16 %v1528
        %v1538 = vunpack.c.l.b16 %v1529
        %v1539 = vunpack.c.h.b16 %v1529
        %v1540 = vunpack.c.l.b16 %v1530
        %v1541 = vpack.c.b16 %v1536, %v1536
        %v1542 = vpack.c.b16 %v1537, %v1537
        %v1543 = vpack.c.b16 %v1538, %v1538
        %v1544 = vpack.c.b16 %v1539, %v1539
        %v1545 = vpack.c.b16 %v1540, %v1540
        %1546 = vrot.lane.b32.xlu0 %v1541, 96
        %v1547 = vpop.permute.xlu0 %1546
        %1548 = vrot.lane.b32.xlu0 %v1542, 96
        %v1549 = vpop.permute.xlu0 %1548
        %1550 = vrot.lane.b32.xlu0 %v1543, 96
        %v1551 = vpop.permute.xlu0 %1550
        %1552 = vrot.lane.b32.xlu0 %v1544, 96
        %v1553 = vpop.permute.xlu0 %1552
        %1554 = vrot.lane.b32.xlu0 %v1545, 96
        %v1555 = vpop.permute.xlu0 %1554
        %vm1556 = vcmask 785408
        %v1557 = vsel %vm1556, %v1547, %v1549
        %v1558 = vsel %vm1556, %v1549, %v1551
        %v1559 = vsel %vm1556, %v1551, %v1553
        %v1560 = vsel %vm1556, %v1553, %v1555
        %v1562 = vsel %vm453, %v1532, 0
        %v1565 = vsel %vm457, %v1557, 0
        %v1568 = vsel %vm457, %v1558, 0
        %v1571 = vsel %vm457, %v1559, 0
        %v1574 = vsel %vm457, %v1560, 0
        %v1577 = vsel %vm457, %v1555, 0
        %1579 = vmatprep.subr.bf16.mxu0 0
        %1580 = vmatpush1.bf16.msra.mxu0 0
        %1581 = vmatprep.subr.bf16.mxu0 0
        %1582 = vmatpush1.bf16.msra.mxu0 0
        %1583 = vmatprep.subr.bf16.mxu0 0
        %1584 = vmatpush1.bf16.msra.mxu0 0
        %1585 = vmatprep.subr.bf16.mxu0 0
        %1586 = vmatpush1.bf16.msra.mxu0 0
        %1587 = vmatprep.subr.bf16.mxu0 0
        %1588 = vmatpush1.bf16.msra.mxu0 0
        %1589 = vmatprep.subr.bf16.mxu0 0
        %1590 = vmatpush1.bf16.msra.mxu0 0
        %1591 = vmatprep.subr.bf16.mxu0 0
        %1592 = vmatpush1.bf16.msra.mxu0 0
        %1593 = vmatprep.subr.bf16.mxu0 %v1568
        %1594 = vmatpush1.bf16.msra.mxu0 %v1565
        %1595 = vmatprep.subr.bf16.mxu0 0
        %1596 = vmatpush2.bf16.msra.mxu0 0
        %1597 = vmatprep.subr.bf16.mxu0 0
        %1598 = vmatpush2.bf16.msra.mxu0 0
        %1599 = vmatprep.subr.bf16.mxu0 0
        %1600 = vmatpush2.bf16.msra.mxu0 0
        %1601 = vmatprep.subr.bf16.mxu0 0
        %1602 = vmatpush2.bf16.msra.mxu0 0
        %1603 = vmatprep.subr.bf16.mxu0 0
        %1604 = vmatpush2.bf16.msra.mxu0 0
        %1605 = vmatprep.subr.bf16.mxu0 0
        %1606 = vmatpush2.bf16.msra.mxu0 0
        %1607 = vmatprep.subr.bf16.mxu0 0
        %1608 = vmatpush2.bf16.msra.mxu0 0
        %1609 = vmatprep.subr.bf16.mxu0 0
        %1610 = vmatpush2.bf16.msra.mxu0 0
        %1611 = vmatprep.mubr.bf16.mxu0 0
        %1612 = vmatmul.mubr.bf16.gmra.mxu0 %v1562
        %v1613 = vpop.f32.mrf.mxu0
        %v1614 = vadd.f32 0.0, %v1613
        %v1615 = vpop.f32.mrf.mxu0
        %v1616 = vadd.f32 0.0, %v1615
        %v1617 = vpop.f32.mrf.mxu0
        %v1618 = vpop.f32.mrf.mxu0
        %1619 = vdwg.mxu0
        %1620 = vmatprep.subr.bf16.mxu0 0
        %1621 = vmatpush1.bf16.msra.mxu0 0
        %1622 = vmatprep.subr.bf16.mxu0 0
        %1623 = vmatpush1.bf16.msra.mxu0 0
        %1624 = vmatprep.subr.bf16.mxu0 0
        %1625 = vmatpush1.bf16.msra.mxu0 0
        %1626 = vmatprep.subr.bf16.mxu0 0
        %1627 = vmatpush1.bf16.msra.mxu0 0
        %1628 = vmatprep.subr.bf16.mxu0 0
        %1629 = vmatpush1.bf16.msra.mxu0 0
        %1630 = vmatprep.subr.bf16.mxu0 0
        %1631 = vmatpush1.bf16.msra.mxu0 0
        %1632 = vmatprep.subr.bf16.mxu0 0
        %1633 = vmatpush1.bf16.msra.mxu0 0
        %1634 = vmatprep.subr.bf16.mxu0 %v1574
        %1635 = vmatpush1.bf16.msra.mxu0 %v1571
        %1636 = vmatprep.subr.bf16.mxu0 0
        %1637 = vmatpush2.bf16.msra.mxu0 0
        %1638 = vmatprep.subr.bf16.mxu0 0
        %1639 = vmatpush2.bf16.msra.mxu0 0
        %1640 = vmatprep.subr.bf16.mxu0 0
        %1641 = vmatpush2.bf16.msra.mxu0 0
        %1642 = vmatprep.subr.bf16.mxu0 0
        %1643 = vmatpush2.bf16.msra.mxu0 0
        %1644 = vmatprep.subr.bf16.mxu0 0
        %1645 = vmatpush2.bf16.msra.mxu0 0
        %1646 = vmatprep.subr.bf16.mxu0 0
        %1647 = vmatpush2.bf16.msra.mxu0 0
        %1648 = vmatprep.subr.bf16.mxu0 0
        %1649 = vmatpush2.bf16.msra.mxu0 0
        %1650 = vmatprep.subr.bf16.mxu0 0
        %1651 = vmatpush2.bf16.msra.mxu0 0
        %1652 = vmatprep.mubr.bf16.mxu0 0
        %1653 = vmatmul.mubr.bf16.gmra.mxu0 %v1562
        %v1654 = vpop.f32.mrf.mxu0
        %v1655 = vadd.f32 0.0, %v1654
        %v1656 = vpop.f32.mrf.mxu0
        %v1657 = vadd.f32 0.0, %v1656
        %v1658 = vpop.f32.mrf.mxu0
        %v1659 = vpop.f32.mrf.mxu0
        %1660 = vdwg.mxu0
        %1661 = vmatprep.subr.bf16.mxu0 0
        %1662 = vmatpush1.bf16.msra.mxu0 0
        %1663 = vmatprep.subr.bf16.mxu0 0
        %1664 = vmatpush1.bf16.msra.mxu0 0
        %1665 = vmatprep.subr.bf16.mxu0 0
        %1666 = vmatpush1.bf16.msra.mxu0 0
        %1667 = vmatprep.subr.bf16.mxu0 0
        %1668 = vmatpush1.bf16.msra.mxu0 0
        %1669 = vmatprep.subr.bf16.mxu0 0
        %1670 = vmatpush1.bf16.msra.mxu0 0
        %1671 = vmatprep.subr.bf16.mxu0 0
        %1672 = vmatpush1.bf16.msra.mxu0 0
        %1673 = vmatprep.subr.bf16.mxu0 0
        %1674 = vmatpush1.bf16.msra.mxu0 0
        %1675 = vmatprep.subr.bf16.mxu0 0
        %1676 = vmatpush1.bf16.msra.mxu0 %v1577
        %1677 = vmatprep.subr.bf16.mxu0 0
        %1678 = vmatpush2.bf16.msra.mxu0 0
        %1679 = vmatprep.subr.bf16.mxu0 0
        %1680 = vmatpush2.bf16.msra.mxu0 0
        %1681 = vmatprep.subr.bf16.mxu0 0
        %1682 = vmatpush2.bf16.msra.mxu0 0
        %1683 = vmatprep.subr.bf16.mxu0 0
        %1684 = vmatpush2.bf16.msra.mxu0 0
        %1685 = vmatprep.subr.bf16.mxu0 0
        %1686 = vmatpush2.bf16.msra.mxu0 0
        %1687 = vmatprep.subr.bf16.mxu0 0
        %1688 = vmatpush2.bf16.msra.mxu0 0
        %1689 = vmatprep.subr.bf16.mxu0 0
        %1690 = vmatpush2.bf16.msra.mxu0 0
        %1691 = vmatprep.subr.bf16.mxu0 0
        %1692 = vmatpush2.bf16.msra.mxu0 0
        %1693 = vmatprep.mubr.bf16.mxu0 0
        %1694 = vmatmul.mubr.bf16.gmra.mxu0 %v1562
        %v1695 = vpop.f32.mrf.mxu0
        %v1696 = vadd.f32 0.0, %v1695
        %v1697 = vpop.f32.mrf.mxu0
        %v1698 = vpop.f32.mrf.mxu0
        %v1699 = vpop.f32.mrf.mxu0
        %1700 = vdwg.mxu0
        %v1701 = vadd.f32 %v1507, %v1614
        %v1702 = vadd.f32 %v1508, %v1616
        %v1703 = vadd.f32 %v1509, %v1655
        %v1704 = vadd.f32 %v1510, %v1657
        %v1705 = vadd.f32 %v1511, %v1696
        %s1706 = scalar_lea.vmem [#allocation6], 28
        %v1707 = vld [vmem:[%s1706] sm:$0xf]
        %1708 = vrot.lane.b32.xlu0 %v433, 95
        %v1709 = vpop.permute.xlu0 %1708
        %1710 = vrot.lane.b32.xlu0 %v434, 95
        %v1711 = vpop.permute.xlu0 %1710
        %1712 = vrot.lane.b32.xlu0 %v435, 95
        %v1713 = vpop.permute.xlu0 %1712
        %1714 = vrot.lane.b32.xlu0 %v436, 95
        %v1715 = vpop.permute.xlu0 %1714
        %1716 = vrot.lane.b32.xlu0 %v437, 95
        %v1717 = vpop.permute.xlu0 %1716
        %vm1718 = vcmask 777216
        %v1719 = vsel %vm1718, %v1709, %v1711
        %v1720 = vsel %vm1718, %v1711, %v1713
        %v1721 = vsel %vm1718, %v1713, %v1715
        %v1722 = vsel %vm1718, %v1715, %v1717
        %v1724 = vsel %vm453, %v1707, 0
        %v1727 = vsel %vm457, %v1719, 0
        %v1730 = vsel %vm457, %v1720, 0
        %v1733 = vsel %vm457, %v1721, 0
        %v1736 = vsel %vm457, %v1722, 0
        %v1739 = vsel %vm457, %v1717, 0
        %1741 = vmatprep.subr.bf16.mxu0 0
        %1742 = vmatpush1.bf16.msra.mxu0 0
        %1743 = vmatprep.subr.bf16.mxu0 0
        %1744 = vmatpush1.bf16.msra.mxu0 0
        %1745 = vmatprep.subr.bf16.mxu0 0
        %1746 = vmatpush1.bf16.msra.mxu0 0
        %1747 = vmatprep.subr.bf16.mxu0 0
        %1748 = vmatpush1.bf16.msra.mxu0 0
        %1749 = vmatprep.subr.bf16.mxu0 0
        %1750 = vmatpush1.bf16.msra.mxu0 0
        %1751 = vmatprep.subr.bf16.mxu0 0
        %1752 = vmatpush1.bf16.msra.mxu0 0
        %1753 = vmatprep.subr.bf16.mxu0 0
        %1754 = vmatpush1.bf16.msra.mxu0 0
        %1755 = vmatprep.subr.bf16.mxu0 %v1730
        %1756 = vmatpush1.bf16.msra.mxu0 %v1727
        %1757 = vmatprep.subr.bf16.mxu0 0
        %1758 = vmatpush2.bf16.msra.mxu0 0
        %1759 = vmatprep.subr.bf16.mxu0 0
        %1760 = vmatpush2.bf16.msra.mxu0 0
        %1761 = vmatprep.subr.bf16.mxu0 0
        %1762 = vmatpush2.bf16.msra.mxu0 0
        %1763 = vmatprep.subr.bf16.mxu0 0
        %1764 = vmatpush2.bf16.msra.mxu0 0
        %1765 = vmatprep.subr.bf16.mxu0 0
        %1766 = vmatpush2.bf16.msra.mxu0 0
        %1767 = vmatprep.subr.bf16.mxu0 0
        %1768 = vmatpush2.bf16.msra.mxu0 0
        %1769 = vmatprep.subr.bf16.mxu0 0
        %1770 = vmatpush2.bf16.msra.mxu0 0
        %1771 = vmatprep.subr.bf16.mxu0 0
        %1772 = vmatpush2.bf16.msra.mxu0 0
        %1773 = vmatprep.mubr.bf16.mxu0 0
        %1774 = vmatmul.mubr.bf16.gmra.mxu0 %v1724
        %v1775 = vpop.f32.mrf.mxu0
        %v1776 = vadd.f32 0.0, %v1775
        %v1777 = vpop.f32.mrf.mxu0
        %v1778 = vadd.f32 0.0, %v1777
        %v1779 = vpop.f32.mrf.mxu0
        %v1780 = vpop.f32.mrf.mxu0
        %1781 = vdwg.mxu0
        %1782 = vmatprep.subr.bf16.mxu0 0
        %1783 = vmatpush1.bf16.msra.mxu0 0
        %1784 = vmatprep.subr.bf16.mxu0 0
        %1785 = vmatpush1.bf16.msra.mxu0 0
        %1786 = vmatprep.subr.bf16.mxu0 0
        %1787 = vmatpush1.bf16.msra.mxu0 0
        %1788 = vmatprep.subr.bf16.mxu0 0
        %1789 = vmatpush1.bf16.msra.mxu0 0
        %1790 = vmatprep.subr.bf16.mxu0 0
        %1791 = vmatpush1.bf16.msra.mxu0 0
        %1792 = vmatprep.subr.bf16.mxu0 0
        %1793 = vmatpush1.bf16.msra.mxu0 0
        %1794 = vmatprep.subr.bf16.mxu0 0
        %1795 = vmatpush1.bf16.msra.mxu0 0
        %1796 = vmatprep.subr.bf16.mxu0 %v1736
        %1797 = vmatpush1.bf16.msra.mxu0 %v1733
        %1798 = vmatprep.subr.bf16.mxu0 0
        %1799 = vmatpush2.bf16.msra.mxu0 0
        %1800 = vmatprep.subr.bf16.mxu0 0
        %1801 = vmatpush2.bf16.msra.mxu0 0
        %1802 = vmatprep.subr.bf16.mxu0 0
        %1803 = vmatpush2.bf16.msra.mxu0 0
        %1804 = vmatprep.subr.bf16.mxu0 0
        %1805 = vmatpush2.bf16.msra.mxu0 0
        %1806 = vmatprep.subr.bf16.mxu0 0
        %1807 = vmatpush2.bf16.msra.mxu0 0
        %1808 = vmatprep.subr.bf16.mxu0 0
        %1809 = vmatpush2.bf16.msra.mxu0 0
        %1810 = vmatprep.subr.bf16.mxu0 0
        %1811 = vmatpush2.bf16.msra.mxu0 0
        %1812 = vmatprep.subr.bf16.mxu0 0
        %1813 = vmatpush2.bf16.msra.mxu0 0
        %1814 = vmatprep.mubr.bf16.mxu0 0
        %1815 = vmatmul.mubr.bf16.gmra.mxu0 %v1724
        %v1816 = vpop.f32.mrf.mxu0
        %v1817 = vadd.f32 0.0, %v1816
        %v1818 = vpop.f32.mrf.mxu0
        %v1819 = vadd.f32 0.0, %v1818
        %v1820 = vpop.f32.mrf.mxu0
        %v1821 = vpop.f32.mrf.mxu0
        %1822 = vdwg.mxu0
        %1823 = vmatprep.subr.bf16.mxu0 0
        %1824 = vmatpush1.bf16.msra.mxu0 0
        %1825 = vmatprep.subr.bf16.mxu0 0
        %1826 = vmatpush1.bf16.msra.mxu0 0
        %1827 = vmatprep.subr.bf16.mxu0 0
        %1828 = vmatpush1.bf16.msra.mxu0 0
        %1829 = vmatprep.subr.bf16.mxu0 0
        %1830 = vmatpush1.bf16.msra.mxu0 0
        %1831 = vmatprep.subr.bf16.mxu0 0
        %1832 = vmatpush1.bf16.msra.mxu0 0
        %1833 = vmatprep.subr.bf16.mxu0 0
        %1834 = vmatpush1.bf16.msra.mxu0 0
        %1835 = vmatprep.subr.bf16.mxu0 0
        %1836 = vmatpush1.bf16.msra.mxu0 0
        %1837 = vmatprep.subr.bf16.mxu0 0
        %1838 = vmatpush1.bf16.msra.mxu0 %v1739
        %1839 = vmatprep.subr.bf16.mxu0 0
        %1840 = vmatpush2.bf16.msra.mxu0 0
        %1841 = vmatprep.subr.bf16.mxu0 0
        %1842 = vmatpush2.bf16.msra.mxu0 0
        %1843 = vmatprep.subr.bf16.mxu0 0
        %1844 = vmatpush2.bf16.msra.mxu0 0
        %1845 = vmatprep.subr.bf16.mxu0 0
        %1846 = vmatpush2.bf16.msra.mxu0 0
        %1847 = vmatprep.subr.bf16.mxu0 0
        %1848 = vmatpush2.bf16.msra.mxu0 0
        %1849 = vmatprep.subr.bf16.mxu0 0
        %1850 = vmatpush2.bf16.msra.mxu0 0
        %1851 = vmatprep.subr.bf16.mxu0 0
        %1852 = vmatpush2.bf16.msra.mxu0 0
        %1853 = vmatprep.subr.bf16.mxu0 0
        %1854 = vmatpush2.bf16.msra.mxu0 0
        %1855 = vmatprep.mubr.bf16.mxu0 0
        %1856 = vmatmul.mubr.bf16.gmra.mxu0 %v1724
        %v1857 = vpop.f32.mrf.mxu0
        %v1858 = vadd.f32 0.0, %v1857
        %v1859 = vpop.f32.mrf.mxu0
        %v1860 = vpop.f32.mrf.mxu0
        %v1861 = vpop.f32.mrf.mxu0
        %1862 = vdwg.mxu0
        %v1863 = vadd.f32 %v1701, %v1776
        %v1864 = vadd.f32 %v1702, %v1778
        %v1865 = vadd.f32 %v1703, %v1817
        %v1866 = vadd.f32 %v1704, %v1819
        %v1867 = vadd.f32 %v1705, %v1858
        %1868 = vrot.lane.b32.xlu0 %v761, 34
        %v1869 = vpop.permute.xlu0 %1868
        %1870 = vrot.lane.b32.xlu0 %v762, 34
        %v1871 = vpop.permute.xlu0 %1870
        %1872 = vrot.lane.b32.xlu0 %v763, 34
        %v1873 = vpop.permute.xlu0 %1872
        %v1874 = vrot.slane %v1869, 4
        %v1875 = vrot.slane %v1871, 4
        %vm1876 = vcmask 277504
        %v1877 = vsel %vm1876, %v1874, %v1869
        %v1878 = vsel %vm774, %v1874, %v1875
        %v1879 = vsel %vm1876, %v1878, %v1871
        %v1880 = vsel %vm1876, %v1875, %v1873
        %vm1881 = vcmp.ne.s16.totalorder %v1877, 0
        %vm1882 = vcmp.ne.s16.totalorder %v1879, 0
        %vm1883 = vcmp.ne.s16.totalorder %v1880, 0
        %v1884 = vsel %vm1881, %v403, 0
        %v1885 = vsel %vm1882, %v404, 0
        %v1886 = vsel %vm1883, %v405, 0
        %s1887 = scalar_lea.vmem [#allocation6], 32
        %v1888 = vld [vmem:[%s1887] sm:$0xf]
        %v1892 = vunpack.c.l.b16 %v1884
        %v1893 = vunpack.c.h.b16 %v1884
        %v1894 = vunpack.c.l.b16 %v1885
        %v1895 = vunpack.c.h.b16 %v1885
        %v1896 = vunpack.c.l.b16 %v1886
        %v1897 = vpack.c.b16 %v1892, %v1892
        %v1898 = vpack.c.b16 %v1893, %v1893
        %v1899 = vpack.c.b16 %v1894, %v1894
        %v1900 = vpack.c.b16 %v1895, %v1895
        %v1901 = vpack.c.b16 %v1896, %v1896
        %1902 = vrot.lane.b32.xlu0 %v1897, 94
        %v1903 = vpop.permute.xlu0 %1902
        %1904 = vrot.lane.b32.xlu0 %v1898, 94
        %v1905 = vpop.permute.xlu0 %1904
        %1906 = vrot.lane.b32.xlu0 %v1899, 94
        %v1907 = vpop.permute.xlu0 %1906
        %1908 = vrot.lane.b32.xlu0 %v1900, 94
        %v1909 = vpop.permute.xlu0 %1908
        %1910 = vrot.lane.b32.xlu0 %v1901, 94
        %v1911 = vpop.permute.xlu0 %1910
        %vm1912 = vcmask 769024
        %v1913 = vsel %vm1912, %v1903, %v1905
        %v1914 = vsel %vm1912, %v1905, %v1907
        %v1915 = vsel %vm1912, %v1907, %v1909
        %v1916 = vsel %vm1912, %v1909, %v1911
        %v1918 = vsel %vm453, %v1888, 0
        %v1921 = vsel %vm457, %v1913, 0
        %v1924 = vsel %vm457, %v1914, 0
        %v1927 = vsel %vm457, %v1915, 0
        %v1930 = vsel %vm457, %v1916, 0
        %v1933 = vsel %vm457, %v1911, 0
        %1935 = vmatprep.subr.bf16.mxu0 0
        %1936 = vmatpush1.bf16.msra.mxu0 0
        %1937 = vmatprep.subr.bf16.mxu0 0
        %1938 = vmatpush1.bf16.msra.mxu0 0
        %1939 = vmatprep.subr.bf16.mxu0 0
        %1940 = vmatpush1.bf16.msra.mxu0 0
        %1941 = vmatprep.subr.bf16.mxu0 0
        %1942 = vmatpush1.bf16.msra.mxu0 0
        %1943 = vmatprep.subr.bf16.mxu0 0
        %1944 = vmatpush1.bf16.msra.mxu0 0
        %1945 = vmatprep.subr.bf16.mxu0 0
        %1946 = vmatpush1.bf16.msra.mxu0 0
        %1947 = vmatprep.subr.bf16.mxu0 0
        %1948 = vmatpush1.bf16.msra.mxu0 0
        %1949 = vmatprep.subr.bf16.mxu0 %v1924
        %1950 = vmatpush1.bf16.msra.mxu0 %v1921
        %1951 = vmatprep.subr.bf16.mxu0 0
        %1952 = vmatpush2.bf16.msra.mxu0 0
        %1953 = vmatprep.subr.bf16.mxu0 0
        %1954 = vmatpush2.bf16.msra.mxu0 0
        %1955 = vmatprep.subr.bf16.mxu0 0
        %1956 = vmatpush2.bf16.msra.mxu0 0
        %1957 = vmatprep.subr.bf16.mxu0 0
        %1958 = vmatpush2.bf16.msra.mxu0 0
        %1959 = vmatprep.subr.bf16.mxu0 0
        %1960 = vmatpush2.bf16.msra.mxu0 0
        %1961 = vmatprep.subr.bf16.mxu0 0
        %1962 = vmatpush2.bf16.msra.mxu0 0
        %1963 = vmatprep.subr.bf16.mxu0 0
        %1964 = vmatpush2.bf16.msra.mxu0 0
        %1965 = vmatprep.subr.bf16.mxu0 0
        %1966 = vmatpush2.bf16.msra.mxu0 0
        %1967 = vmatprep.mubr.bf16.mxu0 0
        %1968 = vmatmul.mubr.bf16.gmra.mxu0 %v1918
        %v1969 = vpop.f32.mrf.mxu0
        %v1970 = vadd.f32 0.0, %v1969
        %v1971 = vpop.f32.mrf.mxu0
        %v1972 = vadd.f32 0.0, %v1971
        %v1973 = vpop.f32.mrf.mxu0
        %v1974 = vpop.f32.mrf.mxu0
        %1975 = vdwg.mxu0
        %1976 = vmatprep.subr.bf16.mxu0 0
        %1977 = vmatpush1.bf16.msra.mxu0 0
        %1978 = vmatprep.subr.bf16.mxu0 0
        %1979 = vmatpush1.bf16.msra.mxu0 0
        %1980 = vmatprep.subr.bf16.mxu0 0
        %1981 = vmatpush1.bf16.msra.mxu0 0
        %1982 = vmatprep.subr.bf16.mxu0 0
        %1983 = vmatpush1.bf16.msra.mxu0 0
        %1984 = vmatprep.subr.bf16.mxu0 0
        %1985 = vmatpush1.bf16.msra.mxu0 0
        %1986 = vmatprep.subr.bf16.mxu0 0
        %1987 = vmatpush1.bf16.msra.mxu0 0
        %1988 = vmatprep.subr.bf16.mxu0 0
        %1989 = vmatpush1.bf16.msra.mxu0 0
        %1990 = vmatprep.subr.bf16.mxu0 %v1930
        %1991 = vmatpush1.bf16.msra.mxu0 %v1927
        %1992 = vmatprep.subr.bf16.mxu0 0
        %1993 = vmatpush2.bf16.msra.mxu0 0
        %1994 = vmatprep.subr.bf16.mxu0 0
        %1995 = vmatpush2.bf16.msra.mxu0 0
        %1996 = vmatprep.subr.bf16.mxu0 0
        %1997 = vmatpush2.bf16.msra.mxu0 0
        %1998 = vmatprep.subr.bf16.mxu0 0
        %1999 = vmatpush2.bf16.msra.mxu0 0
        %2000 = vmatprep.subr.bf16.mxu0 0
        %2001 = vmatpush2.bf16.msra.mxu0 0
        %2002 = vmatprep.subr.bf16.mxu0 0
        %2003 = vmatpush2.bf16.msra.mxu0 0
        %2004 = vmatprep.subr.bf16.mxu0 0
        %2005 = vmatpush2.bf16.msra.mxu0 0
        %2006 = vmatprep.subr.bf16.mxu0 0
        %2007 = vmatpush2.bf16.msra.mxu0 0
        %2008 = vmatprep.mubr.bf16.mxu0 0
        %2009 = vmatmul.mubr.bf16.gmra.mxu0 %v1918
        %v2010 = vpop.f32.mrf.mxu0
        %v2011 = vadd.f32 0.0, %v2010
        %v2012 = vpop.f32.mrf.mxu0
        %v2013 = vadd.f32 0.0, %v2012
        %v2014 = vpop.f32.mrf.mxu0
        %v2015 = vpop.f32.mrf.mxu0
        %2016 = vdwg.mxu0
        %2017 = vmatprep.subr.bf16.mxu0 0
        %2018 = vmatpush1.bf16.msra.mxu0 0
        %2019 = vmatprep.subr.bf16.mxu0 0
        %2020 = vmatpush1.bf16.msra.mxu0 0
        %2021 = vmatprep.subr.bf16.mxu0 0
        %2022 = vmatpush1.bf16.msra.mxu0 0
        %2023 = vmatprep.subr.bf16.mxu0 0
        %2024 = vmatpush1.bf16.msra.mxu0 0
        %2025 = vmatprep.subr.bf16.mxu0 0
        %2026 = vmatpush1.bf16.msra.mxu0 0
        %2027 = vmatprep.subr.bf16.mxu0 0
        %2028 = vmatpush1.bf16.msra.mxu0 0
        %2029 = vmatprep.subr.bf16.mxu0 0
        %2030 = vmatpush1.bf16.msra.mxu0 0
        %2031 = vmatprep.subr.bf16.mxu0 0
        %2032 = vmatpush1.bf16.msra.mxu0 %v1933
        %2033 = vmatprep.subr.bf16.mxu0 0
        %2034 = vmatpush2.bf16.msra.mxu0 0
        %2035 = vmatprep.subr.bf16.mxu0 0
        %2036 = vmatpush2.bf16.msra.mxu0 0
        %2037 = vmatprep.subr.bf16.mxu0 0
        %2038 = vmatpush2.bf16.msra.mxu0 0
        %2039 = vmatprep.subr.bf16.mxu0 0
        %2040 = vmatpush2.bf16.msra.mxu0 0
        %2041 = vmatprep.subr.bf16.mxu0 0
        %2042 = vmatpush2.bf16.msra.mxu0 0
        %2043 = vmatprep.subr.bf16.mxu0 0
        %2044 = vmatpush2.bf16.msra.mxu0 0
        %2045 = vmatprep.subr.bf16.mxu0 0
        %2046 = vmatpush2.bf16.msra.mxu0 0
        %2047 = vmatprep.subr.bf16.mxu0 0
        %2048 = vmatpush2.bf16.msra.mxu0 0
        %2049 = vmatprep.mubr.bf16.mxu0 0
        %2050 = vmatmul.mubr.bf16.gmra.mxu0 %v1918
        %v2051 = vpop.f32.mrf.mxu0
        %v2052 = vadd.f32 0.0, %v2051
        %v2053 = vpop.f32.mrf.mxu0
        %v2054 = vpop.f32.mrf.mxu0
        %v2055 = vpop.f32.mrf.mxu0
        %2056 = vdwg.mxu0
        %v2057 = vadd.f32 %v1863, %v1970
        %v2058 = vadd.f32 %v1864, %v1972
        %v2059 = vadd.f32 %v1865, %v2011
        %v2060 = vadd.f32 %v1866, %v2013
        %v2061 = vadd.f32 %v1867, %v2052
        %v2062 = vld [vmem:[%s2] sm:$0xff]
        %2064 = vset.pattern.permute.xlu0 0
        %2065 = vperm.xlu0 %2064, %v2062
        %v2066 = vpop.permute.xlu0 %2065
        %v2068 = vadd.f32 %v2057, %v2066
        %v2069 = vadd.f32 %v2058, %v2066
        %v2070 = vadd.f32 %v2059, %v2066
        %v2071 = vadd.f32 %v2060, %v2066
        %v2072 = vadd.f32 %v2061, %v2066
        %v2073 = vmax.f32 %v2068, 0.0
        %v2074 = vmax.f32 %v2069, 0.0
        %v2075 = vmax.f32 %v2070, 0.0
        %v2076 = vmax.f32 %v2071, 0.0
        %v2077 = vmax.f32 %v2072, 0.0
        %v2078 = vpack.c.bf16 %v2073, %v2073
        %v2079 = vpack.c.bf16 %v2074, %v2074
        %v2082 = vunpack.c.l.b16 %v2078
        %v2083 = vunpack.c.l.b16 %v2079
        %v2084 = vpack.c.b16 %v2083, %v2082
        %2085 = vrot.lane.b32.xlu0 %v2084, 17
        %v2086 = vpop.permute.xlu0 %2085
        %v2087 = vrot.slane %v2086, 4
        %v2088 = vsel %vm296, %v2087, %v2086
        %2091 = vst.msk [vmem:[#allocation2] sm:$0xff] %vm302, %v2088
        %2092 = vst.msk [vmem:[#allocation2 + $0x8] sm:$0xf] %vm278, %v2087
        %v2093 = vpack.c.bf16 %v2075, %v2075
        %v2094 = vpack.c.bf16 %v2076, %v2076
        %v2095 = vpack.c.bf16 %v2077, %v2077
        %v2099 = vunpack.c.l.b16 %v2093
        %v2100 = vunpack.c.l.b16 %v2094
        %v2101 = vunpack.c.l.b16 %v2095
        %v2102 = vpack.c.b16 %v2100, %v2099
        %v2103 = vpack.c.b16 %v2101, %v2101
        %2104 = vrot.lane.b32.xlu0 %v2102, 17
        %v2105 = vpop.permute.xlu0 %2104
        %2106 = vrot.lane.b32.xlu0 %v2103, 17
        %v2107 = vpop.permute.xlu0 %2106
        %v2108 = vrot.slane %v2105, 4
        %v2109 = vsel %vm296, %v2108, %v2105
        %v2110 = vsel %vm296, %v2108, %v2107
        %2113 = vst.msk [vmem:[#allocation2 + $0x8] sm:$0xff] %vm323, %v2109
        %2114 = vst.msk [vmem:[#allocation2 + $0x10] sm:$0xf] %vm325, %v2110
        %v2115 = vld [vmem:[#allocation2] sm:$0xff]
        %v2116 = vld [vmem:[#allocation2 + $0x8] sm:$0xff]
        %v2117 = vld [vmem:[#allocation2 + $0x10] sm:$0xf]
        %v2118 = vsel %vm416, %v2115, 0
        %v2119 = vsel %vm417, %v2116, 0
        %v2120 = vsel %vm418, %v2117, 0
        %v2121 = vld [vmem:[#allocation8] sm:$0xf]
        %s2122 = scalar_lea.vmem [#allocation8], 4
        %v2123 = vld [vmem:[%s2122] sm:$0xf]
        %v2127 = vunpack.c.l.b16 %v2115
        %v2128 = vunpack.c.h.b16 %v2115
        %v2129 = vunpack.c.l.b16 %v2116
        %v2130 = vunpack.c.h.b16 %v2116
        %v2131 = vunpack.c.l.b16 %v2117
        %v2132 = vpack.c.b16 %v2127, %v2127
        %v2133 = vpack.c.b16 %v2128, %v2128
        %v2134 = vpack.c.b16 %v2129, %v2129
        %v2135 = vpack.c.b16 %v2130, %v2130
        %v2136 = vpack.c.b16 %v2131, %v2131
        %2137 = vrot.lane.b32.xlu0 %v2132, 127
        %v2138 = vpop.permute.xlu0 %2137
        %2139 = vrot.lane.b32.xlu0 %v2133, 127
        %v2140 = vpop.permute.xlu0 %2139
        %2141 = vrot.lane.b32.xlu0 %v2134, 127
        %v2142 = vpop.permute.xlu0 %2141
        %2143 = vrot.lane.b32.xlu0 %v2135, 127
        %v2144 = vpop.permute.xlu0 %2143
        %2145 = vrot.lane.b32.xlu0 %v2136, 127
        %v2146 = vpop.permute.xlu0 %2145
        %v2147 = vsel %vm448, %v2138, %v2140
        %v2148 = vsel %vm448, %v2140, %v2142
        %v2149 = vsel %vm448, %v2142, %v2144
        %v2150 = vsel %vm448, %v2144, %v2146
        %v2152 = vsel %vm453, %v2123, 0
        %v2155 = vsel %vm457, %v2147, 0
        %v2158 = vsel %vm457, %v2148, 0
        %v2161 = vsel %vm457, %v2149, 0
        %v2164 = vsel %vm457, %v2150, 0
        %v2167 = vsel %vm457, %v2146, 0
        %2169 = vmatprep.subr.bf16.mxu0 0
        %2170 = vmatpush1.bf16.msra.mxu0 0
        %2171 = vmatprep.subr.bf16.mxu0 0
        %2172 = vmatpush1.bf16.msra.mxu0 0
        %2173 = vmatprep.subr.bf16.mxu0 0
        %2174 = vmatpush1.bf16.msra.mxu0 0
        %2175 = vmatprep.subr.bf16.mxu0 0
        %2176 = vmatpush1.bf16.msra.mxu0 0
        %2177 = vmatprep.subr.bf16.mxu0 0
        %2178 = vmatpush1.bf16.msra.mxu0 0
        %2179 = vmatprep.subr.bf16.mxu0 0
        %2180 = vmatpush1.bf16.msra.mxu0 0
        %2181 = vmatprep.subr.bf16.mxu0 0
        %2182 = vmatpush1.bf16.msra.mxu0 0
        %2183 = vmatprep.subr.bf16.mxu0 %v2158
        %2184 = vmatpush1.bf16.msra.mxu0 %v2155
        %2185 = vmatprep.subr.bf16.mxu0 0
        %2186 = vmatpush2.bf16.msra.mxu0 0
        %2187 = vmatprep.subr.bf16.mxu0 0
        %2188 = vmatpush2.bf16.msra.mxu0 0
        %2189 = vmatprep.subr.bf16.mxu0 0
        %2190 = vmatpush2.bf16.msra.mxu0 0
        %2191 = vmatprep.subr.bf16.mxu0 0
        %2192 = vmatpush2.bf16.msra.mxu0 0
        %2193 = vmatprep.subr.bf16.mxu0 0
        %2194 = vmatpush2.bf16.msra.mxu0 0
        %2195 = vmatprep.subr.bf16.mxu0 0
        %2196 = vmatpush2.bf16.msra.mxu0 0
        %2197 = vmatprep.subr.bf16.mxu0 0
        %2198 = vmatpush2.bf16.msra.mxu0 0
        %2199 = vmatprep.subr.bf16.mxu0 0
        %2200 = vmatpush2.bf16.msra.mxu0 0
        %2201 = vmatprep.mubr.bf16.mxu0 0
        %2202 = vmatmul.mubr.bf16.gmra.mxu0 %v2152
        %v2203 = vpop.f32.mrf.mxu0
        %v2204 = vadd.f32 0.0, %v2203
        %v2205 = vpop.f32.mrf.mxu0
        %v2206 = vadd.f32 0.0, %v2205
        %v2207 = vpop.f32.mrf.mxu0
        %v2208 = vpop.f32.mrf.mxu0
        %2209 = vdwg.mxu0
        %2210 = vmatprep.subr.bf16.mxu0 0
        %2211 = vmatpush1.bf16.msra.mxu0 0
        %2212 = vmatprep.subr.bf16.mxu0 0
        %2213 = vmatpush1.bf16.msra.mxu0 0
        %2214 = vmatprep.subr.bf16.mxu0 0
        %2215 = vmatpush1.bf16.msra.mxu0 0
        %2216 = vmatprep.subr.bf16.mxu0 0
        %2217 = vmatpush1.bf16.msra.mxu0 0
        %2218 = vmatprep.subr.bf16.mxu0 0
        %2219 = vmatpush1.bf16.msra.mxu0 0
        %2220 = vmatprep.subr.bf16.mxu0 0
        %2221 = vmatpush1.bf16.msra.mxu0 0
        %2222 = vmatprep.subr.bf16.mxu0 0
        %2223 = vmatpush1.bf16.msra.mxu0 0
        %2224 = vmatprep.subr.bf16.mxu0 %v2164
        %2225 = vmatpush1.bf16.msra.mxu0 %v2161
        %2226 = vmatprep.subr.bf16.mxu0 0
        %2227 = vmatpush2.bf16.msra.mxu0 0
        %2228 = vmatprep.subr.bf16.mxu0 0
        %2229 = vmatpush2.bf16.msra.mxu0 0
        %2230 = vmatprep.subr.bf16.mxu0 0
        %2231 = vmatpush2.bf16.msra.mxu0 0
        %2232 = vmatprep.subr.bf16.mxu0 0
        %2233 = vmatpush2.bf16.msra.mxu0 0
        %2234 = vmatprep.subr.bf16.mxu0 0
        %2235 = vmatpush2.bf16.msra.mxu0 0
        %2236 = vmatprep.subr.bf16.mxu0 0
        %2237 = vmatpush2.bf16.msra.mxu0 0
        %2238 = vmatprep.subr.bf16.mxu0 0
        %2239 = vmatpush2.bf16.msra.mxu0 0
        %2240 = vmatprep.subr.bf16.mxu0 0
        %2241 = vmatpush2.bf16.msra.mxu0 0
        %2242 = vmatprep.mubr.bf16.mxu0 0
        %2243 = vmatmul.mubr.bf16.gmra.mxu0 %v2152
        %v2244 = vpop.f32.mrf.mxu0
        %v2245 = vadd.f32 0.0, %v2244
        %v2246 = vpop.f32.mrf.mxu0
        %v2247 = vadd.f32 0.0, %v2246
        %v2248 = vpop.f32.mrf.mxu0
        %v2249 = vpop.f32.mrf.mxu0
        %2250 = vdwg.mxu0
        %2251 = vmatprep.subr.bf16.mxu0 0
        %2252 = vmatpush1.bf16.msra.mxu0 0
        %2253 = vmatprep.subr.bf16.mxu0 0
        %2254 = vmatpush1.bf16.msra.mxu0 0
        %2255 = vmatprep.subr.bf16.mxu0 0
        %2256 = vmatpush1.bf16.msra.mxu0 0
        %2257 = vmatprep.subr.bf16.mxu0 0
        %2258 = vmatpush1.bf16.msra.mxu0 0
        %2259 = vmatprep.subr.bf16.mxu0 0
        %2260 = vmatpush1.bf16.msra.mxu0 0
        %2261 = vmatprep.subr.bf16.mxu0 0
        %2262 = vmatpush1.bf16.msra.mxu0 0
        %2263 = vmatprep.subr.bf16.mxu0 0
        %2264 = vmatpush1.bf16.msra.mxu0 0
        %2265 = vmatprep.subr.bf16.mxu0 0
        %2266 = vmatpush1.bf16.msra.mxu0 %v2167
        %2267 = vmatprep.subr.bf16.mxu0 0
        %2268 = vmatpush2.bf16.msra.mxu0 0
        %2269 = vmatprep.subr.bf16.mxu0 0
        %2270 = vmatpush2.bf16.msra.mxu0 0
        %2271 = vmatprep.subr.bf16.mxu0 0
        %2272 = vmatpush2.bf16.msra.mxu0 0
        %2273 = vmatprep.subr.bf16.mxu0 0
        %2274 = vmatpush2.bf16.msra.mxu0 0
        %2275 = vmatprep.subr.bf16.mxu0 0
        %2276 = vmatpush2.bf16.msra.mxu0 0
        %2277 = vmatprep.subr.bf16.mxu0 0
        %2278 = vmatpush2.bf16.msra.mxu0 0
        %2279 = vmatprep.subr.bf16.mxu0 0
        %2280 = vmatpush2.bf16.msra.mxu0 0
        %2281 = vmatprep.subr.bf16.mxu0 0
        %2282 = vmatpush2.bf16.msra.mxu0 0
        %2283 = vmatprep.mubr.bf16.mxu0 0
        %2284 = vmatmul.mubr.bf16.gmra.mxu0 %v2152
        %v2285 = vpop.f32.mrf.mxu0
        %v2286 = vadd.f32 0.0, %v2285
        %v2287 = vpop.f32.mrf.mxu0
        %v2288 = vpop.f32.mrf.mxu0
        %v2289 = vpop.f32.mrf.mxu0
        %2290 = vdwg.mxu0
        %v2294 = vunpack.c.l.b16 %v2118
        %v2295 = vunpack.c.h.b16 %v2118
        %v2296 = vunpack.c.l.b16 %v2119
        %v2297 = vunpack.c.h.b16 %v2119
        %v2298 = vunpack.c.l.b16 %v2120
        %v2299 = vpack.c.b16 %v2294, %v2294
        %v2300 = vpack.c.b16 %v2295, %v2295
        %v2301 = vpack.c.b16 %v2296, %v2296
        %v2302 = vpack.c.b16 %v2297, %v2297
        %v2303 = vpack.c.b16 %v2298, %v2298
        %v2305 = vsel %vm453, %v2121, 0
        %v2308 = vsel %vm457, %v2299, 0
        %v2311 = vsel %vm457, %v2300, 0
        %v2314 = vsel %vm457, %v2301, 0
        %v2317 = vsel %vm457, %v2302, 0
        %v2320 = vsel %vm457, %v2303, 0
        %2322 = vmatprep.subr.bf16.mxu0 0
        %2323 = vmatpush1.bf16.msra.mxu0 0
        %2324 = vmatprep.subr.bf16.mxu0 0
        %2325 = vmatpush1.bf16.msra.mxu0 0
        %2326 = vmatprep.subr.bf16.mxu0 0
        %2327 = vmatpush1.bf16.msra.mxu0 0
        %2328 = vmatprep.subr.bf16.mxu0 0
        %2329 = vmatpush1.bf16.msra.mxu0 0
        %2330 = vmatprep.subr.bf16.mxu0 0
        %2331 = vmatpush1.bf16.msra.mxu0 0
        %2332 = vmatprep.subr.bf16.mxu0 0
        %2333 = vmatpush1.bf16.msra.mxu0 0
        %2334 = vmatprep.subr.bf16.mxu0 0
        %2335 = vmatpush1.bf16.msra.mxu0 0
        %2336 = vmatprep.subr.bf16.mxu0 %v2311
        %2337 = vmatpush1.bf16.msra.mxu0 %v2308
        %2338 = vmatprep.subr.bf16.mxu0 0
        %2339 = vmatpush2.bf16.msra.mxu0 0
        %2340 = vmatprep.subr.bf16.mxu0 0
        %2341 = vmatpush2.bf16.msra.mxu0 0
        %2342 = vmatprep.subr.bf16.mxu0 0
        %2343 = vmatpush2.bf16.msra.mxu0 0
        %2344 = vmatprep.subr.bf16.mxu0 0
        %2345 = vmatpush2.bf16.msra.mxu0 0
        %2346 = vmatprep.subr.bf16.mxu0 0
        %2347 = vmatpush2.bf16.msra.mxu0 0
        %2348 = vmatprep.subr.bf16.mxu0 0
        %2349 = vmatpush2.bf16.msra.mxu0 0
        %2350 = vmatprep.subr.bf16.mxu0 0
        %2351 = vmatpush2.bf16.msra.mxu0 0
        %2352 = vmatprep.subr.bf16.mxu0 0
        %2353 = vmatpush2.bf16.msra.mxu0 0
        %2354 = vmatprep.mubr.bf16.mxu0 0
        %2355 = vmatmul.mubr.bf16.gmra.mxu0 %v2305
        %v2356 = vpop.f32.mrf.mxu0
        %v2357 = vadd.f32 %v2204, %v2356
        %v2358 = vpop.f32.mrf.mxu0
        %v2359 = vadd.f32 %v2206, %v2358
        %v2360 = vpop.f32.mrf.mxu0
        %v2361 = vpop.f32.mrf.mxu0
        %2362 = vdwg.mxu0
        %2363 = vmatprep.subr.bf16.mxu0 0
        %2364 = vmatpush1.bf16.msra.mxu0 0
        %2365 = vmatprep.subr.bf16.mxu0 0
        %2366 = vmatpush1.bf16.msra.mxu0 0
        %2367 = vmatprep.subr.bf16.mxu0 0
        %2368 = vmatpush1.bf16.msra.mxu0 0
        %2369 = vmatprep.subr.bf16.mxu0 0
        %2370 = vmatpush1.bf16.msra.mxu0 0
        %2371 = vmatprep.subr.bf16.mxu0 0
        %2372 = vmatpush1.bf16.msra.mxu0 0
        %2373 = vmatprep.subr.bf16.mxu0 0
        %2374 = vmatpush1.bf16.msra.mxu0 0
        %2375 = vmatprep.subr.bf16.mxu0 0
        %2376 = vmatpush1.bf16.msra.mxu0 0
        %2377 = vmatprep.subr.bf16.mxu0 %v2317
        %2378 = vmatpush1.bf16.msra.mxu0 %v2314
        %2379 = vmatprep.subr.bf16.mxu0 0
        %2380 = vmatpush2.bf16.msra.mxu0 0
        %2381 = vmatprep.subr.bf16.mxu0 0
        %2382 = vmatpush2.bf16.msra.mxu0 0
        %2383 = vmatprep.subr.bf16.mxu0 0
        %2384 = vmatpush2.bf16.msra.mxu0 0
        %2385 = vmatprep.subr.bf16.mxu0 0
        %2386 = vmatpush2.bf16.msra.mxu0 0
        %2387 = vmatprep.subr.bf16.mxu0 0
        %2388 = vmatpush2.bf16.msra.mxu0 0
        %2389 = vmatprep.subr.bf16.mxu0 0
        %2390 = vmatpush2.bf16.msra.mxu0 0
        %2391 = vmatprep.subr.bf16.mxu0 0
        %2392 = vmatpush2.bf16.msra.mxu0 0
        %2393 = vmatprep.subr.bf16.mxu0 0
        %2394 = vmatpush2.bf16.msra.mxu0 0
        %2395 = vmatprep.mubr.bf16.mxu0 0
        %2396 = vmatmul.mubr.bf16.gmra.mxu0 %v2305
        %v2397 = vpop.f32.mrf.mxu0
        %v2398 = vadd.f32 %v2245, %v2397
        %v2399 = vpop.f32.mrf.mxu0
        %v2400 = vadd.f32 %v2247, %v2399
        %v2401 = vpop.f32.mrf.mxu0
        %v2402 = vpop.f32.mrf.mxu0
        %2403 = vdwg.mxu0
        %2404 = vmatprep.subr.bf16.mxu0 0
        %2405 = vmatpush1.bf16.msra.mxu0 0
        %2406 = vmatprep.subr.bf16.mxu0 0
        %2407 = vmatpush1.bf16.msra.mxu0 0
        %2408 = vmatprep.subr.bf16.mxu0 0
        %2409 = vmatpush1.bf16.msra.mxu0 0
        %2410 = vmatprep.subr.bf16.mxu0 0
        %2411 = vmatpush1.bf16.msra.mxu0 0
        %2412 = vmatprep.subr.bf16.mxu0 0
        %2413 = vmatpush1.bf16.msra.mxu0 0
        %2414 = vmatprep.subr.bf16.mxu0 0
        %2415 = vmatpush1.bf16.msra.mxu0 0
        %2416 = vmatprep.subr.bf16.mxu0 0
        %2417 = vmatpush1.bf16.msra.mxu0 0
        %2418 = vmatprep.subr.bf16.mxu0 0
        %2419 = vmatpush1.bf16.msra.mxu0 %v2320
        %2420 = vmatprep.subr.bf16.mxu0 0
        %2421 = vmatpush2.bf16.msra.mxu0 0
        %2422 = vmatprep.subr.bf16.mxu0 0
        %2423 = vmatpush2.bf16.msra.mxu0 0
        %2424 = vmatprep.subr.bf16.mxu0 0
        %2425 = vmatpush2.bf16.msra.mxu0 0
        %2426 = vmatprep.subr.bf16.mxu0 0
        %2427 = vmatpush2.bf16.msra.mxu0 0
        %2428 = vmatprep.subr.bf16.mxu0 0
        %2429 = vmatpush2.bf16.msra.mxu0 0
        %2430 = vmatprep.subr.bf16.mxu0 0
        %2431 = vmatpush2.bf16.msra.mxu0 0
        %2432 = vmatprep.subr.bf16.mxu0 0
        %2433 = vmatpush2.bf16.msra.mxu0 0
        %2434 = vmatprep.subr.bf16.mxu0 0
        %2435 = vmatpush2.bf16.msra.mxu0 0
        %2436 = vmatprep.mubr.bf16.mxu0 0
        %2437 = vmatmul.mubr.bf16.gmra.mxu0 %v2305
        %v2438 = vpop.f32.mrf.mxu0
        %v2439 = vadd.f32 %v2286, %v2438
        %v2440 = vpop.f32.mrf.mxu0
        %v2441 = vpop.f32.mrf.mxu0
        %v2442 = vpop.f32.mrf.mxu0
        %2443 = vdwg.mxu0
        %v2444 = vsel %vm778, %v2115, 0
        %v2445 = vsel %vm779, %v2116, 0
        %v2446 = vsel %vm780, %v2117, 0
        %s2447 = scalar_lea.vmem [#allocation8], 8
        %v2448 = vld [vmem:[%s2447] sm:$0xf]
        %v2452 = vunpack.c.l.b16 %v2444
        %v2453 = vunpack.c.h.b16 %v2444
        %v2454 = vunpack.c.l.b16 %v2445
        %v2455 = vunpack.c.h.b16 %v2445
        %v2456 = vunpack.c.l.b16 %v2446
        %v2457 = vpack.c.b16 %v2452, %v2452
        %v2458 = vpack.c.b16 %v2453, %v2453
        %v2459 = vpack.c.b16 %v2454, %v2454
        %v2460 = vpack.c.b16 %v2455, %v2455
        %v2461 = vpack.c.b16 %v2456, %v2456
        %2462 = vrot.lane.b32.xlu0 %v2457, 126
        %v2463 = vpop.permute.xlu0 %2462
        %2464 = vrot.lane.b32.xlu0 %v2458, 126
        %v2465 = vpop.permute.xlu0 %2464
        %2466 = vrot.lane.b32.xlu0 %v2459, 126
        %v2467 = vpop.permute.xlu0 %2466
        %2468 = vrot.lane.b32.xlu0 %v2460, 126
        %v2469 = vpop.permute.xlu0 %2468
        %2470 = vrot.lane.b32.xlu0 %v2461, 126
        %v2471 = vpop.permute.xlu0 %2470
        %v2472 = vsel %vm809, %v2463, %v2465
        %v2473 = vsel %vm809, %v2465, %v2467
        %v2474 = vsel %vm809, %v2467, %v2469
        %v2475 = vsel %vm809, %v2469, %v2471
        %v2477 = vsel %vm453, %v2448, 0
        %v2480 = vsel %vm457, %v2472, 0
        %v2483 = vsel %vm457, %v2473, 0
        %v2486 = vsel %vm457, %v2474, 0
        %v2489 = vsel %vm457, %v2475, 0
        %v2492 = vsel %vm457, %v2471, 0
        %2494 = vmatprep.subr.bf16.mxu0 0
        %2495 = vmatpush1.bf16.msra.mxu0 0
        %2496 = vmatprep.subr.bf16.mxu0 0
        %2497 = vmatpush1.bf16.msra.mxu0 0
        %2498 = vmatprep.subr.bf16.mxu0 0
        %2499 = vmatpush1.bf16.msra.mxu0 0
        %2500 = vmatprep.subr.bf16.mxu0 0
        %2501 = vmatpush1.bf16.msra.mxu0 0
        %2502 = vmatprep.subr.bf16.mxu0 0
        %2503 = vmatpush1.bf16.msra.mxu0 0
        %2504 = vmatprep.subr.bf16.mxu0 0
        %2505 = vmatpush1.bf16.msra.mxu0 0
        %2506 = vmatprep.subr.bf16.mxu0 0
        %2507 = vmatpush1.bf16.msra.mxu0 0
        %2508 = vmatprep.subr.bf16.mxu0 %v2483
        %2509 = vmatpush1.bf16.msra.mxu0 %v2480
        %2510 = vmatprep.subr.bf16.mxu0 0
        %2511 = vmatpush2.bf16.msra.mxu0 0
        %2512 = vmatprep.subr.bf16.mxu0 0
        %2513 = vmatpush2.bf16.msra.mxu0 0
        %2514 = vmatprep.subr.bf16.mxu0 0
        %2515 = vmatpush2.bf16.msra.mxu0 0
        %2516 = vmatprep.subr.bf16.mxu0 0
        %2517 = vmatpush2.bf16.msra.mxu0 0
        %2518 = vmatprep.subr.bf16.mxu0 0
        %2519 = vmatpush2.bf16.msra.mxu0 0
        %2520 = vmatprep.subr.bf16.mxu0 0
        %2521 = vmatpush2.bf16.msra.mxu0 0
        %2522 = vmatprep.subr.bf16.mxu0 0
        %2523 = vmatpush2.bf16.msra.mxu0 0
        %2524 = vmatprep.subr.bf16.mxu0 0
        %2525 = vmatpush2.bf16.msra.mxu0 0
        %2526 = vmatprep.mubr.bf16.mxu0 0
        %2527 = vmatmul.mubr.bf16.gmra.mxu0 %v2477
        %v2528 = vpop.f32.mrf.mxu0
        %v2529 = vadd.f32 0.0, %v2528
        %v2530 = vpop.f32.mrf.mxu0
        %v2531 = vadd.f32 0.0, %v2530
        %v2532 = vpop.f32.mrf.mxu0
        %v2533 = vpop.f32.mrf.mxu0
        %2534 = vdwg.mxu0
        %2535 = vmatprep.subr.bf16.mxu0 0
        %2536 = vmatpush1.bf16.msra.mxu0 0
        %2537 = vmatprep.subr.bf16.mxu0 0
        %2538 = vmatpush1.bf16.msra.mxu0 0
        %2539 = vmatprep.subr.bf16.mxu0 0
        %2540 = vmatpush1.bf16.msra.mxu0 0
        %2541 = vmatprep.subr.bf16.mxu0 0
        %2542 = vmatpush1.bf16.msra.mxu0 0
        %2543 = vmatprep.subr.bf16.mxu0 0
        %2544 = vmatpush1.bf16.msra.mxu0 0
        %2545 = vmatprep.subr.bf16.mxu0 0
        %2546 = vmatpush1.bf16.msra.mxu0 0
        %2547 = vmatprep.subr.bf16.mxu0 0
        %2548 = vmatpush1.bf16.msra.mxu0 0
        %2549 = vmatprep.subr.bf16.mxu0 %v2489
        %2550 = vmatpush1.bf16.msra.mxu0 %v2486
        %2551 = vmatprep.subr.bf16.mxu0 0
        %2552 = vmatpush2.bf16.msra.mxu0 0
        %2553 = vmatprep.subr.bf16.mxu0 0
        %2554 = vmatpush2.bf16.msra.mxu0 0
        %2555 = vmatprep.subr.bf16.mxu0 0
        %2556 = vmatpush2.bf16.msra.mxu0 0
        %2557 = vmatprep.subr.bf16.mxu0 0
        %2558 = vmatpush2.bf16.msra.mxu0 0
        %2559 = vmatprep.subr.bf16.mxu0 0
        %2560 = vmatpush2.bf16.msra.mxu0 0
        %2561 = vmatprep.subr.bf16.mxu0 0
        %2562 = vmatpush2.bf16.msra.mxu0 0
        %2563 = vmatprep.subr.bf16.mxu0 0
        %2564 = vmatpush2.bf16.msra.mxu0 0
        %2565 = vmatprep.subr.bf16.mxu0 0
        %2566 = vmatpush2.bf16.msra.mxu0 0
        %2567 = vmatprep.mubr.bf16.mxu0 0
        %2568 = vmatmul.mubr.bf16.gmra.mxu0 %v2477
        %v2569 = vpop.f32.mrf.mxu0
        %v2570 = vadd.f32 0.0, %v2569
        %v2571 = vpop.f32.mrf.mxu0
        %v2572 = vadd.f32 0.0, %v2571
        %v2573 = vpop.f32.mrf.mxu0
        %v2574 = vpop.f32.mrf.mxu0
        %2575 = vdwg.mxu0
        %2576 = vmatprep.subr.bf16.mxu0 0
        %2577 = vmatpush1.bf16.msra.mxu0 0
        %2578 = vmatprep.subr.bf16.mxu0 0
        %2579 = vmatpush1.bf16.msra.mxu0 0
        %2580 = vmatprep.subr.bf16.mxu0 0
        %2581 = vmatpush1.bf16.msra.mxu0 0
        %2582 = vmatprep.subr.bf16.mxu0 0
        %2583 = vmatpush1.bf16.msra.mxu0 0
        %2584 = vmatprep.subr.bf16.mxu0 0
        %2585 = vmatpush1.bf16.msra.mxu0 0
        %2586 = vmatprep.subr.bf16.mxu0 0
        %2587 = vmatpush1.bf16.msra.mxu0 0
        %2588 = vmatprep.subr.bf16.mxu0 0
        %2589 = vmatpush1.bf16.msra.mxu0 0
        %2590 = vmatprep.subr.bf16.mxu0 0
        %2591 = vmatpush1.bf16.msra.mxu0 %v2492
        %2592 = vmatprep.subr.bf16.mxu0 0
        %2593 = vmatpush2.bf16.msra.mxu0 0
        %2594 = vmatprep.subr.bf16.mxu0 0
        %2595 = vmatpush2.bf16.msra.mxu0 0
        %2596 = vmatprep.subr.bf16.mxu0 0
        %2597 = vmatpush2.bf16.msra.mxu0 0
        %2598 = vmatprep.subr.bf16.mxu0 0
        %2599 = vmatpush2.bf16.msra.mxu0 0
        %2600 = vmatprep.subr.bf16.mxu0 0
        %2601 = vmatpush2.bf16.msra.mxu0 0
        %2602 = vmatprep.subr.bf16.mxu0 0
        %2603 = vmatpush2.bf16.msra.mxu0 0
        %2604 = vmatprep.subr.bf16.mxu0 0
        %2605 = vmatpush2.bf16.msra.mxu0 0
        %2606 = vmatprep.subr.bf16.mxu0 0
        %2607 = vmatpush2.bf16.msra.mxu0 0
        %2608 = vmatprep.mubr.bf16.mxu0 0
        %2609 = vmatmul.mubr.bf16.gmra.mxu0 %v2477
        %v2610 = vpop.f32.mrf.mxu0
        %v2611 = vadd.f32 0.0, %v2610
        %v2612 = vpop.f32.mrf.mxu0
        %v2613 = vpop.f32.mrf.mxu0
        %v2614 = vpop.f32.mrf.mxu0
        %2615 = vdwg.mxu0
        %v2616 = vadd.f32 %v2357, %v2529
        %v2617 = vadd.f32 %v2359, %v2531
        %v2618 = vadd.f32 %v2398, %v2570
        %v2619 = vadd.f32 %v2400, %v2572
        %v2620 = vadd.f32 %v2439, %v2611
        %v2621 = vsel %vm975, %v2115, 0
        %v2622 = vsel %vm976, %v2116, 0
        %v2623 = vsel %vm977, %v2117, 0
        %s2624 = scalar_lea.vmem [#allocation8], 12
        %v2625 = vld [vmem:[%s2624] sm:$0xf]
        %v2629 = vunpack.c.l.b16 %v2621
        %v2630 = vunpack.c.h.b16 %v2621
        %v2631 = vunpack.c.l.b16 %v2622
        %v2632 = vunpack.c.h.b16 %v2622
        %v2633 = vunpack.c.l.b16 %v2623
        %v2634 = vpack.c.b16 %v2629, %v2629
        %v2635 = vpack.c.b16 %v2630, %v2630
        %v2636 = vpack.c.b16 %v2631, %v2631
        %v2637 = vpack.c.b16 %v2632, %v2632
        %v2638 = vpack.c.b16 %v2633, %v2633
        %2639 = vrot.lane.b32.xlu0 %v2634, 112
        %v2640 = vpop.permute.xlu0 %2639
        %2641 = vrot.lane.b32.xlu0 %v2635, 112
        %v2642 = vpop.permute.xlu0 %2641
        %2643 = vrot.lane.b32.xlu0 %v2636, 112
        %v2644 = vpop.permute.xlu0 %2643
        %2645 = vrot.lane.b32.xlu0 %v2637, 112
        %v2646 = vpop.permute.xlu0 %2645
        %2647 = vrot.lane.b32.xlu0 %v2638, 112
        %v2648 = vpop.permute.xlu0 %2647
        %v2649 = vsel %vm1006, %v2640, %v2642
        %v2650 = vsel %vm1006, %v2642, %v2644
        %v2651 = vsel %vm1006, %v2644, %v2646
        %v2652 = vsel %vm1006, %v2646, %v2648
        %v2654 = vsel %vm453, %v2625, 0
        %v2657 = vsel %vm457, %v2649, 0
        %v2660 = vsel %vm457, %v2650, 0
        %v2663 = vsel %vm457, %v2651, 0
        %v2666 = vsel %vm457, %v2652, 0
        %v2669 = vsel %vm457, %v2648, 0
        %2671 = vmatprep.subr.bf16.mxu0 0
        %2672 = vmatpush1.bf16.msra.mxu0 0
        %2673 = vmatprep.subr.bf16.mxu0 0
        %2674 = vmatpush1.bf16.msra.mxu0 0
        %2675 = vmatprep.subr.bf16.mxu0 0
        %2676 = vmatpush1.bf16.msra.mxu0 0
        %2677 = vmatprep.subr.bf16.mxu0 0
        %2678 = vmatpush1.bf16.msra.mxu0 0
        %2679 = vmatprep.subr.bf16.mxu0 0
        %2680 = vmatpush1.bf16.msra.mxu0 0
        %2681 = vmatprep.subr.bf16.mxu0 0
        %2682 = vmatpush1.bf16.msra.mxu0 0
        %2683 = vmatprep.subr.bf16.mxu0 0
        %2684 = vmatpush1.bf16.msra.mxu0 0
        %2685 = vmatprep.subr.bf16.mxu0 %v2660
        %2686 = vmatpush1.bf16.msra.mxu0 %v2657
        %2687 = vmatprep.subr.bf16.mxu0 0
        %2688 = vmatpush2.bf16.msra.mxu0 0
        %2689 = vmatprep.subr.bf16.mxu0 0
        %2690 = vmatpush2.bf16.msra.mxu0 0
        %2691 = vmatprep.subr.bf16.mxu0 0
        %2692 = vmatpush2.bf16.msra.mxu0 0
        %2693 = vmatprep.subr.bf16.mxu0 0
        %2694 = vmatpush2.bf16.msra.mxu0 0
        %2695 = vmatprep.subr.bf16.mxu0 0
        %2696 = vmatpush2.bf16.msra.mxu0 0
        %2697 = vmatprep.subr.bf16.mxu0 0
        %2698 = vmatpush2.bf16.msra.mxu0 0
        %2699 = vmatprep.subr.bf16.mxu0 0
        %2700 = vmatpush2.bf16.msra.mxu0 0
        %2701 = vmatprep.subr.bf16.mxu0 0
        %2702 = vmatpush2.bf16.msra.mxu0 0
        %2703 = vmatprep.mubr.bf16.mxu0 0
        %2704 = vmatmul.mubr.bf16.gmra.mxu0 %v2654
        %v2705 = vpop.f32.mrf.mxu0
        %v2706 = vadd.f32 0.0, %v2705
        %v2707 = vpop.f32.mrf.mxu0
        %v2708 = vadd.f32 0.0, %v2707
        %v2709 = vpop.f32.mrf.mxu0
        %v2710 = vpop.f32.mrf.mxu0
        %2711 = vdwg.mxu0
        %2712 = vmatprep.subr.bf16.mxu0 0
        %2713 = vmatpush1.bf16.msra.mxu0 0
        %2714 = vmatprep.subr.bf16.mxu0 0
        %2715 = vmatpush1.bf16.msra.mxu0 0
        %2716 = vmatprep.subr.bf16.mxu0 0
        %2717 = vmatpush1.bf16.msra.mxu0 0
        %2718 = vmatprep.subr.bf16.mxu0 0
        %2719 = vmatpush1.bf16.msra.mxu0 0
        %2720 = vmatprep.subr.bf16.mxu0 0
        %2721 = vmatpush1.bf16.msra.mxu0 0
        %2722 = vmatprep.subr.bf16.mxu0 0
        %2723 = vmatpush1.bf16.msra.mxu0 0
        %2724 = vmatprep.subr.bf16.mxu0 0
        %2725 = vmatpush1.bf16.msra.mxu0 0
        %2726 = vmatprep.subr.bf16.mxu0 %v2666
        %2727 = vmatpush1.bf16.msra.mxu0 %v2663
        %2728 = vmatprep.subr.bf16.mxu0 0
        %2729 = vmatpush2.bf16.msra.mxu0 0
        %2730 = vmatprep.subr.bf16.mxu0 0
        %2731 = vmatpush2.bf16.msra.mxu0 0
        %2732 = vmatprep.subr.bf16.mxu0 0
        %2733 = vmatpush2.bf16.msra.mxu0 0
        %2734 = vmatprep.subr.bf16.mxu0 0
        %2735 = vmatpush2.bf16.msra.mxu0 0
        %2736 = vmatprep.subr.bf16.mxu0 0
        %2737 = vmatpush2.bf16.msra.mxu0 0
        %2738 = vmatprep.subr.bf16.mxu0 0
        %2739 = vmatpush2.bf16.msra.mxu0 0
        %2740 = vmatprep.subr.bf16.mxu0 0
        %2741 = vmatpush2.bf16.msra.mxu0 0
        %2742 = vmatprep.subr.bf16.mxu0 0
        %2743 = vmatpush2.bf16.msra.mxu0 0
        %2744 = vmatprep.mubr.bf16.mxu0 0
        %2745 = vmatmul.mubr.bf16.gmra.mxu0 %v2654
        %v2746 = vpop.f32.mrf.mxu0
        %v2747 = vadd.f32 0.0, %v2746
        %v2748 = vpop.f32.mrf.mxu0
        %v2749 = vadd.f32 0.0, %v2748
        %v2750 = vpop.f32.mrf.mxu0
        %v2751 = vpop.f32.mrf.mxu0
        %2752 = vdwg.mxu0
        %2753 = vmatprep.subr.bf16.mxu0 0
        %2754 = vmatpush1.bf16.msra.mxu0 0
        %2755 = vmatprep.subr.bf16.mxu0 0
        %2756 = vmatpush1.bf16.msra.mxu0 0
        %2757 = vmatprep.subr.bf16.mxu0 0
        %2758 = vmatpush1.bf16.msra.mxu0 0
        %2759 = vmatprep.subr.bf16.mxu0 0
        %2760 = vmatpush1.bf16.msra.mxu0 0
        %2761 = vmatprep.subr.bf16.mxu0 0
        %2762 = vmatpush1.bf16.msra.mxu0 0
        %2763 = vmatprep.subr.bf16.mxu0 0
        %2764 = vmatpush1.bf16.msra.mxu0 0
        %2765 = vmatprep.subr.bf16.mxu0 0
        %2766 = vmatpush1.bf16.msra.mxu0 0
        %2767 = vmatprep.subr.bf16.mxu0 0
        %2768 = vmatpush1.bf16.msra.mxu0 %v2669
        %2769 = vmatprep.subr.bf16.mxu0 0
        %2770 = vmatpush2.bf16.msra.mxu0 0
        %2771 = vmatprep.subr.bf16.mxu0 0
        %2772 = vmatpush2.bf16.msra.mxu0 0
        %2773 = vmatprep.subr.bf16.mxu0 0
        %2774 = vmatpush2.bf16.msra.mxu0 0
        %2775 = vmatprep.subr.bf16.mxu0 0
        %2776 = vmatpush2.bf16.msra.mxu0 0
        %2777 = vmatprep.subr.bf16.mxu0 0
        %2778 = vmatpush2.bf16.msra.mxu0 0
        %2779 = vmatprep.subr.bf16.mxu0 0
        %2780 = vmatpush2.bf16.msra.mxu0 0
        %2781 = vmatprep.subr.bf16.mxu0 0
        %2782 = vmatpush2.bf16.msra.mxu0 0
        %2783 = vmatprep.subr.bf16.mxu0 0
        %2784 = vmatpush2.bf16.msra.mxu0 0
        %2785 = vmatprep.mubr.bf16.mxu0 0
        %2786 = vmatmul.mubr.bf16.gmra.mxu0 %v2654
        %v2787 = vpop.f32.mrf.mxu0
        %v2788 = vadd.f32 0.0, %v2787
        %v2789 = vpop.f32.mrf.mxu0
        %v2790 = vpop.f32.mrf.mxu0
        %v2791 = vpop.f32.mrf.mxu0
        %2792 = vdwg.mxu0
        %v2793 = vadd.f32 %v2616, %v2706
        %v2794 = vadd.f32 %v2617, %v2708
        %v2795 = vadd.f32 %v2618, %v2747
        %v2796 = vadd.f32 %v2619, %v2749
        %v2797 = vadd.f32 %v2620, %v2788
        %s2798 = scalar_lea.vmem [#allocation8], 16
        %v2799 = vld [vmem:[%s2798] sm:$0xf]
        %2800 = vrot.lane.b32.xlu0 %v2132, 111
        %v2801 = vpop.permute.xlu0 %2800
        %2802 = vrot.lane.b32.xlu0 %v2133, 111
        %v2803 = vpop.permute.xlu0 %2802
        %2804 = vrot.lane.b32.xlu0 %v2134, 111
        %v2805 = vpop.permute.xlu0 %2804
        %2806 = vrot.lane.b32.xlu0 %v2135, 111
        %v2807 = vpop.permute.xlu0 %2806
        %2808 = vrot.lane.b32.xlu0 %v2136, 111
        %v2809 = vpop.permute.xlu0 %2808
        %v2810 = vsel %vm1168, %v2801, %v2803
        %v2811 = vsel %vm1168, %v2803, %v2805
        %v2812 = vsel %vm1168, %v2805, %v2807
        %v2813 = vsel %vm1168, %v2807, %v2809
        %v2815 = vsel %vm453, %v2799, 0
        %v2818 = vsel %vm457, %v2810, 0
        %v2821 = vsel %vm457, %v2811, 0
        %v2824 = vsel %vm457, %v2812, 0
        %v2827 = vsel %vm457, %v2813, 0
        %v2830 = vsel %vm457, %v2809, 0
        %2832 = vmatprep.subr.bf16.mxu0 0
        %2833 = vmatpush1.bf16.msra.mxu0 0
        %2834 = vmatprep.subr.bf16.mxu0 0
        %2835 = vmatpush1.bf16.msra.mxu0 0
        %2836 = vmatprep.subr.bf16.mxu0 0
        %2837 = vmatpush1.bf16.msra.mxu0 0
        %2838 = vmatprep.subr.bf16.mxu0 0
        %2839 = vmatpush1.bf16.msra.mxu0 0
        %2840 = vmatprep.subr.bf16.mxu0 0
        %2841 = vmatpush1.bf16.msra.mxu0 0
        %2842 = vmatprep.subr.bf16.mxu0 0
        %2843 = vmatpush1.bf16.msra.mxu0 0
        %2844 = vmatprep.subr.bf16.mxu0 0
        %2845 = vmatpush1.bf16.msra.mxu0 0
        %2846 = vmatprep.subr.bf16.mxu0 %v2821
        %2847 = vmatpush1.bf16.msra.mxu0 %v2818
        %2848 = vmatprep.subr.bf16.mxu0 0
        %2849 = vmatpush2.bf16.msra.mxu0 0
        %2850 = vmatprep.subr.bf16.mxu0 0
        %2851 = vmatpush2.bf16.msra.mxu0 0
        %2852 = vmatprep.subr.bf16.mxu0 0
        %2853 = vmatpush2.bf16.msra.mxu0 0
        %2854 = vmatprep.subr.bf16.mxu0 0
        %2855 = vmatpush2.bf16.msra.mxu0 0
        %2856 = vmatprep.subr.bf16.mxu0 0
        %2857 = vmatpush2.bf16.msra.mxu0 0
        %2858 = vmatprep.subr.bf16.mxu0 0
        %2859 = vmatpush2.bf16.msra.mxu0 0
        %2860 = vmatprep.subr.bf16.mxu0 0
        %2861 = vmatpush2.bf16.msra.mxu0 0
        %2862 = vmatprep.subr.bf16.mxu0 0
        %2863 = vmatpush2.bf16.msra.mxu0 0
        %2864 = vmatprep.mubr.bf16.mxu0 0
        %2865 = vmatmul.mubr.bf16.gmra.mxu0 %v2815
        %v2866 = vpop.f32.mrf.mxu0
        %v2867 = vadd.f32 0.0, %v2866
        %v2868 = vpop.f32.mrf.mxu0
        %v2869 = vadd.f32 0.0, %v2868
        %v2870 = vpop.f32.mrf.mxu0
        %v2871 = vpop.f32.mrf.mxu0
        %2872 = vdwg.mxu0
        %2873 = vmatprep.subr.bf16.mxu0 0
        %2874 = vmatpush1.bf16.msra.mxu0 0
        %2875 = vmatprep.subr.bf16.mxu0 0
        %2876 = vmatpush1.bf16.msra.mxu0 0
        %2877 = vmatprep.subr.bf16.mxu0 0
        %2878 = vmatpush1.bf16.msra.mxu0 0
        %2879 = vmatprep.subr.bf16.mxu0 0
        %2880 = vmatpush1.bf16.msra.mxu0 0
        %2881 = vmatprep.subr.bf16.mxu0 0
        %2882 = vmatpush1.bf16.msra.mxu0 0
        %2883 = vmatprep.subr.bf16.mxu0 0
        %2884 = vmatpush1.bf16.msra.mxu0 0
        %2885 = vmatprep.subr.bf16.mxu0 0
        %2886 = vmatpush1.bf16.msra.mxu0 0
        %2887 = vmatprep.subr.bf16.mxu0 %v2827
        %2888 = vmatpush1.bf16.msra.mxu0 %v2824
        %2889 = vmatprep.subr.bf16.mxu0 0
        %2890 = vmatpush2.bf16.msra.mxu0 0
        %2891 = vmatprep.subr.bf16.mxu0 0
        %2892 = vmatpush2.bf16.msra.mxu0 0
        %2893 = vmatprep.subr.bf16.mxu0 0
        %2894 = vmatpush2.bf16.msra.mxu0 0
        %2895 = vmatprep.subr.bf16.mxu0 0
        %2896 = vmatpush2.bf16.msra.mxu0 0
        %2897 = vmatprep.subr.bf16.mxu0 0
        %2898 = vmatpush2.bf16.msra.mxu0 0
        %2899 = vmatprep.subr.bf16.mxu0 0
        %2900 = vmatpush2.bf16.msra.mxu0 0
        %2901 = vmatprep.subr.bf16.mxu0 0
        %2902 = vmatpush2.bf16.msra.mxu0 0
        %2903 = vmatprep.subr.bf16.mxu0 0
        %2904 = vmatpush2.bf16.msra.mxu0 0
        %2905 = vmatprep.mubr.bf16.mxu0 0
        %2906 = vmatmul.mubr.bf16.gmra.mxu0 %v2815
        %v2907 = vpop.f32.mrf.mxu0
        %v2908 = vadd.f32 0.0, %v2907
        %v2909 = vpop.f32.mrf.mxu0
        %v2910 = vadd.f32 0.0, %v2909
        %v2911 = vpop.f32.mrf.mxu0
        %v2912 = vpop.f32.mrf.mxu0
        %2913 = vdwg.mxu0
        %2914 = vmatprep.subr.bf16.mxu0 0
        %2915 = vmatpush1.bf16.msra.mxu0 0
        %2916 = vmatprep.subr.bf16.mxu0 0
        %2917 = vmatpush1.bf16.msra.mxu0 0
        %2918 = vmatprep.subr.bf16.mxu0 0
        %2919 = vmatpush1.bf16.msra.mxu0 0
        %2920 = vmatprep.subr.bf16.mxu0 0
        %2921 = vmatpush1.bf16.msra.mxu0 0
        %2922 = vmatprep.subr.bf16.mxu0 0
        %2923 = vmatpush1.bf16.msra.mxu0 0
        %2924 = vmatprep.subr.bf16.mxu0 0
        %2925 = vmatpush1.bf16.msra.mxu0 0
        %2926 = vmatprep.subr.bf16.mxu0 0
        %2927 = vmatpush1.bf16.msra.mxu0 0
        %2928 = vmatprep.subr.bf16.mxu0 0
        %2929 = vmatpush1.bf16.msra.mxu0 %v2830
        %2930 = vmatprep.subr.bf16.mxu0 0
        %2931 = vmatpush2.bf16.msra.mxu0 0
        %2932 = vmatprep.subr.bf16.mxu0 0
        %2933 = vmatpush2.bf16.msra.mxu0 0
        %2934 = vmatprep.subr.bf16.mxu0 0
        %2935 = vmatpush2.bf16.msra.mxu0 0
        %2936 = vmatprep.subr.bf16.mxu0 0
        %2937 = vmatpush2.bf16.msra.mxu0 0
        %2938 = vmatprep.subr.bf16.mxu0 0
        %2939 = vmatpush2.bf16.msra.mxu0 0
        %2940 = vmatprep.subr.bf16.mxu0 0
        %2941 = vmatpush2.bf16.msra.mxu0 0
        %2942 = vmatprep.subr.bf16.mxu0 0
        %2943 = vmatpush2.bf16.msra.mxu0 0
        %2944 = vmatprep.subr.bf16.mxu0 0
        %2945 = vmatpush2.bf16.msra.mxu0 0
        %2946 = vmatprep.mubr.bf16.mxu0 0
        %2947 = vmatmul.mubr.bf16.gmra.mxu0 %v2815
        %v2948 = vpop.f32.mrf.mxu0
        %v2949 = vadd.f32 0.0, %v2948
        %v2950 = vpop.f32.mrf.mxu0
        %v2951 = vpop.f32.mrf.mxu0
        %v2952 = vpop.f32.mrf.mxu0
        %2953 = vdwg.mxu0
        %v2954 = vadd.f32 %v2793, %v2867
        %v2955 = vadd.f32 %v2794, %v2869
        %v2956 = vadd.f32 %v2795, %v2908
        %v2957 = vadd.f32 %v2796, %v2910
        %v2958 = vadd.f32 %v2797, %v2949
        %v2959 = vsel %vm1331, %v2115, 0
        %v2960 = vsel %vm1332, %v2116, 0
        %v2961 = vsel %vm1333, %v2117, 0
        %s2962 = scalar_lea.vmem [#allocation8], 20
        %v2963 = vld [vmem:[%s2962] sm:$0xf]
        %v2967 = vunpack.c.l.b16 %v2959
        %v2968 = vunpack.c.h.b16 %v2959
        %v2969 = vunpack.c.l.b16 %v2960
        %v2970 = vunpack.c.h.b16 %v2960
        %v2971 = vunpack.c.l.b16 %v2961
        %v2972 = vpack.c.b16 %v2967, %v2967
        %v2973 = vpack.c.b16 %v2968, %v2968
        %v2974 = vpack.c.b16 %v2969, %v2969
        %v2975 = vpack.c.b16 %v2970, %v2970
        %v2976 = vpack.c.b16 %v2971, %v2971
        %2977 = vrot.lane.b32.xlu0 %v2972, 110
        %v2978 = vpop.permute.xlu0 %2977
        %2979 = vrot.lane.b32.xlu0 %v2973, 110
        %v2980 = vpop.permute.xlu0 %2979
        %2981 = vrot.lane.b32.xlu0 %v2974, 110
        %v2982 = vpop.permute.xlu0 %2981
        %2983 = vrot.lane.b32.xlu0 %v2975, 110
        %v2984 = vpop.permute.xlu0 %2983
        %2985 = vrot.lane.b32.xlu0 %v2976, 110
        %v2986 = vpop.permute.xlu0 %2985
        %v2987 = vsel %vm1362, %v2978, %v2980
        %v2988 = vsel %vm1362, %v2980, %v2982
        %v2989 = vsel %vm1362, %v2982, %v2984
        %v2990 = vsel %vm1362, %v2984, %v2986
        %v2992 = vsel %vm453, %v2963, 0
        %v2995 = vsel %vm457, %v2987, 0
        %v2998 = vsel %vm457, %v2988, 0
        %v3001 = vsel %vm457, %v2989, 0
        %v3004 = vsel %vm457, %v2990, 0
        %v3007 = vsel %vm457, %v2986, 0
        %3009 = vmatprep.subr.bf16.mxu0 0
        %3010 = vmatpush1.bf16.msra.mxu0 0
        %3011 = vmatprep.subr.bf16.mxu0 0
        %3012 = vmatpush1.bf16.msra.mxu0 0
        %3013 = vmatprep.subr.bf16.mxu0 0
        %3014 = vmatpush1.bf16.msra.mxu0 0
        %3015 = vmatprep.subr.bf16.mxu0 0
        %3016 = vmatpush1.bf16.msra.mxu0 0
        %3017 = vmatprep.subr.bf16.mxu0 0
        %3018 = vmatpush1.bf16.msra.mxu0 0
        %3019 = vmatprep.subr.bf16.mxu0 0
        %3020 = vmatpush1.bf16.msra.mxu0 0
        %3021 = vmatprep.subr.bf16.mxu0 0
        %3022 = vmatpush1.bf16.msra.mxu0 0
        %3023 = vmatprep.subr.bf16.mxu0 %v2998
        %3024 = vmatpush1.bf16.msra.mxu0 %v2995
        %3025 = vmatprep.subr.bf16.mxu0 0
        %3026 = vmatpush2.bf16.msra.mxu0 0
        %3027 = vmatprep.subr.bf16.mxu0 0
        %3028 = vmatpush2.bf16.msra.mxu0 0
        %3029 = vmatprep.subr.bf16.mxu0 0
        %3030 = vmatpush2.bf16.msra.mxu0 0
        %3031 = vmatprep.subr.bf16.mxu0 0
        %3032 = vmatpush2.bf16.msra.mxu0 0
        %3033 = vmatprep.subr.bf16.mxu0 0
        %3034 = vmatpush2.bf16.msra.mxu0 0
        %3035 = vmatprep.subr.bf16.mxu0 0
        %3036 = vmatpush2.bf16.msra.mxu0 0
        %3037 = vmatprep.subr.bf16.mxu0 0
        %3038 = vmatpush2.bf16.msra.mxu0 0
        %3039 = vmatprep.subr.bf16.mxu0 0
        %3040 = vmatpush2.bf16.msra.mxu0 0
        %3041 = vmatprep.mubr.bf16.mxu0 0
        %3042 = vmatmul.mubr.bf16.gmra.mxu0 %v2992
        %v3043 = vpop.f32.mrf.mxu0
        %v3044 = vadd.f32 0.0, %v3043
        %v3045 = vpop.f32.mrf.mxu0
        %v3046 = vadd.f32 0.0, %v3045
        %v3047 = vpop.f32.mrf.mxu0
        %v3048 = vpop.f32.mrf.mxu0
        %3049 = vdwg.mxu0
        %3050 = vmatprep.subr.bf16.mxu0 0
        %3051 = vmatpush1.bf16.msra.mxu0 0
        %3052 = vmatprep.subr.bf16.mxu0 0
        %3053 = vmatpush1.bf16.msra.mxu0 0
        %3054 = vmatprep.subr.bf16.mxu0 0
        %3055 = vmatpush1.bf16.msra.mxu0 0
        %3056 = vmatprep.subr.bf16.mxu0 0
        %3057 = vmatpush1.bf16.msra.mxu0 0
        %3058 = vmatprep.subr.bf16.mxu0 0
        %3059 = vmatpush1.bf16.msra.mxu0 0
        %3060 = vmatprep.subr.bf16.mxu0 0
        %3061 = vmatpush1.bf16.msra.mxu0 0
        %3062 = vmatprep.subr.bf16.mxu0 0
        %3063 = vmatpush1.bf16.msra.mxu0 0
        %3064 = vmatprep.subr.bf16.mxu0 %v3004
        %3065 = vmatpush1.bf16.msra.mxu0 %v3001
        %3066 = vmatprep.subr.bf16.mxu0 0
        %3067 = vmatpush2.bf16.msra.mxu0 0
        %3068 = vmatprep.subr.bf16.mxu0 0
        %3069 = vmatpush2.bf16.msra.mxu0 0
        %3070 = vmatprep.subr.bf16.mxu0 0
        %3071 = vmatpush2.bf16.msra.mxu0 0
        %3072 = vmatprep.subr.bf16.mxu0 0
        %3073 = vmatpush2.bf16.msra.mxu0 0
        %3074 = vmatprep.subr.bf16.mxu0 0
        %3075 = vmatpush2.bf16.msra.mxu0 0
        %3076 = vmatprep.subr.bf16.mxu0 0
        %3077 = vmatpush2.bf16.msra.mxu0 0
        %3078 = vmatprep.subr.bf16.mxu0 0
        %3079 = vmatpush2.bf16.msra.mxu0 0
        %3080 = vmatprep.subr.bf16.mxu0 0
        %3081 = vmatpush2.bf16.msra.mxu0 0
        %3082 = vmatprep.mubr.bf16.mxu0 0
        %3083 = vmatmul.mubr.bf16.gmra.mxu0 %v2992
        %v3084 = vpop.f32.mrf.mxu0
        %v3085 = vadd.f32 0.0, %v3084
        %v3086 = vpop.f32.mrf.mxu0
        %v3087 = vadd.f32 0.0, %v3086
        %v3088 = vpop.f32.mrf.mxu0
        %v3089 = vpop.f32.mrf.mxu0
        %3090 = vdwg.mxu0
        %3091 = vmatprep.subr.bf16.mxu0 0
        %3092 = vmatpush1.bf16.msra.mxu0 0
        %3093 = vmatprep.subr.bf16.mxu0 0
        %3094 = vmatpush1.bf16.msra.mxu0 0
        %3095 = vmatprep.subr.bf16.mxu0 0
        %3096 = vmatpush1.bf16.msra.mxu0 0
        %3097 = vmatprep.subr.bf16.mxu0 0
        %3098 = vmatpush1.bf16.msra.mxu0 0
        %3099 = vmatprep.subr.bf16.mxu0 0
        %3100 = vmatpush1.bf16.msra.mxu0 0
        %3101 = vmatprep.subr.bf16.mxu0 0
        %3102 = vmatpush1.bf16.msra.mxu0 0
        %3103 = vmatprep.subr.bf16.mxu0 0
        %3104 = vmatpush1.bf16.msra.mxu0 0
        %3105 = vmatprep.subr.bf16.mxu0 0
        %3106 = vmatpush1.bf16.msra.mxu0 %v3007
        %3107 = vmatprep.subr.bf16.mxu0 0
        %3108 = vmatpush2.bf16.msra.mxu0 0
        %3109 = vmatprep.subr.bf16.mxu0 0
        %3110 = vmatpush2.bf16.msra.mxu0 0
        %3111 = vmatprep.subr.bf16.mxu0 0
        %3112 = vmatpush2.bf16.msra.mxu0 0
        %3113 = vmatprep.subr.bf16.mxu0 0
        %3114 = vmatpush2.bf16.msra.mxu0 0
        %3115 = vmatprep.subr.bf16.mxu0 0
        %3116 = vmatpush2.bf16.msra.mxu0 0
        %3117 = vmatprep.subr.bf16.mxu0 0
        %3118 = vmatpush2.bf16.msra.mxu0 0
        %3119 = vmatprep.subr.bf16.mxu0 0
        %3120 = vmatpush2.bf16.msra.mxu0 0
        %3121 = vmatprep.subr.bf16.mxu0 0
        %3122 = vmatpush2.bf16.msra.mxu0 0
        %3123 = vmatprep.mubr.bf16.mxu0 0
        %3124 = vmatmul.mubr.bf16.gmra.mxu0 %v2992
        %v3125 = vpop.f32.mrf.mxu0
        %v3126 = vadd.f32 0.0, %v3125
        %v3127 = vpop.f32.mrf.mxu0
        %v3128 = vpop.f32.mrf.mxu0
        %v3129 = vpop.f32.mrf.mxu0
        %3130 = vdwg.mxu0
        %v3131 = vadd.f32 %v2954, %v3044
        %v3132 = vadd.f32 %v2955, %v3046
        %v3133 = vadd.f32 %v2956, %v3085
        %v3134 = vadd.f32 %v2957, %v3087
        %v3135 = vadd.f32 %v2958, %v3126
        %v3136 = vsel %vm1525, %v2115, 0
        %v3137 = vsel %vm1526, %v2116, 0
        %v3138 = vsel %vm1527, %v2117, 0
        %s3139 = scalar_lea.vmem [#allocation8], 24
        %v3140 = vld [vmem:[%s3139] sm:$0xf]
        %v3144 = vunpack.c.l.b16 %v3136
        %v3145 = vunpack.c.h.b16 %v3136
        %v3146 = vunpack.c.l.b16 %v3137
        %v3147 = vunpack.c.h.b16 %v3137
        %v3148 = vunpack.c.l.b16 %v3138
        %v3149 = vpack.c.b16 %v3144, %v3144
        %v3150 = vpack.c.b16 %v3145, %v3145
        %v3151 = vpack.c.b16 %v3146, %v3146
        %v3152 = vpack.c.b16 %v3147, %v3147
        %v3153 = vpack.c.b16 %v3148, %v3148
        %3154 = vrot.lane.b32.xlu0 %v3149, 96
        %v3155 = vpop.permute.xlu0 %3154
        %3156 = vrot.lane.b32.xlu0 %v3150, 96
        %v3157 = vpop.permute.xlu0 %3156
        %3158 = vrot.lane.b32.xlu0 %v3151, 96
        %v3159 = vpop.permute.xlu0 %3158
        %3160 = vrot.lane.b32.xlu0 %v3152, 96
        %v3161 = vpop.permute.xlu0 %3160
        %3162 = vrot.lane.b32.xlu0 %v3153, 96
        %v3163 = vpop.permute.xlu0 %3162
        %v3164 = vsel %vm1556, %v3155, %v3157
        %v3165 = vsel %vm1556, %v3157, %v3159
        %v3166 = vsel %vm1556, %v3159, %v3161
        %v3167 = vsel %vm1556, %v3161, %v3163
        %v3169 = vsel %vm453, %v3140, 0
        %v3172 = vsel %vm457, %v3164, 0
        %v3175 = vsel %vm457, %v3165, 0
        %v3178 = vsel %vm457, %v3166, 0
        %v3181 = vsel %vm457, %v3167, 0
        %v3184 = vsel %vm457, %v3163, 0
        %3186 = vmatprep.subr.bf16.mxu0 0
        %3187 = vmatpush1.bf16.msra.mxu0 0
        %3188 = vmatprep.subr.bf16.mxu0 0
        %3189 = vmatpush1.bf16.msra.mxu0 0
        %3190 = vmatprep.subr.bf16.mxu0 0
        %3191 = vmatpush1.bf16.msra.mxu0 0
        %3192 = vmatprep.subr.bf16.mxu0 0
        %3193 = vmatpush1.bf16.msra.mxu0 0
        %3194 = vmatprep.subr.bf16.mxu0 0
        %3195 = vmatpush1.bf16.msra.mxu0 0
        %3196 = vmatprep.subr.bf16.mxu0 0
        %3197 = vmatpush1.bf16.msra.mxu0 0
        %3198 = vmatprep.subr.bf16.mxu0 0
        %3199 = vmatpush1.bf16.msra.mxu0 0
        %3200 = vmatprep.subr.bf16.mxu0 %v3175
        %3201 = vmatpush1.bf16.msra.mxu0 %v3172
        %3202 = vmatprep.subr.bf16.mxu0 0
        %3203 = vmatpush2.bf16.msra.mxu0 0
        %3204 = vmatprep.subr.bf16.mxu0 0
        %3205 = vmatpush2.bf16.msra.mxu0 0
        %3206 = vmatprep.subr.bf16.mxu0 0
        %3207 = vmatpush2.bf16.msra.mxu0 0
        %3208 = vmatprep.subr.bf16.mxu0 0
        %3209 = vmatpush2.bf16.msra.mxu0 0
        %3210 = vmatprep.subr.bf16.mxu0 0
        %3211 = vmatpush2.bf16.msra.mxu0 0
        %3212 = vmatprep.subr.bf16.mxu0 0
        %3213 = vmatpush2.bf16.msra.mxu0 0
        %3214 = vmatprep.subr.bf16.mxu0 0
        %3215 = vmatpush2.bf16.msra.mxu0 0
        %3216 = vmatprep.subr.bf16.mxu0 0
        %3217 = vmatpush2.bf16.msra.mxu0 0
        %3218 = vmatprep.mubr.bf16.mxu0 0
        %3219 = vmatmul.mubr.bf16.gmra.mxu0 %v3169
        %v3220 = vpop.f32.mrf.mxu0
        %v3221 = vadd.f32 0.0, %v3220
        %v3222 = vpop.f32.mrf.mxu0
        %v3223 = vadd.f32 0.0, %v3222
        %v3224 = vpop.f32.mrf.mxu0
        %v3225 = vpop.f32.mrf.mxu0
        %3226 = vdwg.mxu0
        %3227 = vmatprep.subr.bf16.mxu0 0
        %3228 = vmatpush1.bf16.msra.mxu0 0
        %3229 = vmatprep.subr.bf16.mxu0 0
        %3230 = vmatpush1.bf16.msra.mxu0 0
        %3231 = vmatprep.subr.bf16.mxu0 0
        %3232 = vmatpush1.bf16.msra.mxu0 0
        %3233 = vmatprep.subr.bf16.mxu0 0
        %3234 = vmatpush1.bf16.msra.mxu0 0
        %3235 = vmatprep.subr.bf16.mxu0 0
        %3236 = vmatpush1.bf16.msra.mxu0 0
        %3237 = vmatprep.subr.bf16.mxu0 0
        %3238 = vmatpush1.bf16.msra.mxu0 0
        %3239 = vmatprep.subr.bf16.mxu0 0
        %3240 = vmatpush1.bf16.msra.mxu0 0
        %3241 = vmatprep.subr.bf16.mxu0 %v3181
        %3242 = vmatpush1.bf16.msra.mxu0 %v3178
        %3243 = vmatprep.subr.bf16.mxu0 0
        %3244 = vmatpush2.bf16.msra.mxu0 0
        %3245 = vmatprep.subr.bf16.mxu0 0
        %3246 = vmatpush2.bf16.msra.mxu0 0
        %3247 = vmatprep.subr.bf16.mxu0 0
        %3248 = vmatpush2.bf16.msra.mxu0 0
        %3249 = vmatprep.subr.bf16.mxu0 0
        %3250 = vmatpush2.bf16.msra.mxu0 0
        %3251 = vmatprep.subr.bf16.mxu0 0
        %3252 = vmatpush2.bf16.msra.mxu0 0
        %3253 = vmatprep.subr.bf16.mxu0 0
        %3254 = vmatpush2.bf16.msra.mxu0 0
        %3255 = vmatprep.subr.bf16.mxu0 0
        %3256 = vmatpush2.bf16.msra.mxu0 0
        %3257 = vmatprep.subr.bf16.mxu0 0
        %3258 = vmatpush2.bf16.msra.mxu0 0
        %3259 = vmatprep.mubr.bf16.mxu0 0
        %3260 = vmatmul.mubr.bf16.gmra.mxu0 %v3169
        %v3261 = vpop.f32.mrf.mxu0
        %v3262 = vadd.f32 0.0, %v3261
        %v3263 = vpop.f32.mrf.mxu0
        %v3264 = vadd.f32 0.0, %v3263
        %v3265 = vpop.f32.mrf.mxu0
        %v3266 = vpop.f32.mrf.mxu0
        %3267 = vdwg.mxu0
        %3268 = vmatprep.subr.bf16.mxu0 0
        %3269 = vmatpush1.bf16.msra.mxu0 0
        %3270 = vmatprep.subr.bf16.mxu0 0
        %3271 = vmatpush1.bf16.msra.mxu0 0
        %3272 = vmatprep.subr.bf16.mxu0 0
        %3273 = vmatpush1.bf16.msra.mxu0 0
        %3274 = vmatprep.subr.bf16.mxu0 0
        %3275 = vmatpush1.bf16.msra.mxu0 0
        %3276 = vmatprep.subr.bf16.mxu0 0
        %3277 = vmatpush1.bf16.msra.mxu0 0
        %3278 = vmatprep.subr.bf16.mxu0 0
        %3279 = vmatpush1.bf16.msra.mxu0 0
        %3280 = vmatprep.subr.bf16.mxu0 0
        %3281 = vmatpush1.bf16.msra.mxu0 0
        %3282 = vmatprep.subr.bf16.mxu0 0
        %3283 = vmatpush1.bf16.msra.mxu0 %v3184
        %3284 = vmatprep.subr.bf16.mxu0 0
        %3285 = vmatpush2.bf16.msra.mxu0 0
        %3286 = vmatprep.subr.bf16.mxu0 0
        %3287 = vmatpush2.bf16.msra.mxu0 0
        %3288 = vmatprep.subr.bf16.mxu0 0
        %3289 = vmatpush2.bf16.msra.mxu0 0
        %3290 = vmatprep.subr.bf16.mxu0 0
        %3291 = vmatpush2.bf16.msra.mxu0 0
        %3292 = vmatprep.subr.bf16.mxu0 0
        %3293 = vmatpush2.bf16.msra.mxu0 0
        %3294 = vmatprep.subr.bf16.mxu0 0
        %3295 = vmatpush2.bf16.msra.mxu0 0
        %3296 = vmatprep.subr.bf16.mxu0 0
        %3297 = vmatpush2.bf16.msra.mxu0 0
        %3298 = vmatprep.subr.bf16.mxu0 0
        %3299 = vmatpush2.bf16.msra.mxu0 0
        %3300 = vmatprep.mubr.bf16.mxu0 0
        %3301 = vmatmul.mubr.bf16.gmra.mxu0 %v3169
        %v3302 = vpop.f32.mrf.mxu0
        %v3303 = vadd.f32 0.0, %v3302
        %v3304 = vpop.f32.mrf.mxu0
        %v3305 = vpop.f32.mrf.mxu0
        %v3306 = vpop.f32.mrf.mxu0
        %3307 = vdwg.mxu0
        %v3308 = vadd.f32 %v3131, %v3221
        %v3309 = vadd.f32 %v3132, %v3223
        %v3310 = vadd.f32 %v3133, %v3262
        %v3311 = vadd.f32 %v3134, %v3264
        %v3312 = vadd.f32 %v3135, %v3303
        %s3313 = scalar_lea.vmem [#allocation8], 28
        %v3314 = vld [vmem:[%s3313] sm:$0xf]
        %3315 = vrot.lane.b32.xlu0 %v2132, 95
        %v3316 = vpop.permute.xlu0 %3315
        %3317 = vrot.lane.b32.xlu0 %v2133, 95
        %v3318 = vpop.permute.xlu0 %3317
        %3319 = vrot.lane.b32.xlu0 %v2134, 95
        %v3320 = vpop.permute.xlu0 %3319
        %3321 = vrot.lane.b32.xlu0 %v2135, 95
        %v3322 = vpop.permute.xlu0 %3321
        %3323 = vrot.lane.b32.xlu0 %v2136, 95
        %v3324 = vpop.permute.xlu0 %3323
        %v3325 = vsel %vm1718, %v3316, %v3318
        %v3326 = vsel %vm1718, %v3318, %v3320
        %v3327 = vsel %vm1718, %v3320, %v3322
        %v3328 = vsel %vm1718, %v3322, %v3324
        %v3330 = vsel %vm453, %v3314, 0
        %v3333 = vsel %vm457, %v3325, 0
        %v3336 = vsel %vm457, %v3326, 0
        %v3339 = vsel %vm457, %v3327, 0
        %v3342 = vsel %vm457, %v3328, 0
        %v3345 = vsel %vm457, %v3324, 0
        %3347 = vmatprep.subr.bf16.mxu0 0
        %3348 = vmatpush1.bf16.msra.mxu0 0
        %3349 = vmatprep.subr.bf16.mxu0 0
        %3350 = vmatpush1.bf16.msra.mxu0 0
        %3351 = vmatprep.subr.bf16.mxu0 0
        %3352 = vmatpush1.bf16.msra.mxu0 0
        %3353 = vmatprep.subr.bf16.mxu0 0
        %3354 = vmatpush1.bf16.msra.mxu0 0
        %3355 = vmatprep.subr.bf16.mxu0 0
        %3356 = vmatpush1.bf16.msra.mxu0 0
        %3357 = vmatprep.subr.bf16.mxu0 0
        %3358 = vmatpush1.bf16.msra.mxu0 0
        %3359 = vmatprep.subr.bf16.mxu0 0
        %3360 = vmatpush1.bf16.msra.mxu0 0
        %3361 = vmatprep.subr.bf16.mxu0 %v3336
        %3362 = vmatpush1.bf16.msra.mxu0 %v3333
        %3363 = vmatprep.subr.bf16.mxu0 0
        %3364 = vmatpush2.bf16.msra.mxu0 0
        %3365 = vmatprep.subr.bf16.mxu0 0
        %3366 = vmatpush2.bf16.msra.mxu0 0
        %3367 = vmatprep.subr.bf16.mxu0 0
        %3368 = vmatpush2.bf16.msra.mxu0 0
        %3369 = vmatprep.subr.bf16.mxu0 0
        %3370 = vmatpush2.bf16.msra.mxu0 0
        %3371 = vmatprep.subr.bf16.mxu0 0
        %3372 = vmatpush2.bf16.msra.mxu0 0
        %3373 = vmatprep.subr.bf16.mxu0 0
        %3374 = vmatpush2.bf16.msra.mxu0 0
        %3375 = vmatprep.subr.bf16.mxu0 0
        %3376 = vmatpush2.bf16.msra.mxu0 0
        %3377 = vmatprep.subr.bf16.mxu0 0
        %3378 = vmatpush2.bf16.msra.mxu0 0
        %3379 = vmatprep.mubr.bf16.mxu0 0
        %3380 = vmatmul.mubr.bf16.gmra.mxu0 %v3330
        %v3381 = vpop.f32.mrf.mxu0
        %v3382 = vadd.f32 0.0, %v3381
        %v3383 = vpop.f32.mrf.mxu0
        %v3384 = vadd.f32 0.0, %v3383
        %v3385 = vpop.f32.mrf.mxu0
        %v3386 = vpop.f32.mrf.mxu0
        %3387 = vdwg.mxu0
        %3388 = vmatprep.subr.bf16.mxu0 0
        %3389 = vmatpush1.bf16.msra.mxu0 0
        %3390 = vmatprep.subr.bf16.mxu0 0
        %3391 = vmatpush1.bf16.msra.mxu0 0
        %3392 = vmatprep.subr.bf16.mxu0 0
        %3393 = vmatpush1.bf16.msra.mxu0 0
        %3394 = vmatprep.subr.bf16.mxu0 0
        %3395 = vmatpush1.bf16.msra.mxu0 0
        %3396 = vmatprep.subr.bf16.mxu0 0
        %3397 = vmatpush1.bf16.msra.mxu0 0
        %3398 = vmatprep.subr.bf16.mxu0 0
        %3399 = vmatpush1.bf16.msra.mxu0 0
        %3400 = vmatprep.subr.bf16.mxu0 0
        %3401 = vmatpush1.bf16.msra.mxu0 0
        %3402 = vmatprep.subr.bf16.mxu0 %v3342
        %3403 = vmatpush1.bf16.msra.mxu0 %v3339
        %3404 = vmatprep.subr.bf16.mxu0 0
        %3405 = vmatpush2.bf16.msra.mxu0 0
        %3406 = vmatprep.subr.bf16.mxu0 0
        %3407 = vmatpush2.bf16.msra.mxu0 0
        %3408 = vmatprep.subr.bf16.mxu0 0
        %3409 = vmatpush2.bf16.msra.mxu0 0
        %3410 = vmatprep.subr.bf16.mxu0 0
        %3411 = vmatpush2.bf16.msra.mxu0 0
        %3412 = vmatprep.subr.bf16.mxu0 0
        %3413 = vmatpush2.bf16.msra.mxu0 0
        %3414 = vmatprep.subr.bf16.mxu0 0
        %3415 = vmatpush2.bf16.msra.mxu0 0
        %3416 = vmatprep.subr.bf16.mxu0 0
        %3417 = vmatpush2.bf16.msra.mxu0 0
        %3418 = vmatprep.subr.bf16.mxu0 0
        %3419 = vmatpush2.bf16.msra.mxu0 0
        %3420 = vmatprep.mubr.bf16.mxu0 0
        %3421 = vmatmul.mubr.bf16.gmra.mxu0 %v3330
        %v3422 = vpop.f32.mrf.mxu0
        %v3423 = vadd.f32 0.0, %v3422
        %v3424 = vpop.f32.mrf.mxu0
        %v3425 = vadd.f32 0.0, %v3424
        %v3426 = vpop.f32.mrf.mxu0
        %v3427 = vpop.f32.mrf.mxu0
        %3428 = vdwg.mxu0
        %3429 = vmatprep.subr.bf16.mxu0 0
        %3430 = vmatpush1.bf16.msra.mxu0 0
        %3431 = vmatprep.subr.bf16.mxu0 0
        %3432 = vmatpush1.bf16.msra.mxu0 0
        %3433 = vmatprep.subr.bf16.mxu0 0
        %3434 = vmatpush1.bf16.msra.mxu0 0
        %3435 = vmatprep.subr.bf16.mxu0 0
        %3436 = vmatpush1.bf16.msra.mxu0 0
        %3437 = vmatprep.subr.bf16.mxu0 0
        %3438 = vmatpush1.bf16.msra.mxu0 0
        %3439 = vmatprep.subr.bf16.mxu0 0
        %3440 = vmatpush1.bf16.msra.mxu0 0
        %3441 = vmatprep.subr.bf16.mxu0 0
        %3442 = vmatpush1.bf16.msra.mxu0 0
        %3443 = vmatprep.subr.bf16.mxu0 0
        %3444 = vmatpush1.bf16.msra.mxu0 %v3345
        %3445 = vmatprep.subr.bf16.mxu0 0
        %3446 = vmatpush2.bf16.msra.mxu0 0
        %3447 = vmatprep.subr.bf16.mxu0 0
        %3448 = vmatpush2.bf16.msra.mxu0 0
        %3449 = vmatprep.subr.bf16.mxu0 0
        %3450 = vmatpush2.bf16.msra.mxu0 0
        %3451 = vmatprep.subr.bf16.mxu0 0
        %3452 = vmatpush2.bf16.msra.mxu0 0
        %3453 = vmatprep.subr.bf16.mxu0 0
        %3454 = vmatpush2.bf16.msra.mxu0 0
        %3455 = vmatprep.subr.bf16.mxu0 0
        %3456 = vmatpush2.bf16.msra.mxu0 0
        %3457 = vmatprep.subr.bf16.mxu0 0
        %3458 = vmatpush2.bf16.msra.mxu0 0
        %3459 = vmatprep.subr.bf16.mxu0 0
        %3460 = vmatpush2.bf16.msra.mxu0 0
        %3461 = vmatprep.mubr.bf16.mxu0 0
        %3462 = vmatmul.mubr.bf16.gmra.mxu0 %v3330
        %v3463 = vpop.f32.mrf.mxu0
        %v3464 = vadd.f32 0.0, %v3463
        %v3465 = vpop.f32.mrf.mxu0
        %v3466 = vpop.f32.mrf.mxu0
        %v3467 = vpop.f32.mrf.mxu0
        %3468 = vdwg.mxu0
        %v3469 = vadd.f32 %v3308, %v3382
        %v3470 = vadd.f32 %v3309, %v3384
        %v3471 = vadd.f32 %v3310, %v3423
        %v3472 = vadd.f32 %v3311, %v3425
        %v3473 = vadd.f32 %v3312, %v3464
        %v3474 = vsel %vm1881, %v2115, 0
        %v3475 = vsel %vm1882, %v2116, 0
        %v3476 = vsel %vm1883, %v2117, 0
        %s3477 = scalar_lea.vmem [#allocation8], 32
        %v3478 = vld [vmem:[%s3477] sm:$0xf]
        %v3482 = vunpack.c.l.b16 %v3474
        %v3483 = vunpack.c.h.b16 %v3474
        %v3484 = vunpack.c.l.b16 %v3475
        %v3485 = vunpack.c.h.b16 %v3475
        %v3486 = vunpack.c.l.b16 %v3476
        %v3487 = vpack.c.b16 %v3482, %v3482
        %v3488 = vpack.c.b16 %v3483, %v3483
        %v3489 = vpack.c.b16 %v3484, %v3484
        %v3490 = vpack.c.b16 %v3485, %v3485
        %v3491 = vpack.c.b16 %v3486, %v3486
        %3492 = vrot.lane.b32.xlu0 %v3487, 94
        %v3493 = vpop.permute.xlu0 %3492
        %3494 = vrot.lane.b32.xlu0 %v3488, 94
        %v3495 = vpop.permute.xlu0 %3494
        %3496 = vrot.lane.b32.xlu0 %v3489, 94
        %v3497 = vpop.permute.xlu0 %3496
        %3498 = vrot.lane.b32.xlu0 %v3490, 94
        %v3499 = vpop.permute.xlu0 %3498
        %3500 = vrot.lane.b32.xlu0 %v3491, 94
        %v3501 = vpop.permute.xlu0 %3500
        %v3502 = vsel %vm1912, %v3493, %v3495
        %v3503 = vsel %vm1912, %v3495, %v3497
        %v3504 = vsel %vm1912, %v3497, %v3499
        %v3505 = vsel %vm1912, %v3499, %v3501
        %v3507 = vsel %vm453, %v3478, 0
        %v3510 = vsel %vm457, %v3502, 0
        %v3513 = vsel %vm457, %v3503, 0
        %v3516 = vsel %vm457, %v3504, 0
        %v3519 = vsel %vm457, %v3505, 0
        %v3522 = vsel %vm457, %v3501, 0
        %3524 = vmatprep.subr.bf16.mxu0 0
        %3525 = vmatpush1.bf16.msra.mxu0 0
        %3526 = vmatprep.subr.bf16.mxu0 0
        %3527 = vmatpush1.bf16.msra.mxu0 0
        %3528 = vmatprep.subr.bf16.mxu0 0
        %3529 = vmatpush1.bf16.msra.mxu0 0
        %3530 = vmatprep.subr.bf16.mxu0 0
        %3531 = vmatpush1.bf16.msra.mxu0 0
        %3532 = vmatprep.subr.bf16.mxu0 0
        %3533 = vmatpush1.bf16.msra.mxu0 0
        %3534 = vmatprep.subr.bf16.mxu0 0
        %3535 = vmatpush1.bf16.msra.mxu0 0
        %3536 = vmatprep.subr.bf16.mxu0 0
        %3537 = vmatpush1.bf16.msra.mxu0 0
        %3538 = vmatprep.subr.bf16.mxu0 %v3513
        %3539 = vmatpush1.bf16.msra.mxu0 %v3510
        %3540 = vmatprep.subr.bf16.mxu0 0
        %3541 = vmatpush2.bf16.msra.mxu0 0
        %3542 = vmatprep.subr.bf16.mxu0 0
        %3543 = vmatpush2.bf16.msra.mxu0 0
        %3544 = vmatprep.subr.bf16.mxu0 0
        %3545 = vmatpush2.bf16.msra.mxu0 0
        %3546 = vmatprep.subr.bf16.mxu0 0
        %3547 = vmatpush2.bf16.msra.mxu0 0
        %3548 = vmatprep.subr.bf16.mxu0 0
        %3549 = vmatpush2.bf16.msra.mxu0 0
        %3550 = vmatprep.subr.bf16.mxu0 0
        %3551 = vmatpush2.bf16.msra.mxu0 0
        %3552 = vmatprep.subr.bf16.mxu0 0
        %3553 = vmatpush2.bf16.msra.mxu0 0
        %3554 = vmatprep.subr.bf16.mxu0 0
        %3555 = vmatpush2.bf16.msra.mxu0 0
        %3556 = vmatprep.mubr.bf16.mxu0 0
        %3557 = vmatmul.mubr.bf16.gmra.mxu0 %v3507
        %v3558 = vpop.f32.mrf.mxu0
        %v3559 = vadd.f32 0.0, %v3558
        %v3560 = vpop.f32.mrf.mxu0
        %v3561 = vadd.f32 0.0, %v3560
        %v3562 = vpop.f32.mrf.mxu0
        %v3563 = vpop.f32.mrf.mxu0
        %3564 = vdwg.mxu0
        %3565 = vmatprep.subr.bf16.mxu0 0
        %3566 = vmatpush1.bf16.msra.mxu0 0
        %3567 = vmatprep.subr.bf16.mxu0 0
        %3568 = vmatpush1.bf16.msra.mxu0 0
        %3569 = vmatprep.subr.bf16.mxu0 0
        %3570 = vmatpush1.bf16.msra.mxu0 0
        %3571 = vmatprep.subr.bf16.mxu0 0
        %3572 = vmatpush1.bf16.msra.mxu0 0
        %3573 = vmatprep.subr.bf16.mxu0 0
        %3574 = vmatpush1.bf16.msra.mxu0 0
        %3575 = vmatprep.subr.bf16.mxu0 0
        %3576 = vmatpush1.bf16.msra.mxu0 0
        %3577 = vmatprep.subr.bf16.mxu0 0
        %3578 = vmatpush1.bf16.msra.mxu0 0
        %3579 = vmatprep.subr.bf16.mxu0 %v3519
        %3580 = vmatpush1.bf16.msra.mxu0 %v3516
        %3581 = vmatprep.subr.bf16.mxu0 0
        %3582 = vmatpush2.bf16.msra.mxu0 0
        %3583 = vmatprep.subr.bf16.mxu0 0
        %3584 = vmatpush2.bf16.msra.mxu0 0
        %3585 = vmatprep.subr.bf16.mxu0 0
        %3586 = vmatpush2.bf16.msra.mxu0 0
        %3587 = vmatprep.subr.bf16.mxu0 0
        %3588 = vmatpush2.bf16.msra.mxu0 0
        %3589 = vmatprep.subr.bf16.mxu0 0
        %3590 = vmatpush2.bf16.msra.mxu0 0
        %3591 = vmatprep.subr.bf16.mxu0 0
        %3592 = vmatpush2.bf16.msra.mxu0 0
        %3593 = vmatprep.subr.bf16.mxu0 0
        %3594 = vmatpush2.bf16.msra.mxu0 0
        %3595 = vmatprep.subr.bf16.mxu0 0
        %3596 = vmatpush2.bf16.msra.mxu0 0
        %3597 = vmatprep.mubr.bf16.mxu0 0
        %3598 = vmatmul.mubr.bf16.gmra.mxu0 %v3507
        %v3599 = vpop.f32.mrf.mxu0
        %v3600 = vadd.f32 0.0, %v3599
        %v3601 = vpop.f32.mrf.mxu0
        %v3602 = vadd.f32 0.0, %v3601
        %v3603 = vpop.f32.mrf.mxu0
        %v3604 = vpop.f32.mrf.mxu0
        %3605 = vdwg.mxu0
        %3606 = vmatprep.subr.bf16.mxu0 0
        %3607 = vmatpush1.bf16.msra.mxu0 0
        %3608 = vmatprep.subr.bf16.mxu0 0
        %3609 = vmatpush1.bf16.msra.mxu0 0
        %3610 = vmatprep.subr.bf16.mxu0 0
        %3611 = vmatpush1.bf16.msra.mxu0 0
        %3612 = vmatprep.subr.bf16.mxu0 0
        %3613 = vmatpush1.bf16.msra.mxu0 0
        %3614 = vmatprep.subr.bf16.mxu0 0
        %3615 = vmatpush1.bf16.msra.mxu0 0
        %3616 = vmatprep.subr.bf16.mxu0 0
        %3617 = vmatpush1.bf16.msra.mxu0 0
        %3618 = vmatprep.subr.bf16.mxu0 0
        %3619 = vmatpush1.bf16.msra.mxu0 0
        %3620 = vmatprep.subr.bf16.mxu0 0
        %3621 = vmatpush1.bf16.msra.mxu0 %v3522
        %3622 = vmatprep.subr.bf16.mxu0 0
        %3623 = vmatpush2.bf16.msra.mxu0 0
        %3624 = vmatprep.subr.bf16.mxu0 0
        %3625 = vmatpush2.bf16.msra.mxu0 0
        %3626 = vmatprep.subr.bf16.mxu0 0
        %3627 = vmatpush2.bf16.msra.mxu0 0
        %3628 = vmatprep.subr.bf16.mxu0 0
        %3629 = vmatpush2.bf16.msra.mxu0 0
        %3630 = vmatprep.subr.bf16.mxu0 0
        %3631 = vmatpush2.bf16.msra.mxu0 0
        %3632 = vmatprep.subr.bf16.mxu0 0
        %3633 = vmatpush2.bf16.msra.mxu0 0
        %3634 = vmatprep.subr.bf16.mxu0 0
        %3635 = vmatpush2.bf16.msra.mxu0 0
        %3636 = vmatprep.subr.bf16.mxu0 0
        %3637 = vmatpush2.bf16.msra.mxu0 0
        %3638 = vmatprep.mubr.bf16.mxu0 0
        %3639 = vmatmul.mubr.bf16.gmra.mxu0 %v3507
        %v3640 = vpop.f32.mrf.mxu0
        %v3641 = vadd.f32 0.0, %v3640
        %v3642 = vpop.f32.mrf.mxu0
        %v3643 = vpop.f32.mrf.mxu0
        %v3644 = vpop.f32.mrf.mxu0
        %3645 = vdwg.mxu0
        %v3646 = vadd.f32 %v3469, %v3559
        %v3647 = vadd.f32 %v3470, %v3561
        %v3648 = vadd.f32 %v3471, %v3600
        %v3649 = vadd.f32 %v3472, %v3602
        %v3650 = vadd.f32 %v3473, %v3641
        %v3651 = vld [vmem:[%s4] sm:$0xff]
        %3653 = vset.pattern.permute.xlu0 0
        %3654 = vperm.xlu0 %3653, %v3651
        %v3655 = vpop.permute.xlu0 %3654
        %v3657 = vadd.f32 %v3646, %v3655
        %v3658 = vadd.f32 %v3647, %v3655
        %v3659 = vadd.f32 %v3648, %v3655
        %v3660 = vadd.f32 %v3649, %v3655
        %v3661 = vadd.f32 %v3650, %v3655
        %v3662 = vld [vmem:[%s238] sm:$0xff]
        %v3663 = vld [vmem:[%s238 + $0x8] sm:$0xff]
        %v3664 = vadd.f32 %v3657, %v3662
        %v3665 = vadd.f32 %v3658, %v3663
        %v3666 = vmax.f32 %v3664, 0.0
        %v3667 = vmax.f32 %v3665, 0.0
        %3668 = vst [vmem:[%s272] sm:$0xff] %v3666
        %3669 = vst [vmem:[%s272 + $0x8] sm:$0xff] %v3667
        %v3670 = vld [vmem:[%s305] sm:$0xff]
        %v3671 = vld [vmem:[%s305 + $0x8] sm:$0xff]
        %3674 = vrot.lane.b32.xlu0 %v3670, 16
        %v3675 = vpop.permute.xlu0 %3674
        %3676 = vrot.lane.b32.xlu0 %v3671, 16
        %v3677 = vpop.permute.xlu0 %3676
        %vm3678 = vcmask 130048
        %v3679 = vsel %vm3678, %v3675, %v3677
        %v3683 = vadd.f32 %v3659, %v3675
        %v3684 = vadd.f32 %v3660, %v3679
        %v3685 = vadd.f32 %v3661, %v3677
        %v3686 = vmax.f32 %v3683, 0.0
        %v3687 = vmax.f32 %v3684, 0.0
        %v3688 = vmax.f32 %v3685, 0.0
        %3692 = vrot.lane.b32.xlu0 %v3686, 112
        %v3693 = vpop.permute.xlu0 %3692
        %3694 = vrot.lane.b32.xlu0 %v3687, 112
        %v3695 = vpop.permute.xlu0 %3694
        %3696 = vrot.lane.b32.xlu0 %v3688, 112
        %v3697 = vpop.permute.xlu0 %3696
        %vm3698 = vcmask 916480
        %v3699 = vsel %vm3698, %v3693, %v3695
        %v3700 = vsel %vm3698, %v3695, %v3697
        %s3703 = scalar_lea.vmem %s272, 16 [#allocation9]
        %3704 = vst [vmem:[%s3703] sm:$0xff] %v3699
        %3705 = vst [vmem:[%s3703 + $0x8] sm:$0xff] %v3700
        %s3706 = sand.u32 %s141, 1
        %s3707 = scalar_lea.sflag [#allocation5], %s3706
        %s3708 = sand.u32 %s141, 1
        %s3709 = smul.addr %s3708, 32
        %s3710 = scalar_lea.vmem [#allocation9], %s3709
        // Predicated region
        $region53: #{tpu_custom_call.1} parent=39 // pred_check
          %p3711 = pneg %p151
        $region54: #{tpu_custom_call.1} parent=39 // pred_check_branch
          %3713 = sbr.rel (%p3711) target = $region56
        $region55: #{tpu_custom_call.1} parent=39 // pred_region
          %s3714 = smul.u32 2, %s23
          %s3716 = ssub.s32 512, 512
          %3717 = vsyncadd %s3707, %s3716
          %s3718 = smul.addr %s3714, 2
          %s3719 = smul.addr %s3718, 128
          %s3720 = scalar_lea.hbm %s5, %s3719
          %s3721 = sshll.u32 %s3710, 4
          %s3722 = int_to_ptr.vmem [resolvable:$true] %s3721
          %3727 = dma.vmem_to_hbm [thread:$0]  %s3722, 512, %s3720, %s3707, 256, 256, 16
        $region56: #{tpu_custom_call.1} parent=39 // pred_fallthru
          _
      $region40: #{tpu_custom_call.1} parent=5 // pred_fallthru
        _
      %p3728 = scmp.le.s32.totalorder 2, %s18
      // Predicated region
      $region57: #{tpu_custom_call.1} parent=5 // pred_check
        %p3729 = pneg %p3728
      $region58: #{tpu_custom_call.1} parent=5 // pred_check_branch
        %3731 = sbr.rel (%p3729) target = $region60
      $region59: #{tpu_custom_call.1} parent=5 // pred_region
        %s3732 = ssub.s32 %s18, 2
        // Predicated region
        $region61: #{tpu_custom_call.1} parent=59 // pred_check
          %p3733 = pneg %p157
        $region62: #{tpu_custom_call.1} parent=59 // pred_check_branch
          %3735 = sbr.rel (%p3733) target = $region64
        $region63: #{tpu_custom_call.1} parent=59 // pred_region
          %s3736 = sand.u32 %s142, 1
          %s3737 = scalar_lea.sflag [#allocation5], %s3736
          %s3738 = sand.u32 %s142, 1
          %s3739 = smul.addr %s3738, 32
          %s3740 = scalar_lea.vmem [#allocation9], %s3739
          %3741 = dma.done %s3737, 512
        $region64: #{tpu_custom_call.1} parent=59 // pred_fallthru
          _
      $region60: #{tpu_custom_call.1} parent=5 // pred_fallthru
        _
    $region6: #{tpu_custom_call.1} parent=1 // loop_footer
      %s22 = sadd.s32 1, %s18
    $region7: #{tpu_custom_call.1} parent=1 // loop_footer_branch
      %17 = sbr.rel target = $region3
    $region8: #{tpu_custom_call.1} parent=1 // loop_exit
      _
    %3742 = vsyncpa [#allocation4], 1
    %s3743 = scalar_lea.sflag [#allocation4], 1
    %3744 = vsyncpa %s3743, 1
    %3745 = vsyncpa [#allocation7], 1
    %3746 = vsyncpa [#allocation5], 1
    %s3747 = scalar_lea.sflag [#allocation5], 1
    %3748 = vsyncpa %s3747, 1

</llo_original>
